<compile_context>
chip_gen: v6e
topology: v6e:2x2x1
jax: 0.10.0
libtpu: 0.0.40
codegen_flags: <defaults>
</compile_context>

<pallas_src>
import functools

import jax
import jax.numpy as jnp
import numpy as np
from jax.experimental import pallas as pl
from jax.experimental.pallas import tpu as pltpu

BN_EPS = 1e-5
LANE = 128


# ----------------------------------------------------------------------------
# small helpers
# ----------------------------------------------------------------------------
def _cpad(c):
    return ((c + LANE - 1) // LANE) * LANE


def _pad_last(a, target):
    if a.shape[-1] == target:
        return a
    pad = [(0, 0)] * a.ndim
    pad[-1] = (0, target - a.shape[-1])
    return jnp.pad(a, pad)


def _vmem_limit(*blocks):
    """Scoped-VMEM limit from the per-step footprint (double-buffer + slack), capped for
    v7x's 64 MiB per-core VMEM (v5e/v6e have 128 MiB, the cap is harmless there)."""
    byt = 0
    for shape, dtype in blocks:
        byt += int(np.prod(shape)) * jnp.dtype(dtype).itemsize
    return int(min(max(2 * byt + (6 << 20), 16 << 20), 44 << 20))


def _pick_tm(m):
    for t in (1024, 512, 256, 128):
        if m % t == 0:
            return t
    if m < 128:
        return m          # tiny inputs: single full-extent tile
    return 128            # ragged M: cdiv grid, boundary block is masked by Pallas


def _pick_tn(c):
    if c % 256 == 0:
        return 256        # fill the 256x256 MXU on v6e/v7x
    if c % 128 == 0:
        return 128
    return c


def _avgpool_nhwc(x, s):
    """Exact s x s average pool (NHWC, bf16 in/out, f32 accumulate). Pure VPU/mem-bound XLA."""
    N, H, W, C = x.shape
    y = x.reshape(N, H // s, s, W // s, s, C).astype(jnp.float32).mean(axis=(2, 4))
    return y.astype(jnp.bfloat16)


# ----------------------------------------------------------------------------
# Kernel A: 1x1 conv (matmul) + folded-BN bias + ReLU
# ----------------------------------------------------------------------------
def _mm_bias_act_kernel(x_ref, w_ref, b_ref, o_ref, *, relu):
    y = jnp.dot(x_ref[...], w_ref[...], preferred_element_type=jnp.float32) + b_ref[...]
    if relu:
        y = jnp.maximum(y, 0.0)
    o_ref[...] = y.astype(o_ref.dtype)


def conv1x1_bias_relu(x2d, w, b, *, relu=True):
    """relu((M,K)@(K,C) + b).  BN scale pre-folded into w; b is f32 (1, C)."""
    M, K = x2d.shape
    C = w.shape[1]
    tm = _pick_tm(M)
    tn = _pick_tn(C)
    grid = (pl.cdiv(M, tm), C // tn)
    blocks = [((tm, K), x2d.dtype), ((K, tn), w.dtype), ((1, tn), jnp.float32),
              ((tm, tn), jnp.bfloat16), ((tm, tn), jnp.float32)]
    return pl.pallas_call(
        functools.partial(_mm_bias_act_kernel, relu=relu),
        out_shape=jax.ShapeDtypeStruct((M, C), jnp.bfloat16),
        grid=grid,
        in_specs=[
            pl.BlockSpec((tm, K), lambda i, j: (i, 0)),
            pl.BlockSpec((K, tn), lambda i, j: (0, j)),
            pl.BlockSpec((1, tn), lambda i, j: (0, j)),
        ],
        out_specs=pl.BlockSpec((tm, tn), lambda i, j: (i, j)),
        compiler_params=pltpu.CompilerParams(
            dimension_semantics=("parallel", "parallel"),
            vmem_limit_bytes=_vmem_limit(*blocks)),
        cost_estimate=pl.CostEstimate(
            flops=2 * M * K * C, transcendentals=0,
            bytes_accessed=M * K * 2 + K * C * 2 + C * 4 + M * C * 2),
    )(x2d, w, b)


# ----------------------------------------------------------------------------
# Kernel B: 3x3 conv (pad=1) + folded-BN bias + ReLU over a halo'd, flattened image tile.
#           kw is folded into the contraction dim: 3 dots with K = 3*Cin (no HBM im2col,
#           no 9 tiny K=Cin dots).  Output stays in the lane-dense (H*(W+2), Cout) layout
#           (one contiguous store); the 2 pad columns are stripped / pooled in the wrapper.
# ----------------------------------------------------------------------------
def _conv3x3_kernel(x_ref, w_ref, b_ref, o_ref, *, Wp, R):
    acc = None
    for kh in range(3):
        base = kh * Wp
        lhs = jnp.concatenate(
            [x_ref[0, base + kw:base + kw + R, :] for kw in range(3)], axis=-1)
        d = jnp.dot(lhs, w_ref[kh], preferred_element_type=jnp.float32)
        acc = d if acc is None else acc + d
    y = jnp.maximum(acc + b_ref[...], 0.0)
    o_ref[0] = y.astype(o_ref.dtype)


def conv3x3_bias_relu(xpad, w, b, *, H, W):
    """xpad: (N, (H+3)*(W+2), Cin) spatially zero-padded + flattened bf16 activation
       (1 pad row on top, 2 at the bottom, 1 pad column on each side).
       w: (3, 3*Cin, Cout), kw folded into K, BN scale folded in, bf16."""
    N, Sp, Cin = xpad.shape
    Wp = W + 2
    R = H * Wp
    Cout = w.shape[2]
    tn = _pick_tn(Cout)
    grid = (N, Cout // tn)
    blocks = [((1, Sp, Cin), xpad.dtype), ((3, 3 * Cin, tn), w.dtype),
              ((1, tn), jnp.float32), ((1, R, tn), jnp.bfloat16),
              ((R, tn), jnp.float32),        # f32 accumulator (value)
              ((R, 3 * Cin), jnp.bfloat16)]  # kw-stacked LHS temporary (value)
    return pl.pallas_call(
        functools.partial(_conv3x3_kernel, Wp=Wp, R=R),
        out_shape=jax.ShapeDtypeStruct((N, R, Cout), jnp.bfloat16),
        grid=grid,
        in_specs=[
            pl.BlockSpec((1, Sp, Cin), lambda n, j: (n, 0, 0)),
            pl.BlockSpec((3, 3 * Cin, tn), lambda n, j: (0, 0, j)),
            pl.BlockSpec((1, tn), lambda n, j: (0, j)),
        ],
        out_specs=pl.BlockSpec((1, R, tn), lambda n, j: (n, 0, j)),
        compiler_params=pltpu.CompilerParams(
            dimension_semantics=("parallel", "parallel"),
            vmem_limit_bytes=_vmem_limit(*blocks)),
        cost_estimate=pl.CostEstimate(
            flops=2 * N * R * 9 * Cin * Cout, transcendentals=0,
            bytes_accessed=N * Sp * Cin * 2 + 9 * Cin * Cout * 2 + Cout * 4
            + N * R * Cout * 2),
    )(xpad, w, b)


# ----------------------------------------------------------------------------
# Kernel C: fused tail = conv3(1x1)+bn3 [+ downsample 1x1+bn on the pre-pooled identity]
#           + residual add + ReLU.  Identity pooling happens once in the wrapper.
# ----------------------------------------------------------------------------
def _tail_add_kernel(h_ref, w3_ref, b3_ref, xid_ref, o_ref):
    main = jnp.dot(h_ref[...], w3_ref[...], preferred_element_type=jnp.float32) + b3_ref[...]
    out = jnp.maximum(main + xid_ref[...].astype(jnp.float32), 0.0)
    o_ref[...] = out.astype(o_ref.dtype)


def _tail_ds_kernel(h_ref, w3_ref, b3_ref, xid_ref, wd_ref, bd_ref, o_ref):
    main = jnp.dot(h_ref[...], w3_ref[...], preferred_element_type=jnp.float32) + b3_ref[...]
    ident = jnp.dot(xid_ref[...], wd_ref[...], preferred_element_type=jnp.float32) + bd_ref[...]
    o_ref[...] = jnp.maximum(main + ident, 0.0).astype(o_ref.dtype)


def tail_fused(h2, w3, b3, xid, wd=None, bd=None):
    """h2: (M, K) bf16 post-conv2(+pool); xid: (M, Cout) identity or (M, Cin) pre-pooled x."""
    M, K = h2.shape
    Cout = w3.shape[1]
    tm = _pick_tm(M)
    tn = _pick_tn(Cout)
    grid = (pl.cdiv(M, tm), Cout // tn)

    in_specs = [
        pl.BlockSpec((tm, K), lambda i, j: (i, 0)),
        pl.BlockSpec((K, tn), lambda i, j: (0, j)),
        pl.BlockSpec((1, tn), lambda i, j: (0, j)),
    ]
    args = [h2, w3, b3]
    blocks = [((tm, K), h2.dtype), ((K, tn), w3.dtype), ((1, tn), jnp.float32),
              ((tm, tn), jnp.bfloat16), ((tm, tn), jnp.float32)]
    flops = 2 * M * K * Cout
    byts = M * K * 2 + K * Cout * 2 + Cout * 4 + M * Cout * 2

    if wd is None:
        in_specs.append(pl.BlockSpec((tm, tn), lambda i, j: (i, j)))
        args.append(xid)
        blocks.append(((tm, tn), xid.dtype))
        byts += M * Cout * 2
        kern = _tail_add_kernel
    else:
        Cin = xid.shape[1]
        in_specs += [pl.BlockSpec((tm, Cin), lambda i, j: (i, 0)),
                     pl.BlockSpec((Cin, tn), lambda i, j: (0, j)),
                     pl.BlockSpec((1, tn), lambda i, j: (0, j))]
        args += [xid, wd, bd]
        blocks += [((tm, Cin), xid.dtype), ((Cin, tn), wd.dtype), ((1, tn), jnp.float32)]
        flops += 2 * M * Cin * Cout
        byts += M * Cin * 2 + Cin * Cout * 2 + Cout * 4
        kern = _tail_ds_kernel

    return pl.pallas_call(
        kern,
        out_shape=jax.ShapeDtypeStruct((M, Cout), jnp.bfloat16),
        grid=grid,
        in_specs=in_specs,
        out_specs=pl.BlockSpec((tm, tn), lambda i, j: (i, j)),
        compiler_params=pltpu.CompilerParams(
            dimension_semantics=("parallel", "parallel"),
            vmem_limit_bytes=_vmem_limit(*blocks)),
        cost_estimate=pl.CostEstimate(flops=flops, transcendentals=0, bytes_accessed=byts),
    )(*args)


# ----------------------------------------------------------------------------
# Bottleneck block + full forward (wrapper-side glue: pad / strip / avgpool are plain XLA)
# ----------------------------------------------------------------------------
def bottleneck_forward(x, blk):
    """x: (N, H, W, Cin_pad) bf16, exactly zero in padded channels."""
    N, H, W, Cinp = x.shape
    s = blk["stride"]
    Ho, Wo = H // s, W // s
    Pp = blk["w1"].shape[1]
    Coutp = blk["w3"].shape[1]
    Wp = W + 2

    # conv1 (1x1) + bn1 + relu
    h1 = conv1x1_bias_relu(x.reshape(N * H * W, Cinp), blk["w1"], blk["b1"])

    # spatial zero-pad for conv2 (1 top, 2 bottom, 1 left/right), flattened row layout
    # TODO(synk): fuse this pad into the conv1 epilogue to avoid the extra HBM round trip.
    h1p = jnp.pad(h1.reshape(N, H, W, Pp), ((0, 0), (1, 2), (1, 1), (0, 0)))
    h1p = h1p.reshape(N, (H + 3) * Wp, Pp)

    # conv2 (3x3, pad=1) + bn2 + relu  ->  lane-dense (N, H*Wp, Pp) layout with 2 junk cols
    h2g = conv3x3_bias_relu(h1p, blk["w2"], blk["b2"], H=H, W=W)
    h2 = h2g.reshape(N, H, Wp, Pp)[:, :, :W, :]          # strip the 2 pad columns (XLA)
    if s > 1:
        h2 = _avgpool_nhwc(h2, s)                        # exact s x s average (VPU, no MXU)
    h2 = h2.reshape(N * Ho * Wo, Pp)

    # conv3 (1x1) + bn3 + downsample + residual add + relu, fused
    if blk["wd"] is not None:
        xid = _avgpool_nhwc(x, s) if s > 1 else x        # pooled identity computed ONCE
        out = tail_fused(h2, blk["w3"], blk["b3"],
                         xid.reshape(N * Ho * Wo, Cinp), blk["wd"], blk["bd"])
    else:
        out = tail_fused(h2, blk["w3"], blk["b3"], x.reshape(N * H * W, Coutp))
    return out.reshape(N, Ho, Wo, Coutp)


def base_resnet_forward(x_nchw, prepared):
    """Equivalent of base_resnet.forward: layer1 -> layer2 -> layer3 -> layer4."""
    x = jnp.transpose(x_nchw, (0, 2, 3, 1))                  # NCHW -> NHWC
    x = _pad_last(x, _cpad(x.shape[-1])).astype(jnp.bfloat16)
    for stage in prepared:
        for blk in stage:
            x = bottleneck_forward(x, blk)
    cout = prepared[-1][-1]["cout_real"]
    x = x[..., :cout].astype(jnp.float32)
    return jnp.transpose(x, (0, 3, 1, 2))                    # back to NCHW


# ----------------------------------------------------------------------------
# Deterministic parameter init (synthetic, no checkpoint) + BN-fold / pad / cast prep
# ----------------------------------------------------------------------------
def init_bn(key, c):
    k1, k2, k3, k4 = jax.random.split(key, 4)
    gamma = jax.random.uniform(k1, (c,), jnp.float32, 0.5, 1.5)
    beta = 0.1 * jax.random.normal(k2, (c,), jnp.float32)
    mean = 0.1 * jax.random.normal(k3, (c,), jnp.float32)
    var = jax.random.uniform(k4, (c,), jnp.float32, 0.5, 1.5)
    return (gamma, beta, mean, var)


def init_block(key, inplanes, planes, stride):
    ks = jax.random.split(key, 8)
    exp = 4
    p = {
        "stride": stride,
        "w1": 0.1 * jax.random.normal(ks[0], (planes, inplanes, 1, 1), jnp.float32),
        "bn1": init_bn(ks[1], planes),
        "w2": 0.1 * jax.random.normal(ks[2], (planes, planes, 3, 3), jnp.float32),
        "bn2": init_bn(ks[3], planes),
        "w3": 0.1 * jax.random.normal(ks[4], (planes * exp, planes, 1, 1), jnp.float32),
        "bn3": init_bn(ks[5], planes * exp),
    }
    if stride > 1 or inplanes != planes * exp:
        p["wd"] = 0.1 * jax.random.normal(ks[6], (planes * exp, inplanes, 1, 1), jnp.float32)
        p["bnd"] = init_bn(ks[7], planes * exp)
    else:
        p["wd"] = None
        p["bnd"] = None
    return p


def make_params(key, width, layers):
    params = []
    inplanes = width
    stage_planes = (width, width * 2, width * 4, width * 8)
    for si, (planes, nblocks) in enumerate(zip(stage_planes, layers)):
        stage_stride = 1 if si == 0 else 2
        stage = []
        for bi in range(nblocks):
            key, sub = jax.random.split(key)
            s = stage_stride if bi == 0 else 1
            stage.append(init_block(sub, inplanes, planes, s))
            inplanes = planes * 4
        params.append(stage)
    return params


def fold_bn(bn):
    gamma, beta, mean, var = bn
    scale = gamma * jax.lax.rsqrt(var + BN_EPS)
    bias = beta - mean * scale
    return scale, bias


def _prep_w_1x1(w, scale, cin_p, cout_p):
    wt = w[:, :, 0, 0].T * scale[None, :]                    # (cin, cout), BN scale folded
    wt = jnp.pad(wt, ((0, cin_p - wt.shape[0]), (0, cout_p - wt.shape[1])))
    return wt.astype(jnp.bfloat16)


def _prep_bias(bias, c_p):
    return jnp.pad(bias, (0, c_p - bias.shape[0])).reshape(1, c_p).astype(jnp.float32)


def prepare_block(p):
    planes = p["w1"].shape[0]
    cin = p["w1"].shape[1]
    cout = p["w3"].shape[0]
    pp, cinp, coutp = _cpad(planes), _cpad(cin), _cpad(cout)

    s1, b1 = fold_bn(p["bn1"])
    s2, b2 = fold_bn(p["bn2"])
    s3, b3 = fold_bn(p["bn3"])

    # conv2 weights: (kh, kw, in, out) -> kw folded into K: (3, 3*pp, pp)
    w2 = jnp.transpose(p["w2"], (2, 3, 1, 0)) * s2[None, None, None, :]
    w2 = jnp.pad(w2, ((0, 0), (0, 0), (0, pp - planes), (0, pp - planes)))
    w2 = w2.reshape(3, 3 * pp, pp).astype(jnp.bfloat16)

    blk = {
        "stride": p["stride"],
        "cout_real": cout,
        "w1": _prep_w_1x1(p["w1"], s1, cinp, pp),
        "b1": _prep_bias(b1, pp),
        "w2": w2,
        "b2": _prep_bias(b2, pp),
        "w3": _prep_w_1x1(p["w3"], s3, pp, coutp),
        "b3": _prep_bias(b3, coutp),
        "wd": None,
        "bd": None,
    }
    if p["wd"] is not None:
        sd, bd = fold_bn(p["bnd"])
        blk["wd"] = _prep_w_1x1(p["wd"], sd, cinp, coutp)
        blk["bd"] = _prep_bias(bd, coutp)
    return blk


def prepare_params(params):
    return [[prepare_block(p) for p in stage] for stage in params]


# ----------------------------------------------------------------------------
# Pure-JAX reference with the same folded/padded bf16 parameters and the same cast points
# (BN folding / zero channel padding are exact reparameterizations of the PyTorch math).
# ----------------------------------------------------------------------------
def ref_bottleneck(x, blk):
    N, H, W, _ = x.shape
    s = blk["stride"]
    f32 = jnp.float32
    Pp = blk["w1"].shape[1]

    h = jnp.einsum("nhwc,cd->nhwd", x, blk["w1"], preferred_element_type=f32)
    h = jnp.maximum(h + blk["b1"].reshape(1, 1, 1, -1), 0.0).astype(jnp.bfloat16)

    hp = jnp.pad(h, ((0, 0), (1, 1), (1, 1), (0, 0)))
    acc = jnp.zeros((N, H, W, blk["w2"].shape[2]), f32)
    for kh in range(3):
        for kw in range(3):
            wt = blk["w2"][kh, kw * Pp:(kw + 1) * Pp, :]
            acc = acc + jnp.einsum("nhwc,cd->nhwd", hp[:, kh:kh + H, kw:kw + W, :],
                                   wt, preferred_element_type=f32)
    h2 = jnp.maximum(acc + blk["b2"].reshape(1, 1, 1, -1), 0.0).astype(jnp.bfloat16)
    if s > 1:
        h2 = _avgpool_nhwc(h2, s)

    main = jnp.einsum("nhwc,cd->nhwd", h2, blk["w3"], preferred_element_type=f32)
    main = main + blk["b3"].reshape(1, 1, 1, -1)
    if blk["wd"] is not None:
        xi = _avgpool_nhwc(x, s) if s > 1 else x
        ident = jnp.einsum("nhwc,cd->nhwd", xi, blk["wd"], preferred_element_type=f32)
        ident = ident + blk["bd"].reshape(1, 1, 1, -1)
    else:
        ident = x.astype(f32)
    return jnp.maximum(main + ident, 0.0).astype(jnp.bfloat16)


def ref_forward(x_nchw, prepared):
    x = jnp.transpose(x_nchw, (0, 2, 3, 1))
    x = _pad_last(x, _cpad(x.shape[-1])).astype(jnp.bfloat16)
    for stage in prepared:
        for blk in stage:
            x = ref_bottleneck(x, blk)
    cout = prepared[-1][-1]["cout_real"]
    return jnp.transpose(x[..., :cout].astype(jnp.float32), (0, 3, 1, 2))


# ----------------------------------------------------------------------------
if __name__ == "__main__":
    key = jax.random.PRNGKey(0)
    width = 8              # CLIP RN50 uses 64; small synthetic config
    layers = (2, 1, 1, 1)  # CLIP RN50 uses (3, 4, 6, 3)
    kx, kp = jax.random.split(key)

    # PyTorch-style NCHW input: (batch=2, channels=width, H=16, W=16)
    x = jax.random.normal(kx, (2, width, 16, 16), dtype=jnp.float32)
    params = make_params(kp, width=width, layers=layers)
    prepared = prepare_params(params)

    fwd = jax.jit(lambda inp: base_resnet_forward(inp, prepared))
    out = jax.block_until_ready(fwd(x))

    ref_fn = jax.jit(lambda inp: ref_forward(inp, prepared))
    ref = jax.block_until_ready(ref_fn(x))

    assert out.shape == (2, width * 8 * 4, 2, 2), out.shape
    np.testing.assert_allclose(np.asarray(out), np.asarray(ref), rtol=2e-2, atol=2e-2)

    print("KERNEL_OK")
</pallas_src>

<mosaic_0001>
module attributes {stable_mosaic.version = 11 : i64} {
  func.func @_mm_bias_act_kernel(%arg0: i32, %arg1: i32, %arg2: memref<512x128xbf16, #tpu.memory_space<vmem>>, %arg3: memref<128x128xbf16, #tpu.memory_space<vmem>>, %arg4: memref<1x128xf32, #tpu.memory_space<vmem>>, %arg5: memref<512x128xbf16, #tpu.memory_space<vmem>>) attributes {dimension_semantics = [#tpu.dimension_semantics<parallel>, #tpu.dimension_semantics<parallel>], iteration_bounds = array<i64: 1, 1>, scalar_prefetch = 0 : i64, scratch_operands = 0 : i64, tpu.core_type = #tpu.core_type<tc>, window_params = [{transform_indices = @transform_0, window_bounds = array<i64: 512, 128>}, {transform_indices = @transform_1, window_bounds = array<i64: 128, 128>}, {transform_indices = @transform_2, window_bounds = array<i64: 1, 128>}, {transform_indices = @transform_3, window_bounds = array<i64: 512, 128>}]} {
    %c0 = arith.constant 0 : index
    %c0_0 = arith.constant 0 : index
    %0 = vector.load %arg2[%c0, %c0_0] : memref<512x128xbf16, #tpu.memory_space<vmem>>, vector<512x128xbf16>
    %c0_1 = arith.constant 0 : index
    %c0_2 = arith.constant 0 : index
    %1 = vector.load %arg3[%c0_1, %c0_2] : memref<128x128xbf16, #tpu.memory_space<vmem>>, vector<128x128xbf16>
    %cst = arith.constant dense<0.000000e+00> : vector<512x128xf32>
    %2 = tpu.matmul %0, %1, %cst {dimension_numbers = #tpu.dot_dimension_numbers<[1], [0], [0], [1], [0, 0, 1, 1], [], []>} : vector<512x128xbf16>, vector<128x128xbf16>, vector<512x128xf32> -> vector<512x128xf32>
    %c0_3 = arith.constant 0 : index
    %c0_4 = arith.constant 0 : index
    %3 = vector.load %arg4[%c0_3, %c0_4] : memref<1x128xf32, #tpu.memory_space<vmem>>, vector<1x128xf32>
    %4 = vector.broadcast %3 : vector<1x128xf32> to vector<512x128xf32>
    %5 = arith.addf %2, %4 : vector<512x128xf32>
    %cst_5 = arith.constant 0.000000e+00 : f32
    %6 = vector.broadcast %cst_5 : f32 to vector<512x128xf32>
    %7 = arith.maximumf %5, %6 : vector<512x128xf32>
    %8 = arith.truncf %7 : vector<512x128xf32> to vector<512x128xbf16>
    %c0_6 = arith.constant 0 : index
    %c0_7 = arith.constant 0 : index
    %9 = vector.load %arg5[%c0_6, %c0_7] : memref<512x128xbf16, #tpu.memory_space<vmem>>, vector<512x128xbf16>
    tpu.vector_store %arg5[%c0_6, %c0_7], %8 {strides = array<i32>} : memref<512x128xbf16, #tpu.memory_space<vmem>>, vector<512x128xbf16>,
    return
  }
  func.func @transform_0(%arg0: i32, %arg1: i32) -> (i32, i32) {
    %c0_i32 = arith.constant 0 : i32
    %c0_i32_0 = arith.constant 0 : i32
    return %arg0, %c0_i32 : i32, i32
  }
  func.func @transform_1(%arg0: i32, %arg1: i32) -> (i32, i32) {
    %c0_i32 = arith.constant 0 : i32
    %c0_i32_0 = arith.constant 0 : i32
    return %c0_i32, %arg1 : i32, i32
  }
  func.func @transform_2(%arg0: i32, %arg1: i32) -> (i32, i32) {
    %c0_i32 = arith.constant 0 : i32
    %c0_i32_0 = arith.constant 0 : i32
    return %c0_i32, %arg1 : i32, i32
  }
  func.func @transform_3(%arg0: i32, %arg1: i32) -> (i32, i32) {
    %c0_i32 = arith.constant 0 : i32
    return %arg0, %arg1 : i32, i32
  }
}

module attributes {stable_mosaic.version = 11 : i64} {
  func.func @_conv3x3_kernel(%arg0: i32, %arg1: i32, %arg2: memref<1x342x128xbf16, #tpu.memory_space<vmem>>, %arg3: memref<3x384x128xbf16, #tpu.memory_space<vmem>>, %arg4: memref<1x128xf32, #tpu.memory_space<vmem>>, %arg5: memref<1x288x128xbf16, #tpu.memory_space<vmem>>) attributes {dimension_semantics = [#tpu.dimension_semantics<parallel>, #tpu.dimension_semantics<parallel>], iteration_bounds = array<i64: 2, 1>, scalar_prefetch = 0 : i64, scratch_operands = 0 : i64, tpu.core_type = #tpu.core_type<tc>, window_params = [{transform_indices = @transform_0, window_bounds = array<i64: 1, 342, 128>}, {transform_indices = @transform_1, window_bounds = array<i64: 3, 384, 128>}, {transform_indices = @transform_2, window_bounds = array<i64: 1, 128>}, {transform_indices = @transform_3, window_bounds = array<i64: 1, 288, 128>}]} {
    %c0 = arith.constant 0 : index
    %c0_0 = arith.constant 0 : index
    %c0_1 = arith.constant 0 : index
    %0 = vector.load %arg2[%c0, %c0_0, %c0_1] : memref<1x342x128xbf16, #tpu.memory_space<vmem>>, vector<1x288x128xbf16>
    %1 = vector.shape_cast %0 : vector<1x288x128xbf16> to vector<288x128xbf16>
    %c0_2 = arith.constant 0 : index
    %c1 = arith.constant 1 : index
    %c0_3 = arith.constant 0 : index
    %2 = vector.load %arg2[%c0_2, %c1, %c0_3] : memref<1x342x128xbf16, #tpu.memory_space<vmem>>, vector<1x288x128xbf16>
    %3 = vector.shape_cast %2 : vector<1x288x128xbf16> to vector<288x128xbf16>
    %c0_4 = arith.constant 0 : index
    %c2 = arith.constant 2 : index
    %c0_5 = arith.constant 0 : index
    %4 = vector.load %arg2[%c0_4, %c2, %c0_5] : memref<1x342x128xbf16, #tpu.memory_space<vmem>>, vector<1x288x128xbf16>
    %5 = vector.shape_cast %4 : vector<1x288x128xbf16> to vector<288x128xbf16>
    %6 = tpu.concatenate %1, %3, %5 in 1 : vector<288x128xbf16>, vector<288x128xbf16>, vector<288x128xbf16> -> vector<288x384xbf16>
    %c0_6 = arith.constant 0 : index
    %c0_7 = arith.constant 0 : index
    %c0_8 = arith.constant 0 : index
    %7 = vector.load %arg3[%c0_6, %c0_7, %c0_8] : memref<3x384x128xbf16, #tpu.memory_space<vmem>>, vector<1x384x128xbf16>
    %8 = vector.shape_cast %7 : vector<1x384x128xbf16> to vector<384x128xbf16>
    %cst = arith.constant dense<0.000000e+00> : vector<288x128xf32>
    %9 = tpu.matmul %6, %8, %cst {dimension_numbers = #tpu.dot_dimension_numbers<[1], [0], [0], [1], [0, 0, 1, 1], [], []>} : vector<288x384xbf16>, vector<384x128xbf16>, vector<288x128xf32> -> vector<288x128xf32>
    %c0_9 = arith.constant 0 : index
    %c18 = arith.constant 18 : index
    %c0_10 = arith.constant 0 : index
    %10 = vector.load %arg2[%c0_9, %c18, %c0_10] : memref<1x342x128xbf16, #tpu.memory_space<vmem>>, vector<1x288x128xbf16>
    %11 = vector.shape_cast %10 : vector<1x288x128xbf16> to vector<288x128xbf16>
    %c0_11 = arith.constant 0 : index
    %c19 = arith.constant 19 : index
    %c0_12 = arith.constant 0 : index
    %12 = vector.load %arg2[%c0_11, %c19, %c0_12] : memref<1x342x128xbf16, #tpu.memory_space<vmem>>, vector<1x288x128xbf16>
    %13 = vector.shape_cast %12 : vector<1x288x128xbf16> to vector<288x128xbf16>
    %c0_13 = arith.constant 0 : index
    %c20 = arith.constant 20 : index
    %c0_14 = arith.constant 0 : index
    %14 = vector.load %arg2[%c0_13, %c20, %c0_14] : memref<1x342x128xbf16, #tpu.memory_space<vmem>>, vector<1x288x128xbf16>
    %15 = vector.shape_cast %14 : vector<1x288x128xbf16> to vector<288x128xbf16>
    %16 = tpu.concatenate %11, %13, %15 in 1 : vector<288x128xbf16>, vector<288x128xbf16>, vector<288x128xbf16> -> vector<288x384xbf16>
    %c1_15 = arith.constant 1 : index
    %c0_16 = arith.constant 0 : index
    %c0_17 = arith.constant 0 : index
    %17 = vector.load %arg3[%c1_15, %c0_16, %c0_17] : memref<3x384x128xbf16, #tpu.memory_space<vmem>>, vector<1x384x128xbf16>
    %18 = vector.shape_cast %17 : vector<1x384x128xbf16> to vector<384x128xbf16>
    %cst_18 = arith.constant dense<0.000000e+00> : vector<288x128xf32>
    %19 = tpu.matmul %16, %18, %cst_18 {dimension_numbers = #tpu.dot_dimension_numbers<[1], [0], [0], [1], [0, 0, 1, 1], [], []>} : vector<288x384xbf16>, vector<384x128xbf16>, vector<288x128xf32> -> vector<288x128xf32>
    %20 = arith.addf %9, %19 : vector<288x128xf32>
    %c0_19 = arith.constant 0 : index
    %c36 = arith.constant 36 : index
    %c0_20 = arith.constant 0 : index
    %21 = vector.load %arg2[%c0_19, %c36, %c0_20] : memref<1x342x128xbf16, #tpu.memory_space<vmem>>, vector<1x288x128xbf16>
    %22 = vector.shape_cast %21 : vector<1x288x128xbf16> to vector<288x128xbf16>
    %c0_21 = arith.constant 0 : index
    %c37 = arith.constant 37 : index
    %c0_22 = arith.constant 0 : index
    %23 = vector.load %arg2[%c0_21, %c37, %c0_22] : memref<1x342x128xbf16, #tpu.memory_space<vmem>>, vector<1x288x128xbf16>
    %24 = vector.shape_cast %23 : vector<1x288x128xbf16> to vector<288x128xbf16>
    %c0_23 = arith.constant 0 : index
    %c38 = arith.constant 38 : index
    %c0_24 = arith.constant 0 : index
    %25 = vector.load %arg2[%c0_23, %c38, %c0_24] : memref<1x342x128xbf16, #tpu.memory_space<vmem>>, vector<1x288x128xbf16>
    %26 = vector.shape_cast %25 : vector<1x288x128xbf16> to vector<288x128xbf16>
    %27 = tpu.concatenate %22, %24, %26 in 1 : vector<288x128xbf16>, vector<288x128xbf16>, vector<288x128xbf16> -> vector<288x384xbf16>
    %c2_25 = arith.constant 2 : index
    %c0_26 = arith.constant 0 : index
    %c0_27 = arith.constant 0 : index
    %28 = vector.load %arg3[%c2_25, %c0_26, %c0_27] : memref<3x384x128xbf16, #tpu.memory_space<vmem>>, vector<1x384x128xbf16>
    %29 = vector.shape_cast %28 : vector<1x384x128xbf16> to vector<384x128xbf16>
    %cst_28 = arith.constant dense<0.000000e+00> : vector<288x128xf32>
    %30 = tpu.matmul %27, %29, %cst_28 {dimension_numbers = #tpu.dot_dimension_numbers<[1], [0], [0], [1], [0, 0, 1, 1], [], []>} : vector<288x384xbf16>, vector<384x128xbf16>, vector<288x128xf32> -> vector<288x128xf32>
    %31 = arith.addf %20, %30 : vector<288x128xf32>
    %c0_29 = arith.constant 0 : index
    %c0_30 = arith.constant 0 : index
    %32 = vector.load %arg4[%c0_29, %c0_30] : memref<1x128xf32, #tpu.memory_space<vmem>>, vector<1x128xf32>
    %33 = vector.broadcast %32 : vector<1x128xf32> to vector<288x128xf32>
    %34 = arith.addf %31, %33 : vector<288x128xf32>
    %cst_31 = arith.constant 0.000000e+00 : f32
    %35 = vector.broadcast %cst_31 : f32 to vector<288x128xf32>
    %36 = arith.maximumf %34, %35 : vector<288x128xf32>
    %37 = arith.truncf %36 : vector<288x128xf32> to vector<288x128xbf16>
    %c0_32 = arith.constant 0 : index
    %c0_33 = arith.constant 0 : index
    %c0_34 = arith.constant 0 : index
    %38 = vector.load %arg5[%c0_32, %c0_33, %c0_34] : memref<1x288x128xbf16, #tpu.memory_space<vmem>>, vector<1x288x128xbf16>
    %39 = vector.shape_cast %38 : vector<1x288x128xbf16> to vector<288x128xbf16>
    %40 = vector.shape_cast %37 : vector<288x128xbf16> to vector<1x288x128xbf16>
    tpu.vector_store %arg5[%c0_32, %c0_33, %c0_34], %40 {strides = array<i32>} : memref<1x288x128xbf16, #tpu.memory_space<vmem>>, vector<1x288x128xbf16>,
    return
  }
  func.func @transform_0(%arg0: i32, %arg1: i32) -> (i32, i32, i32) {
    %c0_i32 = arith.constant 0 : i32
    %c0_i32_0 = arith.constant 0 : i32
    %c0_i32_1 = arith.constant 0 : i32
    return %arg0, %c0_i32, %c0_i32_0 : i32, i32, i32
  }
  func.func @transform_1(%arg0: i32, %arg1: i32) -> (i32, i32, i32) {
    %c0_i32 = arith.constant 0 : i32
    %c0_i32_0 = arith.constant 0 : i32
    %c0_i32_1 = arith.constant 0 : i32
    return %c0_i32, %c0_i32_0, %arg1 : i32, i32, i32
  }
  func.func @transform_2(%arg0: i32, %arg1: i32) -> (i32, i32) {
    %c0_i32 = arith.constant 0 : i32
    %c0_i32_0 = arith.constant 0 : i32
    return %c0_i32, %arg1 : i32, i32
  }
  func.func @transform_3(%arg0: i32, %arg1: i32) -> (i32, i32, i32) {
    %c0_i32 = arith.constant 0 : i32
    %c0_i32_0 = arith.constant 0 : i32
    return %arg0, %c0_i32, %arg1 : i32, i32, i32
  }
}

module attributes {stable_mosaic.version = 11 : i64} {
  func.func @_tail_add_kernel(%arg0: i32, %arg1: i32, %arg2: memref<512x128xbf16, #tpu.memory_space<vmem>>, %arg3: memref<128x128xbf16, #tpu.memory_space<vmem>>, %arg4: memref<1x128xf32, #tpu.memory_space<vmem>>, %arg5: memref<512x128xbf16, #tpu.memory_space<vmem>>, %arg6: memref<512x128xbf16, #tpu.memory_space<vmem>>) attributes {dimension_semantics = [#tpu.dimension_semantics<parallel>, #tpu.dimension_semantics<parallel>], iteration_bounds = array<i64: 1, 1>, scalar_prefetch = 0 : i64, scratch_operands = 0 : i64, tpu.core_type = #tpu.core_type<tc>, window_params = [{transform_indices = @transform_0, window_bounds = array<i64: 512, 128>}, {transform_indices = @transform_1, window_bounds = array<i64: 128, 128>}, {transform_indices = @transform_2, window_bounds = array<i64: 1, 128>}, {transform_indices = @transform_3, window_bounds = array<i64: 512, 128>}, {transform_indices = @transform_4, window_bounds = array<i64: 512, 128>}]} {
    %c0 = arith.constant 0 : index
    %c0_0 = arith.constant 0 : index
    %0 = vector.load %arg2[%c0, %c0_0] : memref<512x128xbf16, #tpu.memory_space<vmem>>, vector<512x128xbf16>
    %c0_1 = arith.constant 0 : index
    %c0_2 = arith.constant 0 : index
    %1 = vector.load %arg3[%c0_1, %c0_2] : memref<128x128xbf16, #tpu.memory_space<vmem>>, vector<128x128xbf16>
    %cst = arith.constant dense<0.000000e+00> : vector<512x128xf32>
    %2 = tpu.matmul %0, %1, %cst {dimension_numbers = #tpu.dot_dimension_numbers<[1], [0], [0], [1], [0, 0, 1, 1], [], []>} : vector<512x128xbf16>, vector<128x128xbf16>, vector<512x128xf32> -> vector<512x128xf32>
    %c0_3 = arith.constant 0 : index
    %c0_4 = arith.constant 0 : index
    %3 = vector.load %arg4[%c0_3, %c0_4] : memref<1x128xf32, #tpu.memory_space<vmem>>, vector<1x128xf32>
    %4 = vector.broadcast %3 : vector<1x128xf32> to vector<512x128xf32>
    %5 = arith.addf %2, %4 : vector<512x128xf32>
    %c0_5 = arith.constant 0 : index
    %c0_6 = arith.constant 0 : index
    %6 = vector.load %arg5[%c0_5, %c0_6] : memref<512x128xbf16, #tpu.memory_space<vmem>>, vector<512x128xbf16>
    %7 = arith.extf %6 : vector<512x128xbf16> to vector<512x128xf32>
    %8 = arith.addf %5, %7 : vector<512x128xf32>
    %cst_7 = arith.constant 0.000000e+00 : f32
    %9 = vector.broadcast %cst_7 : f32 to vector<512x128xf32>
    %10 = arith.maximumf %8, %9 : vector<512x128xf32>
    %11 = arith.truncf %10 : vector<512x128xf32> to vector<512x128xbf16>
    %c0_8 = arith.constant 0 : index
    %c0_9 = arith.constant 0 : index
    %12 = vector.load %arg6[%c0_8, %c0_9] : memref<512x128xbf16, #tpu.memory_space<vmem>>, vector<512x128xbf16>
    tpu.vector_store %arg6[%c0_8, %c0_9], %11 {strides = array<i32>} : memref<512x128xbf16, #tpu.memory_space<vmem>>, vector<512x128xbf16>,
    return
  }
  func.func @transform_0(%arg0: i32, %arg1: i32) -> (i32, i32) {
    %c0_i32 = arith.constant 0 : i32
    %c0_i32_0 = arith.constant 0 : i32
    return %arg0, %c0_i32 : i32, i32
  }
  func.func @transform_1(%arg0: i32, %arg1: i32) -> (i32, i32) {
    %c0_i32 = arith.constant 0 : i32
    %c0_i32_0 = arith.constant 0 : i32
    return %c0_i32, %arg1 : i32, i32
  }
  func.func @transform_2(%arg0: i32, %arg1: i32) -> (i32, i32) {
    %c0_i32 = arith.constant 0 : i32
    %c0_i32_0 = arith.constant 0 : i32
    return %c0_i32, %arg1 : i32, i32
  }
  func.func @transform_3(%arg0: i32, %arg1: i32) -> (i32, i32) {
    %c0_i32 = arith.constant 0 : i32
    return %arg0, %arg1 : i32, i32
  }
  func.func @transform_4(%arg0: i32, %arg1: i32) -> (i32, i32) {
    %c0_i32 = arith.constant 0 : i32
    return %arg0, %arg1 : i32, i32
  }
}

module attributes {stable_mosaic.version = 11 : i64} {
  func.func @_tail_ds_kernel(%arg0: i32, %arg1: i32, %arg2: memref<512x128xbf16, #tpu.memory_space<vmem>>, %arg3: memref<128x128xbf16, #tpu.memory_space<vmem>>, %arg4: memref<1x128xf32, #tpu.memory_space<vmem>>, %arg5: memref<512x128xbf16, #tpu.memory_space<vmem>>, %arg6: memref<128x128xbf16, #tpu.memory_space<vmem>>, %arg7: memref<1x128xf32, #tpu.memory_space<vmem>>, %arg8: memref<512x128xbf16, #tpu.memory_space<vmem>>) attributes {dimension_semantics = [#tpu.dimension_semantics<parallel>, #tpu.dimension_semantics<parallel>], iteration_bounds = array<i64: 1, 1>, scalar_prefetch = 0 : i64, scratch_operands = 0 : i64, tpu.core_type = #tpu.core_type<tc>, window_params = [{transform_indices = @transform_0, window_bounds = array<i64: 512, 128>}, {transform_indices = @transform_1, window_bounds = array<i64: 128, 128>}, {transform_indices = @transform_2, window_bounds = array<i64: 1, 128>}, {transform_indices = @transform_3, window_bounds = array<i64: 512, 128>}, {transform_indices = @transform_4, window_bounds = array<i64: 128, 128>}, {transform_indices = @transform_5, window_bounds = array<i64: 1, 128>}, {transform_indices = @transform_6, window_bounds = array<i64: 512, 128>}]} {
    %c0 = arith.constant 0 : index
    %c0_0 = arith.constant 0 : index
    %0 = vector.load %arg2[%c0, %c0_0] : memref<512x128xbf16, #tpu.memory_space<vmem>>, vector<512x128xbf16>
    %c0_1 = arith.constant 0 : index
    %c0_2 = arith.constant 0 : index
    %1 = vector.load %arg3[%c0_1, %c0_2] : memref<128x128xbf16, #tpu.memory_space<vmem>>, vector<128x128xbf16>
    %cst = arith.constant dense<0.000000e+00> : vector<512x128xf32>
    %2 = tpu.matmul %0, %1, %cst {dimension_numbers = #tpu.dot_dimension_numbers<[1], [0], [0], [1], [0, 0, 1, 1], [], []>} : vector<512x128xbf16>, vector<128x128xbf16>, vector<512x128xf32> -> vector<512x128xf32>
    %c0_3 = arith.constant 0 : index
    %c0_4 = arith.constant 0 : index
    %3 = vector.load %arg4[%c0_3, %c0_4] : memref<1x128xf32, #tpu.memory_space<vmem>>, vector<1x128xf32>
    %4 = vector.broadcast %3 : vector<1x128xf32> to vector<512x128xf32>
    %5 = arith.addf %2, %4 : vector<512x128xf32>
    %c0_5 = arith.constant 0 : index
    %c0_6 = arith.constant 0 : index
    %6 = vector.load %arg5[%c0_5, %c0_6] : memref<512x128xbf16, #tpu.memory_space<vmem>>, vector<512x128xbf16>
    %c0_7 = arith.constant 0 : index
    %c0_8 = arith.constant 0 : index
    %7 = vector.load %arg6[%c0_7, %c0_8] : memref<128x128xbf16, #tpu.memory_space<vmem>>, vector<128x128xbf16>
    %cst_9 = arith.constant dense<0.000000e+00> : vector<512x128xf32>
    %8 = tpu.matmul %6, %7, %cst_9 {dimension_numbers = #tpu.dot_dimension_numbers<[1], [0], [0], [1], [0, 0, 1, 1], [], []>} : vector<512x128xbf16>, vector<128x128xbf16>, vector<512x128xf32> -> vector<512x128xf32>
    %c0_10 = arith.constant 0 : index
    %c0_11 = arith.constant 0 : index
    %9 = vector.load %arg7[%c0_10, %c0_11] : memref<1x128xf32, #tpu.memory_space<vmem>>, vector<1x128xf32>
    %10 = vector.broadcast %9 : vector<1x128xf32> to vector<512x128xf32>
    %11 = arith.addf %8, %10 : vector<512x128xf32>
    %12 = arith.addf %5, %11 : vector<512x128xf32>
    %cst_12 = arith.constant 0.000000e+00 : f32
    %13 = vector.broadcast %cst_12 : f32 to vector<512x128xf32>
    %14 = arith.maximumf %12, %13 : vector<512x128xf32>
    %15 = arith.truncf %14 : vector<512x128xf32> to vector<512x128xbf16>
    %c0_13 = arith.constant 0 : index
    %c0_14 = arith.constant 0 : index
    %16 = vector.load %arg8[%c0_13, %c0_14] : memref<512x128xbf16, #tpu.memory_space<vmem>>, vector<512x128xbf16>
    tpu.vector_store %arg8[%c0_13, %c0_14], %15 {strides = array<i32>} : memref<512x128xbf16, #tpu.memory_space<vmem>>, vector<512x128xbf16>,
    return
  }
  func.func @transform_0(%arg0: i32, %arg1: i32) -> (i32, i32) {
    %c0_i32 = arith.constant 0 : i32
    %c0_i32_0 = arith.constant 0 : i32
    return %arg0, %c0_i32 : i32, i32
  }
  func.func @transform_1(%arg0: i32, %arg1: i32) -> (i32, i32) {
    %c0_i32 = arith.constant 0 : i32
    %c0_i32_0 = arith.constant 0 : i32
    return %c0_i32, %arg1 : i32, i32
  }
  func.func @transform_2(%arg0: i32, %arg1: i32) -> (i32, i32) {
    %c0_i32 = arith.constant 0 : i32
    %c0_i32_0 = arith.constant 0 : i32
    return %c0_i32, %arg1 : i32, i32
  }
  func.func @transform_3(%arg0: i32, %arg1: i32) -> (i32, i32) {
    %c0_i32 = arith.constant 0 : i32
    %c0_i32_0 = arith.constant 0 : i32
    return %arg0, %c0_i32 : i32, i32
  }
  func.func @transform_4(%arg0: i32, %arg1: i32) -> (i32, i32) {
    %c0_i32 = arith.constant 0 : i32
    %c0_i32_0 = arith.constant 0 : i32
    return %c0_i32, %arg1 : i32, i32
  }
  func.func @transform_5(%arg0: i32, %arg1: i32) -> (i32, i32) {
    %c0_i32 = arith.constant 0 : i32
    %c0_i32_0 = arith.constant 0 : i32
    return %c0_i32, %arg1 : i32, i32
  }
  func.func @transform_6(%arg0: i32, %arg1: i32) -> (i32, i32) {
    %c0_i32 = arith.constant 0 : i32
    return %arg0, %arg1 : i32, i32
  }
}

module attributes {stable_mosaic.version = 11 : i64} {
  func.func @_tail_ds_kernel(%arg0: i32, %arg1: i32, %arg2: memref<128x128xbf16, #tpu.memory_space<vmem>>, %arg3: memref<128x128xbf16, #tpu.memory_space<vmem>>, %arg4: memref<1x128xf32, #tpu.memory_space<vmem>>, %arg5: memref<128x128xbf16, #tpu.memory_space<vmem>>, %arg6: memref<128x128xbf16, #tpu.memory_space<vmem>>, %arg7: memref<1x128xf32, #tpu.memory_space<vmem>>, %arg8: memref<128x128xbf16, #tpu.memory_space<vmem>>) attributes {dimension_semantics = [#tpu.dimension_semantics<parallel>, #tpu.dimension_semantics<parallel>], iteration_bounds = array<i64: 1, 1>, scalar_prefetch = 0 : i64, scratch_operands = 0 : i64, tpu.core_type = #tpu.core_type<tc>, window_params = [{transform_indices = @transform_0, window_bounds = array<i64: 128, 128>}, {transform_indices = @transform_1, window_bounds = array<i64: 128, 128>}, {transform_indices = @transform_2, window_bounds = array<i64: 1, 128>}, {transform_indices = @transform_3, window_bounds = array<i64: 128, 128>}, {transform_indices = @transform_4, window_bounds = array<i64: 128, 128>}, {transform_indices = @transform_5, window_bounds = array<i64: 1, 128>}, {transform_indices = @transform_6, window_bounds = array<i64: 128, 128>}]} {
    %c0 = arith.constant 0 : index
    %c0_0 = arith.constant 0 : index
    %0 = vector.load %arg2[%c0, %c0_0] : memref<128x128xbf16, #tpu.memory_space<vmem>>, vector<128x128xbf16>
    %c0_1 = arith.constant 0 : index
    %c0_2 = arith.constant 0 : index
    %1 = vector.load %arg3[%c0_1, %c0_2] : memref<128x128xbf16, #tpu.memory_space<vmem>>, vector<128x128xbf16>
    %cst = arith.constant dense<0.000000e+00> : vector<128x128xf32>
    %2 = tpu.matmul %0, %1, %cst {dimension_numbers = #tpu.dot_dimension_numbers<[1], [0], [0], [1], [0, 0, 1, 1], [], []>} : vector<128x128xbf16>, vector<128x128xbf16>, vector<128x128xf32> -> vector<128x128xf32>
    %c0_3 = arith.constant 0 : index
    %c0_4 = arith.constant 0 : index
    %3 = vector.load %arg4[%c0_3, %c0_4] : memref<1x128xf32, #tpu.memory_space<vmem>>, vector<1x128xf32>
    %4 = vector.broadcast %3 : vector<1x128xf32> to vector<128x128xf32>
    %5 = arith.addf %2, %4 : vector<128x128xf32>
    %c0_5 = arith.constant 0 : index
    %c0_6 = arith.constant 0 : index
    %6 = vector.load %arg5[%c0_5, %c0_6] : memref<128x128xbf16, #tpu.memory_space<vmem>>, vector<128x128xbf16>
    %c0_7 = arith.constant 0 : index
    %c0_8 = arith.constant 0 : index
    %7 = vector.load %arg6[%c0_7, %c0_8] : memref<128x128xbf16, #tpu.memory_space<vmem>>, vector<128x128xbf16>
    %cst_9 = arith.constant dense<0.000000e+00> : vector<128x128xf32>
    %8 = tpu.matmul %6, %7, %cst_9 {dimension_numbers = #tpu.dot_dimension_numbers<[1], [0], [0], [1], [0, 0, 1, 1], [], []>} : vector<128x128xbf16>, vector<128x128xbf16>, vector<128x128xf32> -> vector<128x128xf32>
    %c0_10 = arith.constant 0 : index
    %c0_11 = arith.constant 0 : index
    %9 = vector.load %arg7[%c0_10, %c0_11] : memref<1x128xf32, #tpu.memory_space<vmem>>, vector<1x128xf32>
    %10 = vector.broadcast %9 : vector<1x128xf32> to vector<128x128xf32>
    %11 = arith.addf %8, %10 : vector<128x128xf32>
    %12 = arith.addf %5, %11 : vector<128x128xf32>
    %cst_12 = arith.constant 0.000000e+00 : f32
    %13 = vector.broadcast %cst_12 : f32 to vector<128x128xf32>
    %14 = arith.maximumf %12, %13 : vector<128x128xf32>
    %15 = arith.truncf %14 : vector<128x128xf32> to vector<128x128xbf16>
    %c0_13 = arith.constant 0 : index
    %c0_14 = arith.constant 0 : index
    %16 = vector.load %arg8[%c0_13, %c0_14] : memref<128x128xbf16, #tpu.memory_space<vmem>>, vector<128x128xbf16>
    tpu.vector_store %arg8[%c0_13, %c0_14], %15 {strides = array<i32>} : memref<128x128xbf16, #tpu.memory_space<vmem>>, vector<128x128xbf16>,
    return
  }
  func.func @transform_0(%arg0: i32, %arg1: i32) -> (i32, i32) {
    %c0_i32 = arith.constant 0 : i32
    %c0_i32_0 = arith.constant 0 : i32
    return %arg0, %c0_i32 : i32, i32
  }
  func.func @transform_1(%arg0: i32, %arg1: i32) -> (i32, i32) {
    %c0_i32 = arith.constant 0 : i32
    %c0_i32_0 = arith.constant 0 : i32
    return %c0_i32, %arg1 : i32, i32
  }
  func.func @transform_2(%arg0: i32, %arg1: i32) -> (i32, i32) {
    %c0_i32 = arith.constant 0 : i32
    %c0_i32_0 = arith.constant 0 : i32
    return %c0_i32, %arg1 : i32, i32
  }
  func.func @transform_3(%arg0: i32, %arg1: i32) -> (i32, i32) {
    %c0_i32 = arith.constant 0 : i32
    %c0_i32_0 = arith.constant 0 : i32
    return %arg0, %c0_i32 : i32, i32
  }
  func.func @transform_4(%arg0: i32, %arg1: i32) -> (i32, i32) {
    %c0_i32 = arith.constant 0 : i32
    %c0_i32_0 = arith.constant 0 : i32
    return %c0_i32, %arg1 : i32, i32
  }
  func.func @transform_5(%arg0: i32, %arg1: i32) -> (i32, i32) {
    %c0_i32 = arith.constant 0 : i32
    %c0_i32_0 = arith.constant 0 : i32
    return %c0_i32, %arg1 : i32, i32
  }
  func.func @transform_6(%arg0: i32, %arg1: i32) -> (i32, i32) {
    %c0_i32 = arith.constant 0 : i32
    return %arg0, %arg1 : i32, i32
  }
}

module attributes {stable_mosaic.version = 11 : i64} {
  func.func @_mm_bias_act_kernel(%arg0: i32, %arg1: i32, %arg2: memref<128x128xbf16, #tpu.memory_space<vmem>>, %arg3: memref<128x128xbf16, #tpu.memory_space<vmem>>, %arg4: memref<1x128xf32, #tpu.memory_space<vmem>>, %arg5: memref<128x128xbf16, #tpu.memory_space<vmem>>) attributes {dimension_semantics = [#tpu.dimension_semantics<parallel>, #tpu.dimension_semantics<parallel>], iteration_bounds = array<i64: 1, 1>, scalar_prefetch = 0 : i64, scratch_operands = 0 : i64, tpu.core_type = #tpu.core_type<tc>, window_params = [{transform_indices = @transform_0, window_bounds = array<i64: 128, 128>}, {transform_indices = @transform_1, window_bounds = array<i64: 128, 128>}, {transform_indices = @transform_2, window_bounds = array<i64: 1, 128>}, {transform_indices = @transform_3, window_bounds = array<i64: 128, 128>}]} {
    %c0 = arith.constant 0 : index
    %c0_0 = arith.constant 0 : index
    %0 = vector.load %arg2[%c0, %c0_0] : memref<128x128xbf16, #tpu.memory_space<vmem>>, vector<128x128xbf16>
    %c0_1 = arith.constant 0 : index
    %c0_2 = arith.constant 0 : index
    %1 = vector.load %arg3[%c0_1, %c0_2] : memref<128x128xbf16, #tpu.memory_space<vmem>>, vector<128x128xbf16>
    %cst = arith.constant dense<0.000000e+00> : vector<128x128xf32>
    %2 = tpu.matmul %0, %1, %cst {dimension_numbers = #tpu.dot_dimension_numbers<[1], [0], [0], [1], [0, 0, 1, 1], [], []>} : vector<128x128xbf16>, vector<128x128xbf16>, vector<128x128xf32> -> vector<128x128xf32>
    %c0_3 = arith.constant 0 : index
    %c0_4 = arith.constant 0 : index
    %3 = vector.load %arg4[%c0_3, %c0_4] : memref<1x128xf32, #tpu.memory_space<vmem>>, vector<1x128xf32>
    %4 = vector.broadcast %3 : vector<1x128xf32> to vector<128x128xf32>
    %5 = arith.addf %2, %4 : vector<128x128xf32>
    %cst_5 = arith.constant 0.000000e+00 : f32
    %6 = vector.broadcast %cst_5 : f32 to vector<128x128xf32>
    %7 = arith.maximumf %5, %6 : vector<128x128xf32>
    %8 = arith.truncf %7 : vector<128x128xf32> to vector<128x128xbf16>
    %c0_6 = arith.constant 0 : index
    %c0_7 = arith.constant 0 : index
    %9 = vector.load %arg5[%c0_6, %c0_7] : memref<128x128xbf16, #tpu.memory_space<vmem>>, vector<128x128xbf16>
    tpu.vector_store %arg5[%c0_6, %c0_7], %8 {strides = array<i32>} : memref<128x128xbf16, #tpu.memory_space<vmem>>, vector<128x128xbf16>,
    return
  }
  func.func @transform_0(%arg0: i32, %arg1: i32) -> (i32, i32) {
    %c0_i32 = arith.constant 0 : i32
    %c0_i32_0 = arith.constant 0 : i32
    return %arg0, %c0_i32 : i32, i32
  }
  func.func @transform_1(%arg0: i32, %arg1: i32) -> (i32, i32) {
    %c0_i32 = arith.constant 0 : i32
    %c0_i32_0 = arith.constant 0 : i32
    return %c0_i32, %arg1 : i32, i32
  }
  func.func @transform_2(%arg0: i32, %arg1: i32) -> (i32, i32) {
    %c0_i32 = arith.constant 0 : i32
    %c0_i32_0 = arith.constant 0 : i32
    return %c0_i32, %arg1 : i32, i32
  }
  func.func @transform_3(%arg0: i32, %arg1: i32) -> (i32, i32) {
    %c0_i32 = arith.constant 0 : i32
    return %arg0, %arg1 : i32, i32
  }
}

module attributes {stable_mosaic.version = 11 : i64} {
  func.func @_conv3x3_kernel(%arg0: i32, %arg1: i32, %arg2: memref<1x110x128xbf16, #tpu.memory_space<vmem>>, %arg3: memref<3x384x128xbf16, #tpu.memory_space<vmem>>, %arg4: memref<1x128xf32, #tpu.memory_space<vmem>>, %arg5: memref<1x80x128xbf16, #tpu.memory_space<vmem>>) attributes {dimension_semantics = [#tpu.dimension_semantics<parallel>, #tpu.dimension_semantics<parallel>], iteration_bounds = array<i64: 2, 1>, scalar_prefetch = 0 : i64, scratch_operands = 0 : i64, tpu.core_type = #tpu.core_type<tc>, window_params = [{transform_indices = @transform_0, window_bounds = array<i64: 1, 110, 128>}, {transform_indices = @transform_1, window_bounds = array<i64: 3, 384, 128>}, {transform_indices = @transform_2, window_bounds = array<i64: 1, 128>}, {transform_indices = @transform_3, window_bounds = array<i64: 1, 80, 128>}]} {
    %c0 = arith.constant 0 : index
    %c0_0 = arith.constant 0 : index
    %c0_1 = arith.constant 0 : index
    %0 = vector.load %arg2[%c0, %c0_0, %c0_1] : memref<1x110x128xbf16, #tpu.memory_space<vmem>>, vector<1x80x128xbf16>
    %1 = vector.shape_cast %0 : vector<1x80x128xbf16> to vector<80x128xbf16>
    %c0_2 = arith.constant 0 : index
    %c1 = arith.constant 1 : index
    %c0_3 = arith.constant 0 : index
    %2 = vector.load %arg2[%c0_2, %c1, %c0_3] : memref<1x110x128xbf16, #tpu.memory_space<vmem>>, vector<1x80x128xbf16>
    %3 = vector.shape_cast %2 : vector<1x80x128xbf16> to vector<80x128xbf16>
    %c0_4 = arith.constant 0 : index
    %c2 = arith.constant 2 : index
    %c0_5 = arith.constant 0 : index
    %4 = vector.load %arg2[%c0_4, %c2, %c0_5] : memref<1x110x128xbf16, #tpu.memory_space<vmem>>, vector<1x80x128xbf16>
    %5 = vector.shape_cast %4 : vector<1x80x128xbf16> to vector<80x128xbf16>
    %6 = tpu.concatenate %1, %3, %5 in 1 : vector<80x128xbf16>, vector<80x128xbf16>, vector<80x128xbf16> -> vector<80x384xbf16>
    %c0_6 = arith.constant 0 : index
    %c0_7 = arith.constant 0 : index
    %c0_8 = arith.constant 0 : index
    %7 = vector.load %arg3[%c0_6, %c0_7, %c0_8] : memref<3x384x128xbf16, #tpu.memory_space<vmem>>, vector<1x384x128xbf16>
    %8 = vector.shape_cast %7 : vector<1x384x128xbf16> to vector<384x128xbf16>
    %cst = arith.constant dense<0.000000e+00> : vector<80x128xf32>
    %9 = tpu.matmul %6, %8, %cst {dimension_numbers = #tpu.dot_dimension_numbers<[1], [0], [0], [1], [0, 0, 1, 1], [], []>} : vector<80x384xbf16>, vector<384x128xbf16>, vector<80x128xf32> -> vector<80x128xf32>
    %c0_9 = arith.constant 0 : index
    %c10 = arith.constant 10 : index
    %c0_10 = arith.constant 0 : index
    %10 = vector.load %arg2[%c0_9, %c10, %c0_10] : memref<1x110x128xbf16, #tpu.memory_space<vmem>>, vector<1x80x128xbf16>
    %11 = vector.shape_cast %10 : vector<1x80x128xbf16> to vector<80x128xbf16>
    %c0_11 = arith.constant 0 : index
    %c11 = arith.constant 11 : index
    %c0_12 = arith.constant 0 : index
    %12 = vector.load %arg2[%c0_11, %c11, %c0_12] : memref<1x110x128xbf16, #tpu.memory_space<vmem>>, vector<1x80x128xbf16>
    %13 = vector.shape_cast %12 : vector<1x80x128xbf16> to vector<80x128xbf16>
    %c0_13 = arith.constant 0 : index
    %c12 = arith.constant 12 : index
    %c0_14 = arith.constant 0 : index
    %14 = vector.load %arg2[%c0_13, %c12, %c0_14] : memref<1x110x128xbf16, #tpu.memory_space<vmem>>, vector<1x80x128xbf16>
    %15 = vector.shape_cast %14 : vector<1x80x128xbf16> to vector<80x128xbf16>
    %16 = tpu.concatenate %11, %13, %15 in 1 : vector<80x128xbf16>, vector<80x128xbf16>, vector<80x128xbf16> -> vector<80x384xbf16>
    %c1_15 = arith.constant 1 : index
    %c0_16 = arith.constant 0 : index
    %c0_17 = arith.constant 0 : index
    %17 = vector.load %arg3[%c1_15, %c0_16, %c0_17] : memref<3x384x128xbf16, #tpu.memory_space<vmem>>, vector<1x384x128xbf16>
    %18 = vector.shape_cast %17 : vector<1x384x128xbf16> to vector<384x128xbf16>
    %cst_18 = arith.constant dense<0.000000e+00> : vector<80x128xf32>
    %19 = tpu.matmul %16, %18, %cst_18 {dimension_numbers = #tpu.dot_dimension_numbers<[1], [0], [0], [1], [0, 0, 1, 1], [], []>} : vector<80x384xbf16>, vector<384x128xbf16>, vector<80x128xf32> -> vector<80x128xf32>
    %20 = arith.addf %9, %19 : vector<80x128xf32>
    %c0_19 = arith.constant 0 : index
    %c20 = arith.constant 20 : index
    %c0_20 = arith.constant 0 : index
    %21 = vector.load %arg2[%c0_19, %c20, %c0_20] : memref<1x110x128xbf16, #tpu.memory_space<vmem>>, vector<1x80x128xbf16>
    %22 = vector.shape_cast %21 : vector<1x80x128xbf16> to vector<80x128xbf16>
    %c0_21 = arith.constant 0 : index
    %c21 = arith.constant 21 : index
    %c0_22 = arith.constant 0 : index
    %23 = vector.load %arg2[%c0_21, %c21, %c0_22] : memref<1x110x128xbf16, #tpu.memory_space<vmem>>, vector<1x80x128xbf16>
    %24 = vector.shape_cast %23 : vector<1x80x128xbf16> to vector<80x128xbf16>
    %c0_23 = arith.constant 0 : index
    %c22 = arith.constant 22 : index
    %c0_24 = arith.constant 0 : index
    %25 = vector.load %arg2[%c0_23, %c22, %c0_24] : memref<1x110x128xbf16, #tpu.memory_space<vmem>>, vector<1x80x128xbf16>
    %26 = vector.shape_cast %25 : vector<1x80x128xbf16> to vector<80x128xbf16>
    %27 = tpu.concatenate %22, %24, %26 in 1 : vector<80x128xbf16>, vector<80x128xbf16>, vector<80x128xbf16> -> vector<80x384xbf16>
    %c2_25 = arith.constant 2 : index
    %c0_26 = arith.constant 0 : index
    %c0_27 = arith.constant 0 : index
    %28 = vector.load %arg3[%c2_25, %c0_26, %c0_27] : memref<3x384x128xbf16, #tpu.memory_space<vmem>>, vector<1x384x128xbf16>
    %29 = vector.shape_cast %28 : vector<1x384x128xbf16> to vector<384x128xbf16>
    %cst_28 = arith.constant dense<0.000000e+00> : vector<80x128xf32>
    %30 = tpu.matmul %27, %29, %cst_28 {dimension_numbers = #tpu.dot_dimension_numbers<[1], [0], [0], [1], [0, 0, 1, 1], [], []>} : vector<80x384xbf16>, vector<384x128xbf16>, vector<80x128xf32> -> vector<80x128xf32>
    %31 = arith.addf %20, %30 : vector<80x128xf32>
    %c0_29 = arith.constant 0 : index
    %c0_30 = arith.constant 0 : index
    %32 = vector.load %arg4[%c0_29, %c0_30] : memref<1x128xf32, #tpu.memory_space<vmem>>, vector<1x128xf32>
    %33 = vector.broadcast %32 : vector<1x128xf32> to vector<80x128xf32>
    %34 = arith.addf %31, %33 : vector<80x128xf32>
    %cst_31 = arith.constant 0.000000e+00 : f32
    %35 = vector.broadcast %cst_31 : f32 to vector<80x128xf32>
    %36 = arith.maximumf %34, %35 : vector<80x128xf32>
    %37 = arith.truncf %36 : vector<80x128xf32> to vector<80x128xbf16>
    %c0_32 = arith.constant 0 : index
    %c0_33 = arith.constant 0 : index
    %c0_34 = arith.constant 0 : index
    %38 = vector.load %arg5[%c0_32, %c0_33, %c0_34] : memref<1x80x128xbf16, #tpu.memory_space<vmem>>, vector<1x80x128xbf16>
    %39 = vector.shape_cast %38 : vector<1x80x128xbf16> to vector<80x128xbf16>
    %40 = vector.shape_cast %37 : vector<80x128xbf16> to vector<1x80x128xbf16>
    tpu.vector_store %arg5[%c0_32, %c0_33, %c0_34], %40 {strides = array<i32>} : memref<1x80x128xbf16, #tpu.memory_space<vmem>>, vector<1x80x128xbf16>,
    return
  }
  func.func @transform_0(%arg0: i32, %arg1: i32) -> (i32, i32, i32) {
    %c0_i32 = arith.constant 0 : i32
    %c0_i32_0 = arith.constant 0 : i32
    %c0_i32_1 = arith.constant 0 : i32
    return %arg0, %c0_i32, %c0_i32_0 : i32, i32, i32
  }
  func.func @transform_1(%arg0: i32, %arg1: i32) -> (i32, i32, i32) {
    %c0_i32 = arith.constant 0 : i32
    %c0_i32_0 = arith.constant 0 : i32
    %c0_i32_1 = arith.constant 0 : i32
    return %c0_i32, %c0_i32_0, %arg1 : i32, i32, i32
  }
  func.func @transform_2(%arg0: i32, %arg1: i32) -> (i32, i32) {
    %c0_i32 = arith.constant 0 : i32
    %c0_i32_0 = arith.constant 0 : i32
    return %c0_i32, %arg1 : i32, i32
  }
  func.func @transform_3(%arg0: i32, %arg1: i32) -> (i32, i32, i32) {
    %c0_i32 = arith.constant 0 : i32
    %c0_i32_0 = arith.constant 0 : i32
    return %arg0, %c0_i32, %arg1 : i32, i32, i32
  }
}

module attributes {stable_mosaic.version = 11 : i64} {
  func.func @_tail_ds_kernel(%arg0: i32, %arg1: i32, %arg2: memref<32x128xbf16, #tpu.memory_space<vmem>>, %arg3: memref<128x128xbf16, #tpu.memory_space<vmem>>, %arg4: memref<1x128xf32, #tpu.memory_space<vmem>>, %arg5: memref<32x128xbf16, #tpu.memory_space<vmem>>, %arg6: memref<128x128xbf16, #tpu.memory_space<vmem>>, %arg7: memref<1x128xf32, #tpu.memory_space<vmem>>, %arg8: memref<32x128xbf16, #tpu.memory_space<vmem>>) attributes {dimension_semantics = [#tpu.dimension_semantics<parallel>, #tpu.dimension_semantics<parallel>], iteration_bounds = array<i64: 1, 1>, scalar_prefetch = 0 : i64, scratch_operands = 0 : i64, tpu.core_type = #tpu.core_type<tc>, window_params = [{transform_indices = @transform_0, window_bounds = array<i64: 32, 128>}, {transform_indices = @transform_1, window_bounds = array<i64: 128, 128>}, {transform_indices = @transform_2, window_bounds = array<i64: 1, 128>}, {transform_indices = @transform_3, window_bounds = array<i64: 32, 128>}, {transform_indices = @transform_4, window_bounds = array<i64: 128, 128>}, {transform_indices = @transform_5, window_bounds = array<i64: 1, 128>}, {transform_indices = @transform_6, window_bounds = array<i64: 32, 128>}]} {
    %c0 = arith.constant 0 : index
    %c0_0 = arith.constant 0 : index
    %0 = vector.load %arg2[%c0, %c0_0] : memref<32x128xbf16, #tpu.memory_space<vmem>>, vector<32x128xbf16>
    %c0_1 = arith.constant 0 : index
    %c0_2 = arith.constant 0 : index
    %1 = vector.load %arg3[%c0_1, %c0_2] : memref<128x128xbf16, #tpu.memory_space<vmem>>, vector<128x128xbf16>
    %cst = arith.constant dense<0.000000e+00> : vector<32x128xf32>
    %2 = tpu.matmul %0, %1, %cst {dimension_numbers = #tpu.dot_dimension_numbers<[1], [0], [0], [1], [0, 0, 1, 1], [], []>} : vector<32x128xbf16>, vector<128x128xbf16>, vector<32x128xf32> -> vector<32x128xf32>
    %c0_3 = arith.constant 0 : index
    %c0_4 = arith.constant 0 : index
    %3 = vector.load %arg4[%c0_3, %c0_4] : memref<1x128xf32, #tpu.memory_space<vmem>>, vector<1x128xf32>
    %4 = vector.broadcast %3 : vector<1x128xf32> to vector<32x128xf32>
    %5 = arith.addf %2, %4 : vector<32x128xf32>
    %c0_5 = arith.constant 0 : index
    %c0_6 = arith.constant 0 : index
    %6 = vector.load %arg5[%c0_5, %c0_6] : memref<32x128xbf16, #tpu.memory_space<vmem>>, vector<32x128xbf16>
    %c0_7 = arith.constant 0 : index
    %c0_8 = arith.constant 0 : index
    %7 = vector.load %arg6[%c0_7, %c0_8] : memref<128x128xbf16, #tpu.memory_space<vmem>>, vector<128x128xbf16>
    %cst_9 = arith.constant dense<0.000000e+00> : vector<32x128xf32>
    %8 = tpu.matmul %6, %7, %cst_9 {dimension_numbers = #tpu.dot_dimension_numbers<[1], [0], [0], [1], [0, 0, 1, 1], [], []>} : vector<32x128xbf16>, vector<128x128xbf16>, vector<32x128xf32> -> vector<32x128xf32>
    %c0_10 = arith.constant 0 : index
    %c0_11 = arith.constant 0 : index
    %9 = vector.load %arg7[%c0_10, %c0_11] : memref<1x128xf32, #tpu.memory_space<vmem>>, vector<1x128xf32>
    %10 = vector.broadcast %9 : vector<1x128xf32> to vector<32x128xf32>
    %11 = arith.addf %8, %10 : vector<32x128xf32>
    %12 = arith.addf %5, %11 : vector<32x128xf32>
    %cst_12 = arith.constant 0.000000e+00 : f32
    %13 = vector.broadcast %cst_12 : f32 to vector<32x128xf32>
    %14 = arith.maximumf %12, %13 : vector<32x128xf32>
    %15 = arith.truncf %14 : vector<32x128xf32> to vector<32x128xbf16>
    %c0_13 = arith.constant 0 : index
    %c0_14 = arith.constant 0 : index
    %16 = vector.load %arg8[%c0_13, %c0_14] : memref<32x128xbf16, #tpu.memory_space<vmem>>, vector<32x128xbf16>
    tpu.vector_store %arg8[%c0_13, %c0_14], %15 {strides = array<i32>} : memref<32x128xbf16, #tpu.memory_space<vmem>>, vector<32x128xbf16>,
    return
  }
  func.func @transform_0(%arg0: i32, %arg1: i32) -> (i32, i32) {
    %c0_i32 = arith.constant 0 : i32
    %c0_i32_0 = arith.constant 0 : i32
    return %arg0, %c0_i32 : i32, i32
  }
  func.func @transform_1(%arg0: i32, %arg1: i32) -> (i32, i32) {
    %c0_i32 = arith.constant 0 : i32
    %c0_i32_0 = arith.constant 0 : i32
    return %c0_i32, %arg1 : i32, i32
  }
  func.func @transform_2(%arg0: i32, %arg1: i32) -> (i32, i32) {
    %c0_i32 = arith.constant 0 : i32
    %c0_i32_0 = arith.constant 0 : i32
    return %c0_i32, %arg1 : i32, i32
  }
  func.func @transform_3(%arg0: i32, %arg1: i32) -> (i32, i32) {
    %c0_i32 = arith.constant 0 : i32
    %c0_i32_0 = arith.constant 0 : i32
    return %arg0, %c0_i32 : i32, i32
  }
  func.func @transform_4(%arg0: i32, %arg1: i32) -> (i32, i32) {
    %c0_i32 = arith.constant 0 : i32
    %c0_i32_0 = arith.constant 0 : i32
    return %c0_i32, %arg1 : i32, i32
  }
  func.func @transform_5(%arg0: i32, %arg1: i32) -> (i32, i32) {
    %c0_i32 = arith.constant 0 : i32
    %c0_i32_0 = arith.constant 0 : i32
    return %c0_i32, %arg1 : i32, i32
  }
  func.func @transform_6(%arg0: i32, %arg1: i32) -> (i32, i32) {
    %c0_i32 = arith.constant 0 : i32
    return %arg0, %arg1 : i32, i32
  }
}

module attributes {stable_mosaic.version = 11 : i64} {
  func.func @_mm_bias_act_kernel(%arg0: i32, %arg1: i32, %arg2: memref<32x128xbf16, #tpu.memory_space<vmem>>, %arg3: memref<128x128xbf16, #tpu.memory_space<vmem>>, %arg4: memref<1x128xf32, #tpu.memory_space<vmem>>, %arg5: memref<32x128xbf16, #tpu.memory_space<vmem>>) attributes {dimension_semantics = [#tpu.dimension_semantics<parallel>, #tpu.dimension_semantics<parallel>], iteration_bounds = array<i64: 1, 1>, scalar_prefetch = 0 : i64, scratch_operands = 0 : i64, tpu.core_type = #tpu.core_type<tc>, window_params = [{transform_indices = @transform_0, window_bounds = array<i64: 32, 128>}, {transform_indices = @transform_1, window_bounds = array<i64: 128, 128>}, {transform_indices = @transform_2, window_bounds = array<i64: 1, 128>}, {transform_indices = @transform_3, window_bounds = array<i64: 32, 128>}]} {
    %c0 = arith.constant 0 : index
    %c0_0 = arith.constant 0 : index
    %0 = vector.load %arg2[%c0, %c0_0] : memref<32x128xbf16, #tpu.memory_space<vmem>>, vector<32x128xbf16>
    %c0_1 = arith.constant 0 : index
    %c0_2 = arith.constant 0 : index
    %1 = vector.load %arg3[%c0_1, %c0_2] : memref<128x128xbf16, #tpu.memory_space<vmem>>, vector<128x128xbf16>
    %cst = arith.constant dense<0.000000e+00> : vector<32x128xf32>
    %2 = tpu.matmul %0, %1, %cst {dimension_numbers = #tpu.dot_dimension_numbers<[1], [0], [0], [1], [0, 0, 1, 1], [], []>} : vector<32x128xbf16>, vector<128x128xbf16>, vector<32x128xf32> -> vector<32x128xf32>
    %c0_3 = arith.constant 0 : index
    %c0_4 = arith.constant 0 : index
    %3 = vector.load %arg4[%c0_3, %c0_4] : memref<1x128xf32, #tpu.memory_space<vmem>>, vector<1x128xf32>
    %4 = vector.broadcast %3 : vector<1x128xf32> to vector<32x128xf32>
    %5 = arith.addf %2, %4 : vector<32x128xf32>
    %cst_5 = arith.constant 0.000000e+00 : f32
    %6 = vector.broadcast %cst_5 : f32 to vector<32x128xf32>
    %7 = arith.maximumf %5, %6 : vector<32x128xf32>
    %8 = arith.truncf %7 : vector<32x128xf32> to vector<32x128xbf16>
    %c0_6 = arith.constant 0 : index
    %c0_7 = arith.constant 0 : index
    %9 = vector.load %arg5[%c0_6, %c0_7] : memref<32x128xbf16, #tpu.memory_space<vmem>>, vector<32x128xbf16>
    tpu.vector_store %arg5[%c0_6, %c0_7], %8 {strides = array<i32>} : memref<32x128xbf16, #tpu.memory_space<vmem>>, vector<32x128xbf16>,
    return
  }
  func.func @transform_0(%arg0: i32, %arg1: i32) -> (i32, i32) {
    %c0_i32 = arith.constant 0 : i32
    %c0_i32_0 = arith.constant 0 : i32
    return %arg0, %c0_i32 : i32, i32
  }
  func.func @transform_1(%arg0: i32, %arg1: i32) -> (i32, i32) {
    %c0_i32 = arith.constant 0 : i32
    %c0_i32_0 = arith.constant 0 : i32
    return %c0_i32, %arg1 : i32, i32
  }
  func.func @transform_2(%arg0: i32, %arg1: i32) -> (i32, i32) {
    %c0_i32 = arith.constant 0 : i32
    %c0_i32_0 = arith.constant 0 : i32
    return %c0_i32, %arg1 : i32, i32
  }
  func.func @transform_3(%arg0: i32, %arg1: i32) -> (i32, i32) {
    %c0_i32 = arith.constant 0 : i32
    return %arg0, %arg1 : i32, i32
  }
}

module attributes {stable_mosaic.version = 11 : i64} {
  func.func @_conv3x3_kernel(%arg0: i32, %arg1: i32, %arg2: memref<1x42x128xbf16, #tpu.memory_space<vmem>>, %arg3: memref<3x384x128xbf16, #tpu.memory_space<vmem>>, %arg4: memref<1x128xf32, #tpu.memory_space<vmem>>, %arg5: memref<1x24x128xbf16, #tpu.memory_space<vmem>>) attributes {dimension_semantics = [#tpu.dimension_semantics<parallel>, #tpu.dimension_semantics<parallel>], iteration_bounds = array<i64: 2, 1>, scalar_prefetch = 0 : i64, scratch_operands = 0 : i64, tpu.core_type = #tpu.core_type<tc>, window_params = [{transform_indices = @transform_0, window_bounds = array<i64: 1, 42, 128>}, {transform_indices = @transform_1, window_bounds = array<i64: 3, 384, 128>}, {transform_indices = @transform_2, window_bounds = array<i64: 1, 128>}, {transform_indices = @transform_3, window_bounds = array<i64: 1, 24, 128>}]} {
    %c0 = arith.constant 0 : index
    %c0_0 = arith.constant 0 : index
    %c0_1 = arith.constant 0 : index
    %0 = vector.load %arg2[%c0, %c0_0, %c0_1] : memref<1x42x128xbf16, #tpu.memory_space<vmem>>, vector<1x24x128xbf16>
    %1 = vector.shape_cast %0 : vector<1x24x128xbf16> to vector<24x128xbf16>
    %c0_2 = arith.constant 0 : index
    %c1 = arith.constant 1 : index
    %c0_3 = arith.constant 0 : index
    %2 = vector.load %arg2[%c0_2, %c1, %c0_3] : memref<1x42x128xbf16, #tpu.memory_space<vmem>>, vector<1x24x128xbf16>
    %3 = vector.shape_cast %2 : vector<1x24x128xbf16> to vector<24x128xbf16>
    %c0_4 = arith.constant 0 : index
    %c2 = arith.constant 2 : index
    %c0_5 = arith.constant 0 : index
    %4 = vector.load %arg2[%c0_4, %c2, %c0_5] : memref<1x42x128xbf16, #tpu.memory_space<vmem>>, vector<1x24x128xbf16>
    %5 = vector.shape_cast %4 : vector<1x24x128xbf16> to vector<24x128xbf16>
    %6 = tpu.concatenate %1, %3, %5 in 1 : vector<24x128xbf16>, vector<24x128xbf16>, vector<24x128xbf16> -> vector<24x384xbf16>
    %c0_6 = arith.constant 0 : index
    %c0_7 = arith.constant 0 : index
    %c0_8 = arith.constant 0 : index
    %7 = vector.load %arg3[%c0_6, %c0_7, %c0_8] : memref<3x384x128xbf16, #tpu.memory_space<vmem>>, vector<1x384x128xbf16>
    %8 = vector.shape_cast %7 : vector<1x384x128xbf16> to vector<384x128xbf16>
    %cst = arith.constant dense<0.000000e+00> : vector<24x128xf32>
    %9 = tpu.matmul %6, %8, %cst {dimension_numbers = #tpu.dot_dimension_numbers<[1], [0], [0], [1], [0, 0, 1, 1], [], []>} : vector<24x384xbf16>, vector<384x128xbf16>, vector<24x128xf32> -> vector<24x128xf32>
    %c0_9 = arith.constant 0 : index
    %c6 = arith.constant 6 : index
    %c0_10 = arith.constant 0 : index
    %10 = vector.load %arg2[%c0_9, %c6, %c0_10] : memref<1x42x128xbf16, #tpu.memory_space<vmem>>, vector<1x24x128xbf16>
    %11 = vector.shape_cast %10 : vector<1x24x128xbf16> to vector<24x128xbf16>
    %c0_11 = arith.constant 0 : index
    %c7 = arith.constant 7 : index
    %c0_12 = arith.constant 0 : index
    %12 = vector.load %arg2[%c0_11, %c7, %c0_12] : memref<1x42x128xbf16, #tpu.memory_space<vmem>>, vector<1x24x128xbf16>
    %13 = vector.shape_cast %12 : vector<1x24x128xbf16> to vector<24x128xbf16>
    %c0_13 = arith.constant 0 : index
    %c8 = arith.constant 8 : index
    %c0_14 = arith.constant 0 : index
    %14 = vector.load %arg2[%c0_13, %c8, %c0_14] : memref<1x42x128xbf16, #tpu.memory_space<vmem>>, vector<1x24x128xbf16>
    %15 = vector.shape_cast %14 : vector<1x24x128xbf16> to vector<24x128xbf16>
    %16 = tpu.concatenate %11, %13, %15 in 1 : vector<24x128xbf16>, vector<24x128xbf16>, vector<24x128xbf16> -> vector<24x384xbf16>
    %c1_15 = arith.constant 1 : index
    %c0_16 = arith.constant 0 : index
    %c0_17 = arith.constant 0 : index
    %17 = vector.load %arg3[%c1_15, %c0_16, %c0_17] : memref<3x384x128xbf16, #tpu.memory_space<vmem>>, vector<1x384x128xbf16>
    %18 = vector.shape_cast %17 : vector<1x384x128xbf16> to vector<384x128xbf16>
    %cst_18 = arith.constant dense<0.000000e+00> : vector<24x128xf32>
    %19 = tpu.matmul %16, %18, %cst_18 {dimension_numbers = #tpu.dot_dimension_numbers<[1], [0], [0], [1], [0, 0, 1, 1], [], []>} : vector<24x384xbf16>, vector<384x128xbf16>, vector<24x128xf32> -> vector<24x128xf32>
    %20 = arith.addf %9, %19 : vector<24x128xf32>
    %c0_19 = arith.constant 0 : index
    %c12 = arith.constant 12 : index
    %c0_20 = arith.constant 0 : index
    %21 = vector.load %arg2[%c0_19, %c12, %c0_20] : memref<1x42x128xbf16, #tpu.memory_space<vmem>>, vector<1x24x128xbf16>
    %22 = vector.shape_cast %21 : vector<1x24x128xbf16> to vector<24x128xbf16>
    %c0_21 = arith.constant 0 : index
    %c13 = arith.constant 13 : index
    %c0_22 = arith.constant 0 : index
    %23 = vector.load %arg2[%c0_21, %c13, %c0_22] : memref<1x42x128xbf16, #tpu.memory_space<vmem>>, vector<1x24x128xbf16>
    %24 = vector.shape_cast %23 : vector<1x24x128xbf16> to vector<24x128xbf16>
    %c0_23 = arith.constant 0 : index
    %c14 = arith.constant 14 : index
    %c0_24 = arith.constant 0 : index
    %25 = vector.load %arg2[%c0_23, %c14, %c0_24] : memref<1x42x128xbf16, #tpu.memory_space<vmem>>, vector<1x24x128xbf16>
    %26 = vector.shape_cast %25 : vector<1x24x128xbf16> to vector<24x128xbf16>
    %27 = tpu.concatenate %22, %24, %26 in 1 : vector<24x128xbf16>, vector<24x128xbf16>, vector<24x128xbf16> -> vector<24x384xbf16>
    %c2_25 = arith.constant 2 : index
    %c0_26 = arith.constant 0 : index
    %c0_27 = arith.constant 0 : index
    %28 = vector.load %arg3[%c2_25, %c0_26, %c0_27] : memref<3x384x128xbf16, #tpu.memory_space<vmem>>, vector<1x384x128xbf16>
    %29 = vector.shape_cast %28 : vector<1x384x128xbf16> to vector<384x128xbf16>
    %cst_28 = arith.constant dense<0.000000e+00> : vector<24x128xf32>
    %30 = tpu.matmul %27, %29, %cst_28 {dimension_numbers = #tpu.dot_dimension_numbers<[1], [0], [0], [1], [0, 0, 1, 1], [], []>} : vector<24x384xbf16>, vector<384x128xbf16>, vector<24x128xf32> -> vector<24x128xf32>
    %31 = arith.addf %20, %30 : vector<24x128xf32>
    %c0_29 = arith.constant 0 : index
    %c0_30 = arith.constant 0 : index
    %32 = vector.load %arg4[%c0_29, %c0_30] : memref<1x128xf32, #tpu.memory_space<vmem>>, vector<1x128xf32>
    %33 = vector.broadcast %32 : vector<1x128xf32> to vector<24x128xf32>
    %34 = arith.addf %31, %33 : vector<24x128xf32>
    %cst_31 = arith.constant 0.000000e+00 : f32
    %35 = vector.broadcast %cst_31 : f32 to vector<24x128xf32>
    %36 = arith.maximumf %34, %35 : vector<24x128xf32>
    %37 = arith.truncf %36 : vector<24x128xf32> to vector<24x128xbf16>
    %c0_32 = arith.constant 0 : index
    %c0_33 = arith.constant 0 : index
    %c0_34 = arith.constant 0 : index
    %38 = vector.load %arg5[%c0_32, %c0_33, %c0_34] : memref<1x24x128xbf16, #tpu.memory_space<vmem>>, vector<1x24x128xbf16>
    %39 = vector.shape_cast %38 : vector<1x24x128xbf16> to vector<24x128xbf16>
    %40 = vector.shape_cast %37 : vector<24x128xbf16> to vector<1x24x128xbf16>
    tpu.vector_store %arg5[%c0_32, %c0_33, %c0_34], %40 {strides = array<i32>} : memref<1x24x128xbf16, #tpu.memory_space<vmem>>, vector<1x24x128xbf16>,
    return
  }
  func.func @transform_0(%arg0: i32, %arg1: i32) -> (i32, i32, i32) {
    %c0_i32 = arith.constant 0 : i32
    %c0_i32_0 = arith.constant 0 : i32
    %c0_i32_1 = arith.constant 0 : i32
    return %arg0, %c0_i32, %c0_i32_0 : i32, i32, i32
  }
  func.func @transform_1(%arg0: i32, %arg1: i32) -> (i32, i32, i32) {
    %c0_i32 = arith.constant 0 : i32
    %c0_i32_0 = arith.constant 0 : i32
    %c0_i32_1 = arith.constant 0 : i32
    return %c0_i32, %c0_i32_0, %arg1 : i32, i32, i32
  }
  func.func @transform_2(%arg0: i32, %arg1: i32) -> (i32, i32) {
    %c0_i32 = arith.constant 0 : i32
    %c0_i32_0 = arith.constant 0 : i32
    return %c0_i32, %arg1 : i32, i32
  }
  func.func @transform_3(%arg0: i32, %arg1: i32) -> (i32, i32, i32) {
    %c0_i32 = arith.constant 0 : i32
    %c0_i32_0 = arith.constant 0 : i32
    return %arg0, %c0_i32, %arg1 : i32, i32, i32
  }
}

module attributes {stable_mosaic.version = 11 : i64} {
  func.func @_tail_ds_kernel(%arg0: i32, %arg1: i32, %arg2: memref<8x128xbf16, #tpu.memory_space<vmem>>, %arg3: memref<128x256xbf16, #tpu.memory_space<vmem>>, %arg4: memref<1x256xf32, #tpu.memory_space<vmem>>, %arg5: memref<8x128xbf16, #tpu.memory_space<vmem>>, %arg6: memref<128x256xbf16, #tpu.memory_space<vmem>>, %arg7: memref<1x256xf32, #tpu.memory_space<vmem>>, %arg8: memref<8x256xbf16, #tpu.memory_space<vmem>>) attributes {dimension_semantics = [#tpu.dimension_semantics<parallel>, #tpu.dimension_semantics<parallel>], iteration_bounds = array<i64: 1, 1>, scalar_prefetch = 0 : i64, scratch_operands = 0 : i64, tpu.core_type = #tpu.core_type<tc>, window_params = [{transform_indices = @transform_0, window_bounds = array<i64: 8, 128>}, {transform_indices = @transform_1, window_bounds = array<i64: 128, 256>}, {transform_indices = @transform_2, window_bounds = array<i64: 1, 256>}, {transform_indices = @transform_3, window_bounds = array<i64: 8, 128>}, {transform_indices = @transform_4, window_bounds = array<i64: 128, 256>}, {transform_indices = @transform_5, window_bounds = array<i64: 1, 256>}, {transform_indices = @transform_6, window_bounds = array<i64: 8, 256>}]} {
    %c0 = arith.constant 0 : index
    %c0_0 = arith.constant 0 : index
    %0 = vector.load %arg2[%c0, %c0_0] : memref<8x128xbf16, #tpu.memory_space<vmem>>, vector<8x128xbf16>
    %c0_1 = arith.constant 0 : index
    %c0_2 = arith.constant 0 : index
    %1 = vector.load %arg3[%c0_1, %c0_2] : memref<128x256xbf16, #tpu.memory_space<vmem>>, vector<128x256xbf16>
    %cst = arith.constant dense<0.000000e+00> : vector<8x256xf32>
    %2 = tpu.matmul %0, %1, %cst {dimension_numbers = #tpu.dot_dimension_numbers<[1], [0], [0], [1], [0, 0, 1, 1], [], []>} : vector<8x128xbf16>, vector<128x256xbf16>, vector<8x256xf32> -> vector<8x256xf32>
    %c0_3 = arith.constant 0 : index
    %c0_4 = arith.constant 0 : index
    %3 = vector.load %arg4[%c0_3, %c0_4] : memref<1x256xf32, #tpu.memory_space<vmem>>, vector<1x256xf32>
    %4 = vector.broadcast %3 : vector<1x256xf32> to vector<8x256xf32>
    %5 = arith.addf %2, %4 : vector<8x256xf32>
    %c0_5 = arith.constant 0 : index
    %c0_6 = arith.constant 0 : index
    %6 = vector.load %arg5[%c0_5, %c0_6] : memref<8x128xbf16, #tpu.memory_space<vmem>>, vector<8x128xbf16>
    %c0_7 = arith.constant 0 : index
    %c0_8 = arith.constant 0 : index
    %7 = vector.load %arg6[%c0_7, %c0_8] : memref<128x256xbf16, #tpu.memory_space<vmem>>, vector<128x256xbf16>
    %cst_9 = arith.constant dense<0.000000e+00> : vector<8x256xf32>
    %8 = tpu.matmul %6, %7, %cst_9 {dimension_numbers = #tpu.dot_dimension_numbers<[1], [0], [0], [1], [0, 0, 1, 1], [], []>} : vector<8x128xbf16>, vector<128x256xbf16>, vector<8x256xf32> -> vector<8x256xf32>
    %c0_10 = arith.constant 0 : index
    %c0_11 = arith.constant 0 : index
    %9 = vector.load %arg7[%c0_10, %c0_11] : memref<1x256xf32, #tpu.memory_space<vmem>>, vector<1x256xf32>
    %10 = vector.broadcast %9 : vector<1x256xf32> to vector<8x256xf32>
    %11 = arith.addf %8, %10 : vector<8x256xf32>
    %12 = arith.addf %5, %11 : vector<8x256xf32>
    %cst_12 = arith.constant 0.000000e+00 : f32
    %13 = vector.broadcast %cst_12 : f32 to vector<8x256xf32>
    %14 = arith.maximumf %12, %13 : vector<8x256xf32>
    %15 = arith.truncf %14 : vector<8x256xf32> to vector<8x256xbf16>
    %c0_13 = arith.constant 0 : index
    %c0_14 = arith.constant 0 : index
    %16 = vector.load %arg8[%c0_13, %c0_14] : memref<8x256xbf16, #tpu.memory_space<vmem>>, vector<8x256xbf16>
    tpu.vector_store %arg8[%c0_13, %c0_14], %15 {strides = array<i32>} : memref<8x256xbf16, #tpu.memory_space<vmem>>, vector<8x256xbf16>,
    return
  }
  func.func @transform_0(%arg0: i32, %arg1: i32) -> (i32, i32) {
    %c0_i32 = arith.constant 0 : i32
    %c0_i32_0 = arith.constant 0 : i32
    return %arg0, %c0_i32 : i32, i32
  }
  func.func @transform_1(%arg0: i32, %arg1: i32) -> (i32, i32) {
    %c0_i32 = arith.constant 0 : i32
    %c0_i32_0 = arith.constant 0 : i32
    return %c0_i32, %arg1 : i32, i32
  }
  func.func @transform_2(%arg0: i32, %arg1: i32) -> (i32, i32) {
    %c0_i32 = arith.constant 0 : i32
    %c0_i32_0 = arith.constant 0 : i32
    return %c0_i32, %arg1 : i32, i32
  }
  func.func @transform_3(%arg0: i32, %arg1: i32) -> (i32, i32) {
    %c0_i32 = arith.constant 0 : i32
    %c0_i32_0 = arith.constant 0 : i32
    return %arg0, %c0_i32 : i32, i32
  }
  func.func @transform_4(%arg0: i32, %arg1: i32) -> (i32, i32) {
    %c0_i32 = arith.constant 0 : i32
    %c0_i32_0 = arith.constant 0 : i32
    return %c0_i32, %arg1 : i32, i32
  }
  func.func @transform_5(%arg0: i32, %arg1: i32) -> (i32, i32) {
    %c0_i32 = arith.constant 0 : i32
    %c0_i32_0 = arith.constant 0 : i32
    return %c0_i32, %arg1 : i32, i32
  }
  func.func @transform_6(%arg0: i32, %arg1: i32) -> (i32, i32) {
    %c0_i32 = arith.constant 0 : i32
    return %arg0, %arg1 : i32, i32
  }
}

</mosaic_0001>

<llo_original>
// kernel: _lambda_.15
$region0: #{_lambda_.15}
  #allocation0 [shape = 'u32[]', space=smem, size = 0x4, offset = 0x4, fixed_abs, tag = 'smem constant byte address 0x4 - core index']
  #allocation1 [shape = 'u32[144,128]{1,0:T(1,128)}', space=vmem, size = 0x12000, scoped, tag = 'internal scratch']
  %s0 = inlined_call_operand.vmem [shape: bf16[512,128], index: 0, kind: input, shape index: {}]
  %s1 = inlined_call_operand.vmem [shape: bf16[128,128], index: 1, kind: input, shape index: {}]
  %s2 = inlined_call_operand.vmem [shape: f32[1,128], index: 2, kind: input, shape index: {}]
  %s3 = inlined_call_operand.vmem [shape: bf16[512,128], index: 3, kind: output, shape index: {}]
  %s4 = sld [smem:[#allocation0]]
  $region22: #{_lambda_.15} parent=0
    _
  %s6 = ssub.s32 1, %s4
  %s7 = scalar_select 0, %s6, %s4
  // Predicated region
  $region2: #{_lambda_.15} parent=0 // pred_check
    _
  $region3: #{_lambda_.15} parent=0 // pred_check_branch
    %9 = sbr.rel (0) target = $region5
  $region4: #{_lambda_.15} parent=0 // pred_region
    _
  $region5: #{_lambda_.15} parent=0 // pred_fallthru
    _
  // Predicated region
  $region6: #{_lambda_.15} parent=0 // pred_check
    _
  $region7: #{_lambda_.15} parent=0 // pred_check_branch
    %11 = sbr.rel (0) target = $region9
  $region8: #{_lambda_.15} parent=0 // pred_region
    _
  $region9: #{_lambda_.15} parent=0 // pred_fallthru
    _
  // Predicated region
  $region10: #{_lambda_.15} parent=0 // pred_check
    _
  $region11: #{_lambda_.15} parent=0 // pred_check_branch
    %13 = sbr.rel (0) target = $region13
  $region12: #{_lambda_.15} parent=0 // pred_region
    _
  $region13: #{_lambda_.15} parent=0 // pred_fallthru
    _
  %v15 = vld [vmem:[%s0] sm:$0xf]
  %v16 = vld [vmem:[%s0 + $0x4] sm:$0xf]
  %v17 = vld [vmem:[%s0 + $0x8] sm:$0xf]
  %v18 = vld [vmem:[%s0 + $0xc] sm:$0xf]
  %v19 = vld [vmem:[%s0 + $0x10] sm:$0xf]
  %v20 = vld [vmem:[%s0 + $0x14] sm:$0xf]
  %v21 = vld [vmem:[%s0 + $0x18] sm:$0xf]
  %v22 = vld [vmem:[%s0 + $0x1c] sm:$0xf]
  %v23 = vld [vmem:[%s0 + $0x20] sm:$0xf]
  %v24 = vld [vmem:[%s0 + $0x24] sm:$0xf]
  %v25 = vld [vmem:[%s0 + $0x28] sm:$0xf]
  %v26 = vld [vmem:[%s0 + $0x2c] sm:$0xf]
  %v27 = vld [vmem:[%s0 + $0x30] sm:$0xf]
  %v28 = vld [vmem:[%s0 + $0x34] sm:$0xf]
  %v29 = vld [vmem:[%s0 + $0x38] sm:$0xf]
  %v30 = vld [vmem:[%s0 + $0x3c] sm:$0xf]
  %v31 = vld [vmem:[%s0 + $0x40] sm:$0xf]
  %v32 = vld [vmem:[%s0 + $0x44] sm:$0xf]
  %v33 = vld [vmem:[%s0 + $0x48] sm:$0xf]
  %v34 = vld [vmem:[%s0 + $0x4c] sm:$0xf]
  %v35 = vld [vmem:[%s0 + $0x50] sm:$0xf]
  %v36 = vld [vmem:[%s0 + $0x54] sm:$0xf]
  %v37 = vld [vmem:[%s0 + $0x58] sm:$0xf]
  %v38 = vld [vmem:[%s0 + $0x5c] sm:$0xf]
  %v39 = vld [vmem:[%s0 + $0x60] sm:$0xf]
  %v40 = vld [vmem:[%s0 + $0x64] sm:$0xf]
  %v41 = vld [vmem:[%s0 + $0x68] sm:$0xf]
  %v42 = vld [vmem:[%s0 + $0x6c] sm:$0xf]
  %v43 = vld [vmem:[%s0 + $0x70] sm:$0xf]
  %v44 = vld [vmem:[%s0 + $0x74] sm:$0xf]
  %v45 = vld [vmem:[%s0 + $0x78] sm:$0xf]
  %v46 = vld [vmem:[%s0 + $0x7c] sm:$0xf]
  %v47 = vld [vmem:[%s0 + $0x80] sm:$0xf]
  %v48 = vld [vmem:[%s0 + $0x84] sm:$0xf]
  %v49 = vld [vmem:[%s0 + $0x88] sm:$0xf]
  %v50 = vld [vmem:[%s0 + $0x8c] sm:$0xf]
  %v51 = vld [vmem:[%s0 + $0x90] sm:$0xf]
  %v52 = vld [vmem:[%s0 + $0x94] sm:$0xf]
  %v53 = vld [vmem:[%s0 + $0x98] sm:$0xf]
  %v54 = vld [vmem:[%s0 + $0x9c] sm:$0xf]
  %v55 = vld [vmem:[%s0 + $0xa0] sm:$0xf]
  %v56 = vld [vmem:[%s0 + $0xa4] sm:$0xf]
  %v57 = vld [vmem:[%s0 + $0xa8] sm:$0xf]
  %v58 = vld [vmem:[%s0 + $0xac] sm:$0xf]
  %v59 = vld [vmem:[%s0 + $0xb0] sm:$0xf]
  %v60 = vld [vmem:[%s0 + $0xb4] sm:$0xf]
  %v61 = vld [vmem:[%s0 + $0xb8] sm:$0xf]
  %v62 = vld [vmem:[%s0 + $0xbc] sm:$0xf]
  %v63 = vld [vmem:[%s0 + $0xc0] sm:$0xf]
  %v64 = vld [vmem:[%s0 + $0xc4] sm:$0xf]
  %v65 = vld [vmem:[%s0 + $0xc8] sm:$0xf]
  %v66 = vld [vmem:[%s0 + $0xcc] sm:$0xf]
  %v67 = vld [vmem:[%s0 + $0xd0] sm:$0xf]
  %v68 = vld [vmem:[%s0 + $0xd4] sm:$0xf]
  %v69 = vld [vmem:[%s0 + $0xd8] sm:$0xf]
  %v70 = vld [vmem:[%s0 + $0xdc] sm:$0xf]
  %v71 = vld [vmem:[%s0 + $0xe0] sm:$0xf]
  %v72 = vld [vmem:[%s0 + $0xe4] sm:$0xf]
  %v73 = vld [vmem:[%s0 + $0xe8] sm:$0xf]
  %v74 = vld [vmem:[%s0 + $0xec] sm:$0xf]
  %v75 = vld [vmem:[%s0 + $0xf0] sm:$0xf]
  %v76 = vld [vmem:[%s0 + $0xf4] sm:$0xf]
  %v77 = vld [vmem:[%s0 + $0xf8] sm:$0xf]
  %v78 = vld [vmem:[%s0 + $0xfc] sm:$0xf]
  %v79 = vld [vmem:[%s1] sm:$0xf]
  %v80 = vld [vmem:[%s1 + $0x4] sm:$0xf]
  %v81 = vld [vmem:[%s1 + $0x8] sm:$0xf]
  %v82 = vld [vmem:[%s1 + $0xc] sm:$0xf]
  %v83 = vld [vmem:[%s1 + $0x10] sm:$0xf]
  %v84 = vld [vmem:[%s1 + $0x14] sm:$0xf]
  %v85 = vld [vmem:[%s1 + $0x18] sm:$0xf]
  %v86 = vld [vmem:[%s1 + $0x1c] sm:$0xf]
  %v87 = vld [vmem:[%s1 + $0x20] sm:$0xf]
  %v88 = vld [vmem:[%s1 + $0x24] sm:$0xf]
  %v89 = vld [vmem:[%s1 + $0x28] sm:$0xf]
  %v90 = vld [vmem:[%s1 + $0x2c] sm:$0xf]
  %v91 = vld [vmem:[%s1 + $0x30] sm:$0xf]
  %v92 = vld [vmem:[%s1 + $0x34] sm:$0xf]
  %v93 = vld [vmem:[%s1 + $0x38] sm:$0xf]
  %v94 = vld [vmem:[%s1 + $0x3c] sm:$0xf]
  %v95 = vld [vmem:[%s2] sm:$0x1]
  %v97 = vlaneseq
  %v98 = vshrl.u32 %v97, 7
  %v99 = vsub.s32 0, %v98
  %v100 = vrot.slane %v95, %v99
  %v166 = vunpack.c.l.b16 %v15
  %v167 = vunpack.c.l.b16 %v16
  %v168 = vunpack.c.l.b16 %v17
  %v169 = vunpack.c.l.b16 %v18
  %v170 = vunpack.c.l.b16 %v19
  %v171 = vunpack.c.l.b16 %v20
  %v172 = vunpack.c.l.b16 %v21
  %v173 = vunpack.c.l.b16 %v22
  %v174 = vunpack.c.l.b16 %v23
  %v175 = vunpack.c.l.b16 %v24
  %v176 = vunpack.c.l.b16 %v25
  %v177 = vunpack.c.l.b16 %v26
  %v178 = vunpack.c.l.b16 %v27
  %v179 = vunpack.c.l.b16 %v28
  %v180 = vunpack.c.l.b16 %v29
  %v181 = vunpack.c.l.b16 %v30
  %v182 = vunpack.c.l.b16 %v31
  %v183 = vunpack.c.l.b16 %v32
  %v184 = vunpack.c.l.b16 %v33
  %v185 = vunpack.c.l.b16 %v34
  %v186 = vunpack.c.l.b16 %v35
  %v187 = vunpack.c.l.b16 %v36
  %v188 = vunpack.c.l.b16 %v37
  %v189 = vunpack.c.l.b16 %v38
  %v190 = vunpack.c.l.b16 %v39
  %v191 = vunpack.c.l.b16 %v40
  %v192 = vunpack.c.l.b16 %v41
  %v193 = vunpack.c.l.b16 %v42
  %v194 = vunpack.c.l.b16 %v43
  %v195 = vunpack.c.l.b16 %v44
  %v196 = vunpack.c.l.b16 %v45
  %v197 = vunpack.c.l.b16 %v46
  %v198 = vunpack.c.l.b16 %v47
  %v199 = vunpack.c.l.b16 %v48
  %v200 = vunpack.c.l.b16 %v49
  %v201 = vunpack.c.l.b16 %v50
  %v202 = vunpack.c.l.b16 %v51
  %v203 = vunpack.c.l.b16 %v52
  %v204 = vunpack.c.l.b16 %v53
  %v205 = vunpack.c.l.b16 %v54
  %v206 = vunpack.c.l.b16 %v55
  %v207 = vunpack.c.l.b16 %v56
  %v208 = vunpack.c.l.b16 %v57
  %v209 = vunpack.c.l.b16 %v58
  %v210 = vunpack.c.l.b16 %v59
  %v211 = vunpack.c.l.b16 %v60
  %v212 = vunpack.c.l.b16 %v61
  %v213 = vunpack.c.l.b16 %v62
  %v214 = vunpack.c.l.b16 %v63
  %v215 = vunpack.c.l.b16 %v64
  %v216 = vunpack.c.l.b16 %v65
  %v217 = vunpack.c.l.b16 %v66
  %v218 = vunpack.c.l.b16 %v67
  %v219 = vunpack.c.l.b16 %v68
  %v220 = vunpack.c.l.b16 %v69
  %v221 = vunpack.c.l.b16 %v70
  %v222 = vunpack.c.l.b16 %v71
  %v223 = vunpack.c.l.b16 %v72
  %v224 = vunpack.c.l.b16 %v73
  %v225 = vunpack.c.l.b16 %v74
  %v226 = vunpack.c.l.b16 %v75
  %v227 = vunpack.c.l.b16 %v76
  %v228 = vunpack.c.l.b16 %v77
  %v229 = vunpack.c.l.b16 %v78
  %v230 = vpack.c.b16 %v167, %v166
  %v231 = vpack.c.b16 %v169, %v168
  %v232 = vpack.c.b16 %v171, %v170
  %v233 = vpack.c.b16 %v173, %v172
  %v234 = vpack.c.b16 %v175, %v174
  %v235 = vpack.c.b16 %v177, %v176
  %v236 = vpack.c.b16 %v179, %v178
  %v237 = vpack.c.b16 %v181, %v180
  %v238 = vpack.c.b16 %v183, %v182
  %v239 = vpack.c.b16 %v185, %v184
  %v240 = vpack.c.b16 %v187, %v186
  %v241 = vpack.c.b16 %v189, %v188
  %v242 = vpack.c.b16 %v191, %v190
  %v243 = vpack.c.b16 %v193, %v192
  %v244 = vpack.c.b16 %v195, %v194
  %v245 = vpack.c.b16 %v197, %v196
  %v246 = vpack.c.b16 %v199, %v198
  %v247 = vpack.c.b16 %v201, %v200
  %v248 = vpack.c.b16 %v203, %v202
  %v249 = vpack.c.b16 %v205, %v204
  %v250 = vpack.c.b16 %v207, %v206
  %v251 = vpack.c.b16 %v209, %v208
  %v252 = vpack.c.b16 %v211, %v210
  %v253 = vpack.c.b16 %v213, %v212
  %v254 = vpack.c.b16 %v215, %v214
  %v255 = vpack.c.b16 %v217, %v216
  %v256 = vpack.c.b16 %v219, %v218
  %v257 = vpack.c.b16 %v221, %v220
  %v258 = vpack.c.b16 %v223, %v222
  %v259 = vpack.c.b16 %v225, %v224
  %v260 = vpack.c.b16 %v227, %v226
  %v261 = vpack.c.b16 %v229, %v228
  %v310 = vunpack.c.l.b16 %v79
  %v311 = vunpack.c.l.b16 %v80
  %v312 = vunpack.c.l.b16 %v81
  %v313 = vunpack.c.l.b16 %v82
  %v314 = vunpack.c.l.b16 %v83
  %v315 = vunpack.c.l.b16 %v84
  %v316 = vunpack.c.l.b16 %v85
  %v317 = vunpack.c.l.b16 %v86
  %v318 = vunpack.c.l.b16 %v87
  %v319 = vunpack.c.l.b16 %v88
  %v320 = vunpack.c.l.b16 %v89
  %v321 = vunpack.c.l.b16 %v90
  %v322 = vunpack.c.l.b16 %v91
  %v323 = vunpack.c.l.b16 %v92
  %v324 = vunpack.c.l.b16 %v93
  %v325 = vunpack.c.l.b16 %v94
  %v326 = vpack.c.b16 %v311, %v310
  %v327 = vpack.c.b16 %v313, %v312
  %v328 = vpack.c.b16 %v315, %v314
  %v329 = vpack.c.b16 %v317, %v316
  %v330 = vpack.c.b16 %v319, %v318
  %v331 = vpack.c.b16 %v321, %v320
  %v332 = vpack.c.b16 %v323, %v322
  %v333 = vpack.c.b16 %v325, %v324
  %342 = vmatprep.subr.bf16.mxu0 0
  %343 = vmatpush1.bf16.msra.mxu0 %v333
  %344 = vmatprep.subr.bf16.mxu0 0
  %345 = vmatpush1.bf16.msra.mxu0 %v332
  %346 = vmatprep.subr.bf16.mxu0 0
  %347 = vmatpush1.bf16.msra.mxu0 %v331
  %348 = vmatprep.subr.bf16.mxu0 0
  %349 = vmatpush1.bf16.msra.mxu0 %v330
  %350 = vmatprep.subr.bf16.mxu0 0
  %351 = vmatpush1.bf16.msra.mxu0 %v329
  %352 = vmatprep.subr.bf16.mxu0 0
  %353 = vmatpush1.bf16.msra.mxu0 %v328
  %354 = vmatprep.subr.bf16.mxu0 0
  %355 = vmatpush1.bf16.msra.mxu0 %v327
  %356 = vmatprep.subr.bf16.mxu0 0
  %357 = vmatpush1.bf16.msra.mxu0 %v326
  %358 = vmatprep.subr.bf16.mxu0 0
  %359 = vmatpush2.bf16.msra.mxu0 0
  %360 = vmatprep.subr.bf16.mxu0 0
  %361 = vmatpush2.bf16.msra.mxu0 0
  %362 = vmatprep.subr.bf16.mxu0 0
  %363 = vmatpush2.bf16.msra.mxu0 0
  %364 = vmatprep.subr.bf16.mxu0 0
  %365 = vmatpush2.bf16.msra.mxu0 0
  %366 = vmatprep.subr.bf16.mxu0 0
  %367 = vmatpush2.bf16.msra.mxu0 0
  %368 = vmatprep.subr.bf16.mxu0 0
  %369 = vmatpush2.bf16.msra.mxu0 0
  %370 = vmatprep.subr.bf16.mxu0 0
  %371 = vmatpush2.bf16.msra.mxu0 0
  %372 = vmatprep.subr.bf16.mxu0 0
  %373 = vmatpush2.bf16.msra.mxu0 0
  %374 = vmatprep.mubr.bf16.mxu0 0
  %375 = vmatmul.mubr.bf16.gmra.mxu0 %v230
  %v376 = vpop.f32.mrf.mxu0
  %v377 = vadd.f32 %v100, %v376
  %v378 = vpop.f32.mrf.mxu0
  %v379 = vpop.f32.mrf.mxu0
  %v380 = vadd.f32 %v100, %v379
  %v381 = vpop.f32.mrf.mxu0
  %382 = vmatprep.mubr.bf16.mxu0 0
  %383 = vmatmul.mubr.bf16.gmra.mxu0 %v231
  %v384 = vpop.f32.mrf.mxu0
  %v385 = vadd.f32 %v100, %v384
  %v386 = vpop.f32.mrf.mxu0
  %v387 = vpop.f32.mrf.mxu0
  %v388 = vadd.f32 %v100, %v387
  %v389 = vpop.f32.mrf.mxu0
  %390 = vmatprep.mubr.bf16.mxu0 0
  %391 = vmatmul.mubr.bf16.gmra.mxu0 %v232
  %v392 = vpop.f32.mrf.mxu0
  %v393 = vadd.f32 %v100, %v392
  %v394 = vpop.f32.mrf.mxu0
  %v395 = vpop.f32.mrf.mxu0
  %v396 = vadd.f32 %v100, %v395
  %v397 = vpop.f32.mrf.mxu0
  %398 = vmatprep.mubr.bf16.mxu0 0
  %399 = vmatmul.mubr.bf16.gmra.mxu0 %v233
  %v400 = vpop.f32.mrf.mxu0
  %v401 = vadd.f32 %v100, %v400
  %v402 = vpop.f32.mrf.mxu0
  %v403 = vpop.f32.mrf.mxu0
  %v404 = vadd.f32 %v100, %v403
  %v405 = vpop.f32.mrf.mxu0
  %406 = vmatprep.mubr.bf16.mxu0 0
  %407 = vmatmul.mubr.bf16.gmra.mxu0 %v234
  %v408 = vpop.f32.mrf.mxu0
  %v409 = vadd.f32 %v100, %v408
  %v410 = vpop.f32.mrf.mxu0
  %v411 = vpop.f32.mrf.mxu0
  %v412 = vadd.f32 %v100, %v411
  %v413 = vpop.f32.mrf.mxu0
  %414 = vmatprep.mubr.bf16.mxu0 0
  %415 = vmatmul.mubr.bf16.gmra.mxu0 %v235
  %v416 = vpop.f32.mrf.mxu0
  %v417 = vadd.f32 %v100, %v416
  %v418 = vpop.f32.mrf.mxu0
  %v419 = vpop.f32.mrf.mxu0
  %v420 = vadd.f32 %v100, %v419
  %v421 = vpop.f32.mrf.mxu0
  %422 = vmatprep.mubr.bf16.mxu0 0
  %423 = vmatmul.mubr.bf16.gmra.mxu0 %v236
  %v424 = vpop.f32.mrf.mxu0
  %v425 = vadd.f32 %v100, %v424
  %v426 = vpop.f32.mrf.mxu0
  %v427 = vpop.f32.mrf.mxu0
  %v428 = vadd.f32 %v100, %v427
  %v429 = vpop.f32.mrf.mxu0
  %430 = vmatprep.mubr.bf16.mxu0 0
  %431 = vmatmul.mubr.bf16.gmra.mxu0 %v237
  %v432 = vpop.f32.mrf.mxu0
  %v433 = vadd.f32 %v100, %v432
  %v434 = vpop.f32.mrf.mxu0
  %v435 = vpop.f32.mrf.mxu0
  %v436 = vadd.f32 %v100, %v435
  %v437 = vpop.f32.mrf.mxu0
  %438 = vmatprep.mubr.bf16.mxu0 0
  %439 = vmatmul.mubr.bf16.gmra.mxu0 %v238
  %v440 = vpop.f32.mrf.mxu0
  %v441 = vadd.f32 %v100, %v440
  %v442 = vpop.f32.mrf.mxu0
  %v443 = vpop.f32.mrf.mxu0
  %v444 = vadd.f32 %v100, %v443
  %v445 = vpop.f32.mrf.mxu0
  %446 = vmatprep.mubr.bf16.mxu0 0
  %447 = vmatmul.mubr.bf16.gmra.mxu0 %v239
  %v448 = vpop.f32.mrf.mxu0
  %v449 = vadd.f32 %v100, %v448
  %v450 = vpop.f32.mrf.mxu0
  %v451 = vpop.f32.mrf.mxu0
  %v452 = vadd.f32 %v100, %v451
  %v453 = vpop.f32.mrf.mxu0
  %454 = vmatprep.mubr.bf16.mxu0 0
  %455 = vmatmul.mubr.bf16.gmra.mxu0 %v240
  %v456 = vpop.f32.mrf.mxu0
  %v457 = vadd.f32 %v100, %v456
  %v458 = vpop.f32.mrf.mxu0
  %v459 = vpop.f32.mrf.mxu0
  %v460 = vadd.f32 %v100, %v459
  %v461 = vpop.f32.mrf.mxu0
  %462 = vmatprep.mubr.bf16.mxu0 0
  %463 = vmatmul.mubr.bf16.gmra.mxu0 %v241
  %v464 = vpop.f32.mrf.mxu0
  %v465 = vadd.f32 %v100, %v464
  %v466 = vpop.f32.mrf.mxu0
  %v467 = vpop.f32.mrf.mxu0
  %v468 = vadd.f32 %v100, %v467
  %v469 = vpop.f32.mrf.mxu0
  %470 = vmatprep.mubr.bf16.mxu0 0
  %471 = vmatmul.mubr.bf16.gmra.mxu0 %v242
  %v472 = vpop.f32.mrf.mxu0
  %v473 = vadd.f32 %v100, %v472
  %v474 = vpop.f32.mrf.mxu0
  %v475 = vpop.f32.mrf.mxu0
  %v476 = vadd.f32 %v100, %v475
  %v477 = vpop.f32.mrf.mxu0
  %478 = vmatprep.mubr.bf16.mxu0 0
  %479 = vmatmul.mubr.bf16.gmra.mxu0 %v243
  %v480 = vpop.f32.mrf.mxu0
  %v481 = vadd.f32 %v100, %v480
  %v482 = vpop.f32.mrf.mxu0
  %v483 = vpop.f32.mrf.mxu0
  %v484 = vadd.f32 %v100, %v483
  %v485 = vpop.f32.mrf.mxu0
  %486 = vmatprep.mubr.bf16.mxu0 0
  %487 = vmatmul.mubr.bf16.gmra.mxu0 %v244
  %v488 = vpop.f32.mrf.mxu0
  %v489 = vadd.f32 %v100, %v488
  %v490 = vpop.f32.mrf.mxu0
  %v491 = vpop.f32.mrf.mxu0
  %v492 = vadd.f32 %v100, %v491
  %v493 = vpop.f32.mrf.mxu0
  %494 = vmatprep.mubr.bf16.mxu0 0
  %495 = vmatmul.mubr.bf16.gmra.mxu0 %v245
  %v496 = vpop.f32.mrf.mxu0
  %v497 = vadd.f32 %v100, %v496
  %v498 = vpop.f32.mrf.mxu0
  %v499 = vpop.f32.mrf.mxu0
  %v500 = vadd.f32 %v100, %v499
  %v501 = vpop.f32.mrf.mxu0
  %502 = vmatprep.mubr.bf16.mxu0 0
  %503 = vmatmul.mubr.bf16.gmra.mxu0 %v246
  %v504 = vpop.f32.mrf.mxu0
  %v505 = vadd.f32 %v100, %v504
  %v506 = vpop.f32.mrf.mxu0
  %v507 = vpop.f32.mrf.mxu0
  %v508 = vadd.f32 %v100, %v507
  %v509 = vpop.f32.mrf.mxu0
  %510 = vmatprep.mubr.bf16.mxu0 0
  %511 = vmatmul.mubr.bf16.gmra.mxu0 %v247
  %v512 = vpop.f32.mrf.mxu0
  %v513 = vadd.f32 %v100, %v512
  %v514 = vpop.f32.mrf.mxu0
  %v515 = vpop.f32.mrf.mxu0
  %v516 = vadd.f32 %v100, %v515
  %v517 = vpop.f32.mrf.mxu0
  %518 = vmatprep.mubr.bf16.mxu0 0
  %519 = vmatmul.mubr.bf16.gmra.mxu0 %v248
  %v520 = vpop.f32.mrf.mxu0
  %v521 = vadd.f32 %v100, %v520
  %v522 = vpop.f32.mrf.mxu0
  %v523 = vpop.f32.mrf.mxu0
  %v524 = vadd.f32 %v100, %v523
  %v525 = vpop.f32.mrf.mxu0
  %526 = vmatprep.mubr.bf16.mxu0 0
  %527 = vmatmul.mubr.bf16.gmra.mxu0 %v249
  %v528 = vpop.f32.mrf.mxu0
  %v529 = vadd.f32 %v100, %v528
  %v530 = vpop.f32.mrf.mxu0
  %v531 = vpop.f32.mrf.mxu0
  %v532 = vadd.f32 %v100, %v531
  %v533 = vpop.f32.mrf.mxu0
  %534 = vmatprep.mubr.bf16.mxu0 0
  %535 = vmatmul.mubr.bf16.gmra.mxu0 %v250
  %v536 = vpop.f32.mrf.mxu0
  %v537 = vadd.f32 %v100, %v536
  %v538 = vpop.f32.mrf.mxu0
  %v539 = vpop.f32.mrf.mxu0
  %v540 = vadd.f32 %v100, %v539
  %v541 = vpop.f32.mrf.mxu0
  %542 = vmatprep.mubr.bf16.mxu0 0
  %543 = vmatmul.mubr.bf16.gmra.mxu0 %v251
  %v544 = vpop.f32.mrf.mxu0
  %v545 = vadd.f32 %v100, %v544
  %v546 = vpop.f32.mrf.mxu0
  %v547 = vpop.f32.mrf.mxu0
  %v548 = vadd.f32 %v100, %v547
  %v549 = vpop.f32.mrf.mxu0
  %550 = vmatprep.mubr.bf16.mxu0 0
  %551 = vmatmul.mubr.bf16.gmra.mxu0 %v252
  %v552 = vpop.f32.mrf.mxu0
  %v553 = vadd.f32 %v100, %v552
  %v554 = vpop.f32.mrf.mxu0
  %v555 = vpop.f32.mrf.mxu0
  %v556 = vadd.f32 %v100, %v555
  %v557 = vpop.f32.mrf.mxu0
  %558 = vmatprep.mubr.bf16.mxu0 0
  %559 = vmatmul.mubr.bf16.gmra.mxu0 %v253
  %v560 = vpop.f32.mrf.mxu0
  %v561 = vadd.f32 %v100, %v560
  %v562 = vpop.f32.mrf.mxu0
  %v563 = vpop.f32.mrf.mxu0
  %v564 = vadd.f32 %v100, %v563
  %v565 = vpop.f32.mrf.mxu0
  %566 = vmatprep.mubr.bf16.mxu0 0
  %567 = vmatmul.mubr.bf16.gmra.mxu0 %v254
  %v568 = vpop.f32.mrf.mxu0
  %v569 = vadd.f32 %v100, %v568
  %v570 = vpop.f32.mrf.mxu0
  %v571 = vpop.f32.mrf.mxu0
  %v572 = vadd.f32 %v100, %v571
  %v573 = vpop.f32.mrf.mxu0
  %574 = vmatprep.mubr.bf16.mxu0 0
  %575 = vmatmul.mubr.bf16.gmra.mxu0 %v255
  %v576 = vpop.f32.mrf.mxu0
  %v577 = vadd.f32 %v100, %v576
  %v578 = vpop.f32.mrf.mxu0
  %v579 = vpop.f32.mrf.mxu0
  %v580 = vadd.f32 %v100, %v579
  %v581 = vpop.f32.mrf.mxu0
  %582 = vmatprep.mubr.bf16.mxu0 0
  %583 = vmatmul.mubr.bf16.gmra.mxu0 %v256
  %v584 = vpop.f32.mrf.mxu0
  %v585 = vadd.f32 %v100, %v584
  %v586 = vpop.f32.mrf.mxu0
  %v587 = vpop.f32.mrf.mxu0
  %v588 = vadd.f32 %v100, %v587
  %v589 = vpop.f32.mrf.mxu0
  %590 = vmatprep.mubr.bf16.mxu0 0
  %591 = vmatmul.mubr.bf16.gmra.mxu0 %v257
  %v592 = vpop.f32.mrf.mxu0
  %v593 = vadd.f32 %v100, %v592
  %v594 = vpop.f32.mrf.mxu0
  %v595 = vpop.f32.mrf.mxu0
  %v596 = vadd.f32 %v100, %v595
  %v597 = vpop.f32.mrf.mxu0
  %598 = vmatprep.mubr.bf16.mxu0 0
  %599 = vmatmul.mubr.bf16.gmra.mxu0 %v258
  %v600 = vpop.f32.mrf.mxu0
  %v601 = vadd.f32 %v100, %v600
  %v602 = vpop.f32.mrf.mxu0
  %v603 = vpop.f32.mrf.mxu0
  %v604 = vadd.f32 %v100, %v603
  %v605 = vpop.f32.mrf.mxu0
  %606 = vmatprep.mubr.bf16.mxu0 0
  %607 = vmatmul.mubr.bf16.gmra.mxu0 %v259
  %v608 = vpop.f32.mrf.mxu0
  %v609 = vadd.f32 %v100, %v608
  %v610 = vpop.f32.mrf.mxu0
  %v611 = vpop.f32.mrf.mxu0
  %v612 = vadd.f32 %v100, %v611
  %v613 = vpop.f32.mrf.mxu0
  %614 = vmatprep.mubr.bf16.mxu0 0
  %615 = vmatmul.mubr.bf16.gmra.mxu0 %v260
  %v616 = vpop.f32.mrf.mxu0
  %v617 = vadd.f32 %v100, %v616
  %v618 = vpop.f32.mrf.mxu0
  %v619 = vpop.f32.mrf.mxu0
  %v620 = vadd.f32 %v100, %v619
  %v621 = vpop.f32.mrf.mxu0
  %622 = vmatprep.mubr.bf16.mxu0 0
  %623 = vmatmul.mubr.bf16.gmra.mxu0 %v261
  %v624 = vpop.f32.mrf.mxu0
  %v625 = vadd.f32 %v100, %v624
  %v626 = vpop.f32.mrf.mxu0
  %v627 = vpop.f32.mrf.mxu0
  %v628 = vadd.f32 %v100, %v627
  %v629 = vpop.f32.mrf.mxu0
  %630 = vdwg.mxu0
  %v631 = vmax.f32 %v377, 0.0
  %v632 = vmax.f32 %v380, 0.0
  %v633 = vmax.f32 %v385, 0.0
  %v634 = vmax.f32 %v388, 0.0
  %v635 = vmax.f32 %v393, 0.0
  %v636 = vmax.f32 %v396, 0.0
  %v637 = vmax.f32 %v401, 0.0
  %v638 = vmax.f32 %v404, 0.0
  %v639 = vmax.f32 %v409, 0.0
  %v640 = vmax.f32 %v412, 0.0
  %v641 = vmax.f32 %v417, 0.0
  %v642 = vmax.f32 %v420, 0.0
  %v643 = vmax.f32 %v425, 0.0
  %v644 = vmax.f32 %v428, 0.0
  %v645 = vmax.f32 %v433, 0.0
  %v646 = vmax.f32 %v436, 0.0
  %v647 = vmax.f32 %v441, 0.0
  %v648 = vmax.f32 %v444, 0.0
  %v649 = vmax.f32 %v449, 0.0
  %v650 = vmax.f32 %v452, 0.0
  %v651 = vmax.f32 %v457, 0.0
  %v652 = vmax.f32 %v460, 0.0
  %v653 = vmax.f32 %v465, 0.0
  %v654 = vmax.f32 %v468, 0.0
  %v655 = vmax.f32 %v473, 0.0
  %v656 = vmax.f32 %v476, 0.0
  %v657 = vmax.f32 %v481, 0.0
  %v658 = vmax.f32 %v484, 0.0
  %v659 = vmax.f32 %v489, 0.0
  %v660 = vmax.f32 %v492, 0.0
  %v661 = vmax.f32 %v497, 0.0
  %v662 = vmax.f32 %v500, 0.0
  %v663 = vmax.f32 %v505, 0.0
  %v664 = vmax.f32 %v508, 0.0
  %v665 = vmax.f32 %v513, 0.0
  %v666 = vmax.f32 %v516, 0.0
  %v667 = vmax.f32 %v521, 0.0
  %v668 = vmax.f32 %v524, 0.0
  %v669 = vmax.f32 %v529, 0.0
  %v670 = vmax.f32 %v532, 0.0
  %v671 = vmax.f32 %v537, 0.0
  %v672 = vmax.f32 %v540, 0.0
  %v673 = vmax.f32 %v545, 0.0
  %v674 = vmax.f32 %v548, 0.0
  %v675 = vmax.f32 %v553, 0.0
  %v676 = vmax.f32 %v556, 0.0
  %v677 = vmax.f32 %v561, 0.0
  %v678 = vmax.f32 %v564, 0.0
  %v679 = vmax.f32 %v569, 0.0
  %v680 = vmax.f32 %v572, 0.0
  %v681 = vmax.f32 %v577, 0.0
  %v682 = vmax.f32 %v580, 0.0
  %v683 = vmax.f32 %v585, 0.0
  %v684 = vmax.f32 %v588, 0.0
  %v685 = vmax.f32 %v593, 0.0
  %v686 = vmax.f32 %v596, 0.0
  %v687 = vmax.f32 %v601, 0.0
  %v688 = vmax.f32 %v604, 0.0
  %v689 = vmax.f32 %v609, 0.0
  %v690 = vmax.f32 %v612, 0.0
  %v691 = vmax.f32 %v617, 0.0
  %v692 = vmax.f32 %v620, 0.0
  %v693 = vmax.f32 %v625, 0.0
  %v694 = vmax.f32 %v628, 0.0
  %v695 = vpack.c.bf16 %v632, %v631
  %v696 = vpack.c.bf16 %v634, %v633
  %v697 = vpack.c.bf16 %v636, %v635
  %v698 = vpack.c.bf16 %v638, %v637
  %v699 = vpack.c.bf16 %v640, %v639
  %v700 = vpack.c.bf16 %v642, %v641
  %v701 = vpack.c.bf16 %v644, %v643
  %v702 = vpack.c.bf16 %v646, %v645
  %v703 = vpack.c.bf16 %v648, %v647
  %v704 = vpack.c.bf16 %v650, %v649
  %v705 = vpack.c.bf16 %v652, %v651
  %v706 = vpack.c.bf16 %v654, %v653
  %v707 = vpack.c.bf16 %v656, %v655
  %v708 = vpack.c.bf16 %v658, %v657
  %v709 = vpack.c.bf16 %v660, %v659
  %v710 = vpack.c.bf16 %v662, %v661
  %v711 = vpack.c.bf16 %v664, %v663
  %v712 = vpack.c.bf16 %v666, %v665
  %v713 = vpack.c.bf16 %v668, %v667
  %v714 = vpack.c.bf16 %v670, %v669
  %v715 = vpack.c.bf16 %v672, %v671
  %v716 = vpack.c.bf16 %v674, %v673
  %v717 = vpack.c.bf16 %v676, %v675
  %v718 = vpack.c.bf16 %v678, %v677
  %v719 = vpack.c.bf16 %v680, %v679
  %v720 = vpack.c.bf16 %v682, %v681
  %v721 = vpack.c.bf16 %v684, %v683
  %v722 = vpack.c.bf16 %v686, %v685
  %v723 = vpack.c.bf16 %v688, %v687
  %v724 = vpack.c.bf16 %v690, %v689
  %v725 = vpack.c.bf16 %v692, %v691
  %v726 = vpack.c.bf16 %v694, %v693
  %v759 = vunpack.c.l.b16 %v695
  %v760 = vunpack.c.h.b16 %v695
  %v761 = vunpack.c.l.b16 %v696
  %v762 = vunpack.c.h.b16 %v696
  %v763 = vunpack.c.l.b16 %v697
  %v764 = vunpack.c.h.b16 %v697
  %v765 = vunpack.c.l.b16 %v698
  %v766 = vunpack.c.h.b16 %v698
  %v767 = vunpack.c.l.b16 %v699
  %v768 = vunpack.c.h.b16 %v699
  %v769 = vunpack.c.l.b16 %v700
  %v770 = vunpack.c.h.b16 %v700
  %v771 = vunpack.c.l.b16 %v701
  %v772 = vunpack.c.h.b16 %v701
  %v773 = vunpack.c.l.b16 %v702
  %v774 = vunpack.c.h.b16 %v702
  %v775 = vunpack.c.l.b16 %v703
  %v776 = vunpack.c.h.b16 %v703
  %v777 = vunpack.c.l.b16 %v704
  %v778 = vunpack.c.h.b16 %v704
  %v779 = vunpack.c.l.b16 %v705
  %v780 = vunpack.c.h.b16 %v705
  %v781 = vunpack.c.l.b16 %v706
  %v782 = vunpack.c.h.b16 %v706
  %v783 = vunpack.c.l.b16 %v707
  %v784 = vunpack.c.h.b16 %v707
  %v785 = vunpack.c.l.b16 %v708
  %v786 = vunpack.c.h.b16 %v708
  %v787 = vunpack.c.l.b16 %v709
  %v788 = vunpack.c.h.b16 %v709
  %v789 = vunpack.c.l.b16 %v710
  %v790 = vunpack.c.h.b16 %v710
  %v791 = vunpack.c.l.b16 %v711
  %v792 = vunpack.c.h.b16 %v711
  %v793 = vunpack.c.l.b16 %v712
  %v794 = vunpack.c.h.b16 %v712
  %v795 = vunpack.c.l.b16 %v713
  %v796 = vunpack.c.h.b16 %v713
  %v797 = vunpack.c.l.b16 %v714
  %v798 = vunpack.c.h.b16 %v714
  %v799 = vunpack.c.l.b16 %v715
  %v800 = vunpack.c.h.b16 %v715
  %v801 = vunpack.c.l.b16 %v716
  %v802 = vunpack.c.h.b16 %v716
  %v803 = vunpack.c.l.b16 %v717
  %v804 = vunpack.c.h.b16 %v717
  %v805 = vunpack.c.l.b16 %v718
  %v806 = vunpack.c.h.b16 %v718
  %v807 = vunpack.c.l.b16 %v719
  %v808 = vunpack.c.h.b16 %v719
  %v809 = vunpack.c.l.b16 %v720
  %v810 = vunpack.c.h.b16 %v720
  %v811 = vunpack.c.l.b16 %v721
  %v812 = vunpack.c.h.b16 %v721
  %v813 = vunpack.c.l.b16 %v722
  %v814 = vunpack.c.h.b16 %v722
  %v815 = vunpack.c.l.b16 %v723
  %v816 = vunpack.c.h.b16 %v723
  %v817 = vunpack.c.l.b16 %v724
  %v818 = vunpack.c.h.b16 %v724
  %v819 = vunpack.c.l.b16 %v725
  %v820 = vunpack.c.h.b16 %v725
  %v821 = vunpack.c.l.b16 %v726
  %v822 = vunpack.c.h.b16 %v726
  %v823 = vpack.c.b16 %v759, %v759
  %v824 = vpack.c.b16 %v760, %v760
  %v825 = vpack.c.b16 %v761, %v761
  %v826 = vpack.c.b16 %v762, %v762
  %v827 = vpack.c.b16 %v763, %v763
  %v828 = vpack.c.b16 %v764, %v764
  %v829 = vpack.c.b16 %v765, %v765
  %v830 = vpack.c.b16 %v766, %v766
  %v831 = vpack.c.b16 %v767, %v767
  %v832 = vpack.c.b16 %v768, %v768
  %v833 = vpack.c.b16 %v769, %v769
  %v834 = vpack.c.b16 %v770, %v770
  %v835 = vpack.c.b16 %v771, %v771
  %v836 = vpack.c.b16 %v772, %v772
  %v837 = vpack.c.b16 %v773, %v773
  %v838 = vpack.c.b16 %v774, %v774
  %v839 = vpack.c.b16 %v775, %v775
  %v840 = vpack.c.b16 %v776, %v776
  %v841 = vpack.c.b16 %v777, %v777
  %v842 = vpack.c.b16 %v778, %v778
  %v843 = vpack.c.b16 %v779, %v779
  %v844 = vpack.c.b16 %v780, %v780
  %v845 = vpack.c.b16 %v781, %v781
  %v846 = vpack.c.b16 %v782, %v782
  %v847 = vpack.c.b16 %v783, %v783
  %v848 = vpack.c.b16 %v784, %v784
  %v849 = vpack.c.b16 %v785, %v785
  %v850 = vpack.c.b16 %v786, %v786
  %v851 = vpack.c.b16 %v787, %v787
  %v852 = vpack.c.b16 %v788, %v788
  %v853 = vpack.c.b16 %v789, %v789
  %v854 = vpack.c.b16 %v790, %v790
  %v855 = vpack.c.b16 %v791, %v791
  %v856 = vpack.c.b16 %v792, %v792
  %v857 = vpack.c.b16 %v793, %v793
  %v858 = vpack.c.b16 %v794, %v794
  %v859 = vpack.c.b16 %v795, %v795
  %v860 = vpack.c.b16 %v796, %v796
  %v861 = vpack.c.b16 %v797, %v797
  %v862 = vpack.c.b16 %v798, %v798
  %v863 = vpack.c.b16 %v799, %v799
  %v864 = vpack.c.b16 %v800, %v800
  %v865 = vpack.c.b16 %v801, %v801
  %v866 = vpack.c.b16 %v802, %v802
  %v867 = vpack.c.b16 %v803, %v803
  %v868 = vpack.c.b16 %v804, %v804
  %v869 = vpack.c.b16 %v805, %v805
  %v870 = vpack.c.b16 %v806, %v806
  %v871 = vpack.c.b16 %v807, %v807
  %v872 = vpack.c.b16 %v808, %v808
  %v873 = vpack.c.b16 %v809, %v809
  %v874 = vpack.c.b16 %v810, %v810
  %v875 = vpack.c.b16 %v811, %v811
  %v876 = vpack.c.b16 %v812, %v812
  %v877 = vpack.c.b16 %v813, %v813
  %v878 = vpack.c.b16 %v814, %v814
  %v879 = vpack.c.b16 %v815, %v815
  %v880 = vpack.c.b16 %v816, %v816
  %v881 = vpack.c.b16 %v817, %v817
  %v882 = vpack.c.b16 %v818, %v818
  %v883 = vpack.c.b16 %v819, %v819
  %v884 = vpack.c.b16 %v820, %v820
  %v885 = vpack.c.b16 %v821, %v821
  %v886 = vpack.c.b16 %v822, %v822
  %951 = vst [vmem:[%s3] sm:$0xf] %v823
  %952 = vst [vmem:[%s3 + $0x4] sm:$0xf] %v824
  %953 = vst [vmem:[%s3 + $0x8] sm:$0xf] %v825
  %954 = vst [vmem:[%s3 + $0xc] sm:$0xf] %v826
  %955 = vst [vmem:[%s3 + $0x10] sm:$0xf] %v827
  %956 = vst [vmem:[%s3 + $0x14] sm:$0xf] %v828
  %957 = vst [vmem:[%s3 + $0x18] sm:$0xf] %v829
  %958 = vst [vmem:[%s3 + $0x1c] sm:$0xf] %v830
  %959 = vst [vmem:[%s3 + $0x20] sm:$0xf] %v831
  %960 = vst [vmem:[%s3 + $0x24] sm:$0xf] %v832
  %961 = vst [vmem:[%s3 + $0x28] sm:$0xf] %v833
  %962 = vst [vmem:[%s3 + $0x2c] sm:$0xf] %v834
  %963 = vst [vmem:[%s3 + $0x30] sm:$0xf] %v835
  %964 = vst [vmem:[%s3 + $0x34] sm:$0xf] %v836
  %965 = vst [vmem:[%s3 + $0x38] sm:$0xf] %v837
  %966 = vst [vmem:[%s3 + $0x3c] sm:$0xf] %v838
  %967 = vst [vmem:[%s3 + $0x40] sm:$0xf] %v839
  %968 = vst [vmem:[%s3 + $0x44] sm:$0xf] %v840
  %969 = vst [vmem:[%s3 + $0x48] sm:$0xf] %v841
  %970 = vst [vmem:[%s3 + $0x4c] sm:$0xf] %v842
  %971 = vst [vmem:[%s3 + $0x50] sm:$0xf] %v843
  %972 = vst [vmem:[%s3 + $0x54] sm:$0xf] %v844
  %973 = vst [vmem:[%s3 + $0x58] sm:$0xf] %v845
  %974 = vst [vmem:[%s3 + $0x5c] sm:$0xf] %v846
  %975 = vst [vmem:[%s3 + $0x60] sm:$0xf] %v847
  %976 = vst [vmem:[%s3 + $0x64] sm:$0xf] %v848
  %977 = vst [vmem:[%s3 + $0x68] sm:$0xf] %v849
  %978 = vst [vmem:[%s3 + $0x6c] sm:$0xf] %v850
  %979 = vst [vmem:[%s3 + $0x70] sm:$0xf] %v851
  %980 = vst [vmem:[%s3 + $0x74] sm:$0xf] %v852
  %981 = vst [vmem:[%s3 + $0x78] sm:$0xf] %v853
  %982 = vst [vmem:[%s3 + $0x7c] sm:$0xf] %v854
  %983 = vst [vmem:[%s3 + $0x80] sm:$0xf] %v855
  %984 = vst [vmem:[%s3 + $0x84] sm:$0xf] %v856
  %985 = vst [vmem:[%s3 + $0x88] sm:$0xf] %v857
  %986 = vst [vmem:[%s3 + $0x8c] sm:$0xf] %v858
  %987 = vst [vmem:[%s3 + $0x90] sm:$0xf] %v859
  %988 = vst [vmem:[%s3 + $0x94] sm:$0xf] %v860
  %989 = vst [vmem:[%s3 + $0x98] sm:$0xf] %v861
  %990 = vst [vmem:[%s3 + $0x9c] sm:$0xf] %v862
  %991 = vst [vmem:[%s3 + $0xa0] sm:$0xf] %v863
  %992 = vst [vmem:[%s3 + $0xa4] sm:$0xf] %v864
  %993 = vst [vmem:[%s3 + $0xa8] sm:$0xf] %v865
  %994 = vst [vmem:[%s3 + $0xac] sm:$0xf] %v866
  %995 = vst [vmem:[%s3 + $0xb0] sm:$0xf] %v867
  %996 = vst [vmem:[%s3 + $0xb4] sm:$0xf] %v868
  %997 = vst [vmem:[%s3 + $0xb8] sm:$0xf] %v869
  %998 = vst [vmem:[%s3 + $0xbc] sm:$0xf] %v870
  %999 = vst [vmem:[%s3 + $0xc0] sm:$0xf] %v871
  %1000 = vst [vmem:[%s3 + $0xc4] sm:$0xf] %v872
  %1001 = vst [vmem:[%s3 + $0xc8] sm:$0xf] %v873
  %1002 = vst [vmem:[%s3 + $0xcc] sm:$0xf] %v874
  %1003 = vst [vmem:[%s3 + $0xd0] sm:$0xf] %v875
  %1004 = vst [vmem:[%s3 + $0xd4] sm:$0xf] %v876
  %1005 = vst [vmem:[%s3 + $0xd8] sm:$0xf] %v877
  %1006 = vst [vmem:[%s3 + $0xdc] sm:$0xf] %v878
  %1007 = vst [vmem:[%s3 + $0xe0] sm:$0xf] %v879
  %1008 = vst [vmem:[%s3 + $0xe4] sm:$0xf] %v880
  %1009 = vst [vmem:[%s3 + $0xe8] sm:$0xf] %v881
  %1010 = vst [vmem:[%s3 + $0xec] sm:$0xf] %v882
  %1011 = vst [vmem:[%s3 + $0xf0] sm:$0xf] %v883
  %1012 = vst [vmem:[%s3 + $0xf4] sm:$0xf] %v884
  %1013 = vst [vmem:[%s3 + $0xf8] sm:$0xf] %v885
  %1014 = vst [vmem:[%s3 + $0xfc] sm:$0xf] %v886
  // Predicated region
  $region14: #{_lambda_.15} parent=0 // pred_check
    _
  $region15: #{_lambda_.15} parent=0 // pred_check_branch
    %1016 = sbr.rel (0) target = $region17
  $region16: #{_lambda_.15} parent=0 // pred_region
    _
  $region17: #{_lambda_.15} parent=0 // pred_fallthru
    _
  // Predicated region
  $region18: #{_lambda_.15} parent=0 // pred_check
    _
  $region19: #{_lambda_.15} parent=0 // pred_check_branch
    %1018 = sbr.rel (0) target = $region21
  $region20: #{_lambda_.15} parent=0 // pred_region
    _
  $region21: #{_lambda_.15} parent=0 // pred_fallthru
    _

// kernel: _lambda_.20
$region0: #{_lambda_.20}
  #allocation0 [shape = 'u32[]', space=smem, size = 0x4, offset = 0x4, fixed_abs, tag = 'smem constant byte address 0x4 - core index']
  #allocation1 [shape = 'u32[144,128]{1,0:T(1,128)}', space=vmem, size = 0x12000, scoped, tag = 'internal scratch']
  %s0 = inlined_call_operand.vmem [shape: bf16[512,128], index: 0, kind: input, shape index: {}]
  %s1 = inlined_call_operand.vmem [shape: bf16[128,128], index: 1, kind: input, shape index: {}]
  %s2 = inlined_call_operand.vmem [shape: f32[1,128], index: 2, kind: input, shape index: {}]
  %s3 = inlined_call_operand.vmem [shape: bf16[512,128], index: 3, kind: input, shape index: {}]
  %s4 = inlined_call_operand.vmem [shape: bf16[512,128], index: 4, kind: output, shape index: {}]
  %s5 = sld [smem:[#allocation0]]
  $region26: #{_lambda_.20} parent=0
    _
  %s7 = ssub.s32 1, %s5
  %s8 = scalar_select 0, %s7, %s5
  // Predicated region
  $region2: #{_lambda_.20} parent=0 // pred_check
    _
  $region3: #{_lambda_.20} parent=0 // pred_check_branch
    %10 = sbr.rel (0) target = $region5
  $region4: #{_lambda_.20} parent=0 // pred_region
    _
  $region5: #{_lambda_.20} parent=0 // pred_fallthru
    _
  // Predicated region
  $region6: #{_lambda_.20} parent=0 // pred_check
    _
  $region7: #{_lambda_.20} parent=0 // pred_check_branch
    %12 = sbr.rel (0) target = $region9
  $region8: #{_lambda_.20} parent=0 // pred_region
    _
  $region9: #{_lambda_.20} parent=0 // pred_fallthru
    _
  // Predicated region
  $region10: #{_lambda_.20} parent=0 // pred_check
    _
  $region11: #{_lambda_.20} parent=0 // pred_check_branch
    %14 = sbr.rel (0) target = $region13
  $region12: #{_lambda_.20} parent=0 // pred_region
    _
  $region13: #{_lambda_.20} parent=0 // pred_fallthru
    _
  // Predicated region
  $region14: #{_lambda_.20} parent=0 // pred_check
    _
  $region15: #{_lambda_.20} parent=0 // pred_check_branch
    %16 = sbr.rel (0) target = $region17
  $region16: #{_lambda_.20} parent=0 // pred_region
    _
  $region17: #{_lambda_.20} parent=0 // pred_fallthru
    _
  %v18 = vld [vmem:[%s0] sm:$0xf]
  %v19 = vld [vmem:[%s0 + $0x4] sm:$0xf]
  %v20 = vld [vmem:[%s0 + $0x8] sm:$0xf]
  %v21 = vld [vmem:[%s0 + $0xc] sm:$0xf]
  %v22 = vld [vmem:[%s0 + $0x10] sm:$0xf]
  %v23 = vld [vmem:[%s0 + $0x14] sm:$0xf]
  %v24 = vld [vmem:[%s0 + $0x18] sm:$0xf]
  %v25 = vld [vmem:[%s0 + $0x1c] sm:$0xf]
  %v26 = vld [vmem:[%s0 + $0x20] sm:$0xf]
  %v27 = vld [vmem:[%s0 + $0x24] sm:$0xf]
  %v28 = vld [vmem:[%s0 + $0x28] sm:$0xf]
  %v29 = vld [vmem:[%s0 + $0x2c] sm:$0xf]
  %v30 = vld [vmem:[%s0 + $0x30] sm:$0xf]
  %v31 = vld [vmem:[%s0 + $0x34] sm:$0xf]
  %v32 = vld [vmem:[%s0 + $0x38] sm:$0xf]
  %v33 = vld [vmem:[%s0 + $0x3c] sm:$0xf]
  %v34 = vld [vmem:[%s0 + $0x40] sm:$0xf]
  %v35 = vld [vmem:[%s0 + $0x44] sm:$0xf]
  %v36 = vld [vmem:[%s0 + $0x48] sm:$0xf]
  %v37 = vld [vmem:[%s0 + $0x4c] sm:$0xf]
  %v38 = vld [vmem:[%s0 + $0x50] sm:$0xf]
  %v39 = vld [vmem:[%s0 + $0x54] sm:$0xf]
  %v40 = vld [vmem:[%s0 + $0x58] sm:$0xf]
  %v41 = vld [vmem:[%s0 + $0x5c] sm:$0xf]
  %v42 = vld [vmem:[%s0 + $0x60] sm:$0xf]
  %v43 = vld [vmem:[%s0 + $0x64] sm:$0xf]
  %v44 = vld [vmem:[%s0 + $0x68] sm:$0xf]
  %v45 = vld [vmem:[%s0 + $0x6c] sm:$0xf]
  %v46 = vld [vmem:[%s0 + $0x70] sm:$0xf]
  %v47 = vld [vmem:[%s0 + $0x74] sm:$0xf]
  %v48 = vld [vmem:[%s0 + $0x78] sm:$0xf]
  %v49 = vld [vmem:[%s0 + $0x7c] sm:$0xf]
  %v50 = vld [vmem:[%s0 + $0x80] sm:$0xf]
  %v51 = vld [vmem:[%s0 + $0x84] sm:$0xf]
  %v52 = vld [vmem:[%s0 + $0x88] sm:$0xf]
  %v53 = vld [vmem:[%s0 + $0x8c] sm:$0xf]
  %v54 = vld [vmem:[%s0 + $0x90] sm:$0xf]
  %v55 = vld [vmem:[%s0 + $0x94] sm:$0xf]
  %v56 = vld [vmem:[%s0 + $0x98] sm:$0xf]
  %v57 = vld [vmem:[%s0 + $0x9c] sm:$0xf]
  %v58 = vld [vmem:[%s0 + $0xa0] sm:$0xf]
  %v59 = vld [vmem:[%s0 + $0xa4] sm:$0xf]
  %v60 = vld [vmem:[%s0 + $0xa8] sm:$0xf]
  %v61 = vld [vmem:[%s0 + $0xac] sm:$0xf]
  %v62 = vld [vmem:[%s0 + $0xb0] sm:$0xf]
  %v63 = vld [vmem:[%s0 + $0xb4] sm:$0xf]
  %v64 = vld [vmem:[%s0 + $0xb8] sm:$0xf]
  %v65 = vld [vmem:[%s0 + $0xbc] sm:$0xf]
  %v66 = vld [vmem:[%s0 + $0xc0] sm:$0xf]
  %v67 = vld [vmem:[%s0 + $0xc4] sm:$0xf]
  %v68 = vld [vmem:[%s0 + $0xc8] sm:$0xf]
  %v69 = vld [vmem:[%s0 + $0xcc] sm:$0xf]
  %v70 = vld [vmem:[%s0 + $0xd0] sm:$0xf]
  %v71 = vld [vmem:[%s0 + $0xd4] sm:$0xf]
  %v72 = vld [vmem:[%s0 + $0xd8] sm:$0xf]
  %v73 = vld [vmem:[%s0 + $0xdc] sm:$0xf]
  %v74 = vld [vmem:[%s0 + $0xe0] sm:$0xf]
  %v75 = vld [vmem:[%s0 + $0xe4] sm:$0xf]
  %v76 = vld [vmem:[%s0 + $0xe8] sm:$0xf]
  %v77 = vld [vmem:[%s0 + $0xec] sm:$0xf]
  %v78 = vld [vmem:[%s0 + $0xf0] sm:$0xf]
  %v79 = vld [vmem:[%s0 + $0xf4] sm:$0xf]
  %v80 = vld [vmem:[%s0 + $0xf8] sm:$0xf]
  %v81 = vld [vmem:[%s0 + $0xfc] sm:$0xf]
  %v82 = vld [vmem:[%s1] sm:$0xf]
  %v83 = vld [vmem:[%s1 + $0x4] sm:$0xf]
  %v84 = vld [vmem:[%s1 + $0x8] sm:$0xf]
  %v85 = vld [vmem:[%s1 + $0xc] sm:$0xf]
  %v86 = vld [vmem:[%s1 + $0x10] sm:$0xf]
  %v87 = vld [vmem:[%s1 + $0x14] sm:$0xf]
  %v88 = vld [vmem:[%s1 + $0x18] sm:$0xf]
  %v89 = vld [vmem:[%s1 + $0x1c] sm:$0xf]
  %v90 = vld [vmem:[%s1 + $0x20] sm:$0xf]
  %v91 = vld [vmem:[%s1 + $0x24] sm:$0xf]
  %v92 = vld [vmem:[%s1 + $0x28] sm:$0xf]
  %v93 = vld [vmem:[%s1 + $0x2c] sm:$0xf]
  %v94 = vld [vmem:[%s1 + $0x30] sm:$0xf]
  %v95 = vld [vmem:[%s1 + $0x34] sm:$0xf]
  %v96 = vld [vmem:[%s1 + $0x38] sm:$0xf]
  %v97 = vld [vmem:[%s1 + $0x3c] sm:$0xf]
  %v98 = vld [vmem:[%s2] sm:$0x1]
  %v100 = vlaneseq
  %v101 = vshrl.u32 %v100, 7
  %v102 = vsub.s32 0, %v101
  %v103 = vrot.slane %v98, %v102
  %v169 = vunpack.c.l.b16 %v18
  %v170 = vunpack.c.l.b16 %v19
  %v171 = vunpack.c.l.b16 %v20
  %v172 = vunpack.c.l.b16 %v21
  %v173 = vunpack.c.l.b16 %v22
  %v174 = vunpack.c.l.b16 %v23
  %v175 = vunpack.c.l.b16 %v24
  %v176 = vunpack.c.l.b16 %v25
  %v177 = vunpack.c.l.b16 %v26
  %v178 = vunpack.c.l.b16 %v27
  %v179 = vunpack.c.l.b16 %v28
  %v180 = vunpack.c.l.b16 %v29
  %v181 = vunpack.c.l.b16 %v30
  %v182 = vunpack.c.l.b16 %v31
  %v183 = vunpack.c.l.b16 %v32
  %v184 = vunpack.c.l.b16 %v33
  %v185 = vunpack.c.l.b16 %v34
  %v186 = vunpack.c.l.b16 %v35
  %v187 = vunpack.c.l.b16 %v36
  %v188 = vunpack.c.l.b16 %v37
  %v189 = vunpack.c.l.b16 %v38
  %v190 = vunpack.c.l.b16 %v39
  %v191 = vunpack.c.l.b16 %v40
  %v192 = vunpack.c.l.b16 %v41
  %v193 = vunpack.c.l.b16 %v42
  %v194 = vunpack.c.l.b16 %v43
  %v195 = vunpack.c.l.b16 %v44
  %v196 = vunpack.c.l.b16 %v45
  %v197 = vunpack.c.l.b16 %v46
  %v198 = vunpack.c.l.b16 %v47
  %v199 = vunpack.c.l.b16 %v48
  %v200 = vunpack.c.l.b16 %v49
  %v201 = vunpack.c.l.b16 %v50
  %v202 = vunpack.c.l.b16 %v51
  %v203 = vunpack.c.l.b16 %v52
  %v204 = vunpack.c.l.b16 %v53
  %v205 = vunpack.c.l.b16 %v54
  %v206 = vunpack.c.l.b16 %v55
  %v207 = vunpack.c.l.b16 %v56
  %v208 = vunpack.c.l.b16 %v57
  %v209 = vunpack.c.l.b16 %v58
  %v210 = vunpack.c.l.b16 %v59
  %v211 = vunpack.c.l.b16 %v60
  %v212 = vunpack.c.l.b16 %v61
  %v213 = vunpack.c.l.b16 %v62
  %v214 = vunpack.c.l.b16 %v63
  %v215 = vunpack.c.l.b16 %v64
  %v216 = vunpack.c.l.b16 %v65
  %v217 = vunpack.c.l.b16 %v66
  %v218 = vunpack.c.l.b16 %v67
  %v219 = vunpack.c.l.b16 %v68
  %v220 = vunpack.c.l.b16 %v69
  %v221 = vunpack.c.l.b16 %v70
  %v222 = vunpack.c.l.b16 %v71
  %v223 = vunpack.c.l.b16 %v72
  %v224 = vunpack.c.l.b16 %v73
  %v225 = vunpack.c.l.b16 %v74
  %v226 = vunpack.c.l.b16 %v75
  %v227 = vunpack.c.l.b16 %v76
  %v228 = vunpack.c.l.b16 %v77
  %v229 = vunpack.c.l.b16 %v78
  %v230 = vunpack.c.l.b16 %v79
  %v231 = vunpack.c.l.b16 %v80
  %v232 = vunpack.c.l.b16 %v81
  %v233 = vpack.c.b16 %v170, %v169
  %v234 = vpack.c.b16 %v172, %v171
  %v235 = vpack.c.b16 %v174, %v173
  %v236 = vpack.c.b16 %v176, %v175
  %v237 = vpack.c.b16 %v178, %v177
  %v238 = vpack.c.b16 %v180, %v179
  %v239 = vpack.c.b16 %v182, %v181
  %v240 = vpack.c.b16 %v184, %v183
  %v241 = vpack.c.b16 %v186, %v185
  %v242 = vpack.c.b16 %v188, %v187
  %v243 = vpack.c.b16 %v190, %v189
  %v244 = vpack.c.b16 %v192, %v191
  %v245 = vpack.c.b16 %v194, %v193
  %v246 = vpack.c.b16 %v196, %v195
  %v247 = vpack.c.b16 %v198, %v197
  %v248 = vpack.c.b16 %v200, %v199
  %v249 = vpack.c.b16 %v202, %v201
  %v250 = vpack.c.b16 %v204, %v203
  %v251 = vpack.c.b16 %v206, %v205
  %v252 = vpack.c.b16 %v208, %v207
  %v253 = vpack.c.b16 %v210, %v209
  %v254 = vpack.c.b16 %v212, %v211
  %v255 = vpack.c.b16 %v214, %v213
  %v256 = vpack.c.b16 %v216, %v215
  %v257 = vpack.c.b16 %v218, %v217
  %v258 = vpack.c.b16 %v220, %v219
  %v259 = vpack.c.b16 %v222, %v221
  %v260 = vpack.c.b16 %v224, %v223
  %v261 = vpack.c.b16 %v226, %v225
  %v262 = vpack.c.b16 %v228, %v227
  %v263 = vpack.c.b16 %v230, %v229
  %v264 = vpack.c.b16 %v232, %v231
  %v313 = vunpack.c.l.b16 %v82
  %v314 = vunpack.c.l.b16 %v83
  %v315 = vunpack.c.l.b16 %v84
  %v316 = vunpack.c.l.b16 %v85
  %v317 = vunpack.c.l.b16 %v86
  %v318 = vunpack.c.l.b16 %v87
  %v319 = vunpack.c.l.b16 %v88
  %v320 = vunpack.c.l.b16 %v89
  %v321 = vunpack.c.l.b16 %v90
  %v322 = vunpack.c.l.b16 %v91
  %v323 = vunpack.c.l.b16 %v92
  %v324 = vunpack.c.l.b16 %v93
  %v325 = vunpack.c.l.b16 %v94
  %v326 = vunpack.c.l.b16 %v95
  %v327 = vunpack.c.l.b16 %v96
  %v328 = vunpack.c.l.b16 %v97
  %v329 = vpack.c.b16 %v314, %v313
  %v330 = vpack.c.b16 %v316, %v315
  %v331 = vpack.c.b16 %v318, %v317
  %v332 = vpack.c.b16 %v320, %v319
  %v333 = vpack.c.b16 %v322, %v321
  %v334 = vpack.c.b16 %v324, %v323
  %v335 = vpack.c.b16 %v326, %v325
  %v336 = vpack.c.b16 %v328, %v327
  %345 = vmatprep.subr.bf16.mxu0 0
  %346 = vmatpush1.bf16.msra.mxu0 %v336
  %347 = vmatprep.subr.bf16.mxu0 0
  %348 = vmatpush1.bf16.msra.mxu0 %v335
  %349 = vmatprep.subr.bf16.mxu0 0
  %350 = vmatpush1.bf16.msra.mxu0 %v334
  %351 = vmatprep.subr.bf16.mxu0 0
  %352 = vmatpush1.bf16.msra.mxu0 %v333
  %353 = vmatprep.subr.bf16.mxu0 0
  %354 = vmatpush1.bf16.msra.mxu0 %v332
  %355 = vmatprep.subr.bf16.mxu0 0
  %356 = vmatpush1.bf16.msra.mxu0 %v331
  %357 = vmatprep.subr.bf16.mxu0 0
  %358 = vmatpush1.bf16.msra.mxu0 %v330
  %359 = vmatprep.subr.bf16.mxu0 0
  %360 = vmatpush1.bf16.msra.mxu0 %v329
  %361 = vmatprep.subr.bf16.mxu0 0
  %362 = vmatpush2.bf16.msra.mxu0 0
  %363 = vmatprep.subr.bf16.mxu0 0
  %364 = vmatpush2.bf16.msra.mxu0 0
  %365 = vmatprep.subr.bf16.mxu0 0
  %366 = vmatpush2.bf16.msra.mxu0 0
  %367 = vmatprep.subr.bf16.mxu0 0
  %368 = vmatpush2.bf16.msra.mxu0 0
  %369 = vmatprep.subr.bf16.mxu0 0
  %370 = vmatpush2.bf16.msra.mxu0 0
  %371 = vmatprep.subr.bf16.mxu0 0
  %372 = vmatpush2.bf16.msra.mxu0 0
  %373 = vmatprep.subr.bf16.mxu0 0
  %374 = vmatpush2.bf16.msra.mxu0 0
  %375 = vmatprep.subr.bf16.mxu0 0
  %376 = vmatpush2.bf16.msra.mxu0 0
  %377 = vmatprep.mubr.bf16.mxu0 0
  %378 = vmatmul.mubr.bf16.gmra.mxu0 %v233
  %v379 = vpop.f32.mrf.mxu0
  %v380 = vadd.f32 %v103, %v379
  %v381 = vpop.f32.mrf.mxu0
  %v382 = vpop.f32.mrf.mxu0
  %v383 = vadd.f32 %v103, %v382
  %v384 = vpop.f32.mrf.mxu0
  %385 = vmatprep.mubr.bf16.mxu0 0
  %386 = vmatmul.mubr.bf16.gmra.mxu0 %v234
  %v387 = vpop.f32.mrf.mxu0
  %v388 = vadd.f32 %v103, %v387
  %v389 = vpop.f32.mrf.mxu0
  %v390 = vpop.f32.mrf.mxu0
  %v391 = vadd.f32 %v103, %v390
  %v392 = vpop.f32.mrf.mxu0
  %393 = vmatprep.mubr.bf16.mxu0 0
  %394 = vmatmul.mubr.bf16.gmra.mxu0 %v235
  %v395 = vpop.f32.mrf.mxu0
  %v396 = vadd.f32 %v103, %v395
  %v397 = vpop.f32.mrf.mxu0
  %v398 = vpop.f32.mrf.mxu0
  %v399 = vadd.f32 %v103, %v398
  %v400 = vpop.f32.mrf.mxu0
  %401 = vmatprep.mubr.bf16.mxu0 0
  %402 = vmatmul.mubr.bf16.gmra.mxu0 %v236
  %v403 = vpop.f32.mrf.mxu0
  %v404 = vadd.f32 %v103, %v403
  %v405 = vpop.f32.mrf.mxu0
  %v406 = vpop.f32.mrf.mxu0
  %v407 = vadd.f32 %v103, %v406
  %v408 = vpop.f32.mrf.mxu0
  %409 = vmatprep.mubr.bf16.mxu0 0
  %410 = vmatmul.mubr.bf16.gmra.mxu0 %v237
  %v411 = vpop.f32.mrf.mxu0
  %v412 = vadd.f32 %v103, %v411
  %v413 = vpop.f32.mrf.mxu0
  %v414 = vpop.f32.mrf.mxu0
  %v415 = vadd.f32 %v103, %v414
  %v416 = vpop.f32.mrf.mxu0
  %417 = vmatprep.mubr.bf16.mxu0 0
  %418 = vmatmul.mubr.bf16.gmra.mxu0 %v238
  %v419 = vpop.f32.mrf.mxu0
  %v420 = vadd.f32 %v103, %v419
  %v421 = vpop.f32.mrf.mxu0
  %v422 = vpop.f32.mrf.mxu0
  %v423 = vadd.f32 %v103, %v422
  %v424 = vpop.f32.mrf.mxu0
  %425 = vmatprep.mubr.bf16.mxu0 0
  %426 = vmatmul.mubr.bf16.gmra.mxu0 %v239
  %v427 = vpop.f32.mrf.mxu0
  %v428 = vadd.f32 %v103, %v427
  %v429 = vpop.f32.mrf.mxu0
  %v430 = vpop.f32.mrf.mxu0
  %v431 = vadd.f32 %v103, %v430
  %v432 = vpop.f32.mrf.mxu0
  %433 = vmatprep.mubr.bf16.mxu0 0
  %434 = vmatmul.mubr.bf16.gmra.mxu0 %v240
  %v435 = vpop.f32.mrf.mxu0
  %v436 = vadd.f32 %v103, %v435
  %v437 = vpop.f32.mrf.mxu0
  %v438 = vpop.f32.mrf.mxu0
  %v439 = vadd.f32 %v103, %v438
  %v440 = vpop.f32.mrf.mxu0
  %441 = vmatprep.mubr.bf16.mxu0 0
  %442 = vmatmul.mubr.bf16.gmra.mxu0 %v241
  %v443 = vpop.f32.mrf.mxu0
  %v444 = vadd.f32 %v103, %v443
  %v445 = vpop.f32.mrf.mxu0
  %v446 = vpop.f32.mrf.mxu0
  %v447 = vadd.f32 %v103, %v446
  %v448 = vpop.f32.mrf.mxu0
  %449 = vmatprep.mubr.bf16.mxu0 0
  %450 = vmatmul.mubr.bf16.gmra.mxu0 %v242
  %v451 = vpop.f32.mrf.mxu0
  %v452 = vadd.f32 %v103, %v451
  %v453 = vpop.f32.mrf.mxu0
  %v454 = vpop.f32.mrf.mxu0
  %v455 = vadd.f32 %v103, %v454
  %v456 = vpop.f32.mrf.mxu0
  %457 = vmatprep.mubr.bf16.mxu0 0
  %458 = vmatmul.mubr.bf16.gmra.mxu0 %v243
  %v459 = vpop.f32.mrf.mxu0
  %v460 = vadd.f32 %v103, %v459
  %v461 = vpop.f32.mrf.mxu0
  %v462 = vpop.f32.mrf.mxu0
  %v463 = vadd.f32 %v103, %v462
  %v464 = vpop.f32.mrf.mxu0
  %465 = vmatprep.mubr.bf16.mxu0 0
  %466 = vmatmul.mubr.bf16.gmra.mxu0 %v244
  %v467 = vpop.f32.mrf.mxu0
  %v468 = vadd.f32 %v103, %v467
  %v469 = vpop.f32.mrf.mxu0
  %v470 = vpop.f32.mrf.mxu0
  %v471 = vadd.f32 %v103, %v470
  %v472 = vpop.f32.mrf.mxu0
  %473 = vmatprep.mubr.bf16.mxu0 0
  %474 = vmatmul.mubr.bf16.gmra.mxu0 %v245
  %v475 = vpop.f32.mrf.mxu0
  %v476 = vadd.f32 %v103, %v475
  %v477 = vpop.f32.mrf.mxu0
  %v478 = vpop.f32.mrf.mxu0
  %v479 = vadd.f32 %v103, %v478
  %v480 = vpop.f32.mrf.mxu0
  %481 = vmatprep.mubr.bf16.mxu0 0
  %482 = vmatmul.mubr.bf16.gmra.mxu0 %v246
  %v483 = vpop.f32.mrf.mxu0
  %v484 = vadd.f32 %v103, %v483
  %v485 = vpop.f32.mrf.mxu0
  %v486 = vpop.f32.mrf.mxu0
  %v487 = vadd.f32 %v103, %v486
  %v488 = vpop.f32.mrf.mxu0
  %489 = vmatprep.mubr.bf16.mxu0 0
  %490 = vmatmul.mubr.bf16.gmra.mxu0 %v247
  %v491 = vpop.f32.mrf.mxu0
  %v492 = vadd.f32 %v103, %v491
  %v493 = vpop.f32.mrf.mxu0
  %v494 = vpop.f32.mrf.mxu0
  %v495 = vadd.f32 %v103, %v494
  %v496 = vpop.f32.mrf.mxu0
  %497 = vmatprep.mubr.bf16.mxu0 0
  %498 = vmatmul.mubr.bf16.gmra.mxu0 %v248
  %v499 = vpop.f32.mrf.mxu0
  %v500 = vadd.f32 %v103, %v499
  %v501 = vpop.f32.mrf.mxu0
  %v502 = vpop.f32.mrf.mxu0
  %v503 = vadd.f32 %v103, %v502
  %v504 = vpop.f32.mrf.mxu0
  %505 = vmatprep.mubr.bf16.mxu0 0
  %506 = vmatmul.mubr.bf16.gmra.mxu0 %v249
  %v507 = vpop.f32.mrf.mxu0
  %v508 = vadd.f32 %v103, %v507
  %v509 = vpop.f32.mrf.mxu0
  %v510 = vpop.f32.mrf.mxu0
  %v511 = vadd.f32 %v103, %v510
  %v512 = vpop.f32.mrf.mxu0
  %513 = vmatprep.mubr.bf16.mxu0 0
  %514 = vmatmul.mubr.bf16.gmra.mxu0 %v250
  %v515 = vpop.f32.mrf.mxu0
  %v516 = vadd.f32 %v103, %v515
  %v517 = vpop.f32.mrf.mxu0
  %v518 = vpop.f32.mrf.mxu0
  %v519 = vadd.f32 %v103, %v518
  %v520 = vpop.f32.mrf.mxu0
  %521 = vmatprep.mubr.bf16.mxu0 0
  %522 = vmatmul.mubr.bf16.gmra.mxu0 %v251
  %v523 = vpop.f32.mrf.mxu0
  %v524 = vadd.f32 %v103, %v523
  %v525 = vpop.f32.mrf.mxu0
  %v526 = vpop.f32.mrf.mxu0
  %v527 = vadd.f32 %v103, %v526
  %v528 = vpop.f32.mrf.mxu0
  %529 = vmatprep.mubr.bf16.mxu0 0
  %530 = vmatmul.mubr.bf16.gmra.mxu0 %v252
  %v531 = vpop.f32.mrf.mxu0
  %v532 = vadd.f32 %v103, %v531
  %v533 = vpop.f32.mrf.mxu0
  %v534 = vpop.f32.mrf.mxu0
  %v535 = vadd.f32 %v103, %v534
  %v536 = vpop.f32.mrf.mxu0
  %537 = vmatprep.mubr.bf16.mxu0 0
  %538 = vmatmul.mubr.bf16.gmra.mxu0 %v253
  %v539 = vpop.f32.mrf.mxu0
  %v540 = vadd.f32 %v103, %v539
  %v541 = vpop.f32.mrf.mxu0
  %v542 = vpop.f32.mrf.mxu0
  %v543 = vadd.f32 %v103, %v542
  %v544 = vpop.f32.mrf.mxu0
  %545 = vmatprep.mubr.bf16.mxu0 0
  %546 = vmatmul.mubr.bf16.gmra.mxu0 %v254
  %v547 = vpop.f32.mrf.mxu0
  %v548 = vadd.f32 %v103, %v547
  %v549 = vpop.f32.mrf.mxu0
  %v550 = vpop.f32.mrf.mxu0
  %v551 = vadd.f32 %v103, %v550
  %v552 = vpop.f32.mrf.mxu0
  %553 = vmatprep.mubr.bf16.mxu0 0
  %554 = vmatmul.mubr.bf16.gmra.mxu0 %v255
  %v555 = vpop.f32.mrf.mxu0
  %v556 = vadd.f32 %v103, %v555
  %v557 = vpop.f32.mrf.mxu0
  %v558 = vpop.f32.mrf.mxu0
  %v559 = vadd.f32 %v103, %v558
  %v560 = vpop.f32.mrf.mxu0
  %561 = vmatprep.mubr.bf16.mxu0 0
  %562 = vmatmul.mubr.bf16.gmra.mxu0 %v256
  %v563 = vpop.f32.mrf.mxu0
  %v564 = vadd.f32 %v103, %v563
  %v565 = vpop.f32.mrf.mxu0
  %v566 = vpop.f32.mrf.mxu0
  %v567 = vadd.f32 %v103, %v566
  %v568 = vpop.f32.mrf.mxu0
  %569 = vmatprep.mubr.bf16.mxu0 0
  %570 = vmatmul.mubr.bf16.gmra.mxu0 %v257
  %v571 = vpop.f32.mrf.mxu0
  %v572 = vadd.f32 %v103, %v571
  %v573 = vpop.f32.mrf.mxu0
  %v574 = vpop.f32.mrf.mxu0
  %v575 = vadd.f32 %v103, %v574
  %v576 = vpop.f32.mrf.mxu0
  %577 = vmatprep.mubr.bf16.mxu0 0
  %578 = vmatmul.mubr.bf16.gmra.mxu0 %v258
  %v579 = vpop.f32.mrf.mxu0
  %v580 = vadd.f32 %v103, %v579
  %v581 = vpop.f32.mrf.mxu0
  %v582 = vpop.f32.mrf.mxu0
  %v583 = vadd.f32 %v103, %v582
  %v584 = vpop.f32.mrf.mxu0
  %585 = vmatprep.mubr.bf16.mxu0 0
  %586 = vmatmul.mubr.bf16.gmra.mxu0 %v259
  %v587 = vpop.f32.mrf.mxu0
  %v588 = vadd.f32 %v103, %v587
  %v589 = vpop.f32.mrf.mxu0
  %v590 = vpop.f32.mrf.mxu0
  %v591 = vadd.f32 %v103, %v590
  %v592 = vpop.f32.mrf.mxu0
  %593 = vmatprep.mubr.bf16.mxu0 0
  %594 = vmatmul.mubr.bf16.gmra.mxu0 %v260
  %v595 = vpop.f32.mrf.mxu0
  %v596 = vadd.f32 %v103, %v595
  %v597 = vpop.f32.mrf.mxu0
  %v598 = vpop.f32.mrf.mxu0
  %v599 = vadd.f32 %v103, %v598
  %v600 = vpop.f32.mrf.mxu0
  %601 = vmatprep.mubr.bf16.mxu0 0
  %602 = vmatmul.mubr.bf16.gmra.mxu0 %v261
  %v603 = vpop.f32.mrf.mxu0
  %v604 = vadd.f32 %v103, %v603
  %v605 = vpop.f32.mrf.mxu0
  %v606 = vpop.f32.mrf.mxu0
  %v607 = vadd.f32 %v103, %v606
  %v608 = vpop.f32.mrf.mxu0
  %609 = vmatprep.mubr.bf16.mxu0 0
  %610 = vmatmul.mubr.bf16.gmra.mxu0 %v262
  %v611 = vpop.f32.mrf.mxu0
  %v612 = vadd.f32 %v103, %v611
  %v613 = vpop.f32.mrf.mxu0
  %v614 = vpop.f32.mrf.mxu0
  %v615 = vadd.f32 %v103, %v614
  %v616 = vpop.f32.mrf.mxu0
  %617 = vmatprep.mubr.bf16.mxu0 0
  %618 = vmatmul.mubr.bf16.gmra.mxu0 %v263
  %v619 = vpop.f32.mrf.mxu0
  %v620 = vadd.f32 %v103, %v619
  %v621 = vpop.f32.mrf.mxu0
  %v622 = vpop.f32.mrf.mxu0
  %v623 = vadd.f32 %v103, %v622
  %v624 = vpop.f32.mrf.mxu0
  %625 = vmatprep.mubr.bf16.mxu0 0
  %626 = vmatmul.mubr.bf16.gmra.mxu0 %v264
  %v627 = vpop.f32.mrf.mxu0
  %v628 = vadd.f32 %v103, %v627
  %v629 = vpop.f32.mrf.mxu0
  %v630 = vpop.f32.mrf.mxu0
  %v631 = vadd.f32 %v103, %v630
  %v632 = vpop.f32.mrf.mxu0
  %633 = vdwg.mxu0
  %v634 = vld [vmem:[%s3] sm:$0xf]
  %v635 = vld [vmem:[%s3 + $0x4] sm:$0xf]
  %v636 = vld [vmem:[%s3 + $0x8] sm:$0xf]
  %v637 = vld [vmem:[%s3 + $0xc] sm:$0xf]
  %v638 = vld [vmem:[%s3 + $0x10] sm:$0xf]
  %v639 = vld [vmem:[%s3 + $0x14] sm:$0xf]
  %v640 = vld [vmem:[%s3 + $0x18] sm:$0xf]
  %v641 = vld [vmem:[%s3 + $0x1c] sm:$0xf]
  %v642 = vld [vmem:[%s3 + $0x20] sm:$0xf]
  %v643 = vld [vmem:[%s3 + $0x24] sm:$0xf]
  %v644 = vld [vmem:[%s3 + $0x28] sm:$0xf]
  %v645 = vld [vmem:[%s3 + $0x2c] sm:$0xf]
  %v646 = vld [vmem:[%s3 + $0x30] sm:$0xf]
  %v647 = vld [vmem:[%s3 + $0x34] sm:$0xf]
  %v648 = vld [vmem:[%s3 + $0x38] sm:$0xf]
  %v649 = vld [vmem:[%s3 + $0x3c] sm:$0xf]
  %v650 = vld [vmem:[%s3 + $0x40] sm:$0xf]
  %v651 = vld [vmem:[%s3 + $0x44] sm:$0xf]
  %v652 = vld [vmem:[%s3 + $0x48] sm:$0xf]
  %v653 = vld [vmem:[%s3 + $0x4c] sm:$0xf]
  %v654 = vld [vmem:[%s3 + $0x50] sm:$0xf]
  %v655 = vld [vmem:[%s3 + $0x54] sm:$0xf]
  %v656 = vld [vmem:[%s3 + $0x58] sm:$0xf]
  %v657 = vld [vmem:[%s3 + $0x5c] sm:$0xf]
  %v658 = vld [vmem:[%s3 + $0x60] sm:$0xf]
  %v659 = vld [vmem:[%s3 + $0x64] sm:$0xf]
  %v660 = vld [vmem:[%s3 + $0x68] sm:$0xf]
  %v661 = vld [vmem:[%s3 + $0x6c] sm:$0xf]
  %v662 = vld [vmem:[%s3 + $0x70] sm:$0xf]
  %v663 = vld [vmem:[%s3 + $0x74] sm:$0xf]
  %v664 = vld [vmem:[%s3 + $0x78] sm:$0xf]
  %v665 = vld [vmem:[%s3 + $0x7c] sm:$0xf]
  %v666 = vld [vmem:[%s3 + $0x80] sm:$0xf]
  %v667 = vld [vmem:[%s3 + $0x84] sm:$0xf]
  %v668 = vld [vmem:[%s3 + $0x88] sm:$0xf]
  %v669 = vld [vmem:[%s3 + $0x8c] sm:$0xf]
  %v670 = vld [vmem:[%s3 + $0x90] sm:$0xf]
  %v671 = vld [vmem:[%s3 + $0x94] sm:$0xf]
  %v672 = vld [vmem:[%s3 + $0x98] sm:$0xf]
  %v673 = vld [vmem:[%s3 + $0x9c] sm:$0xf]
  %v674 = vld [vmem:[%s3 + $0xa0] sm:$0xf]
  %v675 = vld [vmem:[%s3 + $0xa4] sm:$0xf]
  %v676 = vld [vmem:[%s3 + $0xa8] sm:$0xf]
  %v677 = vld [vmem:[%s3 + $0xac] sm:$0xf]
  %v678 = vld [vmem:[%s3 + $0xb0] sm:$0xf]
  %v679 = vld [vmem:[%s3 + $0xb4] sm:$0xf]
  %v680 = vld [vmem:[%s3 + $0xb8] sm:$0xf]
  %v681 = vld [vmem:[%s3 + $0xbc] sm:$0xf]
  %v682 = vld [vmem:[%s3 + $0xc0] sm:$0xf]
  %v683 = vld [vmem:[%s3 + $0xc4] sm:$0xf]
  %v684 = vld [vmem:[%s3 + $0xc8] sm:$0xf]
  %v685 = vld [vmem:[%s3 + $0xcc] sm:$0xf]
  %v686 = vld [vmem:[%s3 + $0xd0] sm:$0xf]
  %v687 = vld [vmem:[%s3 + $0xd4] sm:$0xf]
  %v688 = vld [vmem:[%s3 + $0xd8] sm:$0xf]
  %v689 = vld [vmem:[%s3 + $0xdc] sm:$0xf]
  %v690 = vld [vmem:[%s3 + $0xe0] sm:$0xf]
  %v691 = vld [vmem:[%s3 + $0xe4] sm:$0xf]
  %v692 = vld [vmem:[%s3 + $0xe8] sm:$0xf]
  %v693 = vld [vmem:[%s3 + $0xec] sm:$0xf]
  %v694 = vld [vmem:[%s3 + $0xf0] sm:$0xf]
  %v695 = vld [vmem:[%s3 + $0xf4] sm:$0xf]
  %v696 = vld [vmem:[%s3 + $0xf8] sm:$0xf]
  %v697 = vld [vmem:[%s3 + $0xfc] sm:$0xf]
  %v698 = vunpack.c.l.bf16 %v634
  %v699 = vunpack.c.l.bf16 %v635
  %v700 = vunpack.c.l.bf16 %v636
  %v701 = vunpack.c.l.bf16 %v637
  %v702 = vunpack.c.l.bf16 %v638
  %v703 = vunpack.c.l.bf16 %v639
  %v704 = vunpack.c.l.bf16 %v640
  %v705 = vunpack.c.l.bf16 %v641
  %v706 = vunpack.c.l.bf16 %v642
  %v707 = vunpack.c.l.bf16 %v643
  %v708 = vunpack.c.l.bf16 %v644
  %v709 = vunpack.c.l.bf16 %v645
  %v710 = vunpack.c.l.bf16 %v646
  %v711 = vunpack.c.l.bf16 %v647
  %v712 = vunpack.c.l.bf16 %v648
  %v713 = vunpack.c.l.bf16 %v649
  %v714 = vunpack.c.l.bf16 %v650
  %v715 = vunpack.c.l.bf16 %v651
  %v716 = vunpack.c.l.bf16 %v652
  %v717 = vunpack.c.l.bf16 %v653
  %v718 = vunpack.c.l.bf16 %v654
  %v719 = vunpack.c.l.bf16 %v655
  %v720 = vunpack.c.l.bf16 %v656
  %v721 = vunpack.c.l.bf16 %v657
  %v722 = vunpack.c.l.bf16 %v658
  %v723 = vunpack.c.l.bf16 %v659
  %v724 = vunpack.c.l.bf16 %v660
  %v725 = vunpack.c.l.bf16 %v661
  %v726 = vunpack.c.l.bf16 %v662
  %v727 = vunpack.c.l.bf16 %v663
  %v728 = vunpack.c.l.bf16 %v664
  %v729 = vunpack.c.l.bf16 %v665
  %v730 = vunpack.c.l.bf16 %v666
  %v731 = vunpack.c.l.bf16 %v667
  %v732 = vunpack.c.l.bf16 %v668
  %v733 = vunpack.c.l.bf16 %v669
  %v734 = vunpack.c.l.bf16 %v670
  %v735 = vunpack.c.l.bf16 %v671
  %v736 = vunpack.c.l.bf16 %v672
  %v737 = vunpack.c.l.bf16 %v673
  %v738 = vunpack.c.l.bf16 %v674
  %v739 = vunpack.c.l.bf16 %v675
  %v740 = vunpack.c.l.bf16 %v676
  %v741 = vunpack.c.l.bf16 %v677
  %v742 = vunpack.c.l.bf16 %v678
  %v743 = vunpack.c.l.bf16 %v679
  %v744 = vunpack.c.l.bf16 %v680
  %v745 = vunpack.c.l.bf16 %v681
  %v746 = vunpack.c.l.bf16 %v682
  %v747 = vunpack.c.l.bf16 %v683
  %v748 = vunpack.c.l.bf16 %v684
  %v749 = vunpack.c.l.bf16 %v685
  %v750 = vunpack.c.l.bf16 %v686
  %v751 = vunpack.c.l.bf16 %v687
  %v752 = vunpack.c.l.bf16 %v688
  %v753 = vunpack.c.l.bf16 %v689
  %v754 = vunpack.c.l.bf16 %v690
  %v755 = vunpack.c.l.bf16 %v691
  %v756 = vunpack.c.l.bf16 %v692
  %v757 = vunpack.c.l.bf16 %v693
  %v758 = vunpack.c.l.bf16 %v694
  %v759 = vunpack.c.l.bf16 %v695
  %v760 = vunpack.c.l.bf16 %v696
  %v761 = vunpack.c.l.bf16 %v697
  %v762 = vadd.f32 %v380, %v698
  %v763 = vadd.f32 %v383, %v699
  %v764 = vadd.f32 %v388, %v700
  %v765 = vadd.f32 %v391, %v701
  %v766 = vadd.f32 %v396, %v702
  %v767 = vadd.f32 %v399, %v703
  %v768 = vadd.f32 %v404, %v704
  %v769 = vadd.f32 %v407, %v705
  %v770 = vadd.f32 %v412, %v706
  %v771 = vadd.f32 %v415, %v707
  %v772 = vadd.f32 %v420, %v708
  %v773 = vadd.f32 %v423, %v709
  %v774 = vadd.f32 %v428, %v710
  %v775 = vadd.f32 %v431, %v711
  %v776 = vadd.f32 %v436, %v712
  %v777 = vadd.f32 %v439, %v713
  %v778 = vadd.f32 %v444, %v714
  %v779 = vadd.f32 %v447, %v715
  %v780 = vadd.f32 %v452, %v716
  %v781 = vadd.f32 %v455, %v717
  %v782 = vadd.f32 %v460, %v718
  %v783 = vadd.f32 %v463, %v719
  %v784 = vadd.f32 %v468, %v720
  %v785 = vadd.f32 %v471, %v721
  %v786 = vadd.f32 %v476, %v722
  %v787 = vadd.f32 %v479, %v723
  %v788 = vadd.f32 %v484, %v724
  %v789 = vadd.f32 %v487, %v725
  %v790 = vadd.f32 %v492, %v726
  %v791 = vadd.f32 %v495, %v727
  %v792 = vadd.f32 %v500, %v728
  %v793 = vadd.f32 %v503, %v729
  %v794 = vadd.f32 %v508, %v730
  %v795 = vadd.f32 %v511, %v731
  %v796 = vadd.f32 %v516, %v732
  %v797 = vadd.f32 %v519, %v733
  %v798 = vadd.f32 %v524, %v734
  %v799 = vadd.f32 %v527, %v735
  %v800 = vadd.f32 %v532, %v736
  %v801 = vadd.f32 %v535, %v737
  %v802 = vadd.f32 %v540, %v738
  %v803 = vadd.f32 %v543, %v739
  %v804 = vadd.f32 %v548, %v740
  %v805 = vadd.f32 %v551, %v741
  %v806 = vadd.f32 %v556, %v742
  %v807 = vadd.f32 %v559, %v743
  %v808 = vadd.f32 %v564, %v744
  %v809 = vadd.f32 %v567, %v745
  %v810 = vadd.f32 %v572, %v746
  %v811 = vadd.f32 %v575, %v747
  %v812 = vadd.f32 %v580, %v748
  %v813 = vadd.f32 %v583, %v749
  %v814 = vadd.f32 %v588, %v750
  %v815 = vadd.f32 %v591, %v751
  %v816 = vadd.f32 %v596, %v752
  %v817 = vadd.f32 %v599, %v753
  %v818 = vadd.f32 %v604, %v754
  %v819 = vadd.f32 %v607, %v755
  %v820 = vadd.f32 %v612, %v756
  %v821 = vadd.f32 %v615, %v757
  %v822 = vadd.f32 %v620, %v758
  %v823 = vadd.f32 %v623, %v759
  %v824 = vadd.f32 %v628, %v760
  %v825 = vadd.f32 %v631, %v761
  %v826 = vmax.f32 %v762, 0.0
  %v827 = vmax.f32 %v763, 0.0
  %v828 = vmax.f32 %v764, 0.0
  %v829 = vmax.f32 %v765, 0.0
  %v830 = vmax.f32 %v766, 0.0
  %v831 = vmax.f32 %v767, 0.0
  %v832 = vmax.f32 %v768, 0.0
  %v833 = vmax.f32 %v769, 0.0
  %v834 = vmax.f32 %v770, 0.0
  %v835 = vmax.f32 %v771, 0.0
  %v836 = vmax.f32 %v772, 0.0
  %v837 = vmax.f32 %v773, 0.0
  %v838 = vmax.f32 %v774, 0.0
  %v839 = vmax.f32 %v775, 0.0
  %v840 = vmax.f32 %v776, 0.0
  %v841 = vmax.f32 %v777, 0.0
  %v842 = vmax.f32 %v778, 0.0
  %v843 = vmax.f32 %v779, 0.0
  %v844 = vmax.f32 %v780, 0.0
  %v845 = vmax.f32 %v781, 0.0
  %v846 = vmax.f32 %v782, 0.0
  %v847 = vmax.f32 %v783, 0.0
  %v848 = vmax.f32 %v784, 0.0
  %v849 = vmax.f32 %v785, 0.0
  %v850 = vmax.f32 %v786, 0.0
  %v851 = vmax.f32 %v787, 0.0
  %v852 = vmax.f32 %v788, 0.0
  %v853 = vmax.f32 %v789, 0.0
  %v854 = vmax.f32 %v790, 0.0
  %v855 = vmax.f32 %v791, 0.0
  %v856 = vmax.f32 %v792, 0.0
  %v857 = vmax.f32 %v793, 0.0
  %v858 = vmax.f32 %v794, 0.0
  %v859 = vmax.f32 %v795, 0.0
  %v860 = vmax.f32 %v796, 0.0
  %v861 = vmax.f32 %v797, 0.0
  %v862 = vmax.f32 %v798, 0.0
  %v863 = vmax.f32 %v799, 0.0
  %v864 = vmax.f32 %v800, 0.0
  %v865 = vmax.f32 %v801, 0.0
  %v866 = vmax.f32 %v802, 0.0
  %v867 = vmax.f32 %v803, 0.0
  %v868 = vmax.f32 %v804, 0.0
  %v869 = vmax.f32 %v805, 0.0
  %v870 = vmax.f32 %v806, 0.0
  %v871 = vmax.f32 %v807, 0.0
  %v872 = vmax.f32 %v808, 0.0
  %v873 = vmax.f32 %v809, 0.0
  %v874 = vmax.f32 %v810, 0.0
  %v875 = vmax.f32 %v811, 0.0
  %v876 = vmax.f32 %v812, 0.0
  %v877 = vmax.f32 %v813, 0.0
  %v878 = vmax.f32 %v814, 0.0
  %v879 = vmax.f32 %v815, 0.0
  %v880 = vmax.f32 %v816, 0.0
  %v881 = vmax.f32 %v817, 0.0
  %v882 = vmax.f32 %v818, 0.0
  %v883 = vmax.f32 %v819, 0.0
  %v884 = vmax.f32 %v820, 0.0
  %v885 = vmax.f32 %v821, 0.0
  %v886 = vmax.f32 %v822, 0.0
  %v887 = vmax.f32 %v823, 0.0
  %v888 = vmax.f32 %v824, 0.0
  %v889 = vmax.f32 %v825, 0.0
  %v890 = vpack.c.bf16 %v827, %v826
  %v891 = vpack.c.bf16 %v829, %v828
  %v892 = vpack.c.bf16 %v831, %v830
  %v893 = vpack.c.bf16 %v833, %v832
  %v894 = vpack.c.bf16 %v835, %v834
  %v895 = vpack.c.bf16 %v837, %v836
  %v896 = vpack.c.bf16 %v839, %v838
  %v897 = vpack.c.bf16 %v841, %v840
  %v898 = vpack.c.bf16 %v843, %v842
  %v899 = vpack.c.bf16 %v845, %v844
  %v900 = vpack.c.bf16 %v847, %v846
  %v901 = vpack.c.bf16 %v849, %v848
  %v902 = vpack.c.bf16 %v851, %v850
  %v903 = vpack.c.bf16 %v853, %v852
  %v904 = vpack.c.bf16 %v855, %v854
  %v905 = vpack.c.bf16 %v857, %v856
  %v906 = vpack.c.bf16 %v859, %v858
  %v907 = vpack.c.bf16 %v861, %v860
  %v908 = vpack.c.bf16 %v863, %v862
  %v909 = vpack.c.bf16 %v865, %v864
  %v910 = vpack.c.bf16 %v867, %v866
  %v911 = vpack.c.bf16 %v869, %v868
  %v912 = vpack.c.bf16 %v871, %v870
  %v913 = vpack.c.bf16 %v873, %v872
  %v914 = vpack.c.bf16 %v875, %v874
  %v915 = vpack.c.bf16 %v877, %v876
  %v916 = vpack.c.bf16 %v879, %v878
  %v917 = vpack.c.bf16 %v881, %v880
  %v918 = vpack.c.bf16 %v883, %v882
  %v919 = vpack.c.bf16 %v885, %v884
  %v920 = vpack.c.bf16 %v887, %v886
  %v921 = vpack.c.bf16 %v889, %v888
  %v954 = vunpack.c.l.b16 %v890
  %v955 = vunpack.c.h.b16 %v890
  %v956 = vunpack.c.l.b16 %v891
  %v957 = vunpack.c.h.b16 %v891
  %v958 = vunpack.c.l.b16 %v892
  %v959 = vunpack.c.h.b16 %v892
  %v960 = vunpack.c.l.b16 %v893
  %v961 = vunpack.c.h.b16 %v893
  %v962 = vunpack.c.l.b16 %v894
  %v963 = vunpack.c.h.b16 %v894
  %v964 = vunpack.c.l.b16 %v895
  %v965 = vunpack.c.h.b16 %v895
  %v966 = vunpack.c.l.b16 %v896
  %v967 = vunpack.c.h.b16 %v896
  %v968 = vunpack.c.l.b16 %v897
  %v969 = vunpack.c.h.b16 %v897
  %v970 = vunpack.c.l.b16 %v898
  %v971 = vunpack.c.h.b16 %v898
  %v972 = vunpack.c.l.b16 %v899
  %v973 = vunpack.c.h.b16 %v899
  %v974 = vunpack.c.l.b16 %v900
  %v975 = vunpack.c.h.b16 %v900
  %v976 = vunpack.c.l.b16 %v901
  %v977 = vunpack.c.h.b16 %v901
  %v978 = vunpack.c.l.b16 %v902
  %v979 = vunpack.c.h.b16 %v902
  %v980 = vunpack.c.l.b16 %v903
  %v981 = vunpack.c.h.b16 %v903
  %v982 = vunpack.c.l.b16 %v904
  %v983 = vunpack.c.h.b16 %v904
  %v984 = vunpack.c.l.b16 %v905
  %v985 = vunpack.c.h.b16 %v905
  %v986 = vunpack.c.l.b16 %v906
  %v987 = vunpack.c.h.b16 %v906
  %v988 = vunpack.c.l.b16 %v907
  %v989 = vunpack.c.h.b16 %v907
  %v990 = vunpack.c.l.b16 %v908
  %v991 = vunpack.c.h.b16 %v908
  %v992 = vunpack.c.l.b16 %v909
  %v993 = vunpack.c.h.b16 %v909
  %v994 = vunpack.c.l.b16 %v910
  %v995 = vunpack.c.h.b16 %v910
  %v996 = vunpack.c.l.b16 %v911
  %v997 = vunpack.c.h.b16 %v911
  %v998 = vunpack.c.l.b16 %v912
  %v999 = vunpack.c.h.b16 %v912
  %v1000 = vunpack.c.l.b16 %v913
  %v1001 = vunpack.c.h.b16 %v913
  %v1002 = vunpack.c.l.b16 %v914
  %v1003 = vunpack.c.h.b16 %v914
  %v1004 = vunpack.c.l.b16 %v915
  %v1005 = vunpack.c.h.b16 %v915
  %v1006 = vunpack.c.l.b16 %v916
  %v1007 = vunpack.c.h.b16 %v916
  %v1008 = vunpack.c.l.b16 %v917
  %v1009 = vunpack.c.h.b16 %v917
  %v1010 = vunpack.c.l.b16 %v918
  %v1011 = vunpack.c.h.b16 %v918
  %v1012 = vunpack.c.l.b16 %v919
  %v1013 = vunpack.c.h.b16 %v919
  %v1014 = vunpack.c.l.b16 %v920
  %v1015 = vunpack.c.h.b16 %v920
  %v1016 = vunpack.c.l.b16 %v921
  %v1017 = vunpack.c.h.b16 %v921
  %v1018 = vpack.c.b16 %v954, %v954
  %v1019 = vpack.c.b16 %v955, %v955
  %v1020 = vpack.c.b16 %v956, %v956
  %v1021 = vpack.c.b16 %v957, %v957
  %v1022 = vpack.c.b16 %v958, %v958
  %v1023 = vpack.c.b16 %v959, %v959
  %v1024 = vpack.c.b16 %v960, %v960
  %v1025 = vpack.c.b16 %v961, %v961
  %v1026 = vpack.c.b16 %v962, %v962
  %v1027 = vpack.c.b16 %v963, %v963
  %v1028 = vpack.c.b16 %v964, %v964
  %v1029 = vpack.c.b16 %v965, %v965
  %v1030 = vpack.c.b16 %v966, %v966
  %v1031 = vpack.c.b16 %v967, %v967
  %v1032 = vpack.c.b16 %v968, %v968
  %v1033 = vpack.c.b16 %v969, %v969
  %v1034 = vpack.c.b16 %v970, %v970
  %v1035 = vpack.c.b16 %v971, %v971
  %v1036 = vpack.c.b16 %v972, %v972
  %v1037 = vpack.c.b16 %v973, %v973
  %v1038 = vpack.c.b16 %v974, %v974
  %v1039 = vpack.c.b16 %v975, %v975
  %v1040 = vpack.c.b16 %v976, %v976
  %v1041 = vpack.c.b16 %v977, %v977
  %v1042 = vpack.c.b16 %v978, %v978
  %v1043 = vpack.c.b16 %v979, %v979
  %v1044 = vpack.c.b16 %v980, %v980
  %v1045 = vpack.c.b16 %v981, %v981
  %v1046 = vpack.c.b16 %v982, %v982
  %v1047 = vpack.c.b16 %v983, %v983
  %v1048 = vpack.c.b16 %v984, %v984
  %v1049 = vpack.c.b16 %v985, %v985
  %v1050 = vpack.c.b16 %v986, %v986
  %v1051 = vpack.c.b16 %v987, %v987
  %v1052 = vpack.c.b16 %v988, %v988
  %v1053 = vpack.c.b16 %v989, %v989
  %v1054 = vpack.c.b16 %v990, %v990
  %v1055 = vpack.c.b16 %v991, %v991
  %v1056 = vpack.c.b16 %v992, %v992
  %v1057 = vpack.c.b16 %v993, %v993
  %v1058 = vpack.c.b16 %v994, %v994
  %v1059 = vpack.c.b16 %v995, %v995
  %v1060 = vpack.c.b16 %v996, %v996
  %v1061 = vpack.c.b16 %v997, %v997
  %v1062 = vpack.c.b16 %v998, %v998
  %v1063 = vpack.c.b16 %v999, %v999
  %v1064 = vpack.c.b16 %v1000, %v1000
  %v1065 = vpack.c.b16 %v1001, %v1001
  %v1066 = vpack.c.b16 %v1002, %v1002
  %v1067 = vpack.c.b16 %v1003, %v1003
  %v1068 = vpack.c.b16 %v1004, %v1004
  %v1069 = vpack.c.b16 %v1005, %v1005
  %v1070 = vpack.c.b16 %v1006, %v1006
  %v1071 = vpack.c.b16 %v1007, %v1007
  %v1072 = vpack.c.b16 %v1008, %v1008
  %v1073 = vpack.c.b16 %v1009, %v1009
  %v1074 = vpack.c.b16 %v1010, %v1010
  %v1075 = vpack.c.b16 %v1011, %v1011
  %v1076 = vpack.c.b16 %v1012, %v1012
  %v1077 = vpack.c.b16 %v1013, %v1013
  %v1078 = vpack.c.b16 %v1014, %v1014
  %v1079 = vpack.c.b16 %v1015, %v1015
  %v1080 = vpack.c.b16 %v1016, %v1016
  %v1081 = vpack.c.b16 %v1017, %v1017
  %1146 = vst [vmem:[%s4] sm:$0xf] %v1018
  %1147 = vst [vmem:[%s4 + $0x4] sm:$0xf] %v1019
  %1148 = vst [vmem:[%s4 + $0x8] sm:$0xf] %v1020
  %1149 = vst [vmem:[%s4 + $0xc] sm:$0xf] %v1021
  %1150 = vst [vmem:[%s4 + $0x10] sm:$0xf] %v1022
  %1151 = vst [vmem:[%s4 + $0x14] sm:$0xf] %v1023
  %1152 = vst [vmem:[%s4 + $0x18] sm:$0xf] %v1024
  %1153 = vst [vmem:[%s4 + $0x1c] sm:$0xf] %v1025
  %1154 = vst [vmem:[%s4 + $0x20] sm:$0xf] %v1026
  %1155 = vst [vmem:[%s4 + $0x24] sm:$0xf] %v1027
  %1156 = vst [vmem:[%s4 + $0x28] sm:$0xf] %v1028
  %1157 = vst [vmem:[%s4 + $0x2c] sm:$0xf] %v1029
  %1158 = vst [vmem:[%s4 + $0x30] sm:$0xf] %v1030
  %1159 = vst [vmem:[%s4 + $0x34] sm:$0xf] %v1031
  %1160 = vst [vmem:[%s4 + $0x38] sm:$0xf] %v1032
  %1161 = vst [vmem:[%s4 + $0x3c] sm:$0xf] %v1033
  %1162 = vst [vmem:[%s4 + $0x40] sm:$0xf] %v1034
  %1163 = vst [vmem:[%s4 + $0x44] sm:$0xf] %v1035
  %1164 = vst [vmem:[%s4 + $0x48] sm:$0xf] %v1036
  %1165 = vst [vmem:[%s4 + $0x4c] sm:$0xf] %v1037
  %1166 = vst [vmem:[%s4 + $0x50] sm:$0xf] %v1038
  %1167 = vst [vmem:[%s4 + $0x54] sm:$0xf] %v1039
  %1168 = vst [vmem:[%s4 + $0x58] sm:$0xf] %v1040
  %1169 = vst [vmem:[%s4 + $0x5c] sm:$0xf] %v1041
  %1170 = vst [vmem:[%s4 + $0x60] sm:$0xf] %v1042
  %1171 = vst [vmem:[%s4 + $0x64] sm:$0xf] %v1043
  %1172 = vst [vmem:[%s4 + $0x68] sm:$0xf] %v1044
  %1173 = vst [vmem:[%s4 + $0x6c] sm:$0xf] %v1045
  %1174 = vst [vmem:[%s4 + $0x70] sm:$0xf] %v1046
  %1175 = vst [vmem:[%s4 + $0x74] sm:$0xf] %v1047
  %1176 = vst [vmem:[%s4 + $0x78] sm:$0xf] %v1048
  %1177 = vst [vmem:[%s4 + $0x7c] sm:$0xf] %v1049
  %1178 = vst [vmem:[%s4 + $0x80] sm:$0xf] %v1050
  %1179 = vst [vmem:[%s4 + $0x84] sm:$0xf] %v1051
  %1180 = vst [vmem:[%s4 + $0x88] sm:$0xf] %v1052
  %1181 = vst [vmem:[%s4 + $0x8c] sm:$0xf] %v1053
  %1182 = vst [vmem:[%s4 + $0x90] sm:$0xf] %v1054
  %1183 = vst [vmem:[%s4 + $0x94] sm:$0xf] %v1055
  %1184 = vst [vmem:[%s4 + $0x98] sm:$0xf] %v1056
  %1185 = vst [vmem:[%s4 + $0x9c] sm:$0xf] %v1057
  %1186 = vst [vmem:[%s4 + $0xa0] sm:$0xf] %v1058
  %1187 = vst [vmem:[%s4 + $0xa4] sm:$0xf] %v1059
  %1188 = vst [vmem:[%s4 + $0xa8] sm:$0xf] %v1060
  %1189 = vst [vmem:[%s4 + $0xac] sm:$0xf] %v1061
  %1190 = vst [vmem:[%s4 + $0xb0] sm:$0xf] %v1062
  %1191 = vst [vmem:[%s4 + $0xb4] sm:$0xf] %v1063
  %1192 = vst [vmem:[%s4 + $0xb8] sm:$0xf] %v1064
  %1193 = vst [vmem:[%s4 + $0xbc] sm:$0xf] %v1065
  %1194 = vst [vmem:[%s4 + $0xc0] sm:$0xf] %v1066
  %1195 = vst [vmem:[%s4 + $0xc4] sm:$0xf] %v1067
  %1196 = vst [vmem:[%s4 + $0xc8] sm:$0xf] %v1068
  %1197 = vst [vmem:[%s4 + $0xcc] sm:$0xf] %v1069
  %1198 = vst [vmem:[%s4 + $0xd0] sm:$0xf] %v1070
  %1199 = vst [vmem:[%s4 + $0xd4] sm:$0xf] %v1071
  %1200 = vst [vmem:[%s4 + $0xd8] sm:$0xf] %v1072
  %1201 = vst [vmem:[%s4 + $0xdc] sm:$0xf] %v1073
  %1202 = vst [vmem:[%s4 + $0xe0] sm:$0xf] %v1074
  %1203 = vst [vmem:[%s4 + $0xe4] sm:$0xf] %v1075
  %1204 = vst [vmem:[%s4 + $0xe8] sm:$0xf] %v1076
  %1205 = vst [vmem:[%s4 + $0xec] sm:$0xf] %v1077
  %1206 = vst [vmem:[%s4 + $0xf0] sm:$0xf] %v1078
  %1207 = vst [vmem:[%s4 + $0xf4] sm:$0xf] %v1079
  %1208 = vst [vmem:[%s4 + $0xf8] sm:$0xf] %v1080
  %1209 = vst [vmem:[%s4 + $0xfc] sm:$0xf] %v1081
  // Predicated region
  $region18: #{_lambda_.20} parent=0 // pred_check
    _
  $region19: #{_lambda_.20} parent=0 // pred_check_branch
    %1211 = sbr.rel (0) target = $region21
  $region20: #{_lambda_.20} parent=0 // pred_region
    _
  $region21: #{_lambda_.20} parent=0 // pred_fallthru
    _
  // Predicated region
  $region22: #{_lambda_.20} parent=0 // pred_check
    _
  $region23: #{_lambda_.20} parent=0 // pred_check_branch
    %1213 = sbr.rel (0) target = $region25
  $region24: #{_lambda_.20} parent=0 // pred_region
    _
  $region25: #{_lambda_.20} parent=0 // pred_fallthru
    _

// kernel: _lambda_.16
$region0: #{_lambda_.16}
  #allocation0 [shape = 'u32[]', space=smem, size = 0x4, offset = 0x4, fixed_abs, tag = 'smem constant byte address 0x4 - core index']
  #allocation1 [shape = 'u32[144,128]{1,0:T(1,128)}', space=vmem, size = 0x12000, scoped, tag = 'internal scratch']
  %s0 = inlined_call_operand.vmem [shape: bf16[2,342,128], index: 0, kind: input, shape index: {}]
  %s1 = inlined_call_operand.vmem [shape: bf16[3,384,128], index: 1, kind: input, shape index: {}]
  %s2 = inlined_call_operand.vmem [shape: f32[1,128], index: 2, kind: input, shape index: {}]
  %s3 = inlined_call_operand.vmem [shape: bf16[2,288,128], index: 3, kind: output, shape index: {}]
  %s4 = sld [smem:[#allocation0]]
  $region45: #{_lambda_.16} parent=0
    _
  %s6 = ssub.s32 1, %s4
  %s7 = scalar_select 0, %s6, %s4
  loop: start=0, step=1, limit=4
  $region2: #{_lambda_.16} parent=0 // loop_pre_header
    _
  $region3: #{_lambda_.16} parent=0 // loop_header
    %s9 = sphi 0, %s13
    %p10 = scmp.ge.s32.totalorder %s9, 4
    %s16 = sphi 0, %s28
    %s17 = sphi 0, %s24
    %s18 = sphi 0, %s16
    %s19 = sphi 0, %s17
    %s20 = sphi 0, %s18
    %s21 = sphi 0, %s19
    %s31 = sphi 0, %s33
    %s34 = sphi 0, %s31
    %s35 = sphi 0, %s34
    %s51 = sphi 0, %s35
    %s57 = sphi 0, %s59
    %s60 = sphi 0, %s57
    %s61 = sphi 0, %s60
    %s77 = sphi 0, %s61
    %s83 = sphi 0, %s85
    %s86 = sphi 0, %s83
    %s87 = sphi 0, %s86
    %s103 = sphi 0, %s87
    %s111 = sphi 0, %s113
    %s114 = sphi 0, %s111
    %s115 = sphi 0, %s114
    %s131 = sphi 0, %s115
  $region4: #{_lambda_.16} parent=0 // loop_header_branch
    %12 = sbr.rel (%p10) target = $region8
  $region5: #{_lambda_.16} parent=0 // loop_body
    %s14 = ssub.s32 %s9, 1
    %s15 = ssub.s32 %s9, 2
    %s22 = sadd.s32 1, %s17
    %p23 = scmp.ge.s32.totalorder %s22, 1
    %s24 = scalar_select %p23, 0, %s22
    %s25 = sadd.s32 1, %s16
    %s26 = scalar_select %p23, %s25, %s16
    %p27 = scmp.ge.s32.totalorder %s26, 2
    %s28 = scalar_select %p27, 0, %s26
    %s29 = ssub.s32 %s16, %s28
    %p30 = scmp.eq.s32.totalorder %s29, 0
    %s32 = sadd.s32 %s31, 1
    %s33 = scalar_select %p30, %s31, %s32
    %p36 = pneg %p30
    %p37 = scmp.eq.s32.totalorder %s9, 1
    %p38 = por %p36, %p37
    %p39 = scmp.ne.s32.totalorder %s31, %s34
    %p40 = scmp.eq.s32.totalorder %s9, 0
    %p41 = por %p39, %p40
    %p42 = scmp.ne.s32.totalorder %s31, %s34
    %p43 = scmp.eq.s32.totalorder %s14, 1
    %p44 = por %p42, %p43
    %p45 = scmp.ne.s32.totalorder %s34, %s35
    %p46 = scmp.eq.s32.totalorder %s14, 0
    %p47 = por %p45, %p46
    %p48 = scmp.ne.s32.totalorder %s34, %s35
    %p49 = scmp.eq.s32.totalorder %s15, 1
    %p50 = por %p48, %p49
    %p52 = scmp.ne.s32.totalorder %s35, %s51
    %p53 = scmp.eq.s32.totalorder %s15, 0
    %p54 = por %p52, %p53
    %s55 = ssub.s32 %s17, %s24
    %p56 = scmp.eq.s32.totalorder %s55, 0
    %s58 = sadd.s32 %s57, 1
    %s59 = scalar_select %p56, %s57, %s58
    %p62 = pneg %p56
    %p63 = scmp.eq.s32.totalorder %s9, 1
    %p64 = por %p62, %p63
    %p65 = scmp.ne.s32.totalorder %s57, %s60
    %p66 = scmp.eq.s32.totalorder %s9, 0
    %p67 = por %p65, %p66
    %p68 = scmp.ne.s32.totalorder %s57, %s60
    %p69 = scmp.eq.s32.totalorder %s14, 1
    %p70 = por %p68, %p69
    %p71 = scmp.ne.s32.totalorder %s60, %s61
    %p72 = scmp.eq.s32.totalorder %s14, 0
    %p73 = por %p71, %p72
    %p74 = scmp.ne.s32.totalorder %s60, %s61
    %p75 = scmp.eq.s32.totalorder %s15, 1
    %p76 = por %p74, %p75
    %p78 = scmp.ne.s32.totalorder %s61, %s77
    %p79 = scmp.eq.s32.totalorder %s15, 0
    %p80 = por %p78, %p79
    %s81 = ssub.s32 %s17, %s24
    %p82 = scmp.eq.s32.totalorder %s81, 0
    %s84 = sadd.s32 %s83, 1
    %s85 = scalar_select %p82, %s83, %s84
    %p88 = pneg %p82
    %p89 = scmp.eq.s32.totalorder %s9, 1
    %p90 = por %p88, %p89
    %p91 = scmp.ne.s32.totalorder %s83, %s86
    %p92 = scmp.eq.s32.totalorder %s9, 0
    %p93 = por %p91, %p92
    %p94 = scmp.ne.s32.totalorder %s83, %s86
    %p95 = scmp.eq.s32.totalorder %s14, 1
    %p96 = por %p94, %p95
    %p97 = scmp.ne.s32.totalorder %s86, %s87
    %p98 = scmp.eq.s32.totalorder %s14, 0
    %p99 = por %p97, %p98
    %p100 = scmp.ne.s32.totalorder %s86, %s87
    %p101 = scmp.eq.s32.totalorder %s15, 1
    %p102 = por %p100, %p101
    %p104 = scmp.ne.s32.totalorder %s87, %s103
    %p105 = scmp.eq.s32.totalorder %s15, 0
    %p106 = por %p104, %p105
    %s107 = ssub.s32 %s16, %s28
    %s108 = ssub.s32 %s17, %s24
    %s109 = sor.u32 %s107, %s108
    %p110 = scmp.eq.s32.totalorder %s109, 0
    %s112 = sadd.s32 %s111, 1
    %s113 = scalar_select %p110, %s111, %s112
    %p116 = pneg %p110
    %p117 = scmp.eq.s32.totalorder %s9, 1
    %p118 = por %p116, %p117
    %p119 = scmp.ne.s32.totalorder %s111, %s114
    %p120 = scmp.eq.s32.totalorder %s9, 0
    %p121 = por %p119, %p120
    %p122 = scmp.ne.s32.totalorder %s111, %s114
    %p123 = scmp.eq.s32.totalorder %s14, 1
    %p124 = por %p122, %p123
    %p125 = scmp.ne.s32.totalorder %s114, %s115
    %p126 = scmp.eq.s32.totalorder %s14, 0
    %p127 = por %p125, %p126
    %p128 = scmp.ne.s32.totalorder %s114, %s115
    %p129 = scmp.eq.s32.totalorder %s15, 1
    %p130 = por %p128, %p129
    %p132 = scmp.ne.s32.totalorder %s115, %s131
    %p133 = scmp.eq.s32.totalorder %s15, 0
    %p134 = por %p132, %p133
    %p135 = scmp.le.s32.totalorder 1, %s9
    %p136 = scmp.lt.s32.totalorder %s9, 3
    %p137 = pnand %p135, %p136
    %p138 = pneg %p137
    // Predicated region
    $region9: #{_lambda_.16} parent=5 // pred_check
      _
    $region10: #{_lambda_.16} parent=5 // pred_check_branch
      %140 = sbr.rel (%p137) target = $region12
    $region11: #{_lambda_.16} parent=5 // pred_region
      %s141 = ssub.s32 %s9, 1
      // Predicated region
      $region13: #{_lambda_.16} parent=11 // pred_check
        %p142 = pneg %p73
      $region14: #{_lambda_.16} parent=11 // pred_check_branch
        %144 = sbr.rel (%p142) target = $region16
      $region15: #{_lambda_.16} parent=11 // pred_region
        %p145 = scmp.lt.s32.totalorder %s19, 0
        %s146 = scalar_select %p145, %s19, 0
        %s147 = smul.addr %s146, 4
        %s148 = scalar_lea.vmem %s1, %s147
      $region16: #{_lambda_.16} parent=11 // pred_fallthru
        _
      // Predicated region
      $region17: #{_lambda_.16} parent=11 // pred_check
        %p149 = pneg %p99
      $region18: #{_lambda_.16} parent=11 // pred_check_branch
        %151 = sbr.rel (%p149) target = $region20
      $region19: #{_lambda_.16} parent=11 // pred_region
        %p152 = scmp.lt.s32.totalorder %s19, 0
        %s153 = scalar_select %p152, %s19, 0
        %s154 = scalar_lea.vmem %s2, %s153
      $region20: #{_lambda_.16} parent=11 // pred_fallthru
        _
    $region12: #{_lambda_.16} parent=5 // pred_fallthru
      _
    %p155 = scmp.lt.s32.totalorder %s9, 2
    // Predicated region
    $region21: #{_lambda_.16} parent=5 // pred_check
      %p156 = pneg %p155
    $region22: #{_lambda_.16} parent=5 // pred_check_branch
      %158 = sbr.rel (%p156) target = $region24
    $region23: #{_lambda_.16} parent=5 // pred_region
      // Predicated region
      $region25: #{_lambda_.16} parent=23 // pred_check
        %p159 = pneg %p41
      $region26: #{_lambda_.16} parent=23 // pred_check_branch
        %161 = sbr.rel (%p159) target = $region28
      $region27: #{_lambda_.16} parent=23 // pred_region
        %p162 = scmp.lt.s32.totalorder %s16, 1
        %s163 = scalar_select %p162, %s16, 1
        %s164 = smul.addr %s163, 43
        %s165 = smul.addr %s164, 4
        %s166 = scalar_lea.vmem %s0, %s165
      $region28: #{_lambda_.16} parent=23 // pred_fallthru
        _
    $region24: #{_lambda_.16} parent=5 // pred_fallthru
      _
    %p167 = scmp.le.s32.totalorder 1, %s9
    %p168 = scmp.lt.s32.totalorder %s9, 3
    %p169 = pnand %p167, %p168
    %p170 = pneg %p169
    // Predicated region
    $region29: #{_lambda_.16} parent=5 // pred_check
      _
    $region30: #{_lambda_.16} parent=5 // pred_check_branch
      %172 = sbr.rel (%p169) target = $region32
    $region31: #{_lambda_.16} parent=5 // pred_region
      %s173 = ssub.s32 %s9, 1
      %p174 = scmp.lt.s32.totalorder %s18, 1
      %s175 = scalar_select %p174, %s18, 1
      %s176 = smul.addr %s175, 43
      %s177 = smul.addr %s176, 4
      %s178 = scalar_lea.vmem %s0, %s177
      %p179 = pneg %p47
      %p180 = pneg %p44
      %p181 = scmp.lt.s32.totalorder %s19, 0
      %s182 = scalar_select %p181, %s19, 0
      %s183 = smul.addr %s182, 4
      %s184 = scalar_lea.vmem %s1, %s183
      %p185 = pneg %p73
      %p186 = pneg %p70
      %p187 = scmp.lt.s32.totalorder %s19, 0
      %s188 = scalar_select %p187, %s19, 0
      %s189 = scalar_lea.vmem %s2, %s188
      %p190 = pneg %p99
      %p191 = pneg %p96
      %p192 = pneg %p127
      %p193 = pneg %p124
      %p194 = scmp.lt.s32.totalorder %s18, 1
      %s195 = scalar_select %p194, %s18, 1
      %p196 = scmp.lt.s32.totalorder %s19, 0
      %s197 = scalar_select %p196, %s19, 0
      %s198 = smul.addr %s195, 36
      %s199 = sadd.s32 %s197, %s198
      %s200 = smul.addr %s199, 4
      %s201 = scalar_lea.vmem %s3, %s200
      %p202 = scmp.lt.s32.totalorder %s18, 1
      %s203 = scalar_select %p202, %s18, 1
      %s204 = smul.addr %s203, 43
      %s205 = smul.addr %s204, 4
      %s206 = scalar_lea.vmem %s0, %s205
      %p207 = scmp.lt.s32.totalorder %s19, 0
      %s208 = scalar_select %p207, %s19, 0
      %s209 = smul.addr %s208, 4
      %s210 = scalar_lea.vmem %s1, %s209
      %p211 = scmp.lt.s32.totalorder %s19, 0
      %s212 = scalar_select %p211, %s19, 0
      %s213 = scalar_lea.vmem %s2, %s212
      %p214 = scmp.lt.s32.totalorder %s18, 1
      %s215 = scalar_select %p214, %s18, 1
      %p216 = scmp.lt.s32.totalorder %s19, 0
      %s217 = scalar_select %p216, %s19, 0
      %s218 = smul.addr %s215, 36
      %s219 = sadd.s32 %s217, %s218
      %s220 = smul.addr %s219, 4
      %s221 = scalar_lea.vmem %s3, %s220
      %v223 = vld [vmem:[%s206] sm:$0xf]
      %v224 = vld [vmem:[%s206 + $0x4] sm:$0xf]
      %v225 = vld [vmem:[%s206 + $0x8] sm:$0xf]
      %v226 = vld [vmem:[%s206 + $0xc] sm:$0xf]
      %v227 = vld [vmem:[%s206 + $0x10] sm:$0xf]
      %v228 = vld [vmem:[%s206 + $0x14] sm:$0xf]
      %v229 = vld [vmem:[%s206 + $0x18] sm:$0xf]
      %v230 = vld [vmem:[%s206 + $0x1c] sm:$0xf]
      %v231 = vld [vmem:[%s206 + $0x20] sm:$0xf]
      %v232 = vld [vmem:[%s206 + $0x24] sm:$0xf]
      %v233 = vld [vmem:[%s206 + $0x28] sm:$0xf]
      %v234 = vld [vmem:[%s206 + $0x2c] sm:$0xf]
      %v235 = vld [vmem:[%s206 + $0x30] sm:$0xf]
      %v236 = vld [vmem:[%s206 + $0x34] sm:$0xf]
      %v237 = vld [vmem:[%s206 + $0x38] sm:$0xf]
      %v238 = vld [vmem:[%s206 + $0x3c] sm:$0xf]
      %v239 = vld [vmem:[%s206 + $0x40] sm:$0xf]
      %v240 = vld [vmem:[%s206 + $0x44] sm:$0xf]
      %v241 = vld [vmem:[%s206 + $0x48] sm:$0xf]
      %v242 = vld [vmem:[%s206 + $0x4c] sm:$0xf]
      %v243 = vld [vmem:[%s206 + $0x50] sm:$0xf]
      %v244 = vld [vmem:[%s206 + $0x54] sm:$0xf]
      %v245 = vld [vmem:[%s206 + $0x58] sm:$0xf]
      %v246 = vld [vmem:[%s206 + $0x5c] sm:$0xf]
      %v247 = vld [vmem:[%s206 + $0x60] sm:$0xf]
      %v248 = vld [vmem:[%s206 + $0x64] sm:$0xf]
      %v249 = vld [vmem:[%s206 + $0x68] sm:$0xf]
      %v250 = vld [vmem:[%s206 + $0x6c] sm:$0xf]
      %v251 = vld [vmem:[%s206 + $0x70] sm:$0xf]
      %v252 = vld [vmem:[%s206 + $0x74] sm:$0xf]
      %v253 = vld [vmem:[%s206 + $0x78] sm:$0xf]
      %v254 = vld [vmem:[%s206 + $0x7c] sm:$0xf]
      %v255 = vld [vmem:[%s206 + $0x80] sm:$0xf]
      %v256 = vld [vmem:[%s206 + $0x84] sm:$0xf]
      %v257 = vld [vmem:[%s206 + $0x88] sm:$0xf]
      %v258 = vld [vmem:[%s206 + $0x8c] sm:$0xf]
      %v259 = vld [vmem:[%s206 + $0x90] sm:$0x1]
      %v260 = vld [vmem:[%s206] sm:$0xe]
      %v297 = vunpack.c.l.b16 %v223
      %v298 = vunpack.c.l.b16 %v224
      %v299 = vunpack.c.l.b16 %v225
      %v300 = vunpack.c.l.b16 %v226
      %v301 = vunpack.c.l.b16 %v227
      %v302 = vunpack.c.l.b16 %v228
      %v303 = vunpack.c.l.b16 %v229
      %v304 = vunpack.c.l.b16 %v230
      %v305 = vunpack.c.l.b16 %v231
      %v306 = vunpack.c.l.b16 %v232
      %v307 = vunpack.c.l.b16 %v233
      %v308 = vunpack.c.l.b16 %v234
      %v309 = vunpack.c.l.b16 %v235
      %v310 = vunpack.c.l.b16 %v236
      %v311 = vunpack.c.l.b16 %v237
      %v312 = vunpack.c.l.b16 %v238
      %v313 = vunpack.c.l.b16 %v239
      %v314 = vunpack.c.l.b16 %v240
      %v315 = vunpack.c.l.b16 %v241
      %v316 = vunpack.c.l.b16 %v242
      %v317 = vunpack.c.l.b16 %v243
      %v318 = vunpack.c.l.b16 %v244
      %v319 = vunpack.c.l.b16 %v245
      %v320 = vunpack.c.l.b16 %v246
      %v321 = vunpack.c.l.b16 %v247
      %v322 = vunpack.c.l.b16 %v248
      %v323 = vunpack.c.l.b16 %v249
      %v324 = vunpack.c.l.b16 %v250
      %v325 = vunpack.c.l.b16 %v251
      %v326 = vunpack.c.l.b16 %v252
      %v327 = vunpack.c.l.b16 %v253
      %v328 = vunpack.c.l.b16 %v254
      %v329 = vunpack.c.l.b16 %v255
      %v330 = vunpack.c.l.b16 %v256
      %v331 = vunpack.c.l.b16 %v257
      %v332 = vunpack.c.l.b16 %v258
      %v333 = vpack.c.b16 %v298, %v297
      %v334 = vpack.c.b16 %v300, %v299
      %v335 = vpack.c.b16 %v302, %v301
      %v336 = vpack.c.b16 %v304, %v303
      %v337 = vpack.c.b16 %v306, %v305
      %v338 = vpack.c.b16 %v308, %v307
      %v339 = vpack.c.b16 %v310, %v309
      %v340 = vpack.c.b16 %v312, %v311
      %v341 = vpack.c.b16 %v314, %v313
      %v342 = vpack.c.b16 %v316, %v315
      %v343 = vpack.c.b16 %v318, %v317
      %v344 = vpack.c.b16 %v320, %v319
      %v345 = vpack.c.b16 %v322, %v321
      %v346 = vpack.c.b16 %v324, %v323
      %v347 = vpack.c.b16 %v326, %v325
      %v348 = vpack.c.b16 %v328, %v327
      %v349 = vpack.c.b16 %v330, %v329
      %v350 = vpack.c.b16 %v332, %v331
      %v370 = vunpack.c.l.b16 %v259
      %v371 = vpack.c.b16 %v370, %v370
      %vm372 = vsmask.f32 7424
      %v374 = vshrl.u32 %v333, 16
      %v376 = vshll.u32 %v333, 16
      %v378 = vrot.slane %v376, 1
      %v379 = vor.u32 %v374, %v378
      %v381 = vshll.u32 %v334, 16
      %v383 = vrot.slane %v381, 1
      %v384 = vsel %vm372, %v379, %v383
      %v385 = vshrl.u32 %v334, 16
      %v387 = vor.u32 %v385, %v383
      %v389 = vshll.u32 %v335, 16
      %v391 = vrot.slane %v389, 1
      %v392 = vsel %vm372, %v387, %v391
      %v393 = vshrl.u32 %v335, 16
      %v395 = vor.u32 %v393, %v391
      %v397 = vshll.u32 %v336, 16
      %v399 = vrot.slane %v397, 1
      %v400 = vsel %vm372, %v395, %v399
      %v401 = vshrl.u32 %v336, 16
      %v403 = vor.u32 %v401, %v399
      %v405 = vshll.u32 %v337, 16
      %v407 = vrot.slane %v405, 1
      %v408 = vsel %vm372, %v403, %v407
      %v409 = vshrl.u32 %v337, 16
      %v411 = vor.u32 %v409, %v407
      %v413 = vshll.u32 %v338, 16
      %v415 = vrot.slane %v413, 1
      %v416 = vsel %vm372, %v411, %v415
      %v417 = vshrl.u32 %v338, 16
      %v419 = vor.u32 %v417, %v415
      %v421 = vshll.u32 %v339, 16
      %v423 = vrot.slane %v421, 1
      %v424 = vsel %vm372, %v419, %v423
      %v425 = vshrl.u32 %v339, 16
      %v427 = vor.u32 %v425, %v423
      %v429 = vshll.u32 %v340, 16
      %v431 = vrot.slane %v429, 1
      %v432 = vsel %vm372, %v427, %v431
      %v433 = vshrl.u32 %v340, 16
      %v435 = vor.u32 %v433, %v431
      %v437 = vshll.u32 %v341, 16
      %v439 = vrot.slane %v437, 1
      %v440 = vsel %vm372, %v435, %v439
      %v441 = vshrl.u32 %v341, 16
      %v443 = vor.u32 %v441, %v439
      %v445 = vshll.u32 %v342, 16
      %v447 = vrot.slane %v445, 1
      %v448 = vsel %vm372, %v443, %v447
      %v449 = vshrl.u32 %v342, 16
      %v451 = vor.u32 %v449, %v447
      %v453 = vshll.u32 %v343, 16
      %v455 = vrot.slane %v453, 1
      %v456 = vsel %vm372, %v451, %v455
      %v457 = vshrl.u32 %v343, 16
      %v459 = vor.u32 %v457, %v455
      %v461 = vshll.u32 %v344, 16
      %v463 = vrot.slane %v461, 1
      %v464 = vsel %vm372, %v459, %v463
      %v465 = vshrl.u32 %v344, 16
      %v467 = vor.u32 %v465, %v463
      %v469 = vshll.u32 %v345, 16
      %v471 = vrot.slane %v469, 1
      %v472 = vsel %vm372, %v467, %v471
      %v473 = vshrl.u32 %v345, 16
      %v475 = vor.u32 %v473, %v471
      %v477 = vshll.u32 %v346, 16
      %v479 = vrot.slane %v477, 1
      %v480 = vsel %vm372, %v475, %v479
      %v481 = vshrl.u32 %v346, 16
      %v483 = vor.u32 %v481, %v479
      %v485 = vshll.u32 %v347, 16
      %v487 = vrot.slane %v485, 1
      %v488 = vsel %vm372, %v483, %v487
      %v489 = vshrl.u32 %v347, 16
      %v491 = vor.u32 %v489, %v487
      %v493 = vshll.u32 %v348, 16
      %v495 = vrot.slane %v493, 1
      %v496 = vsel %vm372, %v491, %v495
      %v497 = vshrl.u32 %v348, 16
      %v499 = vor.u32 %v497, %v495
      %v501 = vshll.u32 %v349, 16
      %v503 = vrot.slane %v501, 1
      %v504 = vsel %vm372, %v499, %v503
      %v505 = vshrl.u32 %v349, 16
      %v507 = vor.u32 %v505, %v503
      %v509 = vshll.u32 %v350, 16
      %v511 = vrot.slane %v509, 1
      %v512 = vsel %vm372, %v507, %v511
      %v513 = vshrl.u32 %v350, 16
      %v515 = vor.u32 %v513, %v511
      %v517 = vshll.u32 %v371, 16
      %v519 = vrot.slane %v517, 1
      %v520 = vsel %vm372, %v515, %v519
      %v540 = vunpack.c.l.b16 %v260
      %v541 = vpack.c.b16 %v298, %v540
      %vm542 = vcmask 1046528
      %v543 = vrot.slane %v541, 1
      %v544 = vrot.slane %v334, 1
      %v545 = vsel %vm542, %v543, %v544
      %v546 = vrot.slane %v335, 1
      %v547 = vsel %vm542, %v544, %v546
      %v548 = vrot.slane %v336, 1
      %v549 = vsel %vm542, %v546, %v548
      %v550 = vrot.slane %v337, 1
      %v551 = vsel %vm542, %v548, %v550
      %v552 = vrot.slane %v338, 1
      %v553 = vsel %vm542, %v550, %v552
      %v554 = vrot.slane %v339, 1
      %v555 = vsel %vm542, %v552, %v554
      %v556 = vrot.slane %v340, 1
      %v557 = vsel %vm542, %v554, %v556
      %v558 = vrot.slane %v341, 1
      %v559 = vsel %vm542, %v556, %v558
      %v560 = vrot.slane %v342, 1
      %v561 = vsel %vm542, %v558, %v560
      %v562 = vrot.slane %v343, 1
      %v563 = vsel %vm542, %v560, %v562
      %v564 = vrot.slane %v344, 1
      %v565 = vsel %vm542, %v562, %v564
      %v566 = vrot.slane %v345, 1
      %v567 = vsel %vm542, %v564, %v566
      %v568 = vrot.slane %v346, 1
      %v569 = vsel %vm542, %v566, %v568
      %v570 = vrot.slane %v347, 1
      %v571 = vsel %vm542, %v568, %v570
      %v572 = vrot.slane %v348, 1
      %v573 = vsel %vm542, %v570, %v572
      %v574 = vrot.slane %v349, 1
      %v575 = vsel %vm542, %v572, %v574
      %v576 = vrot.slane %v350, 1
      %v577 = vsel %vm542, %v574, %v576
      %v578 = vrot.slane %v371, 1
      %v579 = vsel %vm542, %v576, %v578
      %v598 = vld [vmem:[%s210] sm:$0xf]
      %v599 = vld [vmem:[%s210 + $0x4] sm:$0xf]
      %v600 = vld [vmem:[%s210 + $0x8] sm:$0xf]
      %v601 = vld [vmem:[%s210 + $0xc] sm:$0xf]
      %v602 = vld [vmem:[%s210 + $0x10] sm:$0xf]
      %v603 = vld [vmem:[%s210 + $0x14] sm:$0xf]
      %v604 = vld [vmem:[%s210 + $0x18] sm:$0xf]
      %v605 = vld [vmem:[%s210 + $0x1c] sm:$0xf]
      %v606 = vld [vmem:[%s210 + $0x20] sm:$0xf]
      %v607 = vld [vmem:[%s210 + $0x24] sm:$0xf]
      %v608 = vld [vmem:[%s210 + $0x28] sm:$0xf]
      %v609 = vld [vmem:[%s210 + $0x2c] sm:$0xf]
      %v610 = vld [vmem:[%s210 + $0x30] sm:$0xf]
      %v611 = vld [vmem:[%s210 + $0x34] sm:$0xf]
      %v612 = vld [vmem:[%s210 + $0x38] sm:$0xf]
      %v613 = vld [vmem:[%s210 + $0x3c] sm:$0xf]
      %v614 = vld [vmem:[%s210 + $0x40] sm:$0xf]
      %v615 = vld [vmem:[%s210 + $0x44] sm:$0xf]
      %v616 = vld [vmem:[%s210 + $0x48] sm:$0xf]
      %v617 = vld [vmem:[%s210 + $0x4c] sm:$0xf]
      %v618 = vld [vmem:[%s210 + $0x50] sm:$0xf]
      %v619 = vld [vmem:[%s210 + $0x54] sm:$0xf]
      %v620 = vld [vmem:[%s210 + $0x58] sm:$0xf]
      %v621 = vld [vmem:[%s210 + $0x5c] sm:$0xf]
      %v622 = vld [vmem:[%s210 + $0x60] sm:$0xf]
      %v623 = vld [vmem:[%s210 + $0x64] sm:$0xf]
      %v624 = vld [vmem:[%s210 + $0x68] sm:$0xf]
      %v625 = vld [vmem:[%s210 + $0x6c] sm:$0xf]
      %v626 = vld [vmem:[%s210 + $0x70] sm:$0xf]
      %v627 = vld [vmem:[%s210 + $0x74] sm:$0xf]
      %v628 = vld [vmem:[%s210 + $0x78] sm:$0xf]
      %v629 = vld [vmem:[%s210 + $0x7c] sm:$0xf]
      %v630 = vld [vmem:[%s210 + $0x80] sm:$0xf]
      %v631 = vld [vmem:[%s210 + $0x84] sm:$0xf]
      %v632 = vld [vmem:[%s210 + $0x88] sm:$0xf]
      %v633 = vld [vmem:[%s210 + $0x8c] sm:$0xf]
      %v634 = vld [vmem:[%s210 + $0x90] sm:$0xf]
      %v635 = vld [vmem:[%s210 + $0x94] sm:$0xf]
      %v636 = vld [vmem:[%s210 + $0x98] sm:$0xf]
      %v637 = vld [vmem:[%s210 + $0x9c] sm:$0xf]
      %v638 = vld [vmem:[%s210 + $0xa0] sm:$0xf]
      %v639 = vld [vmem:[%s210 + $0xa4] sm:$0xf]
      %v640 = vld [vmem:[%s210 + $0xa8] sm:$0xf]
      %v641 = vld [vmem:[%s210 + $0xac] sm:$0xf]
      %v642 = vld [vmem:[%s210 + $0xb0] sm:$0xf]
      %v643 = vld [vmem:[%s210 + $0xb4] sm:$0xf]
      %v644 = vld [vmem:[%s210 + $0xb8] sm:$0xf]
      %v645 = vld [vmem:[%s210 + $0xbc] sm:$0xf]
      %v646 = vld [vmem:[%s206 + $0x8] sm:$0xe]
      %v647 = vld [vmem:[%s206 + $0x90] sm:$0xf]
      %v648 = vld [vmem:[%s206 + $0x94] sm:$0xf]
      %v649 = vld [vmem:[%s206 + $0x98] sm:$0x1]
      %v650 = vld [vmem:[%s206 + $0x98] sm:$0x3]
      %v651 = vld [vmem:[%s206 + $0x8] sm:$0xc]
      %v656 = vunpack.c.l.b16 %v646
      %v657 = vunpack.c.l.b16 %v647
      %v658 = vunpack.c.l.b16 %v648
      %v659 = vunpack.c.l.b16 %v649
      %v660 = vpack.c.b16 %v300, %v656
      %v661 = vpack.c.b16 %v658, %v657
      %v662 = vpack.c.b16 %v659, %v659
      %v664 = vunpack.c.l.b16 %v650
      %v665 = vpack.c.b16 %v664, %v664
      %v667 = vshrl.u32 %v660, 16
      %v669 = vshll.u32 %v660, 16
      %v671 = vrot.slane %v669, 1
      %v672 = vor.u32 %v667, %v671
      %v673 = vsel %vm372, %v672, %v391
      %v675 = vshll.u32 %v661, 16
      %v677 = vrot.slane %v675, 1
      %v678 = vsel %vm372, %v515, %v677
      %v679 = vshrl.u32 %v661, 16
      %v681 = vor.u32 %v679, %v677
      %v683 = vshll.u32 %v665, 16
      %v685 = vrot.slane %v683, 1
      %v686 = vsel %vm372, %v681, %v685
      %v687 = vshrl.u32 %v665, 16
      %v689 = vor.u32 %v687, %v685
      %v691 = vunpack.c.l.b16 %v651
      %v692 = vpack.c.b16 %v300, %v691
      %v693 = vrot.slane %v692, 1
      %v694 = vsel %vm542, %v693, %v546
      %v695 = vrot.slane %v661, 1
      %v696 = vsel %vm542, %v576, %v695
      %v697 = vrot.slane %v665, 1
      %v698 = vsel %vm542, %v695, %v697
      %s699 = scalar_lea.vmem %s210, 192
      %v700 = vld [vmem:[%s699] sm:$0xf]
      %v701 = vld [vmem:[%s699 + $0x4] sm:$0xf]
      %v702 = vld [vmem:[%s699 + $0x8] sm:$0xf]
      %v703 = vld [vmem:[%s699 + $0xc] sm:$0xf]
      %v704 = vld [vmem:[%s699 + $0x10] sm:$0xf]
      %v705 = vld [vmem:[%s699 + $0x14] sm:$0xf]
      %v706 = vld [vmem:[%s699 + $0x18] sm:$0xf]
      %v707 = vld [vmem:[%s699 + $0x1c] sm:$0xf]
      %v708 = vld [vmem:[%s699 + $0x20] sm:$0xf]
      %v709 = vld [vmem:[%s699 + $0x24] sm:$0xf]
      %v710 = vld [vmem:[%s699 + $0x28] sm:$0xf]
      %v711 = vld [vmem:[%s699 + $0x2c] sm:$0xf]
      %v712 = vld [vmem:[%s699 + $0x30] sm:$0xf]
      %v713 = vld [vmem:[%s699 + $0x34] sm:$0xf]
      %v714 = vld [vmem:[%s699 + $0x38] sm:$0xf]
      %v715 = vld [vmem:[%s699 + $0x3c] sm:$0xf]
      %v716 = vld [vmem:[%s699 + $0x40] sm:$0xf]
      %v717 = vld [vmem:[%s699 + $0x44] sm:$0xf]
      %v718 = vld [vmem:[%s699 + $0x48] sm:$0xf]
      %v719 = vld [vmem:[%s699 + $0x4c] sm:$0xf]
      %v720 = vld [vmem:[%s699 + $0x50] sm:$0xf]
      %v721 = vld [vmem:[%s699 + $0x54] sm:$0xf]
      %v722 = vld [vmem:[%s699 + $0x58] sm:$0xf]
      %v723 = vld [vmem:[%s699 + $0x5c] sm:$0xf]
      %v724 = vld [vmem:[%s699 + $0x60] sm:$0xf]
      %v725 = vld [vmem:[%s699 + $0x64] sm:$0xf]
      %v726 = vld [vmem:[%s699 + $0x68] sm:$0xf]
      %v727 = vld [vmem:[%s699 + $0x6c] sm:$0xf]
      %v728 = vld [vmem:[%s699 + $0x70] sm:$0xf]
      %v729 = vld [vmem:[%s699 + $0x74] sm:$0xf]
      %v730 = vld [vmem:[%s699 + $0x78] sm:$0xf]
      %v731 = vld [vmem:[%s699 + $0x7c] sm:$0xf]
      %v732 = vld [vmem:[%s699 + $0x80] sm:$0xf]
      %v733 = vld [vmem:[%s699 + $0x84] sm:$0xf]
      %v734 = vld [vmem:[%s699 + $0x88] sm:$0xf]
      %v735 = vld [vmem:[%s699 + $0x8c] sm:$0xf]
      %v736 = vld [vmem:[%s699 + $0x90] sm:$0xf]
      %v737 = vld [vmem:[%s699 + $0x94] sm:$0xf]
      %v738 = vld [vmem:[%s699 + $0x98] sm:$0xf]
      %v739 = vld [vmem:[%s699 + $0x9c] sm:$0xf]
      %v740 = vld [vmem:[%s699 + $0xa0] sm:$0xf]
      %v741 = vld [vmem:[%s699 + $0xa4] sm:$0xf]
      %v742 = vld [vmem:[%s699 + $0xa8] sm:$0xf]
      %v743 = vld [vmem:[%s699 + $0xac] sm:$0xf]
      %v744 = vld [vmem:[%s699 + $0xb0] sm:$0xf]
      %v745 = vld [vmem:[%s699 + $0xb4] sm:$0xf]
      %v746 = vld [vmem:[%s699 + $0xb8] sm:$0xf]
      %v747 = vld [vmem:[%s699 + $0xbc] sm:$0xf]
      %v748 = vrot.slane %v660, 1
      %v749 = vsel %vm542, %v748, %v546
      %v750 = vrot.slane %v673, 1
      %v751 = vrot.slane %v400, 1
      %v752 = vsel %vm542, %v750, %v751
      %v753 = vrot.slane %v694, 1
      %v754 = vrot.slane %v549, 1
      %v755 = vsel %vm542, %v753, %v754
      %v756 = vrot.slane %v408, 1
      %v757 = vsel %vm542, %v751, %v756
      %v758 = vrot.slane %v551, 1
      %v759 = vsel %vm542, %v754, %v758
      %v760 = vrot.slane %v416, 1
      %v761 = vsel %vm542, %v756, %v760
      %v762 = vrot.slane %v553, 1
      %v763 = vsel %vm542, %v758, %v762
      %v764 = vrot.slane %v424, 1
      %v765 = vsel %vm542, %v760, %v764
      %v766 = vrot.slane %v555, 1
      %v767 = vsel %vm542, %v762, %v766
      %v768 = vrot.slane %v432, 1
      %v769 = vsel %vm542, %v764, %v768
      %v770 = vrot.slane %v557, 1
      %v771 = vsel %vm542, %v766, %v770
      %v772 = vrot.slane %v440, 1
      %v773 = vsel %vm542, %v768, %v772
      %v774 = vrot.slane %v559, 1
      %v775 = vsel %vm542, %v770, %v774
      %v776 = vrot.slane %v448, 1
      %v777 = vsel %vm542, %v772, %v776
      %v778 = vrot.slane %v561, 1
      %v779 = vsel %vm542, %v774, %v778
      %v780 = vrot.slane %v456, 1
      %v781 = vsel %vm542, %v776, %v780
      %v782 = vrot.slane %v563, 1
      %v783 = vsel %vm542, %v778, %v782
      %v784 = vrot.slane %v464, 1
      %v785 = vsel %vm542, %v780, %v784
      %v786 = vrot.slane %v565, 1
      %v787 = vsel %vm542, %v782, %v786
      %v788 = vrot.slane %v472, 1
      %v789 = vsel %vm542, %v784, %v788
      %v790 = vrot.slane %v567, 1
      %v791 = vsel %vm542, %v786, %v790
      %v792 = vrot.slane %v480, 1
      %v793 = vsel %vm542, %v788, %v792
      %v794 = vrot.slane %v569, 1
      %v795 = vsel %vm542, %v790, %v794
      %v796 = vrot.slane %v488, 1
      %v797 = vsel %vm542, %v792, %v796
      %v798 = vrot.slane %v571, 1
      %v799 = vsel %vm542, %v794, %v798
      %v800 = vrot.slane %v496, 1
      %v801 = vsel %vm542, %v796, %v800
      %v802 = vrot.slane %v573, 1
      %v803 = vsel %vm542, %v798, %v802
      %v804 = vrot.slane %v504, 1
      %v805 = vsel %vm542, %v800, %v804
      %v806 = vrot.slane %v575, 1
      %v807 = vsel %vm542, %v802, %v806
      %v808 = vrot.slane %v512, 1
      %v809 = vsel %vm542, %v804, %v808
      %v810 = vrot.slane %v577, 1
      %v811 = vsel %vm542, %v806, %v810
      %v812 = vrot.slane %v678, 1
      %v813 = vsel %vm542, %v808, %v812
      %v814 = vrot.slane %v696, 1
      %v815 = vsel %vm542, %v810, %v814
      %v816 = vrot.slane %v686, 1
      %v817 = vsel %vm542, %v812, %v816
      %v818 = vrot.slane %v698, 1
      %v819 = vsel %vm542, %v814, %v818
      %v820 = vrot.slane %v662, 1
      %v821 = vsel %vm542, %v695, %v820
      %v822 = vrot.slane %v689, 1
      %v823 = vsel %vm542, %v816, %v822
      %v824 = vrot.slane %v697, 1
      %v825 = vsel %vm542, %v818, %v824
      %v913 = vunpack.c.l.b16 %v700
      %v914 = vunpack.c.l.b16 %v701
      %v915 = vunpack.c.l.b16 %v702
      %v916 = vunpack.c.l.b16 %v703
      %v917 = vunpack.c.l.b16 %v704
      %v918 = vunpack.c.l.b16 %v705
      %v919 = vunpack.c.l.b16 %v706
      %v920 = vunpack.c.l.b16 %v707
      %v921 = vunpack.c.l.b16 %v708
      %v922 = vunpack.c.l.b16 %v709
      %v923 = vunpack.c.l.b16 %v710
      %v924 = vunpack.c.l.b16 %v711
      %v925 = vunpack.c.l.b16 %v712
      %v926 = vunpack.c.l.b16 %v713
      %v927 = vunpack.c.l.b16 %v714
      %v928 = vunpack.c.l.b16 %v715
      %v929 = vunpack.c.l.b16 %v716
      %v930 = vunpack.c.l.b16 %v717
      %v931 = vunpack.c.l.b16 %v718
      %v932 = vunpack.c.l.b16 %v719
      %v933 = vunpack.c.l.b16 %v720
      %v934 = vunpack.c.l.b16 %v721
      %v935 = vunpack.c.l.b16 %v722
      %v936 = vunpack.c.l.b16 %v723
      %v937 = vunpack.c.l.b16 %v724
      %v938 = vunpack.c.l.b16 %v725
      %v939 = vunpack.c.l.b16 %v726
      %v940 = vunpack.c.l.b16 %v727
      %v941 = vunpack.c.l.b16 %v728
      %v942 = vunpack.c.l.b16 %v729
      %v943 = vunpack.c.l.b16 %v730
      %v944 = vunpack.c.l.b16 %v731
      %v945 = vunpack.c.l.b16 %v732
      %v946 = vunpack.c.l.b16 %v733
      %v947 = vunpack.c.l.b16 %v734
      %v948 = vunpack.c.l.b16 %v735
      %v949 = vunpack.c.l.b16 %v736
      %v950 = vunpack.c.l.b16 %v737
      %v951 = vunpack.c.l.b16 %v738
      %v952 = vunpack.c.l.b16 %v739
      %v953 = vunpack.c.l.b16 %v740
      %v954 = vunpack.c.l.b16 %v741
      %v955 = vunpack.c.l.b16 %v742
      %v956 = vunpack.c.l.b16 %v743
      %v957 = vunpack.c.l.b16 %v744
      %v958 = vunpack.c.l.b16 %v745
      %v959 = vunpack.c.l.b16 %v746
      %v960 = vunpack.c.l.b16 %v747
      %v961 = vpack.c.b16 %v914, %v913
      %v962 = vpack.c.b16 %v916, %v915
      %v963 = vpack.c.b16 %v918, %v917
      %v964 = vpack.c.b16 %v920, %v919
      %v965 = vpack.c.b16 %v922, %v921
      %v966 = vpack.c.b16 %v924, %v923
      %v967 = vpack.c.b16 %v926, %v925
      %v968 = vpack.c.b16 %v928, %v927
      %v969 = vpack.c.b16 %v930, %v929
      %v970 = vpack.c.b16 %v932, %v931
      %v971 = vpack.c.b16 %v934, %v933
      %v972 = vpack.c.b16 %v936, %v935
      %v973 = vpack.c.b16 %v938, %v937
      %v974 = vpack.c.b16 %v940, %v939
      %v975 = vpack.c.b16 %v942, %v941
      %v976 = vpack.c.b16 %v944, %v943
      %v977 = vpack.c.b16 %v946, %v945
      %v978 = vpack.c.b16 %v948, %v947
      %v979 = vpack.c.b16 %v950, %v949
      %v980 = vpack.c.b16 %v952, %v951
      %v981 = vpack.c.b16 %v954, %v953
      %v982 = vpack.c.b16 %v956, %v955
      %v983 = vpack.c.b16 %v958, %v957
      %v984 = vpack.c.b16 %v960, %v959
      %1009 = vmatprep.subr.bf16.mxu0 0
      %1010 = vmatpush1.bf16.msra.mxu0 %v968
      %1011 = vmatprep.subr.bf16.mxu0 0
      %1012 = vmatpush1.bf16.msra.mxu0 %v967
      %1013 = vmatprep.subr.bf16.mxu0 0
      %1014 = vmatpush1.bf16.msra.mxu0 %v966
      %1015 = vmatprep.subr.bf16.mxu0 0
      %1016 = vmatpush1.bf16.msra.mxu0 %v965
      %1017 = vmatprep.subr.bf16.mxu0 0
      %1018 = vmatpush1.bf16.msra.mxu0 %v964
      %1019 = vmatprep.subr.bf16.mxu0 0
      %1020 = vmatpush1.bf16.msra.mxu0 %v963
      %1021 = vmatprep.subr.bf16.mxu0 0
      %1022 = vmatpush1.bf16.msra.mxu0 %v962
      %1023 = vmatprep.subr.bf16.mxu0 0
      %1024 = vmatpush1.bf16.msra.mxu0 %v961
      %1025 = vmatprep.subr.bf16.mxu0 0
      %1026 = vmatpush2.bf16.msra.mxu0 %v976
      %1027 = vmatprep.subr.bf16.mxu0 0
      %1028 = vmatpush2.bf16.msra.mxu0 %v975
      %1029 = vmatprep.subr.bf16.mxu0 0
      %1030 = vmatpush2.bf16.msra.mxu0 %v974
      %1031 = vmatprep.subr.bf16.mxu0 0
      %1032 = vmatpush2.bf16.msra.mxu0 %v973
      %1033 = vmatprep.subr.bf16.mxu0 0
      %1034 = vmatpush2.bf16.msra.mxu0 %v972
      %1035 = vmatprep.subr.bf16.mxu0 0
      %1036 = vmatpush2.bf16.msra.mxu0 %v971
      %1037 = vmatprep.subr.bf16.mxu0 0
      %1038 = vmatpush2.bf16.msra.mxu0 %v970
      %1039 = vmatprep.subr.bf16.mxu0 0
      %1040 = vmatpush2.bf16.msra.mxu0 %v969
      %1041 = vmatprep.mubr.bf16.mxu0 %v752
      %1042 = vmatmul.mubr.bf16.gmra.mxu0 %v749
      %v1043 = vpop.f32.mrf.mxu0
      %v1044 = vadd.f32 0.0, %v1043
      %v1045 = vpop.f32.mrf.mxu0
      %v1046 = vpop.f32.mrf.mxu0
      %v1047 = vadd.f32 0.0, %v1046
      %v1048 = vpop.f32.mrf.mxu0
      %1049 = vmatprep.mubr.bf16.mxu0 %v757
      %1050 = vmatmul.mubr.bf16.gmra.mxu0 %v549
      %v1051 = vpop.f32.mrf.mxu0
      %v1052 = vadd.f32 0.0, %v1051
      %v1053 = vpop.f32.mrf.mxu0
      %v1054 = vpop.f32.mrf.mxu0
      %v1055 = vadd.f32 0.0, %v1054
      %v1056 = vpop.f32.mrf.mxu0
      %1057 = vmatprep.mubr.bf16.mxu0 %v761
      %1058 = vmatmul.mubr.bf16.gmra.mxu0 %v551
      %v1059 = vpop.f32.mrf.mxu0
      %v1060 = vadd.f32 0.0, %v1059
      %v1061 = vpop.f32.mrf.mxu0
      %v1062 = vpop.f32.mrf.mxu0
      %v1063 = vadd.f32 0.0, %v1062
      %v1064 = vpop.f32.mrf.mxu0
      %1065 = vmatprep.mubr.bf16.mxu0 %v765
      %1066 = vmatmul.mubr.bf16.gmra.mxu0 %v553
      %v1067 = vpop.f32.mrf.mxu0
      %v1068 = vadd.f32 0.0, %v1067
      %v1069 = vpop.f32.mrf.mxu0
      %v1070 = vpop.f32.mrf.mxu0
      %v1071 = vadd.f32 0.0, %v1070
      %v1072 = vpop.f32.mrf.mxu0
      %1073 = vmatprep.mubr.bf16.mxu0 %v769
      %1074 = vmatmul.mubr.bf16.gmra.mxu0 %v555
      %v1075 = vpop.f32.mrf.mxu0
      %v1076 = vadd.f32 0.0, %v1075
      %v1077 = vpop.f32.mrf.mxu0
      %v1078 = vpop.f32.mrf.mxu0
      %v1079 = vadd.f32 0.0, %v1078
      %v1080 = vpop.f32.mrf.mxu0
      %1081 = vmatprep.mubr.bf16.mxu0 %v773
      %1082 = vmatmul.mubr.bf16.gmra.mxu0 %v557
      %v1083 = vpop.f32.mrf.mxu0
      %v1084 = vadd.f32 0.0, %v1083
      %v1085 = vpop.f32.mrf.mxu0
      %v1086 = vpop.f32.mrf.mxu0
      %v1087 = vadd.f32 0.0, %v1086
      %v1088 = vpop.f32.mrf.mxu0
      %1089 = vmatprep.mubr.bf16.mxu0 %v777
      %1090 = vmatmul.mubr.bf16.gmra.mxu0 %v559
      %v1091 = vpop.f32.mrf.mxu0
      %v1092 = vadd.f32 0.0, %v1091
      %v1093 = vpop.f32.mrf.mxu0
      %v1094 = vpop.f32.mrf.mxu0
      %v1095 = vadd.f32 0.0, %v1094
      %v1096 = vpop.f32.mrf.mxu0
      %1097 = vmatprep.mubr.bf16.mxu0 %v781
      %1098 = vmatmul.mubr.bf16.gmra.mxu0 %v561
      %v1099 = vpop.f32.mrf.mxu0
      %v1100 = vadd.f32 0.0, %v1099
      %v1101 = vpop.f32.mrf.mxu0
      %v1102 = vpop.f32.mrf.mxu0
      %v1103 = vadd.f32 0.0, %v1102
      %v1104 = vpop.f32.mrf.mxu0
      %1105 = vmatprep.mubr.bf16.mxu0 %v785
      %1106 = vmatmul.mubr.bf16.gmra.mxu0 %v563
      %v1107 = vpop.f32.mrf.mxu0
      %v1108 = vadd.f32 0.0, %v1107
      %v1109 = vpop.f32.mrf.mxu0
      %v1110 = vpop.f32.mrf.mxu0
      %v1111 = vadd.f32 0.0, %v1110
      %v1112 = vpop.f32.mrf.mxu0
      %1113 = vmatprep.mubr.bf16.mxu0 %v789
      %1114 = vmatmul.mubr.bf16.gmra.mxu0 %v565
      %v1115 = vpop.f32.mrf.mxu0
      %v1116 = vadd.f32 0.0, %v1115
      %v1117 = vpop.f32.mrf.mxu0
      %v1118 = vpop.f32.mrf.mxu0
      %v1119 = vadd.f32 0.0, %v1118
      %v1120 = vpop.f32.mrf.mxu0
      %1121 = vmatprep.mubr.bf16.mxu0 %v793
      %1122 = vmatmul.mubr.bf16.gmra.mxu0 %v567
      %v1123 = vpop.f32.mrf.mxu0
      %v1124 = vadd.f32 0.0, %v1123
      %v1125 = vpop.f32.mrf.mxu0
      %v1126 = vpop.f32.mrf.mxu0
      %v1127 = vadd.f32 0.0, %v1126
      %v1128 = vpop.f32.mrf.mxu0
      %1129 = vmatprep.mubr.bf16.mxu0 %v797
      %1130 = vmatmul.mubr.bf16.gmra.mxu0 %v569
      %v1131 = vpop.f32.mrf.mxu0
      %v1132 = vadd.f32 0.0, %v1131
      %v1133 = vpop.f32.mrf.mxu0
      %v1134 = vpop.f32.mrf.mxu0
      %v1135 = vadd.f32 0.0, %v1134
      %v1136 = vpop.f32.mrf.mxu0
      %1137 = vmatprep.mubr.bf16.mxu0 %v801
      %1138 = vmatmul.mubr.bf16.gmra.mxu0 %v571
      %v1139 = vpop.f32.mrf.mxu0
      %v1140 = vadd.f32 0.0, %v1139
      %v1141 = vpop.f32.mrf.mxu0
      %v1142 = vpop.f32.mrf.mxu0
      %v1143 = vadd.f32 0.0, %v1142
      %v1144 = vpop.f32.mrf.mxu0
      %1145 = vmatprep.mubr.bf16.mxu0 %v805
      %1146 = vmatmul.mubr.bf16.gmra.mxu0 %v573
      %v1147 = vpop.f32.mrf.mxu0
      %v1148 = vadd.f32 0.0, %v1147
      %v1149 = vpop.f32.mrf.mxu0
      %v1150 = vpop.f32.mrf.mxu0
      %v1151 = vadd.f32 0.0, %v1150
      %v1152 = vpop.f32.mrf.mxu0
      %1153 = vmatprep.mubr.bf16.mxu0 %v809
      %1154 = vmatmul.mubr.bf16.gmra.mxu0 %v575
      %v1155 = vpop.f32.mrf.mxu0
      %v1156 = vadd.f32 0.0, %v1155
      %v1157 = vpop.f32.mrf.mxu0
      %v1158 = vpop.f32.mrf.mxu0
      %v1159 = vadd.f32 0.0, %v1158
      %v1160 = vpop.f32.mrf.mxu0
      %1161 = vmatprep.mubr.bf16.mxu0 %v813
      %1162 = vmatmul.mubr.bf16.gmra.mxu0 %v577
      %v1163 = vpop.f32.mrf.mxu0
      %v1164 = vadd.f32 0.0, %v1163
      %v1165 = vpop.f32.mrf.mxu0
      %v1166 = vpop.f32.mrf.mxu0
      %v1167 = vadd.f32 0.0, %v1166
      %v1168 = vpop.f32.mrf.mxu0
      %1169 = vmatprep.mubr.bf16.mxu0 %v817
      %1170 = vmatmul.mubr.bf16.gmra.mxu0 %v696
      %v1171 = vpop.f32.mrf.mxu0
      %v1172 = vadd.f32 0.0, %v1171
      %v1173 = vpop.f32.mrf.mxu0
      %v1174 = vpop.f32.mrf.mxu0
      %v1175 = vadd.f32 0.0, %v1174
      %v1176 = vpop.f32.mrf.mxu0
      %1177 = vmatprep.mubr.bf16.mxu0 %v823
      %1178 = vmatmul.mubr.bf16.gmra.mxu0 %v821
      %v1179 = vpop.f32.mrf.mxu0
      %v1180 = vadd.f32 0.0, %v1179
      %v1181 = vpop.f32.mrf.mxu0
      %v1182 = vpop.f32.mrf.mxu0
      %v1183 = vadd.f32 0.0, %v1182
      %v1184 = vpop.f32.mrf.mxu0
      %1185 = vdwg.mxu0
      %1186 = vmatprep.subr.bf16.mxu0 0
      %1187 = vmatpush1.bf16.msra.mxu0 %v984
      %1188 = vmatprep.subr.bf16.mxu0 0
      %1189 = vmatpush1.bf16.msra.mxu0 %v983
      %1190 = vmatprep.subr.bf16.mxu0 0
      %1191 = vmatpush1.bf16.msra.mxu0 %v982
      %1192 = vmatprep.subr.bf16.mxu0 0
      %1193 = vmatpush1.bf16.msra.mxu0 %v981
      %1194 = vmatprep.subr.bf16.mxu0 0
      %1195 = vmatpush1.bf16.msra.mxu0 %v980
      %1196 = vmatprep.subr.bf16.mxu0 0
      %1197 = vmatpush1.bf16.msra.mxu0 %v979
      %1198 = vmatprep.subr.bf16.mxu0 0
      %1199 = vmatpush1.bf16.msra.mxu0 %v978
      %1200 = vmatprep.subr.bf16.mxu0 0
      %1201 = vmatpush1.bf16.msra.mxu0 %v977
      %1202 = vmatprep.subr.bf16.mxu0 0
      %1203 = vmatpush2.bf16.msra.mxu0 0
      %1204 = vmatprep.subr.bf16.mxu0 0
      %1205 = vmatpush2.bf16.msra.mxu0 0
      %1206 = vmatprep.subr.bf16.mxu0 0
      %1207 = vmatpush2.bf16.msra.mxu0 0
      %1208 = vmatprep.subr.bf16.mxu0 0
      %1209 = vmatpush2.bf16.msra.mxu0 0
      %1210 = vmatprep.subr.bf16.mxu0 0
      %1211 = vmatpush2.bf16.msra.mxu0 0
      %1212 = vmatprep.subr.bf16.mxu0 0
      %1213 = vmatpush2.bf16.msra.mxu0 0
      %1214 = vmatprep.subr.bf16.mxu0 0
      %1215 = vmatpush2.bf16.msra.mxu0 0
      %1216 = vmatprep.subr.bf16.mxu0 0
      %1217 = vmatpush2.bf16.msra.mxu0 0
      %1218 = vmatprep.mubr.bf16.mxu0 0
      %1219 = vmatmul.mubr.bf16.gmra.mxu0 %v755
      %v1220 = vpop.f32.mrf.mxu0
      %v1221 = vadd.f32 %v1044, %v1220
      %v1222 = vpop.f32.mrf.mxu0
      %v1223 = vpop.f32.mrf.mxu0
      %v1224 = vadd.f32 %v1047, %v1223
      %v1225 = vpop.f32.mrf.mxu0
      %1226 = vmatprep.mubr.bf16.mxu0 0
      %1227 = vmatmul.mubr.bf16.gmra.mxu0 %v759
      %v1228 = vpop.f32.mrf.mxu0
      %v1229 = vadd.f32 %v1052, %v1228
      %v1230 = vpop.f32.mrf.mxu0
      %v1231 = vpop.f32.mrf.mxu0
      %v1232 = vadd.f32 %v1055, %v1231
      %v1233 = vpop.f32.mrf.mxu0
      %1234 = vmatprep.mubr.bf16.mxu0 0
      %1235 = vmatmul.mubr.bf16.gmra.mxu0 %v763
      %v1236 = vpop.f32.mrf.mxu0
      %v1237 = vadd.f32 %v1060, %v1236
      %v1238 = vpop.f32.mrf.mxu0
      %v1239 = vpop.f32.mrf.mxu0
      %v1240 = vadd.f32 %v1063, %v1239
      %v1241 = vpop.f32.mrf.mxu0
      %1242 = vmatprep.mubr.bf16.mxu0 0
      %1243 = vmatmul.mubr.bf16.gmra.mxu0 %v767
      %v1244 = vpop.f32.mrf.mxu0
      %v1245 = vadd.f32 %v1068, %v1244
      %v1246 = vpop.f32.mrf.mxu0
      %v1247 = vpop.f32.mrf.mxu0
      %v1248 = vadd.f32 %v1071, %v1247
      %v1249 = vpop.f32.mrf.mxu0
      %1250 = vmatprep.mubr.bf16.mxu0 0
      %1251 = vmatmul.mubr.bf16.gmra.mxu0 %v771
      %v1252 = vpop.f32.mrf.mxu0
      %v1253 = vadd.f32 %v1076, %v1252
      %v1254 = vpop.f32.mrf.mxu0
      %v1255 = vpop.f32.mrf.mxu0
      %v1256 = vadd.f32 %v1079, %v1255
      %v1257 = vpop.f32.mrf.mxu0
      %1258 = vmatprep.mubr.bf16.mxu0 0
      %1259 = vmatmul.mubr.bf16.gmra.mxu0 %v775
      %v1260 = vpop.f32.mrf.mxu0
      %v1261 = vadd.f32 %v1084, %v1260
      %v1262 = vpop.f32.mrf.mxu0
      %v1263 = vpop.f32.mrf.mxu0
      %v1264 = vadd.f32 %v1087, %v1263
      %v1265 = vpop.f32.mrf.mxu0
      %1266 = vmatprep.mubr.bf16.mxu0 0
      %1267 = vmatmul.mubr.bf16.gmra.mxu0 %v779
      %v1268 = vpop.f32.mrf.mxu0
      %v1269 = vadd.f32 %v1092, %v1268
      %v1270 = vpop.f32.mrf.mxu0
      %v1271 = vpop.f32.mrf.mxu0
      %v1272 = vadd.f32 %v1095, %v1271
      %v1273 = vpop.f32.mrf.mxu0
      %1274 = vmatprep.mubr.bf16.mxu0 0
      %1275 = vmatmul.mubr.bf16.gmra.mxu0 %v783
      %v1276 = vpop.f32.mrf.mxu0
      %v1277 = vadd.f32 %v1100, %v1276
      %v1278 = vpop.f32.mrf.mxu0
      %v1279 = vpop.f32.mrf.mxu0
      %v1280 = vadd.f32 %v1103, %v1279
      %v1281 = vpop.f32.mrf.mxu0
      %1282 = vmatprep.mubr.bf16.mxu0 0
      %1283 = vmatmul.mubr.bf16.gmra.mxu0 %v787
      %v1284 = vpop.f32.mrf.mxu0
      %v1285 = vadd.f32 %v1108, %v1284
      %v1286 = vpop.f32.mrf.mxu0
      %v1287 = vpop.f32.mrf.mxu0
      %v1288 = vadd.f32 %v1111, %v1287
      %v1289 = vpop.f32.mrf.mxu0
      %1290 = vmatprep.mubr.bf16.mxu0 0
      %1291 = vmatmul.mubr.bf16.gmra.mxu0 %v791
      %v1292 = vpop.f32.mrf.mxu0
      %v1293 = vadd.f32 %v1116, %v1292
      %v1294 = vpop.f32.mrf.mxu0
      %v1295 = vpop.f32.mrf.mxu0
      %v1296 = vadd.f32 %v1119, %v1295
      %v1297 = vpop.f32.mrf.mxu0
      %1298 = vmatprep.mubr.bf16.mxu0 0
      %1299 = vmatmul.mubr.bf16.gmra.mxu0 %v795
      %v1300 = vpop.f32.mrf.mxu0
      %v1301 = vadd.f32 %v1124, %v1300
      %v1302 = vpop.f32.mrf.mxu0
      %v1303 = vpop.f32.mrf.mxu0
      %v1304 = vadd.f32 %v1127, %v1303
      %v1305 = vpop.f32.mrf.mxu0
      %1306 = vmatprep.mubr.bf16.mxu0 0
      %1307 = vmatmul.mubr.bf16.gmra.mxu0 %v799
      %v1308 = vpop.f32.mrf.mxu0
      %v1309 = vadd.f32 %v1132, %v1308
      %v1310 = vpop.f32.mrf.mxu0
      %v1311 = vpop.f32.mrf.mxu0
      %v1312 = vadd.f32 %v1135, %v1311
      %v1313 = vpop.f32.mrf.mxu0
      %1314 = vmatprep.mubr.bf16.mxu0 0
      %1315 = vmatmul.mubr.bf16.gmra.mxu0 %v803
      %v1316 = vpop.f32.mrf.mxu0
      %v1317 = vadd.f32 %v1140, %v1316
      %v1318 = vpop.f32.mrf.mxu0
      %v1319 = vpop.f32.mrf.mxu0
      %v1320 = vadd.f32 %v1143, %v1319
      %v1321 = vpop.f32.mrf.mxu0
      %1322 = vmatprep.mubr.bf16.mxu0 0
      %1323 = vmatmul.mubr.bf16.gmra.mxu0 %v807
      %v1324 = vpop.f32.mrf.mxu0
      %v1325 = vadd.f32 %v1148, %v1324
      %v1326 = vpop.f32.mrf.mxu0
      %v1327 = vpop.f32.mrf.mxu0
      %v1328 = vadd.f32 %v1151, %v1327
      %v1329 = vpop.f32.mrf.mxu0
      %1330 = vmatprep.mubr.bf16.mxu0 0
      %1331 = vmatmul.mubr.bf16.gmra.mxu0 %v811
      %v1332 = vpop.f32.mrf.mxu0
      %v1333 = vadd.f32 %v1156, %v1332
      %v1334 = vpop.f32.mrf.mxu0
      %v1335 = vpop.f32.mrf.mxu0
      %v1336 = vadd.f32 %v1159, %v1335
      %v1337 = vpop.f32.mrf.mxu0
      %1338 = vmatprep.mubr.bf16.mxu0 0
      %1339 = vmatmul.mubr.bf16.gmra.mxu0 %v815
      %v1340 = vpop.f32.mrf.mxu0
      %v1341 = vadd.f32 %v1164, %v1340
      %v1342 = vpop.f32.mrf.mxu0
      %v1343 = vpop.f32.mrf.mxu0
      %v1344 = vadd.f32 %v1167, %v1343
      %v1345 = vpop.f32.mrf.mxu0
      %1346 = vmatprep.mubr.bf16.mxu0 0
      %1347 = vmatmul.mubr.bf16.gmra.mxu0 %v819
      %v1348 = vpop.f32.mrf.mxu0
      %v1349 = vadd.f32 %v1172, %v1348
      %v1350 = vpop.f32.mrf.mxu0
      %v1351 = vpop.f32.mrf.mxu0
      %v1352 = vadd.f32 %v1175, %v1351
      %v1353 = vpop.f32.mrf.mxu0
      %1354 = vmatprep.mubr.bf16.mxu0 0
      %1355 = vmatmul.mubr.bf16.gmra.mxu0 %v825
      %v1356 = vpop.f32.mrf.mxu0
      %v1357 = vadd.f32 %v1180, %v1356
      %v1358 = vpop.f32.mrf.mxu0
      %v1359 = vpop.f32.mrf.mxu0
      %v1360 = vadd.f32 %v1183, %v1359
      %v1361 = vpop.f32.mrf.mxu0
      %1362 = vdwg.mxu0
      %v1411 = vunpack.c.l.b16 %v598
      %v1412 = vunpack.c.l.b16 %v599
      %v1413 = vunpack.c.l.b16 %v600
      %v1414 = vunpack.c.l.b16 %v601
      %v1415 = vunpack.c.l.b16 %v602
      %v1416 = vunpack.c.l.b16 %v603
      %v1417 = vunpack.c.l.b16 %v604
      %v1418 = vunpack.c.l.b16 %v605
      %v1419 = vunpack.c.l.b16 %v606
      %v1420 = vunpack.c.l.b16 %v607
      %v1421 = vunpack.c.l.b16 %v608
      %v1422 = vunpack.c.l.b16 %v609
      %v1423 = vunpack.c.l.b16 %v610
      %v1424 = vunpack.c.l.b16 %v611
      %v1425 = vunpack.c.l.b16 %v612
      %v1426 = vunpack.c.l.b16 %v613
      %v1427 = vunpack.c.l.b16 %v614
      %v1428 = vunpack.c.l.b16 %v615
      %v1429 = vunpack.c.l.b16 %v616
      %v1430 = vunpack.c.l.b16 %v617
      %v1431 = vunpack.c.l.b16 %v618
      %v1432 = vunpack.c.l.b16 %v619
      %v1433 = vunpack.c.l.b16 %v620
      %v1434 = vunpack.c.l.b16 %v621
      %v1435 = vunpack.c.l.b16 %v622
      %v1436 = vunpack.c.l.b16 %v623
      %v1437 = vunpack.c.l.b16 %v624
      %v1438 = vunpack.c.l.b16 %v625
      %v1439 = vunpack.c.l.b16 %v626
      %v1440 = vunpack.c.l.b16 %v627
      %v1441 = vunpack.c.l.b16 %v628
      %v1442 = vunpack.c.l.b16 %v629
      %v1443 = vunpack.c.l.b16 %v630
      %v1444 = vunpack.c.l.b16 %v631
      %v1445 = vunpack.c.l.b16 %v632
      %v1446 = vunpack.c.l.b16 %v633
      %v1447 = vunpack.c.l.b16 %v634
      %v1448 = vunpack.c.l.b16 %v635
      %v1449 = vunpack.c.l.b16 %v636
      %v1450 = vunpack.c.l.b16 %v637
      %v1451 = vunpack.c.l.b16 %v638
      %v1452 = vunpack.c.l.b16 %v639
      %v1453 = vunpack.c.l.b16 %v640
      %v1454 = vunpack.c.l.b16 %v641
      %v1455 = vunpack.c.l.b16 %v642
      %v1456 = vunpack.c.l.b16 %v643
      %v1457 = vunpack.c.l.b16 %v644
      %v1458 = vunpack.c.l.b16 %v645
      %v1459 = vpack.c.b16 %v1412, %v1411
      %v1460 = vpack.c.b16 %v1414, %v1413
      %v1461 = vpack.c.b16 %v1416, %v1415
      %v1462 = vpack.c.b16 %v1418, %v1417
      %v1463 = vpack.c.b16 %v1420, %v1419
      %v1464 = vpack.c.b16 %v1422, %v1421
      %v1465 = vpack.c.b16 %v1424, %v1423
      %v1466 = vpack.c.b16 %v1426, %v1425
      %v1467 = vpack.c.b16 %v1428, %v1427
      %v1468 = vpack.c.b16 %v1430, %v1429
      %v1469 = vpack.c.b16 %v1432, %v1431
      %v1470 = vpack.c.b16 %v1434, %v1433
      %v1471 = vpack.c.b16 %v1436, %v1435
      %v1472 = vpack.c.b16 %v1438, %v1437
      %v1473 = vpack.c.b16 %v1440, %v1439
      %v1474 = vpack.c.b16 %v1442, %v1441
      %v1475 = vpack.c.b16 %v1444, %v1443
      %v1476 = vpack.c.b16 %v1446, %v1445
      %v1477 = vpack.c.b16 %v1448, %v1447
      %v1478 = vpack.c.b16 %v1450, %v1449
      %v1479 = vpack.c.b16 %v1452, %v1451
      %v1480 = vpack.c.b16 %v1454, %v1453
      %v1481 = vpack.c.b16 %v1456, %v1455
      %v1482 = vpack.c.b16 %v1458, %v1457
      %1507 = vmatprep.subr.bf16.mxu0 0
      %1508 = vmatpush1.bf16.msra.mxu0 %v1466
      %1509 = vmatprep.subr.bf16.mxu0 0
      %1510 = vmatpush1.bf16.msra.mxu0 %v1465
      %1511 = vmatprep.subr.bf16.mxu0 0
      %1512 = vmatpush1.bf16.msra.mxu0 %v1464
      %1513 = vmatprep.subr.bf16.mxu0 0
      %1514 = vmatpush1.bf16.msra.mxu0 %v1463
      %1515 = vmatprep.subr.bf16.mxu0 0
      %1516 = vmatpush1.bf16.msra.mxu0 %v1462
      %1517 = vmatprep.subr.bf16.mxu0 0
      %1518 = vmatpush1.bf16.msra.mxu0 %v1461
      %1519 = vmatprep.subr.bf16.mxu0 0
      %1520 = vmatpush1.bf16.msra.mxu0 %v1460
      %1521 = vmatprep.subr.bf16.mxu0 0
      %1522 = vmatpush1.bf16.msra.mxu0 %v1459
      %1523 = vmatprep.subr.bf16.mxu0 0
      %1524 = vmatpush2.bf16.msra.mxu0 %v1474
      %1525 = vmatprep.subr.bf16.mxu0 0
      %1526 = vmatpush2.bf16.msra.mxu0 %v1473
      %1527 = vmatprep.subr.bf16.mxu0 0
      %1528 = vmatpush2.bf16.msra.mxu0 %v1472
      %1529 = vmatprep.subr.bf16.mxu0 0
      %1530 = vmatpush2.bf16.msra.mxu0 %v1471
      %1531 = vmatprep.subr.bf16.mxu0 0
      %1532 = vmatpush2.bf16.msra.mxu0 %v1470
      %1533 = vmatprep.subr.bf16.mxu0 0
      %1534 = vmatpush2.bf16.msra.mxu0 %v1469
      %1535 = vmatprep.subr.bf16.mxu0 0
      %1536 = vmatpush2.bf16.msra.mxu0 %v1468
      %1537 = vmatprep.subr.bf16.mxu0 0
      %1538 = vmatpush2.bf16.msra.mxu0 %v1467
      %1539 = vmatprep.mubr.bf16.mxu0 %v384
      %1540 = vmatmul.mubr.bf16.gmra.mxu0 %v333
      %v1541 = vpop.f32.mrf.mxu0
      %v1542 = vadd.f32 %v1221, %v1541
      %v1543 = vpop.f32.mrf.mxu0
      %v1544 = vpop.f32.mrf.mxu0
      %v1545 = vadd.f32 %v1224, %v1544
      %v1546 = vpop.f32.mrf.mxu0
      %1547 = vmatprep.mubr.bf16.mxu0 %v392
      %1548 = vmatmul.mubr.bf16.gmra.mxu0 %v334
      %v1549 = vpop.f32.mrf.mxu0
      %v1550 = vadd.f32 %v1229, %v1549
      %v1551 = vpop.f32.mrf.mxu0
      %v1552 = vpop.f32.mrf.mxu0
      %v1553 = vadd.f32 %v1232, %v1552
      %v1554 = vpop.f32.mrf.mxu0
      %1555 = vmatprep.mubr.bf16.mxu0 %v400
      %1556 = vmatmul.mubr.bf16.gmra.mxu0 %v335
      %v1557 = vpop.f32.mrf.mxu0
      %v1558 = vadd.f32 %v1237, %v1557
      %v1559 = vpop.f32.mrf.mxu0
      %v1560 = vpop.f32.mrf.mxu0
      %v1561 = vadd.f32 %v1240, %v1560
      %v1562 = vpop.f32.mrf.mxu0
      %1563 = vmatprep.mubr.bf16.mxu0 %v408
      %1564 = vmatmul.mubr.bf16.gmra.mxu0 %v336
      %v1565 = vpop.f32.mrf.mxu0
      %v1566 = vadd.f32 %v1245, %v1565
      %v1567 = vpop.f32.mrf.mxu0
      %v1568 = vpop.f32.mrf.mxu0
      %v1569 = vadd.f32 %v1248, %v1568
      %v1570 = vpop.f32.mrf.mxu0
      %1571 = vmatprep.mubr.bf16.mxu0 %v416
      %1572 = vmatmul.mubr.bf16.gmra.mxu0 %v337
      %v1573 = vpop.f32.mrf.mxu0
      %v1574 = vadd.f32 %v1253, %v1573
      %v1575 = vpop.f32.mrf.mxu0
      %v1576 = vpop.f32.mrf.mxu0
      %v1577 = vadd.f32 %v1256, %v1576
      %v1578 = vpop.f32.mrf.mxu0
      %1579 = vmatprep.mubr.bf16.mxu0 %v424
      %1580 = vmatmul.mubr.bf16.gmra.mxu0 %v338
      %v1581 = vpop.f32.mrf.mxu0
      %v1582 = vadd.f32 %v1261, %v1581
      %v1583 = vpop.f32.mrf.mxu0
      %v1584 = vpop.f32.mrf.mxu0
      %v1585 = vadd.f32 %v1264, %v1584
      %v1586 = vpop.f32.mrf.mxu0
      %1587 = vmatprep.mubr.bf16.mxu0 %v432
      %1588 = vmatmul.mubr.bf16.gmra.mxu0 %v339
      %v1589 = vpop.f32.mrf.mxu0
      %v1590 = vadd.f32 %v1269, %v1589
      %v1591 = vpop.f32.mrf.mxu0
      %v1592 = vpop.f32.mrf.mxu0
      %v1593 = vadd.f32 %v1272, %v1592
      %v1594 = vpop.f32.mrf.mxu0
      %1595 = vmatprep.mubr.bf16.mxu0 %v440
      %1596 = vmatmul.mubr.bf16.gmra.mxu0 %v340
      %v1597 = vpop.f32.mrf.mxu0
      %v1598 = vadd.f32 %v1277, %v1597
      %v1599 = vpop.f32.mrf.mxu0
      %v1600 = vpop.f32.mrf.mxu0
      %v1601 = vadd.f32 %v1280, %v1600
      %v1602 = vpop.f32.mrf.mxu0
      %1603 = vmatprep.mubr.bf16.mxu0 %v448
      %1604 = vmatmul.mubr.bf16.gmra.mxu0 %v341
      %v1605 = vpop.f32.mrf.mxu0
      %v1606 = vadd.f32 %v1285, %v1605
      %v1607 = vpop.f32.mrf.mxu0
      %v1608 = vpop.f32.mrf.mxu0
      %v1609 = vadd.f32 %v1288, %v1608
      %v1610 = vpop.f32.mrf.mxu0
      %1611 = vmatprep.mubr.bf16.mxu0 %v456
      %1612 = vmatmul.mubr.bf16.gmra.mxu0 %v342
      %v1613 = vpop.f32.mrf.mxu0
      %v1614 = vadd.f32 %v1293, %v1613
      %v1615 = vpop.f32.mrf.mxu0
      %v1616 = vpop.f32.mrf.mxu0
      %v1617 = vadd.f32 %v1296, %v1616
      %v1618 = vpop.f32.mrf.mxu0
      %1619 = vmatprep.mubr.bf16.mxu0 %v464
      %1620 = vmatmul.mubr.bf16.gmra.mxu0 %v343
      %v1621 = vpop.f32.mrf.mxu0
      %v1622 = vadd.f32 %v1301, %v1621
      %v1623 = vpop.f32.mrf.mxu0
      %v1624 = vpop.f32.mrf.mxu0
      %v1625 = vadd.f32 %v1304, %v1624
      %v1626 = vpop.f32.mrf.mxu0
      %1627 = vmatprep.mubr.bf16.mxu0 %v472
      %1628 = vmatmul.mubr.bf16.gmra.mxu0 %v344
      %v1629 = vpop.f32.mrf.mxu0
      %v1630 = vadd.f32 %v1309, %v1629
      %v1631 = vpop.f32.mrf.mxu0
      %v1632 = vpop.f32.mrf.mxu0
      %v1633 = vadd.f32 %v1312, %v1632
      %v1634 = vpop.f32.mrf.mxu0
      %1635 = vmatprep.mubr.bf16.mxu0 %v480
      %1636 = vmatmul.mubr.bf16.gmra.mxu0 %v345
      %v1637 = vpop.f32.mrf.mxu0
      %v1638 = vadd.f32 %v1317, %v1637
      %v1639 = vpop.f32.mrf.mxu0
      %v1640 = vpop.f32.mrf.mxu0
      %v1641 = vadd.f32 %v1320, %v1640
      %v1642 = vpop.f32.mrf.mxu0
      %1643 = vmatprep.mubr.bf16.mxu0 %v488
      %1644 = vmatmul.mubr.bf16.gmra.mxu0 %v346
      %v1645 = vpop.f32.mrf.mxu0
      %v1646 = vadd.f32 %v1325, %v1645
      %v1647 = vpop.f32.mrf.mxu0
      %v1648 = vpop.f32.mrf.mxu0
      %v1649 = vadd.f32 %v1328, %v1648
      %v1650 = vpop.f32.mrf.mxu0
      %1651 = vmatprep.mubr.bf16.mxu0 %v496
      %1652 = vmatmul.mubr.bf16.gmra.mxu0 %v347
      %v1653 = vpop.f32.mrf.mxu0
      %v1654 = vadd.f32 %v1333, %v1653
      %v1655 = vpop.f32.mrf.mxu0
      %v1656 = vpop.f32.mrf.mxu0
      %v1657 = vadd.f32 %v1336, %v1656
      %v1658 = vpop.f32.mrf.mxu0
      %1659 = vmatprep.mubr.bf16.mxu0 %v504
      %1660 = vmatmul.mubr.bf16.gmra.mxu0 %v348
      %v1661 = vpop.f32.mrf.mxu0
      %v1662 = vadd.f32 %v1341, %v1661
      %v1663 = vpop.f32.mrf.mxu0
      %v1664 = vpop.f32.mrf.mxu0
      %v1665 = vadd.f32 %v1344, %v1664
      %v1666 = vpop.f32.mrf.mxu0
      %1667 = vmatprep.mubr.bf16.mxu0 %v512
      %1668 = vmatmul.mubr.bf16.gmra.mxu0 %v349
      %v1669 = vpop.f32.mrf.mxu0
      %v1670 = vadd.f32 %v1349, %v1669
      %v1671 = vpop.f32.mrf.mxu0
      %v1672 = vpop.f32.mrf.mxu0
      %v1673 = vadd.f32 %v1352, %v1672
      %v1674 = vpop.f32.mrf.mxu0
      %1675 = vmatprep.mubr.bf16.mxu0 %v520
      %1676 = vmatmul.mubr.bf16.gmra.mxu0 %v350
      %v1677 = vpop.f32.mrf.mxu0
      %v1678 = vadd.f32 %v1357, %v1677
      %v1679 = vpop.f32.mrf.mxu0
      %v1680 = vpop.f32.mrf.mxu0
      %v1681 = vadd.f32 %v1360, %v1680
      %v1682 = vpop.f32.mrf.mxu0
      %1683 = vdwg.mxu0
      %1684 = vmatprep.subr.bf16.mxu0 0
      %1685 = vmatpush1.bf16.msra.mxu0 %v1482
      %1686 = vmatprep.subr.bf16.mxu0 0
      %1687 = vmatpush1.bf16.msra.mxu0 %v1481
      %1688 = vmatprep.subr.bf16.mxu0 0
      %1689 = vmatpush1.bf16.msra.mxu0 %v1480
      %1690 = vmatprep.subr.bf16.mxu0 0
      %1691 = vmatpush1.bf16.msra.mxu0 %v1479
      %1692 = vmatprep.subr.bf16.mxu0 0
      %1693 = vmatpush1.bf16.msra.mxu0 %v1478
      %1694 = vmatprep.subr.bf16.mxu0 0
      %1695 = vmatpush1.bf16.msra.mxu0 %v1477
      %1696 = vmatprep.subr.bf16.mxu0 0
      %1697 = vmatpush1.bf16.msra.mxu0 %v1476
      %1698 = vmatprep.subr.bf16.mxu0 0
      %1699 = vmatpush1.bf16.msra.mxu0 %v1475
      %1700 = vmatprep.subr.bf16.mxu0 0
      %1701 = vmatpush2.bf16.msra.mxu0 0
      %1702 = vmatprep.subr.bf16.mxu0 0
      %1703 = vmatpush2.bf16.msra.mxu0 0
      %1704 = vmatprep.subr.bf16.mxu0 0
      %1705 = vmatpush2.bf16.msra.mxu0 0
      %1706 = vmatprep.subr.bf16.mxu0 0
      %1707 = vmatpush2.bf16.msra.mxu0 0
      %1708 = vmatprep.subr.bf16.mxu0 0
      %1709 = vmatpush2.bf16.msra.mxu0 0
      %1710 = vmatprep.subr.bf16.mxu0 0
      %1711 = vmatpush2.bf16.msra.mxu0 0
      %1712 = vmatprep.subr.bf16.mxu0 0
      %1713 = vmatpush2.bf16.msra.mxu0 0
      %1714 = vmatprep.subr.bf16.mxu0 0
      %1715 = vmatpush2.bf16.msra.mxu0 0
      %1716 = vmatprep.mubr.bf16.mxu0 0
      %1717 = vmatmul.mubr.bf16.gmra.mxu0 %v545
      %v1718 = vpop.f32.mrf.mxu0
      %v1719 = vadd.f32 %v1542, %v1718
      %v1720 = vpop.f32.mrf.mxu0
      %v1721 = vpop.f32.mrf.mxu0
      %v1722 = vadd.f32 %v1545, %v1721
      %v1723 = vpop.f32.mrf.mxu0
      %1724 = vmatprep.mubr.bf16.mxu0 0
      %1725 = vmatmul.mubr.bf16.gmra.mxu0 %v547
      %v1726 = vpop.f32.mrf.mxu0
      %v1727 = vadd.f32 %v1550, %v1726
      %v1728 = vpop.f32.mrf.mxu0
      %v1729 = vpop.f32.mrf.mxu0
      %v1730 = vadd.f32 %v1553, %v1729
      %v1731 = vpop.f32.mrf.mxu0
      %1732 = vmatprep.mubr.bf16.mxu0 0
      %1733 = vmatmul.mubr.bf16.gmra.mxu0 %v549
      %v1734 = vpop.f32.mrf.mxu0
      %v1735 = vadd.f32 %v1558, %v1734
      %v1736 = vpop.f32.mrf.mxu0
      %v1737 = vpop.f32.mrf.mxu0
      %v1738 = vadd.f32 %v1561, %v1737
      %v1739 = vpop.f32.mrf.mxu0
      %1740 = vmatprep.mubr.bf16.mxu0 0
      %1741 = vmatmul.mubr.bf16.gmra.mxu0 %v551
      %v1742 = vpop.f32.mrf.mxu0
      %v1743 = vadd.f32 %v1566, %v1742
      %v1744 = vpop.f32.mrf.mxu0
      %v1745 = vpop.f32.mrf.mxu0
      %v1746 = vadd.f32 %v1569, %v1745
      %v1747 = vpop.f32.mrf.mxu0
      %1748 = vmatprep.mubr.bf16.mxu0 0
      %1749 = vmatmul.mubr.bf16.gmra.mxu0 %v553
      %v1750 = vpop.f32.mrf.mxu0
      %v1751 = vadd.f32 %v1574, %v1750
      %v1752 = vpop.f32.mrf.mxu0
      %v1753 = vpop.f32.mrf.mxu0
      %v1754 = vadd.f32 %v1577, %v1753
      %v1755 = vpop.f32.mrf.mxu0
      %1756 = vmatprep.mubr.bf16.mxu0 0
      %1757 = vmatmul.mubr.bf16.gmra.mxu0 %v555
      %v1758 = vpop.f32.mrf.mxu0
      %v1759 = vadd.f32 %v1582, %v1758
      %v1760 = vpop.f32.mrf.mxu0
      %v1761 = vpop.f32.mrf.mxu0
      %v1762 = vadd.f32 %v1585, %v1761
      %v1763 = vpop.f32.mrf.mxu0
      %1764 = vmatprep.mubr.bf16.mxu0 0
      %1765 = vmatmul.mubr.bf16.gmra.mxu0 %v557
      %v1766 = vpop.f32.mrf.mxu0
      %v1767 = vadd.f32 %v1590, %v1766
      %v1768 = vpop.f32.mrf.mxu0
      %v1769 = vpop.f32.mrf.mxu0
      %v1770 = vadd.f32 %v1593, %v1769
      %v1771 = vpop.f32.mrf.mxu0
      %1772 = vmatprep.mubr.bf16.mxu0 0
      %1773 = vmatmul.mubr.bf16.gmra.mxu0 %v559
      %v1774 = vpop.f32.mrf.mxu0
      %v1775 = vadd.f32 %v1598, %v1774
      %v1776 = vpop.f32.mrf.mxu0
      %v1777 = vpop.f32.mrf.mxu0
      %v1778 = vadd.f32 %v1601, %v1777
      %v1779 = vpop.f32.mrf.mxu0
      %1780 = vmatprep.mubr.bf16.mxu0 0
      %1781 = vmatmul.mubr.bf16.gmra.mxu0 %v561
      %v1782 = vpop.f32.mrf.mxu0
      %v1783 = vadd.f32 %v1606, %v1782
      %v1784 = vpop.f32.mrf.mxu0
      %v1785 = vpop.f32.mrf.mxu0
      %v1786 = vadd.f32 %v1609, %v1785
      %v1787 = vpop.f32.mrf.mxu0
      %1788 = vmatprep.mubr.bf16.mxu0 0
      %1789 = vmatmul.mubr.bf16.gmra.mxu0 %v563
      %v1790 = vpop.f32.mrf.mxu0
      %v1791 = vadd.f32 %v1614, %v1790
      %v1792 = vpop.f32.mrf.mxu0
      %v1793 = vpop.f32.mrf.mxu0
      %v1794 = vadd.f32 %v1617, %v1793
      %v1795 = vpop.f32.mrf.mxu0
      %1796 = vmatprep.mubr.bf16.mxu0 0
      %1797 = vmatmul.mubr.bf16.gmra.mxu0 %v565
      %v1798 = vpop.f32.mrf.mxu0
      %v1799 = vadd.f32 %v1622, %v1798
      %v1800 = vpop.f32.mrf.mxu0
      %v1801 = vpop.f32.mrf.mxu0
      %v1802 = vadd.f32 %v1625, %v1801
      %v1803 = vpop.f32.mrf.mxu0
      %1804 = vmatprep.mubr.bf16.mxu0 0
      %1805 = vmatmul.mubr.bf16.gmra.mxu0 %v567
      %v1806 = vpop.f32.mrf.mxu0
      %v1807 = vadd.f32 %v1630, %v1806
      %v1808 = vpop.f32.mrf.mxu0
      %v1809 = vpop.f32.mrf.mxu0
      %v1810 = vadd.f32 %v1633, %v1809
      %v1811 = vpop.f32.mrf.mxu0
      %1812 = vmatprep.mubr.bf16.mxu0 0
      %1813 = vmatmul.mubr.bf16.gmra.mxu0 %v569
      %v1814 = vpop.f32.mrf.mxu0
      %v1815 = vadd.f32 %v1638, %v1814
      %v1816 = vpop.f32.mrf.mxu0
      %v1817 = vpop.f32.mrf.mxu0
      %v1818 = vadd.f32 %v1641, %v1817
      %v1819 = vpop.f32.mrf.mxu0
      %1820 = vmatprep.mubr.bf16.mxu0 0
      %1821 = vmatmul.mubr.bf16.gmra.mxu0 %v571
      %v1822 = vpop.f32.mrf.mxu0
      %v1823 = vadd.f32 %v1646, %v1822
      %v1824 = vpop.f32.mrf.mxu0
      %v1825 = vpop.f32.mrf.mxu0
      %v1826 = vadd.f32 %v1649, %v1825
      %v1827 = vpop.f32.mrf.mxu0
      %1828 = vmatprep.mubr.bf16.mxu0 0
      %1829 = vmatmul.mubr.bf16.gmra.mxu0 %v573
      %v1830 = vpop.f32.mrf.mxu0
      %v1831 = vadd.f32 %v1654, %v1830
      %v1832 = vpop.f32.mrf.mxu0
      %v1833 = vpop.f32.mrf.mxu0
      %v1834 = vadd.f32 %v1657, %v1833
      %v1835 = vpop.f32.mrf.mxu0
      %1836 = vmatprep.mubr.bf16.mxu0 0
      %1837 = vmatmul.mubr.bf16.gmra.mxu0 %v575
      %v1838 = vpop.f32.mrf.mxu0
      %v1839 = vadd.f32 %v1662, %v1838
      %v1840 = vpop.f32.mrf.mxu0
      %v1841 = vpop.f32.mrf.mxu0
      %v1842 = vadd.f32 %v1665, %v1841
      %v1843 = vpop.f32.mrf.mxu0
      %1844 = vmatprep.mubr.bf16.mxu0 0
      %1845 = vmatmul.mubr.bf16.gmra.mxu0 %v577
      %v1846 = vpop.f32.mrf.mxu0
      %v1847 = vadd.f32 %v1670, %v1846
      %v1848 = vpop.f32.mrf.mxu0
      %v1849 = vpop.f32.mrf.mxu0
      %v1850 = vadd.f32 %v1673, %v1849
      %v1851 = vpop.f32.mrf.mxu0
      %1852 = vmatprep.mubr.bf16.mxu0 0
      %1853 = vmatmul.mubr.bf16.gmra.mxu0 %v579
      %v1854 = vpop.f32.mrf.mxu0
      %v1855 = vadd.f32 %v1678, %v1854
      %v1856 = vpop.f32.mrf.mxu0
      %v1857 = vpop.f32.mrf.mxu0
      %v1858 = vadd.f32 %v1681, %v1857
      %v1859 = vpop.f32.mrf.mxu0
      %1860 = vdwg.mxu0
      %v1861 = vld [vmem:[%s206 + $0x10] sm:$0xc]
      %v1862 = vld [vmem:[%s206 + $0x14] sm:$0xf]
      %v1863 = vld [vmem:[%s206 + $0x18] sm:$0xf]
      %v1864 = vld [vmem:[%s206 + $0x1c] sm:$0xf]
      %v1865 = vld [vmem:[%s206 + $0x20] sm:$0xf]
      %v1866 = vld [vmem:[%s206 + $0x24] sm:$0xf]
      %v1867 = vld [vmem:[%s206 + $0x28] sm:$0xf]
      %v1868 = vld [vmem:[%s206 + $0x2c] sm:$0xf]
      %v1869 = vld [vmem:[%s206 + $0x30] sm:$0xf]
      %v1870 = vld [vmem:[%s206 + $0x34] sm:$0xf]
      %v1871 = vld [vmem:[%s206 + $0x38] sm:$0xf]
      %v1872 = vld [vmem:[%s206 + $0x3c] sm:$0xf]
      %v1873 = vld [vmem:[%s206 + $0x40] sm:$0xf]
      %v1874 = vld [vmem:[%s206 + $0x44] sm:$0xf]
      %v1875 = vld [vmem:[%s206 + $0x48] sm:$0xf]
      %v1876 = vld [vmem:[%s206 + $0x4c] sm:$0xf]
      %v1877 = vld [vmem:[%s206 + $0x50] sm:$0xf]
      %v1878 = vld [vmem:[%s206 + $0x54] sm:$0xf]
      %v1879 = vld [vmem:[%s206 + $0x58] sm:$0xf]
      %v1880 = vld [vmem:[%s206 + $0x5c] sm:$0xf]
      %v1881 = vld [vmem:[%s206 + $0x60] sm:$0xf]
      %v1882 = vld [vmem:[%s206 + $0x64] sm:$0xf]
      %v1883 = vld [vmem:[%s206 + $0x68] sm:$0xf]
      %v1884 = vld [vmem:[%s206 + $0x6c] sm:$0xf]
      %v1885 = vld [vmem:[%s206 + $0x70] sm:$0xf]
      %v1886 = vld [vmem:[%s206 + $0x74] sm:$0xf]
      %v1887 = vld [vmem:[%s206 + $0x78] sm:$0xf]
      %v1888 = vld [vmem:[%s206 + $0x7c] sm:$0xf]
      %v1889 = vld [vmem:[%s206 + $0x80] sm:$0xf]
      %v1890 = vld [vmem:[%s206 + $0x84] sm:$0xf]
      %v1891 = vld [vmem:[%s206 + $0x88] sm:$0xf]
      %v1892 = vld [vmem:[%s206 + $0x8c] sm:$0xf]
      %v1893 = vld [vmem:[%s206 + $0x90] sm:$0xf]
      %v1894 = vld [vmem:[%s206 + $0x94] sm:$0xf]
      %v1895 = vld [vmem:[%s206 + $0x98] sm:$0xf]
      %v1896 = vld [vmem:[%s206 + $0x9c] sm:$0xf]
      %v1897 = vld [vmem:[%s206 + $0xa0] sm:$0x3]
      %v1898 = vld [vmem:[%s206 + $0xa0] sm:$0x7]
      %v1899 = vld [vmem:[%s206 + $0x10] sm:$0x8]
      %v1937 = vunpack.c.l.b16 %v1861
      %v1938 = vunpack.c.l.b16 %v1862
      %v1939 = vunpack.c.l.b16 %v1863
      %v1940 = vunpack.c.l.b16 %v1864
      %v1941 = vunpack.c.l.b16 %v1865
      %v1942 = vunpack.c.l.b16 %v1866
      %v1943 = vunpack.c.l.b16 %v1867
      %v1944 = vunpack.c.l.b16 %v1868
      %v1945 = vunpack.c.l.b16 %v1869
      %v1946 = vunpack.c.l.b16 %v1870
      %v1947 = vunpack.c.l.b16 %v1871
      %v1948 = vunpack.c.l.b16 %v1872
      %v1949 = vunpack.c.l.b16 %v1873
      %v1950 = vunpack.c.l.b16 %v1874
      %v1951 = vunpack.c.l.b16 %v1875
      %v1952 = vunpack.c.l.b16 %v1876
      %v1953 = vunpack.c.l.b16 %v1877
      %v1954 = vunpack.c.l.b16 %v1878
      %v1955 = vunpack.c.l.b16 %v1879
      %v1956 = vunpack.c.l.b16 %v1880
      %v1957 = vunpack.c.l.b16 %v1881
      %v1958 = vunpack.c.l.b16 %v1882
      %v1959 = vunpack.c.l.b16 %v1883
      %v1960 = vunpack.c.l.b16 %v1884
      %v1961 = vunpack.c.l.b16 %v1885
      %v1962 = vunpack.c.l.b16 %v1886
      %v1963 = vunpack.c.l.b16 %v1887
      %v1964 = vunpack.c.l.b16 %v1888
      %v1965 = vunpack.c.l.b16 %v1889
      %v1966 = vunpack.c.l.b16 %v1890
      %v1967 = vunpack.c.l.b16 %v1891
      %v1968 = vunpack.c.l.b16 %v1892
      %v1969 = vunpack.c.l.b16 %v1893
      %v1970 = vunpack.c.l.b16 %v1894
      %v1971 = vunpack.c.l.b16 %v1895
      %v1972 = vunpack.c.l.b16 %v1896
      %v1973 = vunpack.c.l.b16 %v1897
      %v1974 = vpack.c.b16 %v1938, %v1937
      %v1975 = vpack.c.b16 %v1940, %v1939
      %v1976 = vpack.c.b16 %v1942, %v1941
      %v1977 = vpack.c.b16 %v1944, %v1943
      %v1978 = vpack.c.b16 %v1946, %v1945
      %v1979 = vpack.c.b16 %v1948, %v1947
      %v1980 = vpack.c.b16 %v1950, %v1949
      %v1981 = vpack.c.b16 %v1952, %v1951
      %v1982 = vpack.c.b16 %v1954, %v1953
      %v1983 = vpack.c.b16 %v1956, %v1955
      %v1984 = vpack.c.b16 %v1958, %v1957
      %v1985 = vpack.c.b16 %v1960, %v1959
      %v1986 = vpack.c.b16 %v1962, %v1961
      %v1987 = vpack.c.b16 %v1964, %v1963
      %v1988 = vpack.c.b16 %v1966, %v1965
      %v1989 = vpack.c.b16 %v1968, %v1967
      %v1990 = vpack.c.b16 %v1970, %v1969
      %v1991 = vpack.c.b16 %v1972, %v1971
      %v1992 = vpack.c.b16 %v1973, %v1973
      %v1994 = vunpack.c.l.b16 %v1898
      %v1995 = vpack.c.b16 %v1994, %v1994
      %v1997 = vshrl.u32 %v1974, 16
      %v1999 = vshll.u32 %v1974, 16
      %v2001 = vrot.slane %v1999, 1
      %v2002 = vor.u32 %v1997, %v2001
      %v2004 = vshll.u32 %v1975, 16
      %v2006 = vrot.slane %v2004, 1
      %v2007 = vsel %vm372, %v2002, %v2006
      %v2008 = vshrl.u32 %v1975, 16
      %v2010 = vor.u32 %v2008, %v2006
      %v2012 = vshll.u32 %v1976, 16
      %v2014 = vrot.slane %v2012, 1
      %v2015 = vsel %vm372, %v2010, %v2014
      %v2016 = vshrl.u32 %v1976, 16
      %v2018 = vor.u32 %v2016, %v2014
      %v2020 = vshll.u32 %v1977, 16
      %v2022 = vrot.slane %v2020, 1
      %v2023 = vsel %vm372, %v2018, %v2022
      %v2024 = vshrl.u32 %v1977, 16
      %v2026 = vor.u32 %v2024, %v2022
      %v2028 = vshll.u32 %v1978, 16
      %v2030 = vrot.slane %v2028, 1
      %v2031 = vsel %vm372, %v2026, %v2030
      %v2032 = vshrl.u32 %v1978, 16
      %v2034 = vor.u32 %v2032, %v2030
      %v2036 = vshll.u32 %v1979, 16
      %v2038 = vrot.slane %v2036, 1
      %v2039 = vsel %vm372, %v2034, %v2038
      %v2040 = vshrl.u32 %v1979, 16
      %v2042 = vor.u32 %v2040, %v2038
      %v2044 = vshll.u32 %v1980, 16
      %v2046 = vrot.slane %v2044, 1
      %v2047 = vsel %vm372, %v2042, %v2046
      %v2048 = vshrl.u32 %v1980, 16
      %v2050 = vor.u32 %v2048, %v2046
      %v2052 = vshll.u32 %v1981, 16
      %v2054 = vrot.slane %v2052, 1
      %v2055 = vsel %vm372, %v2050, %v2054
      %v2056 = vshrl.u32 %v1981, 16
      %v2058 = vor.u32 %v2056, %v2054
      %v2060 = vshll.u32 %v1982, 16
      %v2062 = vrot.slane %v2060, 1
      %v2063 = vsel %vm372, %v2058, %v2062
      %v2064 = vshrl.u32 %v1982, 16
      %v2066 = vor.u32 %v2064, %v2062
      %v2068 = vshll.u32 %v1983, 16
      %v2070 = vrot.slane %v2068, 1
      %v2071 = vsel %vm372, %v2066, %v2070
      %v2072 = vshrl.u32 %v1983, 16
      %v2074 = vor.u32 %v2072, %v2070
      %v2076 = vshll.u32 %v1984, 16
      %v2078 = vrot.slane %v2076, 1
      %v2079 = vsel %vm372, %v2074, %v2078
      %v2080 = vshrl.u32 %v1984, 16
      %v2082 = vor.u32 %v2080, %v2078
      %v2084 = vshll.u32 %v1985, 16
      %v2086 = vrot.slane %v2084, 1
      %v2087 = vsel %vm372, %v2082, %v2086
      %v2088 = vshrl.u32 %v1985, 16
      %v2090 = vor.u32 %v2088, %v2086
      %v2092 = vshll.u32 %v1986, 16
      %v2094 = vrot.slane %v2092, 1
      %v2095 = vsel %vm372, %v2090, %v2094
      %v2096 = vshrl.u32 %v1986, 16
      %v2098 = vor.u32 %v2096, %v2094
      %v2100 = vshll.u32 %v1987, 16
      %v2102 = vrot.slane %v2100, 1
      %v2103 = vsel %vm372, %v2098, %v2102
      %v2104 = vshrl.u32 %v1987, 16
      %v2106 = vor.u32 %v2104, %v2102
      %v2108 = vshll.u32 %v1988, 16
      %v2110 = vrot.slane %v2108, 1
      %v2111 = vsel %vm372, %v2106, %v2110
      %v2112 = vshrl.u32 %v1988, 16
      %v2114 = vor.u32 %v2112, %v2110
      %v2116 = vshll.u32 %v1989, 16
      %v2118 = vrot.slane %v2116, 1
      %v2119 = vsel %vm372, %v2114, %v2118
      %v2120 = vshrl.u32 %v1989, 16
      %v2122 = vor.u32 %v2120, %v2118
      %v2124 = vshll.u32 %v1990, 16
      %v2126 = vrot.slane %v2124, 1
      %v2127 = vsel %vm372, %v2122, %v2126
      %v2128 = vshrl.u32 %v1990, 16
      %v2130 = vor.u32 %v2128, %v2126
      %v2132 = vshll.u32 %v1991, 16
      %v2134 = vrot.slane %v2132, 1
      %v2135 = vsel %vm372, %v2130, %v2134
      %v2136 = vshrl.u32 %v1991, 16
      %v2138 = vor.u32 %v2136, %v2134
      %v2140 = vshll.u32 %v1995, 16
      %v2142 = vrot.slane %v2140, 1
      %v2143 = vsel %vm372, %v2138, %v2142
      %v2144 = vshrl.u32 %v1995, 16
      %v2146 = vor.u32 %v2144, %v2142
      %v2148 = vunpack.c.l.b16 %v1899
      %v2149 = vpack.c.b16 %v1938, %v2148
      %v2150 = vrot.slane %v2149, 1
      %v2151 = vrot.slane %v1975, 1
      %v2152 = vsel %vm542, %v2150, %v2151
      %v2153 = vrot.slane %v1976, 1
      %v2154 = vsel %vm542, %v2151, %v2153
      %v2155 = vrot.slane %v1977, 1
      %v2156 = vsel %vm542, %v2153, %v2155
      %v2157 = vrot.slane %v1978, 1
      %v2158 = vsel %vm542, %v2155, %v2157
      %v2159 = vrot.slane %v1979, 1
      %v2160 = vsel %vm542, %v2157, %v2159
      %v2161 = vrot.slane %v1980, 1
      %v2162 = vsel %vm542, %v2159, %v2161
      %v2163 = vrot.slane %v1981, 1
      %v2164 = vsel %vm542, %v2161, %v2163
      %v2165 = vrot.slane %v1982, 1
      %v2166 = vsel %vm542, %v2163, %v2165
      %v2167 = vrot.slane %v1983, 1
      %v2168 = vsel %vm542, %v2165, %v2167
      %v2169 = vrot.slane %v1984, 1
      %v2170 = vsel %vm542, %v2167, %v2169
      %v2171 = vrot.slane %v1985, 1
      %v2172 = vsel %vm542, %v2169, %v2171
      %v2173 = vrot.slane %v1986, 1
      %v2174 = vsel %vm542, %v2171, %v2173
      %v2175 = vrot.slane %v1987, 1
      %v2176 = vsel %vm542, %v2173, %v2175
      %v2177 = vrot.slane %v1988, 1
      %v2178 = vsel %vm542, %v2175, %v2177
      %v2179 = vrot.slane %v1989, 1
      %v2180 = vsel %vm542, %v2177, %v2179
      %v2181 = vrot.slane %v1990, 1
      %v2182 = vsel %vm542, %v2179, %v2181
      %v2183 = vrot.slane %v1991, 1
      %v2184 = vsel %vm542, %v2181, %v2183
      %v2185 = vrot.slane %v1995, 1
      %v2186 = vsel %vm542, %v2183, %v2185
      %s2187 = scalar_lea.vmem %s210, 384
      %v2188 = vld [vmem:[%s2187] sm:$0xf]
      %v2189 = vld [vmem:[%s2187 + $0x4] sm:$0xf]
      %v2190 = vld [vmem:[%s2187 + $0x8] sm:$0xf]
      %v2191 = vld [vmem:[%s2187 + $0xc] sm:$0xf]
      %v2192 = vld [vmem:[%s2187 + $0x10] sm:$0xf]
      %v2193 = vld [vmem:[%s2187 + $0x14] sm:$0xf]
      %v2194 = vld [vmem:[%s2187 + $0x18] sm:$0xf]
      %v2195 = vld [vmem:[%s2187 + $0x1c] sm:$0xf]
      %v2196 = vld [vmem:[%s2187 + $0x20] sm:$0xf]
      %v2197 = vld [vmem:[%s2187 + $0x24] sm:$0xf]
      %v2198 = vld [vmem:[%s2187 + $0x28] sm:$0xf]
      %v2199 = vld [vmem:[%s2187 + $0x2c] sm:$0xf]
      %v2200 = vld [vmem:[%s2187 + $0x30] sm:$0xf]
      %v2201 = vld [vmem:[%s2187 + $0x34] sm:$0xf]
      %v2202 = vld [vmem:[%s2187 + $0x38] sm:$0xf]
      %v2203 = vld [vmem:[%s2187 + $0x3c] sm:$0xf]
      %v2204 = vld [vmem:[%s2187 + $0x40] sm:$0xf]
      %v2205 = vld [vmem:[%s2187 + $0x44] sm:$0xf]
      %v2206 = vld [vmem:[%s2187 + $0x48] sm:$0xf]
      %v2207 = vld [vmem:[%s2187 + $0x4c] sm:$0xf]
      %v2208 = vld [vmem:[%s2187 + $0x50] sm:$0xf]
      %v2209 = vld [vmem:[%s2187 + $0x54] sm:$0xf]
      %v2210 = vld [vmem:[%s2187 + $0x58] sm:$0xf]
      %v2211 = vld [vmem:[%s2187 + $0x5c] sm:$0xf]
      %v2212 = vld [vmem:[%s2187 + $0x60] sm:$0xf]
      %v2213 = vld [vmem:[%s2187 + $0x64] sm:$0xf]
      %v2214 = vld [vmem:[%s2187 + $0x68] sm:$0xf]
      %v2215 = vld [vmem:[%s2187 + $0x6c] sm:$0xf]
      %v2216 = vld [vmem:[%s2187 + $0x70] sm:$0xf]
      %v2217 = vld [vmem:[%s2187 + $0x74] sm:$0xf]
      %v2218 = vld [vmem:[%s2187 + $0x78] sm:$0xf]
      %v2219 = vld [vmem:[%s2187 + $0x7c] sm:$0xf]
      %v2220 = vld [vmem:[%s2187 + $0x80] sm:$0xf]
      %v2221 = vld [vmem:[%s2187 + $0x84] sm:$0xf]
      %v2222 = vld [vmem:[%s2187 + $0x88] sm:$0xf]
      %v2223 = vld [vmem:[%s2187 + $0x8c] sm:$0xf]
      %v2224 = vld [vmem:[%s2187 + $0x90] sm:$0xf]
      %v2225 = vld [vmem:[%s2187 + $0x94] sm:$0xf]
      %v2226 = vld [vmem:[%s2187 + $0x98] sm:$0xf]
      %v2227 = vld [vmem:[%s2187 + $0x9c] sm:$0xf]
      %v2228 = vld [vmem:[%s2187 + $0xa0] sm:$0xf]
      %v2229 = vld [vmem:[%s2187 + $0xa4] sm:$0xf]
      %v2230 = vld [vmem:[%s2187 + $0xa8] sm:$0xf]
      %v2231 = vld [vmem:[%s2187 + $0xac] sm:$0xf]
      %v2232 = vld [vmem:[%s2187 + $0xb0] sm:$0xf]
      %v2233 = vld [vmem:[%s2187 + $0xb4] sm:$0xf]
      %v2234 = vld [vmem:[%s2187 + $0xb8] sm:$0xf]
      %v2235 = vld [vmem:[%s2187 + $0xbc] sm:$0xf]
      %vm2236 = vcmask 1045504
      %v2237 = vrot.slane %v1974, 2
      %v2238 = vrot.slane %v1975, 2
      %v2239 = vsel %vm2236, %v2237, %v2238
      %v2240 = vrot.slane %v2007, 2
      %v2241 = vrot.slane %v2015, 2
      %v2242 = vsel %vm2236, %v2240, %v2241
      %v2243 = vrot.slane %v2152, 2
      %v2244 = vrot.slane %v2154, 2
      %v2245 = vsel %vm2236, %v2243, %v2244
      %v2246 = vrot.slane %v1976, 2
      %v2247 = vsel %vm2236, %v2238, %v2246
      %v2248 = vrot.slane %v2023, 2
      %v2249 = vsel %vm2236, %v2241, %v2248
      %v2250 = vrot.slane %v2156, 2
      %v2251 = vsel %vm2236, %v2244, %v2250
      %v2252 = vrot.slane %v1977, 2
      %v2253 = vsel %vm2236, %v2246, %v2252
      %v2254 = vrot.slane %v2031, 2
      %v2255 = vsel %vm2236, %v2248, %v2254
      %v2256 = vrot.slane %v2158, 2
      %v2257 = vsel %vm2236, %v2250, %v2256
      %v2258 = vrot.slane %v1978, 2
      %v2259 = vsel %vm2236, %v2252, %v2258
      %v2260 = vrot.slane %v2039, 2
      %v2261 = vsel %vm2236, %v2254, %v2260
      %v2262 = vrot.slane %v2160, 2
      %v2263 = vsel %vm2236, %v2256, %v2262
      %v2264 = vrot.slane %v1979, 2
      %v2265 = vsel %vm2236, %v2258, %v2264
      %v2266 = vrot.slane %v2047, 2
      %v2267 = vsel %vm2236, %v2260, %v2266
      %v2268 = vrot.slane %v2162, 2
      %v2269 = vsel %vm2236, %v2262, %v2268
      %v2270 = vrot.slane %v1980, 2
      %v2271 = vsel %vm2236, %v2264, %v2270
      %v2272 = vrot.slane %v2055, 2
      %v2273 = vsel %vm2236, %v2266, %v2272
      %v2274 = vrot.slane %v2164, 2
      %v2275 = vsel %vm2236, %v2268, %v2274
      %v2276 = vrot.slane %v1981, 2
      %v2277 = vsel %vm2236, %v2270, %v2276
      %v2278 = vrot.slane %v2063, 2
      %v2279 = vsel %vm2236, %v2272, %v2278
      %v2280 = vrot.slane %v2166, 2
      %v2281 = vsel %vm2236, %v2274, %v2280
      %v2282 = vrot.slane %v1982, 2
      %v2283 = vsel %vm2236, %v2276, %v2282
      %v2284 = vrot.slane %v2071, 2
      %v2285 = vsel %vm2236, %v2278, %v2284
      %v2286 = vrot.slane %v2168, 2
      %v2287 = vsel %vm2236, %v2280, %v2286
      %v2288 = vrot.slane %v1983, 2
      %v2289 = vsel %vm2236, %v2282, %v2288
      %v2290 = vrot.slane %v2079, 2
      %v2291 = vsel %vm2236, %v2284, %v2290
      %v2292 = vrot.slane %v2170, 2
      %v2293 = vsel %vm2236, %v2286, %v2292
      %v2294 = vrot.slane %v1984, 2
      %v2295 = vsel %vm2236, %v2288, %v2294
      %v2296 = vrot.slane %v2087, 2
      %v2297 = vsel %vm2236, %v2290, %v2296
      %v2298 = vrot.slane %v2172, 2
      %v2299 = vsel %vm2236, %v2292, %v2298
      %v2300 = vrot.slane %v1985, 2
      %v2301 = vsel %vm2236, %v2294, %v2300
      %v2302 = vrot.slane %v2095, 2
      %v2303 = vsel %vm2236, %v2296, %v2302
      %v2304 = vrot.slane %v2174, 2
      %v2305 = vsel %vm2236, %v2298, %v2304
      %v2306 = vrot.slane %v1986, 2
      %v2307 = vsel %vm2236, %v2300, %v2306
      %v2308 = vrot.slane %v2103, 2
      %v2309 = vsel %vm2236, %v2302, %v2308
      %v2310 = vrot.slane %v2176, 2
      %v2311 = vsel %vm2236, %v2304, %v2310
      %v2312 = vrot.slane %v1987, 2
      %v2313 = vsel %vm2236, %v2306, %v2312
      %v2314 = vrot.slane %v2111, 2
      %v2315 = vsel %vm2236, %v2308, %v2314
      %v2316 = vrot.slane %v2178, 2
      %v2317 = vsel %vm2236, %v2310, %v2316
      %v2318 = vrot.slane %v1988, 2
      %v2319 = vsel %vm2236, %v2312, %v2318
      %v2320 = vrot.slane %v2119, 2
      %v2321 = vsel %vm2236, %v2314, %v2320
      %v2322 = vrot.slane %v2180, 2
      %v2323 = vsel %vm2236, %v2316, %v2322
      %v2324 = vrot.slane %v1989, 2
      %v2325 = vsel %vm2236, %v2318, %v2324
      %v2326 = vrot.slane %v2127, 2
      %v2327 = vsel %vm2236, %v2320, %v2326
      %v2328 = vrot.slane %v2182, 2
      %v2329 = vsel %vm2236, %v2322, %v2328
      %v2330 = vrot.slane %v1990, 2
      %v2331 = vsel %vm2236, %v2324, %v2330
      %v2332 = vrot.slane %v2135, 2
      %v2333 = vsel %vm2236, %v2326, %v2332
      %v2334 = vrot.slane %v2184, 2
      %v2335 = vsel %vm2236, %v2328, %v2334
      %v2336 = vrot.slane %v1991, 2
      %v2337 = vsel %vm2236, %v2330, %v2336
      %v2338 = vrot.slane %v2143, 2
      %v2339 = vsel %vm2236, %v2332, %v2338
      %v2340 = vrot.slane %v2186, 2
      %v2341 = vsel %vm2236, %v2334, %v2340
      %v2342 = vrot.slane %v1992, 2
      %v2343 = vsel %vm2236, %v2336, %v2342
      %v2344 = vrot.slane %v2146, 2
      %v2345 = vsel %vm2236, %v2338, %v2344
      %v2346 = vrot.slane %v2185, 2
      %v2347 = vsel %vm2236, %v2340, %v2346
      %v2450 = vunpack.c.l.b16 %v2188
      %v2451 = vunpack.c.l.b16 %v2189
      %v2452 = vunpack.c.l.b16 %v2190
      %v2453 = vunpack.c.l.b16 %v2191
      %v2454 = vunpack.c.l.b16 %v2192
      %v2455 = vunpack.c.l.b16 %v2193
      %v2456 = vunpack.c.l.b16 %v2194
      %v2457 = vunpack.c.l.b16 %v2195
      %v2458 = vunpack.c.l.b16 %v2196
      %v2459 = vunpack.c.l.b16 %v2197
      %v2460 = vunpack.c.l.b16 %v2198
      %v2461 = vunpack.c.l.b16 %v2199
      %v2462 = vunpack.c.l.b16 %v2200
      %v2463 = vunpack.c.l.b16 %v2201
      %v2464 = vunpack.c.l.b16 %v2202
      %v2465 = vunpack.c.l.b16 %v2203
      %v2466 = vunpack.c.l.b16 %v2204
      %v2467 = vunpack.c.l.b16 %v2205
      %v2468 = vunpack.c.l.b16 %v2206
      %v2469 = vunpack.c.l.b16 %v2207
      %v2470 = vunpack.c.l.b16 %v2208
      %v2471 = vunpack.c.l.b16 %v2209
      %v2472 = vunpack.c.l.b16 %v2210
      %v2473 = vunpack.c.l.b16 %v2211
      %v2474 = vunpack.c.l.b16 %v2212
      %v2475 = vunpack.c.l.b16 %v2213
      %v2476 = vunpack.c.l.b16 %v2214
      %v2477 = vunpack.c.l.b16 %v2215
      %v2478 = vunpack.c.l.b16 %v2216
      %v2479 = vunpack.c.l.b16 %v2217
      %v2480 = vunpack.c.l.b16 %v2218
      %v2481 = vunpack.c.l.b16 %v2219
      %v2482 = vunpack.c.l.b16 %v2220
      %v2483 = vunpack.c.l.b16 %v2221
      %v2484 = vunpack.c.l.b16 %v2222
      %v2485 = vunpack.c.l.b16 %v2223
      %v2486 = vunpack.c.l.b16 %v2224
      %v2487 = vunpack.c.l.b16 %v2225
      %v2488 = vunpack.c.l.b16 %v2226
      %v2489 = vunpack.c.l.b16 %v2227
      %v2490 = vunpack.c.l.b16 %v2228
      %v2491 = vunpack.c.l.b16 %v2229
      %v2492 = vunpack.c.l.b16 %v2230
      %v2493 = vunpack.c.l.b16 %v2231
      %v2494 = vunpack.c.l.b16 %v2232
      %v2495 = vunpack.c.l.b16 %v2233
      %v2496 = vunpack.c.l.b16 %v2234
      %v2497 = vunpack.c.l.b16 %v2235
      %v2498 = vpack.c.b16 %v2451, %v2450
      %v2499 = vpack.c.b16 %v2453, %v2452
      %v2500 = vpack.c.b16 %v2455, %v2454
      %v2501 = vpack.c.b16 %v2457, %v2456
      %v2502 = vpack.c.b16 %v2459, %v2458
      %v2503 = vpack.c.b16 %v2461, %v2460
      %v2504 = vpack.c.b16 %v2463, %v2462
      %v2505 = vpack.c.b16 %v2465, %v2464
      %v2506 = vpack.c.b16 %v2467, %v2466
      %v2507 = vpack.c.b16 %v2469, %v2468
      %v2508 = vpack.c.b16 %v2471, %v2470
      %v2509 = vpack.c.b16 %v2473, %v2472
      %v2510 = vpack.c.b16 %v2475, %v2474
      %v2511 = vpack.c.b16 %v2477, %v2476
      %v2512 = vpack.c.b16 %v2479, %v2478
      %v2513 = vpack.c.b16 %v2481, %v2480
      %v2514 = vpack.c.b16 %v2483, %v2482
      %v2515 = vpack.c.b16 %v2485, %v2484
      %v2516 = vpack.c.b16 %v2487, %v2486
      %v2517 = vpack.c.b16 %v2489, %v2488
      %v2518 = vpack.c.b16 %v2491, %v2490
      %v2519 = vpack.c.b16 %v2493, %v2492
      %v2520 = vpack.c.b16 %v2495, %v2494
      %v2521 = vpack.c.b16 %v2497, %v2496
      %2546 = vmatprep.subr.bf16.mxu0 0
      %2547 = vmatpush1.bf16.msra.mxu0 %v2505
      %2548 = vmatprep.subr.bf16.mxu0 0
      %2549 = vmatpush1.bf16.msra.mxu0 %v2504
      %2550 = vmatprep.subr.bf16.mxu0 0
      %2551 = vmatpush1.bf16.msra.mxu0 %v2503
      %2552 = vmatprep.subr.bf16.mxu0 0
      %2553 = vmatpush1.bf16.msra.mxu0 %v2502
      %2554 = vmatprep.subr.bf16.mxu0 0
      %2555 = vmatpush1.bf16.msra.mxu0 %v2501
      %2556 = vmatprep.subr.bf16.mxu0 0
      %2557 = vmatpush1.bf16.msra.mxu0 %v2500
      %2558 = vmatprep.subr.bf16.mxu0 0
      %2559 = vmatpush1.bf16.msra.mxu0 %v2499
      %2560 = vmatprep.subr.bf16.mxu0 0
      %2561 = vmatpush1.bf16.msra.mxu0 %v2498
      %2562 = vmatprep.subr.bf16.mxu0 0
      %2563 = vmatpush2.bf16.msra.mxu0 %v2513
      %2564 = vmatprep.subr.bf16.mxu0 0
      %2565 = vmatpush2.bf16.msra.mxu0 %v2512
      %2566 = vmatprep.subr.bf16.mxu0 0
      %2567 = vmatpush2.bf16.msra.mxu0 %v2511
      %2568 = vmatprep.subr.bf16.mxu0 0
      %2569 = vmatpush2.bf16.msra.mxu0 %v2510
      %2570 = vmatprep.subr.bf16.mxu0 0
      %2571 = vmatpush2.bf16.msra.mxu0 %v2509
      %2572 = vmatprep.subr.bf16.mxu0 0
      %2573 = vmatpush2.bf16.msra.mxu0 %v2508
      %2574 = vmatprep.subr.bf16.mxu0 0
      %2575 = vmatpush2.bf16.msra.mxu0 %v2507
      %2576 = vmatprep.subr.bf16.mxu0 0
      %2577 = vmatpush2.bf16.msra.mxu0 %v2506
      %2578 = vmatprep.mubr.bf16.mxu0 %v2242
      %2579 = vmatmul.mubr.bf16.gmra.mxu0 %v2239
      %v2580 = vpop.f32.mrf.mxu0
      %v2581 = vadd.f32 0.0, %v2580
      %v2582 = vpop.f32.mrf.mxu0
      %v2583 = vpop.f32.mrf.mxu0
      %v2584 = vadd.f32 0.0, %v2583
      %v2585 = vpop.f32.mrf.mxu0
      %2586 = vmatprep.mubr.bf16.mxu0 %v2249
      %2587 = vmatmul.mubr.bf16.gmra.mxu0 %v2247
      %v2588 = vpop.f32.mrf.mxu0
      %v2589 = vadd.f32 0.0, %v2588
      %v2590 = vpop.f32.mrf.mxu0
      %v2591 = vpop.f32.mrf.mxu0
      %v2592 = vadd.f32 0.0, %v2591
      %v2593 = vpop.f32.mrf.mxu0
      %2594 = vmatprep.mubr.bf16.mxu0 %v2255
      %2595 = vmatmul.mubr.bf16.gmra.mxu0 %v2253
      %v2596 = vpop.f32.mrf.mxu0
      %v2597 = vadd.f32 0.0, %v2596
      %v2598 = vpop.f32.mrf.mxu0
      %v2599 = vpop.f32.mrf.mxu0
      %v2600 = vadd.f32 0.0, %v2599
      %v2601 = vpop.f32.mrf.mxu0
      %2602 = vmatprep.mubr.bf16.mxu0 %v2261
      %2603 = vmatmul.mubr.bf16.gmra.mxu0 %v2259
      %v2604 = vpop.f32.mrf.mxu0
      %v2605 = vadd.f32 0.0, %v2604
      %v2606 = vpop.f32.mrf.mxu0
      %v2607 = vpop.f32.mrf.mxu0
      %v2608 = vadd.f32 0.0, %v2607
      %v2609 = vpop.f32.mrf.mxu0
      %2610 = vmatprep.mubr.bf16.mxu0 %v2267
      %2611 = vmatmul.mubr.bf16.gmra.mxu0 %v2265
      %v2612 = vpop.f32.mrf.mxu0
      %v2613 = vadd.f32 0.0, %v2612
      %v2614 = vpop.f32.mrf.mxu0
      %v2615 = vpop.f32.mrf.mxu0
      %v2616 = vadd.f32 0.0, %v2615
      %v2617 = vpop.f32.mrf.mxu0
      %2618 = vmatprep.mubr.bf16.mxu0 %v2273
      %2619 = vmatmul.mubr.bf16.gmra.mxu0 %v2271
      %v2620 = vpop.f32.mrf.mxu0
      %v2621 = vadd.f32 0.0, %v2620
      %v2622 = vpop.f32.mrf.mxu0
      %v2623 = vpop.f32.mrf.mxu0
      %v2624 = vadd.f32 0.0, %v2623
      %v2625 = vpop.f32.mrf.mxu0
      %2626 = vmatprep.mubr.bf16.mxu0 %v2279
      %2627 = vmatmul.mubr.bf16.gmra.mxu0 %v2277
      %v2628 = vpop.f32.mrf.mxu0
      %v2629 = vadd.f32 0.0, %v2628
      %v2630 = vpop.f32.mrf.mxu0
      %v2631 = vpop.f32.mrf.mxu0
      %v2632 = vadd.f32 0.0, %v2631
      %v2633 = vpop.f32.mrf.mxu0
      %2634 = vmatprep.mubr.bf16.mxu0 %v2285
      %2635 = vmatmul.mubr.bf16.gmra.mxu0 %v2283
      %v2636 = vpop.f32.mrf.mxu0
      %v2637 = vadd.f32 0.0, %v2636
      %v2638 = vpop.f32.mrf.mxu0
      %v2639 = vpop.f32.mrf.mxu0
      %v2640 = vadd.f32 0.0, %v2639
      %v2641 = vpop.f32.mrf.mxu0
      %2642 = vmatprep.mubr.bf16.mxu0 %v2291
      %2643 = vmatmul.mubr.bf16.gmra.mxu0 %v2289
      %v2644 = vpop.f32.mrf.mxu0
      %v2645 = vadd.f32 0.0, %v2644
      %v2646 = vpop.f32.mrf.mxu0
      %v2647 = vpop.f32.mrf.mxu0
      %v2648 = vadd.f32 0.0, %v2647
      %v2649 = vpop.f32.mrf.mxu0
      %2650 = vmatprep.mubr.bf16.mxu0 %v2297
      %2651 = vmatmul.mubr.bf16.gmra.mxu0 %v2295
      %v2652 = vpop.f32.mrf.mxu0
      %v2653 = vadd.f32 0.0, %v2652
      %v2654 = vpop.f32.mrf.mxu0
      %v2655 = vpop.f32.mrf.mxu0
      %v2656 = vadd.f32 0.0, %v2655
      %v2657 = vpop.f32.mrf.mxu0
      %2658 = vmatprep.mubr.bf16.mxu0 %v2303
      %2659 = vmatmul.mubr.bf16.gmra.mxu0 %v2301
      %v2660 = vpop.f32.mrf.mxu0
      %v2661 = vadd.f32 0.0, %v2660
      %v2662 = vpop.f32.mrf.mxu0
      %v2663 = vpop.f32.mrf.mxu0
      %v2664 = vadd.f32 0.0, %v2663
      %v2665 = vpop.f32.mrf.mxu0
      %2666 = vmatprep.mubr.bf16.mxu0 %v2309
      %2667 = vmatmul.mubr.bf16.gmra.mxu0 %v2307
      %v2668 = vpop.f32.mrf.mxu0
      %v2669 = vadd.f32 0.0, %v2668
      %v2670 = vpop.f32.mrf.mxu0
      %v2671 = vpop.f32.mrf.mxu0
      %v2672 = vadd.f32 0.0, %v2671
      %v2673 = vpop.f32.mrf.mxu0
      %2674 = vmatprep.mubr.bf16.mxu0 %v2315
      %2675 = vmatmul.mubr.bf16.gmra.mxu0 %v2313
      %v2676 = vpop.f32.mrf.mxu0
      %v2677 = vadd.f32 0.0, %v2676
      %v2678 = vpop.f32.mrf.mxu0
      %v2679 = vpop.f32.mrf.mxu0
      %v2680 = vadd.f32 0.0, %v2679
      %v2681 = vpop.f32.mrf.mxu0
      %2682 = vmatprep.mubr.bf16.mxu0 %v2321
      %2683 = vmatmul.mubr.bf16.gmra.mxu0 %v2319
      %v2684 = vpop.f32.mrf.mxu0
      %v2685 = vadd.f32 0.0, %v2684
      %v2686 = vpop.f32.mrf.mxu0
      %v2687 = vpop.f32.mrf.mxu0
      %v2688 = vadd.f32 0.0, %v2687
      %v2689 = vpop.f32.mrf.mxu0
      %2690 = vmatprep.mubr.bf16.mxu0 %v2327
      %2691 = vmatmul.mubr.bf16.gmra.mxu0 %v2325
      %v2692 = vpop.f32.mrf.mxu0
      %v2693 = vadd.f32 0.0, %v2692
      %v2694 = vpop.f32.mrf.mxu0
      %v2695 = vpop.f32.mrf.mxu0
      %v2696 = vadd.f32 0.0, %v2695
      %v2697 = vpop.f32.mrf.mxu0
      %2698 = vmatprep.mubr.bf16.mxu0 %v2333
      %2699 = vmatmul.mubr.bf16.gmra.mxu0 %v2331
      %v2700 = vpop.f32.mrf.mxu0
      %v2701 = vadd.f32 0.0, %v2700
      %v2702 = vpop.f32.mrf.mxu0
      %v2703 = vpop.f32.mrf.mxu0
      %v2704 = vadd.f32 0.0, %v2703
      %v2705 = vpop.f32.mrf.mxu0
      %2706 = vmatprep.mubr.bf16.mxu0 %v2339
      %2707 = vmatmul.mubr.bf16.gmra.mxu0 %v2337
      %v2708 = vpop.f32.mrf.mxu0
      %v2709 = vadd.f32 0.0, %v2708
      %v2710 = vpop.f32.mrf.mxu0
      %v2711 = vpop.f32.mrf.mxu0
      %v2712 = vadd.f32 0.0, %v2711
      %v2713 = vpop.f32.mrf.mxu0
      %2714 = vmatprep.mubr.bf16.mxu0 %v2345
      %2715 = vmatmul.mubr.bf16.gmra.mxu0 %v2343
      %v2716 = vpop.f32.mrf.mxu0
      %v2717 = vadd.f32 0.0, %v2716
      %v2718 = vpop.f32.mrf.mxu0
      %v2719 = vpop.f32.mrf.mxu0
      %v2720 = vadd.f32 0.0, %v2719
      %v2721 = vpop.f32.mrf.mxu0
      %2722 = vdwg.mxu0
      %2723 = vmatprep.subr.bf16.mxu0 0
      %2724 = vmatpush1.bf16.msra.mxu0 %v2521
      %2725 = vmatprep.subr.bf16.mxu0 0
      %2726 = vmatpush1.bf16.msra.mxu0 %v2520
      %2727 = vmatprep.subr.bf16.mxu0 0
      %2728 = vmatpush1.bf16.msra.mxu0 %v2519
      %2729 = vmatprep.subr.bf16.mxu0 0
      %2730 = vmatpush1.bf16.msra.mxu0 %v2518
      %2731 = vmatprep.subr.bf16.mxu0 0
      %2732 = vmatpush1.bf16.msra.mxu0 %v2517
      %2733 = vmatprep.subr.bf16.mxu0 0
      %2734 = vmatpush1.bf16.msra.mxu0 %v2516
      %2735 = vmatprep.subr.bf16.mxu0 0
      %2736 = vmatpush1.bf16.msra.mxu0 %v2515
      %2737 = vmatprep.subr.bf16.mxu0 0
      %2738 = vmatpush1.bf16.msra.mxu0 %v2514
      %2739 = vmatprep.subr.bf16.mxu0 0
      %2740 = vmatpush2.bf16.msra.mxu0 0
      %2741 = vmatprep.subr.bf16.mxu0 0
      %2742 = vmatpush2.bf16.msra.mxu0 0
      %2743 = vmatprep.subr.bf16.mxu0 0
      %2744 = vmatpush2.bf16.msra.mxu0 0
      %2745 = vmatprep.subr.bf16.mxu0 0
      %2746 = vmatpush2.bf16.msra.mxu0 0
      %2747 = vmatprep.subr.bf16.mxu0 0
      %2748 = vmatpush2.bf16.msra.mxu0 0
      %2749 = vmatprep.subr.bf16.mxu0 0
      %2750 = vmatpush2.bf16.msra.mxu0 0
      %2751 = vmatprep.subr.bf16.mxu0 0
      %2752 = vmatpush2.bf16.msra.mxu0 0
      %2753 = vmatprep.subr.bf16.mxu0 0
      %2754 = vmatpush2.bf16.msra.mxu0 0
      %2755 = vmatprep.mubr.bf16.mxu0 0
      %2756 = vmatmul.mubr.bf16.gmra.mxu0 %v2245
      %v2757 = vpop.f32.mrf.mxu0
      %v2758 = vadd.f32 %v2581, %v2757
      %v2759 = vpop.f32.mrf.mxu0
      %v2760 = vpop.f32.mrf.mxu0
      %v2761 = vadd.f32 %v2584, %v2760
      %v2762 = vpop.f32.mrf.mxu0
      %2763 = vmatprep.mubr.bf16.mxu0 0
      %2764 = vmatmul.mubr.bf16.gmra.mxu0 %v2251
      %v2765 = vpop.f32.mrf.mxu0
      %v2766 = vadd.f32 %v2589, %v2765
      %v2767 = vpop.f32.mrf.mxu0
      %v2768 = vpop.f32.mrf.mxu0
      %v2769 = vadd.f32 %v2592, %v2768
      %v2770 = vpop.f32.mrf.mxu0
      %2771 = vmatprep.mubr.bf16.mxu0 0
      %2772 = vmatmul.mubr.bf16.gmra.mxu0 %v2257
      %v2773 = vpop.f32.mrf.mxu0
      %v2774 = vadd.f32 %v2597, %v2773
      %v2775 = vpop.f32.mrf.mxu0
      %v2776 = vpop.f32.mrf.mxu0
      %v2777 = vadd.f32 %v2600, %v2776
      %v2778 = vpop.f32.mrf.mxu0
      %2779 = vmatprep.mubr.bf16.mxu0 0
      %2780 = vmatmul.mubr.bf16.gmra.mxu0 %v2263
      %v2781 = vpop.f32.mrf.mxu0
      %v2782 = vadd.f32 %v2605, %v2781
      %v2783 = vpop.f32.mrf.mxu0
      %v2784 = vpop.f32.mrf.mxu0
      %v2785 = vadd.f32 %v2608, %v2784
      %v2786 = vpop.f32.mrf.mxu0
      %2787 = vmatprep.mubr.bf16.mxu0 0
      %2788 = vmatmul.mubr.bf16.gmra.mxu0 %v2269
      %v2789 = vpop.f32.mrf.mxu0
      %v2790 = vadd.f32 %v2613, %v2789
      %v2791 = vpop.f32.mrf.mxu0
      %v2792 = vpop.f32.mrf.mxu0
      %v2793 = vadd.f32 %v2616, %v2792
      %v2794 = vpop.f32.mrf.mxu0
      %2795 = vmatprep.mubr.bf16.mxu0 0
      %2796 = vmatmul.mubr.bf16.gmra.mxu0 %v2275
      %v2797 = vpop.f32.mrf.mxu0
      %v2798 = vadd.f32 %v2621, %v2797
      %v2799 = vpop.f32.mrf.mxu0
      %v2800 = vpop.f32.mrf.mxu0
      %v2801 = vadd.f32 %v2624, %v2800
      %v2802 = vpop.f32.mrf.mxu0
      %2803 = vmatprep.mubr.bf16.mxu0 0
      %2804 = vmatmul.mubr.bf16.gmra.mxu0 %v2281
      %v2805 = vpop.f32.mrf.mxu0
      %v2806 = vadd.f32 %v2629, %v2805
      %v2807 = vpop.f32.mrf.mxu0
      %v2808 = vpop.f32.mrf.mxu0
      %v2809 = vadd.f32 %v2632, %v2808
      %v2810 = vpop.f32.mrf.mxu0
      %2811 = vmatprep.mubr.bf16.mxu0 0
      %2812 = vmatmul.mubr.bf16.gmra.mxu0 %v2287
      %v2813 = vpop.f32.mrf.mxu0
      %v2814 = vadd.f32 %v2637, %v2813
      %v2815 = vpop.f32.mrf.mxu0
      %v2816 = vpop.f32.mrf.mxu0
      %v2817 = vadd.f32 %v2640, %v2816
      %v2818 = vpop.f32.mrf.mxu0
      %2819 = vmatprep.mubr.bf16.mxu0 0
      %2820 = vmatmul.mubr.bf16.gmra.mxu0 %v2293
      %v2821 = vpop.f32.mrf.mxu0
      %v2822 = vadd.f32 %v2645, %v2821
      %v2823 = vpop.f32.mrf.mxu0
      %v2824 = vpop.f32.mrf.mxu0
      %v2825 = vadd.f32 %v2648, %v2824
      %v2826 = vpop.f32.mrf.mxu0
      %2827 = vmatprep.mubr.bf16.mxu0 0
      %2828 = vmatmul.mubr.bf16.gmra.mxu0 %v2299
      %v2829 = vpop.f32.mrf.mxu0
      %v2830 = vadd.f32 %v2653, %v2829
      %v2831 = vpop.f32.mrf.mxu0
      %v2832 = vpop.f32.mrf.mxu0
      %v2833 = vadd.f32 %v2656, %v2832
      %v2834 = vpop.f32.mrf.mxu0
      %2835 = vmatprep.mubr.bf16.mxu0 0
      %2836 = vmatmul.mubr.bf16.gmra.mxu0 %v2305
      %v2837 = vpop.f32.mrf.mxu0
      %v2838 = vadd.f32 %v2661, %v2837
      %v2839 = vpop.f32.mrf.mxu0
      %v2840 = vpop.f32.mrf.mxu0
      %v2841 = vadd.f32 %v2664, %v2840
      %v2842 = vpop.f32.mrf.mxu0
      %2843 = vmatprep.mubr.bf16.mxu0 0
      %2844 = vmatmul.mubr.bf16.gmra.mxu0 %v2311
      %v2845 = vpop.f32.mrf.mxu0
      %v2846 = vadd.f32 %v2669, %v2845
      %v2847 = vpop.f32.mrf.mxu0
      %v2848 = vpop.f32.mrf.mxu0
      %v2849 = vadd.f32 %v2672, %v2848
      %v2850 = vpop.f32.mrf.mxu0
      %2851 = vmatprep.mubr.bf16.mxu0 0
      %2852 = vmatmul.mubr.bf16.gmra.mxu0 %v2317
      %v2853 = vpop.f32.mrf.mxu0
      %v2854 = vadd.f32 %v2677, %v2853
      %v2855 = vpop.f32.mrf.mxu0
      %v2856 = vpop.f32.mrf.mxu0
      %v2857 = vadd.f32 %v2680, %v2856
      %v2858 = vpop.f32.mrf.mxu0
      %2859 = vmatprep.mubr.bf16.mxu0 0
      %2860 = vmatmul.mubr.bf16.gmra.mxu0 %v2323
      %v2861 = vpop.f32.mrf.mxu0
      %v2862 = vadd.f32 %v2685, %v2861
      %v2863 = vpop.f32.mrf.mxu0
      %v2864 = vpop.f32.mrf.mxu0
      %v2865 = vadd.f32 %v2688, %v2864
      %v2866 = vpop.f32.mrf.mxu0
      %2867 = vmatprep.mubr.bf16.mxu0 0
      %2868 = vmatmul.mubr.bf16.gmra.mxu0 %v2329
      %v2869 = vpop.f32.mrf.mxu0
      %v2870 = vadd.f32 %v2693, %v2869
      %v2871 = vpop.f32.mrf.mxu0
      %v2872 = vpop.f32.mrf.mxu0
      %v2873 = vadd.f32 %v2696, %v2872
      %v2874 = vpop.f32.mrf.mxu0
      %2875 = vmatprep.mubr.bf16.mxu0 0
      %2876 = vmatmul.mubr.bf16.gmra.mxu0 %v2335
      %v2877 = vpop.f32.mrf.mxu0
      %v2878 = vadd.f32 %v2701, %v2877
      %v2879 = vpop.f32.mrf.mxu0
      %v2880 = vpop.f32.mrf.mxu0
      %v2881 = vadd.f32 %v2704, %v2880
      %v2882 = vpop.f32.mrf.mxu0
      %2883 = vmatprep.mubr.bf16.mxu0 0
      %2884 = vmatmul.mubr.bf16.gmra.mxu0 %v2341
      %v2885 = vpop.f32.mrf.mxu0
      %v2886 = vadd.f32 %v2709, %v2885
      %v2887 = vpop.f32.mrf.mxu0
      %v2888 = vpop.f32.mrf.mxu0
      %v2889 = vadd.f32 %v2712, %v2888
      %v2890 = vpop.f32.mrf.mxu0
      %2891 = vmatprep.mubr.bf16.mxu0 0
      %2892 = vmatmul.mubr.bf16.gmra.mxu0 %v2347
      %v2893 = vpop.f32.mrf.mxu0
      %v2894 = vadd.f32 %v2717, %v2893
      %v2895 = vpop.f32.mrf.mxu0
      %v2896 = vpop.f32.mrf.mxu0
      %v2897 = vadd.f32 %v2720, %v2896
      %v2898 = vpop.f32.mrf.mxu0
      %2899 = vdwg.mxu0
      %v2900 = vadd.f32 %v1719, %v2758
      %v2901 = vadd.f32 %v1722, %v2761
      %v2902 = vadd.f32 %v1727, %v2766
      %v2903 = vadd.f32 %v1730, %v2769
      %v2904 = vadd.f32 %v1735, %v2774
      %v2905 = vadd.f32 %v1738, %v2777
      %v2906 = vadd.f32 %v1743, %v2782
      %v2907 = vadd.f32 %v1746, %v2785
      %v2908 = vadd.f32 %v1751, %v2790
      %v2909 = vadd.f32 %v1754, %v2793
      %v2910 = vadd.f32 %v1759, %v2798
      %v2911 = vadd.f32 %v1762, %v2801
      %v2912 = vadd.f32 %v1767, %v2806
      %v2913 = vadd.f32 %v1770, %v2809
      %v2914 = vadd.f32 %v1775, %v2814
      %v2915 = vadd.f32 %v1778, %v2817
      %v2916 = vadd.f32 %v1783, %v2822
      %v2917 = vadd.f32 %v1786, %v2825
      %v2918 = vadd.f32 %v1791, %v2830
      %v2919 = vadd.f32 %v1794, %v2833
      %v2920 = vadd.f32 %v1799, %v2838
      %v2921 = vadd.f32 %v1802, %v2841
      %v2922 = vadd.f32 %v1807, %v2846
      %v2923 = vadd.f32 %v1810, %v2849
      %v2924 = vadd.f32 %v1815, %v2854
      %v2925 = vadd.f32 %v1818, %v2857
      %v2926 = vadd.f32 %v1823, %v2862
      %v2927 = vadd.f32 %v1826, %v2865
      %v2928 = vadd.f32 %v1831, %v2870
      %v2929 = vadd.f32 %v1834, %v2873
      %v2930 = vadd.f32 %v1839, %v2878
      %v2931 = vadd.f32 %v1842, %v2881
      %v2932 = vadd.f32 %v1847, %v2886
      %v2933 = vadd.f32 %v1850, %v2889
      %v2934 = vadd.f32 %v1855, %v2894
      %v2935 = vadd.f32 %v1858, %v2897
      %v2936 = vld [vmem:[%s213] sm:$0x1]
      %v2938 = vlaneseq
      %v2939 = vshrl.u32 %v2938, 7
      %v2940 = vsub.s32 0, %v2939
      %v2941 = vrot.slane %v2936, %v2940
      %v2943 = vadd.f32 %v2900, %v2941
      %v2944 = vadd.f32 %v2901, %v2941
      %v2945 = vadd.f32 %v2902, %v2941
      %v2946 = vadd.f32 %v2903, %v2941
      %v2947 = vadd.f32 %v2904, %v2941
      %v2948 = vadd.f32 %v2905, %v2941
      %v2949 = vadd.f32 %v2906, %v2941
      %v2950 = vadd.f32 %v2907, %v2941
      %v2951 = vadd.f32 %v2908, %v2941
      %v2952 = vadd.f32 %v2909, %v2941
      %v2953 = vadd.f32 %v2910, %v2941
      %v2954 = vadd.f32 %v2911, %v2941
      %v2955 = vadd.f32 %v2912, %v2941
      %v2956 = vadd.f32 %v2913, %v2941
      %v2957 = vadd.f32 %v2914, %v2941
      %v2958 = vadd.f32 %v2915, %v2941
      %v2959 = vadd.f32 %v2916, %v2941
      %v2960 = vadd.f32 %v2917, %v2941
      %v2961 = vadd.f32 %v2918, %v2941
      %v2962 = vadd.f32 %v2919, %v2941
      %v2963 = vadd.f32 %v2920, %v2941
      %v2964 = vadd.f32 %v2921, %v2941
      %v2965 = vadd.f32 %v2922, %v2941
      %v2966 = vadd.f32 %v2923, %v2941
      %v2967 = vadd.f32 %v2924, %v2941
      %v2968 = vadd.f32 %v2925, %v2941
      %v2969 = vadd.f32 %v2926, %v2941
      %v2970 = vadd.f32 %v2927, %v2941
      %v2971 = vadd.f32 %v2928, %v2941
      %v2972 = vadd.f32 %v2929, %v2941
      %v2973 = vadd.f32 %v2930, %v2941
      %v2974 = vadd.f32 %v2931, %v2941
      %v2975 = vadd.f32 %v2932, %v2941
      %v2976 = vadd.f32 %v2933, %v2941
      %v2977 = vadd.f32 %v2934, %v2941
      %v2978 = vadd.f32 %v2935, %v2941
      %v2979 = vmax.f32 %v2943, 0.0
      %v2980 = vmax.f32 %v2944, 0.0
      %v2981 = vmax.f32 %v2945, 0.0
      %v2982 = vmax.f32 %v2946, 0.0
      %v2983 = vmax.f32 %v2947, 0.0
      %v2984 = vmax.f32 %v2948, 0.0
      %v2985 = vmax.f32 %v2949, 0.0
      %v2986 = vmax.f32 %v2950, 0.0
      %v2987 = vmax.f32 %v2951, 0.0
      %v2988 = vmax.f32 %v2952, 0.0
      %v2989 = vmax.f32 %v2953, 0.0
      %v2990 = vmax.f32 %v2954, 0.0
      %v2991 = vmax.f32 %v2955, 0.0
      %v2992 = vmax.f32 %v2956, 0.0
      %v2993 = vmax.f32 %v2957, 0.0
      %v2994 = vmax.f32 %v2958, 0.0
      %v2995 = vmax.f32 %v2959, 0.0
      %v2996 = vmax.f32 %v2960, 0.0
      %v2997 = vmax.f32 %v2961, 0.0
      %v2998 = vmax.f32 %v2962, 0.0
      %v2999 = vmax.f32 %v2963, 0.0
      %v3000 = vmax.f32 %v2964, 0.0
      %v3001 = vmax.f32 %v2965, 0.0
      %v3002 = vmax.f32 %v2966, 0.0
      %v3003 = vmax.f32 %v2967, 0.0
      %v3004 = vmax.f32 %v2968, 0.0
      %v3005 = vmax.f32 %v2969, 0.0
      %v3006 = vmax.f32 %v2970, 0.0
      %v3007 = vmax.f32 %v2971, 0.0
      %v3008 = vmax.f32 %v2972, 0.0
      %v3009 = vmax.f32 %v2973, 0.0
      %v3010 = vmax.f32 %v2974, 0.0
      %v3011 = vmax.f32 %v2975, 0.0
      %v3012 = vmax.f32 %v2976, 0.0
      %v3013 = vmax.f32 %v2977, 0.0
      %v3014 = vmax.f32 %v2978, 0.0
      %v3015 = vpack.c.bf16 %v2980, %v2979
      %v3016 = vpack.c.bf16 %v2982, %v2981
      %v3017 = vpack.c.bf16 %v2984, %v2983
      %v3018 = vpack.c.bf16 %v2986, %v2985
      %v3019 = vpack.c.bf16 %v2988, %v2987
      %v3020 = vpack.c.bf16 %v2990, %v2989
      %v3021 = vpack.c.bf16 %v2992, %v2991
      %v3022 = vpack.c.bf16 %v2994, %v2993
      %v3023 = vpack.c.bf16 %v2996, %v2995
      %v3024 = vpack.c.bf16 %v2998, %v2997
      %v3025 = vpack.c.bf16 %v3000, %v2999
      %v3026 = vpack.c.bf16 %v3002, %v3001
      %v3027 = vpack.c.bf16 %v3004, %v3003
      %v3028 = vpack.c.bf16 %v3006, %v3005
      %v3029 = vpack.c.bf16 %v3008, %v3007
      %v3030 = vpack.c.bf16 %v3010, %v3009
      %v3031 = vpack.c.bf16 %v3012, %v3011
      %v3032 = vpack.c.bf16 %v3014, %v3013
      %v3051 = vunpack.c.l.b16 %v3015
      %v3052 = vunpack.c.h.b16 %v3015
      %v3053 = vunpack.c.l.b16 %v3016
      %v3054 = vunpack.c.h.b16 %v3016
      %v3055 = vunpack.c.l.b16 %v3017
      %v3056 = vunpack.c.h.b16 %v3017
      %v3057 = vunpack.c.l.b16 %v3018
      %v3058 = vunpack.c.h.b16 %v3018
      %v3059 = vunpack.c.l.b16 %v3019
      %v3060 = vunpack.c.h.b16 %v3019
      %v3061 = vunpack.c.l.b16 %v3020
      %v3062 = vunpack.c.h.b16 %v3020
      %v3063 = vunpack.c.l.b16 %v3021
      %v3064 = vunpack.c.h.b16 %v3021
      %v3065 = vunpack.c.l.b16 %v3022
      %v3066 = vunpack.c.h.b16 %v3022
      %v3067 = vunpack.c.l.b16 %v3023
      %v3068 = vunpack.c.h.b16 %v3023
      %v3069 = vunpack.c.l.b16 %v3024
      %v3070 = vunpack.c.h.b16 %v3024
      %v3071 = vunpack.c.l.b16 %v3025
      %v3072 = vunpack.c.h.b16 %v3025
      %v3073 = vunpack.c.l.b16 %v3026
      %v3074 = vunpack.c.h.b16 %v3026
      %v3075 = vunpack.c.l.b16 %v3027
      %v3076 = vunpack.c.h.b16 %v3027
      %v3077 = vunpack.c.l.b16 %v3028
      %v3078 = vunpack.c.h.b16 %v3028
      %v3079 = vunpack.c.l.b16 %v3029
      %v3080 = vunpack.c.h.b16 %v3029
      %v3081 = vunpack.c.l.b16 %v3030
      %v3082 = vunpack.c.h.b16 %v3030
      %v3083 = vunpack.c.l.b16 %v3031
      %v3084 = vunpack.c.h.b16 %v3031
      %v3085 = vunpack.c.l.b16 %v3032
      %v3086 = vunpack.c.h.b16 %v3032
      %v3087 = vpack.c.b16 %v3051, %v3051
      %v3088 = vpack.c.b16 %v3052, %v3052
      %v3089 = vpack.c.b16 %v3053, %v3053
      %v3090 = vpack.c.b16 %v3054, %v3054
      %v3091 = vpack.c.b16 %v3055, %v3055
      %v3092 = vpack.c.b16 %v3056, %v3056
      %v3093 = vpack.c.b16 %v3057, %v3057
      %v3094 = vpack.c.b16 %v3058, %v3058
      %v3095 = vpack.c.b16 %v3059, %v3059
      %v3096 = vpack.c.b16 %v3060, %v3060
      %v3097 = vpack.c.b16 %v3061, %v3061
      %v3098 = vpack.c.b16 %v3062, %v3062
      %v3099 = vpack.c.b16 %v3063, %v3063
      %v3100 = vpack.c.b16 %v3064, %v3064
      %v3101 = vpack.c.b16 %v3065, %v3065
      %v3102 = vpack.c.b16 %v3066, %v3066
      %v3103 = vpack.c.b16 %v3067, %v3067
      %v3104 = vpack.c.b16 %v3068, %v3068
      %v3105 = vpack.c.b16 %v3069, %v3069
      %v3106 = vpack.c.b16 %v3070, %v3070
      %v3107 = vpack.c.b16 %v3071, %v3071
      %v3108 = vpack.c.b16 %v3072, %v3072
      %v3109 = vpack.c.b16 %v3073, %v3073
      %v3110 = vpack.c.b16 %v3074, %v3074
      %v3111 = vpack.c.b16 %v3075, %v3075
      %v3112 = vpack.c.b16 %v3076, %v3076
      %v3113 = vpack.c.b16 %v3077, %v3077
      %v3114 = vpack.c.b16 %v3078, %v3078
      %v3115 = vpack.c.b16 %v3079, %v3079
      %v3116 = vpack.c.b16 %v3080, %v3080
      %v3117 = vpack.c.b16 %v3081, %v3081
      %v3118 = vpack.c.b16 %v3082, %v3082
      %v3119 = vpack.c.b16 %v3083, %v3083
      %v3120 = vpack.c.b16 %v3084, %v3084
      %v3121 = vpack.c.b16 %v3085, %v3085
      %v3122 = vpack.c.b16 %v3086, %v3086
      %3159 = vst [vmem:[%s221] sm:$0xf] %v3087
      %3160 = vst [vmem:[%s221 + $0x4] sm:$0xf] %v3088
      %3161 = vst [vmem:[%s221 + $0x8] sm:$0xf] %v3089
      %3162 = vst [vmem:[%s221 + $0xc] sm:$0xf] %v3090
      %3163 = vst [vmem:[%s221 + $0x10] sm:$0xf] %v3091
      %3164 = vst [vmem:[%s221 + $0x14] sm:$0xf] %v3092
      %3165 = vst [vmem:[%s221 + $0x18] sm:$0xf] %v3093
      %3166 = vst [vmem:[%s221 + $0x1c] sm:$0xf] %v3094
      %3167 = vst [vmem:[%s221 + $0x20] sm:$0xf] %v3095
      %3168 = vst [vmem:[%s221 + $0x24] sm:$0xf] %v3096
      %3169 = vst [vmem:[%s221 + $0x28] sm:$0xf] %v3097
      %3170 = vst [vmem:[%s221 + $0x2c] sm:$0xf] %v3098
      %3171 = vst [vmem:[%s221 + $0x30] sm:$0xf] %v3099
      %3172 = vst [vmem:[%s221 + $0x34] sm:$0xf] %v3100
      %3173 = vst [vmem:[%s221 + $0x38] sm:$0xf] %v3101
      %3174 = vst [vmem:[%s221 + $0x3c] sm:$0xf] %v3102
      %3175 = vst [vmem:[%s221 + $0x40] sm:$0xf] %v3103
      %3176 = vst [vmem:[%s221 + $0x44] sm:$0xf] %v3104
      %3177 = vst [vmem:[%s221 + $0x48] sm:$0xf] %v3105
      %3178 = vst [vmem:[%s221 + $0x4c] sm:$0xf] %v3106
      %3179 = vst [vmem:[%s221 + $0x50] sm:$0xf] %v3107
      %3180 = vst [vmem:[%s221 + $0x54] sm:$0xf] %v3108
      %3181 = vst [vmem:[%s221 + $0x58] sm:$0xf] %v3109
      %3182 = vst [vmem:[%s221 + $0x5c] sm:$0xf] %v3110
      %3183 = vst [vmem:[%s221 + $0x60] sm:$0xf] %v3111
      %3184 = vst [vmem:[%s221 + $0x64] sm:$0xf] %v3112
      %3185 = vst [vmem:[%s221 + $0x68] sm:$0xf] %v3113
      %3186 = vst [vmem:[%s221 + $0x6c] sm:$0xf] %v3114
      %3187 = vst [vmem:[%s221 + $0x70] sm:$0xf] %v3115
      %3188 = vst [vmem:[%s221 + $0x74] sm:$0xf] %v3116
      %3189 = vst [vmem:[%s221 + $0x78] sm:$0xf] %v3117
      %3190 = vst [vmem:[%s221 + $0x7c] sm:$0xf] %v3118
      %3191 = vst [vmem:[%s221 + $0x80] sm:$0xf] %v3119
      %3192 = vst [vmem:[%s221 + $0x84] sm:$0xf] %v3120
      %3193 = vst [vmem:[%s221 + $0x88] sm:$0xf] %v3121
      %3194 = vst [vmem:[%s221 + $0x8c] sm:$0xf] %v3122
      %p3195 = scmp.lt.s32.totalorder %s18, 1
      %s3196 = scalar_select %p3195, %s18, 1
      %p3197 = scmp.lt.s32.totalorder %s19, 0
      %s3198 = scalar_select %p3197, %s19, 0
      %s3199 = smul.addr %s3196, 36
      %s3200 = sadd.s32 %s3198, %s3199
      %s3201 = smul.addr %s3200, 4
      %s3202 = scalar_lea.vmem %s3, %s3201
      // Predicated region
      $region33: #{_lambda_.16} parent=31 // pred_check
        %p3203 = pneg %p124
      $region34: #{_lambda_.16} parent=31 // pred_check_branch
        %3205 = sbr.rel (%p3203) target = $region36
      $region35: #{_lambda_.16} parent=31 // pred_region
        _
      $region36: #{_lambda_.16} parent=31 // pred_fallthru
        _
    $region32: #{_lambda_.16} parent=5 // pred_fallthru
      _
    %p3206 = scmp.le.s32.totalorder 2, %s9
    // Predicated region
    $region37: #{_lambda_.16} parent=5 // pred_check
      %p3207 = pneg %p3206
    $region38: #{_lambda_.16} parent=5 // pred_check_branch
      %3209 = sbr.rel (%p3207) target = $region40
    $region39: #{_lambda_.16} parent=5 // pred_region
      %s3210 = ssub.s32 %s9, 2
      // Predicated region
      $region41: #{_lambda_.16} parent=39 // pred_check
        %p3211 = pneg %p130
      $region42: #{_lambda_.16} parent=39 // pred_check_branch
        %3213 = sbr.rel (%p3211) target = $region44
      $region43: #{_lambda_.16} parent=39 // pred_region
        %p3214 = scmp.lt.s32.totalorder %s20, 1
        %s3215 = scalar_select %p3214, %s20, 1
        %p3216 = scmp.lt.s32.totalorder %s21, 0
        %s3217 = scalar_select %p3216, %s21, 0
        %s3218 = smul.addr %s3215, 36
        %s3219 = sadd.s32 %s3217, %s3218
        %s3220 = smul.addr %s3219, 4
        %s3221 = scalar_lea.vmem %s3, %s3220
      $region44: #{_lambda_.16} parent=39 // pred_fallthru
        _
    $region40: #{_lambda_.16} parent=5 // pred_fallthru
      _
  $region6: #{_lambda_.16} parent=0 // loop_footer
    %s13 = sadd.s32 1, %s9
  $region7: #{_lambda_.16} parent=0 // loop_footer_branch
    %8 = sbr.rel target = $region3
  $region8: #{_lambda_.16} parent=0 // loop_exit
    _

// kernel: _lambda_.17
$region0: #{_lambda_.17}
  #allocation0 [shape = 'u32[]', space=smem, size = 0x4, offset = 0x4, fixed_abs, tag = 'smem constant byte address 0x4 - core index']
  #allocation1 [shape = 'u32[144,128]{1,0:T(1,128)}', space=vmem, size = 0x12000, scoped, tag = 'internal scratch']
  %s0 = inlined_call_operand.vmem [shape: bf16[512,128], index: 0, kind: input, shape index: {}]
  %s1 = inlined_call_operand.vmem [shape: bf16[128,128], index: 1, kind: input, shape index: {}]
  %s2 = inlined_call_operand.vmem [shape: f32[1,128], index: 2, kind: input, shape index: {}]
  %s3 = inlined_call_operand.vmem [shape: bf16[512,128], index: 3, kind: input, shape index: {}]
  %s4 = inlined_call_operand.vmem [shape: bf16[128,128], index: 4, kind: input, shape index: {}]
  %s5 = inlined_call_operand.vmem [shape: f32[1,128], index: 5, kind: input, shape index: {}]
  %s6 = inlined_call_operand.vmem [shape: bf16[512,128], index: 6, kind: output, shape index: {}]
  %s7 = sld [smem:[#allocation0]]
  $region34: #{_lambda_.17} parent=0
    _
  %s9 = ssub.s32 1, %s7
  %s10 = scalar_select 0, %s9, %s7
  // Predicated region
  $region2: #{_lambda_.17} parent=0 // pred_check
    _
  $region3: #{_lambda_.17} parent=0 // pred_check_branch
    %12 = sbr.rel (0) target = $region5
  $region4: #{_lambda_.17} parent=0 // pred_region
    _
  $region5: #{_lambda_.17} parent=0 // pred_fallthru
    _
  // Predicated region
  $region6: #{_lambda_.17} parent=0 // pred_check
    _
  $region7: #{_lambda_.17} parent=0 // pred_check_branch
    %14 = sbr.rel (0) target = $region9
  $region8: #{_lambda_.17} parent=0 // pred_region
    _
  $region9: #{_lambda_.17} parent=0 // pred_fallthru
    _
  // Predicated region
  $region10: #{_lambda_.17} parent=0 // pred_check
    _
  $region11: #{_lambda_.17} parent=0 // pred_check_branch
    %16 = sbr.rel (0) target = $region13
  $region12: #{_lambda_.17} parent=0 // pred_region
    _
  $region13: #{_lambda_.17} parent=0 // pred_fallthru
    _
  // Predicated region
  $region14: #{_lambda_.17} parent=0 // pred_check
    _
  $region15: #{_lambda_.17} parent=0 // pred_check_branch
    %18 = sbr.rel (0) target = $region17
  $region16: #{_lambda_.17} parent=0 // pred_region
    _
  $region17: #{_lambda_.17} parent=0 // pred_fallthru
    _
  // Predicated region
  $region18: #{_lambda_.17} parent=0 // pred_check
    _
  $region19: #{_lambda_.17} parent=0 // pred_check_branch
    %20 = sbr.rel (0) target = $region21
  $region20: #{_lambda_.17} parent=0 // pred_region
    _
  $region21: #{_lambda_.17} parent=0 // pred_fallthru
    _
  // Predicated region
  $region22: #{_lambda_.17} parent=0 // pred_check
    _
  $region23: #{_lambda_.17} parent=0 // pred_check_branch
    %22 = sbr.rel (0) target = $region25
  $region24: #{_lambda_.17} parent=0 // pred_region
    _
  $region25: #{_lambda_.17} parent=0 // pred_fallthru
    _
  %v24 = vld [vmem:[%s0] sm:$0xf]
  %v25 = vld [vmem:[%s0 + $0x4] sm:$0xf]
  %v26 = vld [vmem:[%s0 + $0x8] sm:$0xf]
  %v27 = vld [vmem:[%s0 + $0xc] sm:$0xf]
  %v28 = vld [vmem:[%s0 + $0x10] sm:$0xf]
  %v29 = vld [vmem:[%s0 + $0x14] sm:$0xf]
  %v30 = vld [vmem:[%s0 + $0x18] sm:$0xf]
  %v31 = vld [vmem:[%s0 + $0x1c] sm:$0xf]
  %v32 = vld [vmem:[%s0 + $0x20] sm:$0xf]
  %v33 = vld [vmem:[%s0 + $0x24] sm:$0xf]
  %v34 = vld [vmem:[%s0 + $0x28] sm:$0xf]
  %v35 = vld [vmem:[%s0 + $0x2c] sm:$0xf]
  %v36 = vld [vmem:[%s0 + $0x30] sm:$0xf]
  %v37 = vld [vmem:[%s0 + $0x34] sm:$0xf]
  %v38 = vld [vmem:[%s0 + $0x38] sm:$0xf]
  %v39 = vld [vmem:[%s0 + $0x3c] sm:$0xf]
  %v40 = vld [vmem:[%s0 + $0x40] sm:$0xf]
  %v41 = vld [vmem:[%s0 + $0x44] sm:$0xf]
  %v42 = vld [vmem:[%s0 + $0x48] sm:$0xf]
  %v43 = vld [vmem:[%s0 + $0x4c] sm:$0xf]
  %v44 = vld [vmem:[%s0 + $0x50] sm:$0xf]
  %v45 = vld [vmem:[%s0 + $0x54] sm:$0xf]
  %v46 = vld [vmem:[%s0 + $0x58] sm:$0xf]
  %v47 = vld [vmem:[%s0 + $0x5c] sm:$0xf]
  %v48 = vld [vmem:[%s0 + $0x60] sm:$0xf]
  %v49 = vld [vmem:[%s0 + $0x64] sm:$0xf]
  %v50 = vld [vmem:[%s0 + $0x68] sm:$0xf]
  %v51 = vld [vmem:[%s0 + $0x6c] sm:$0xf]
  %v52 = vld [vmem:[%s0 + $0x70] sm:$0xf]
  %v53 = vld [vmem:[%s0 + $0x74] sm:$0xf]
  %v54 = vld [vmem:[%s0 + $0x78] sm:$0xf]
  %v55 = vld [vmem:[%s0 + $0x7c] sm:$0xf]
  %v56 = vld [vmem:[%s0 + $0x80] sm:$0xf]
  %v57 = vld [vmem:[%s0 + $0x84] sm:$0xf]
  %v58 = vld [vmem:[%s0 + $0x88] sm:$0xf]
  %v59 = vld [vmem:[%s0 + $0x8c] sm:$0xf]
  %v60 = vld [vmem:[%s0 + $0x90] sm:$0xf]
  %v61 = vld [vmem:[%s0 + $0x94] sm:$0xf]
  %v62 = vld [vmem:[%s0 + $0x98] sm:$0xf]
  %v63 = vld [vmem:[%s0 + $0x9c] sm:$0xf]
  %v64 = vld [vmem:[%s0 + $0xa0] sm:$0xf]
  %v65 = vld [vmem:[%s0 + $0xa4] sm:$0xf]
  %v66 = vld [vmem:[%s0 + $0xa8] sm:$0xf]
  %v67 = vld [vmem:[%s0 + $0xac] sm:$0xf]
  %v68 = vld [vmem:[%s0 + $0xb0] sm:$0xf]
  %v69 = vld [vmem:[%s0 + $0xb4] sm:$0xf]
  %v70 = vld [vmem:[%s0 + $0xb8] sm:$0xf]
  %v71 = vld [vmem:[%s0 + $0xbc] sm:$0xf]
  %v72 = vld [vmem:[%s0 + $0xc0] sm:$0xf]
  %v73 = vld [vmem:[%s0 + $0xc4] sm:$0xf]
  %v74 = vld [vmem:[%s0 + $0xc8] sm:$0xf]
  %v75 = vld [vmem:[%s0 + $0xcc] sm:$0xf]
  %v76 = vld [vmem:[%s0 + $0xd0] sm:$0xf]
  %v77 = vld [vmem:[%s0 + $0xd4] sm:$0xf]
  %v78 = vld [vmem:[%s0 + $0xd8] sm:$0xf]
  %v79 = vld [vmem:[%s0 + $0xdc] sm:$0xf]
  %v80 = vld [vmem:[%s0 + $0xe0] sm:$0xf]
  %v81 = vld [vmem:[%s0 + $0xe4] sm:$0xf]
  %v82 = vld [vmem:[%s0 + $0xe8] sm:$0xf]
  %v83 = vld [vmem:[%s0 + $0xec] sm:$0xf]
  %v84 = vld [vmem:[%s0 + $0xf0] sm:$0xf]
  %v85 = vld [vmem:[%s0 + $0xf4] sm:$0xf]
  %v86 = vld [vmem:[%s0 + $0xf8] sm:$0xf]
  %v87 = vld [vmem:[%s0 + $0xfc] sm:$0xf]
  %v88 = vld [vmem:[%s1] sm:$0xf]
  %v89 = vld [vmem:[%s1 + $0x4] sm:$0xf]
  %v90 = vld [vmem:[%s1 + $0x8] sm:$0xf]
  %v91 = vld [vmem:[%s1 + $0xc] sm:$0xf]
  %v92 = vld [vmem:[%s1 + $0x10] sm:$0xf]
  %v93 = vld [vmem:[%s1 + $0x14] sm:$0xf]
  %v94 = vld [vmem:[%s1 + $0x18] sm:$0xf]
  %v95 = vld [vmem:[%s1 + $0x1c] sm:$0xf]
  %v96 = vld [vmem:[%s1 + $0x20] sm:$0xf]
  %v97 = vld [vmem:[%s1 + $0x24] sm:$0xf]
  %v98 = vld [vmem:[%s1 + $0x28] sm:$0xf]
  %v99 = vld [vmem:[%s1 + $0x2c] sm:$0xf]
  %v100 = vld [vmem:[%s1 + $0x30] sm:$0xf]
  %v101 = vld [vmem:[%s1 + $0x34] sm:$0xf]
  %v102 = vld [vmem:[%s1 + $0x38] sm:$0xf]
  %v103 = vld [vmem:[%s1 + $0x3c] sm:$0xf]
  %v104 = vld [vmem:[%s2] sm:$0x1]
  %v106 = vlaneseq
  %v107 = vshrl.u32 %v106, 7
  %v108 = vsub.s32 0, %v107
  %v109 = vrot.slane %v104, %v108
  %v175 = vunpack.c.l.b16 %v24
  %v176 = vunpack.c.l.b16 %v25
  %v177 = vunpack.c.l.b16 %v26
  %v178 = vunpack.c.l.b16 %v27
  %v179 = vunpack.c.l.b16 %v28
  %v180 = vunpack.c.l.b16 %v29
  %v181 = vunpack.c.l.b16 %v30
  %v182 = vunpack.c.l.b16 %v31
  %v183 = vunpack.c.l.b16 %v32
  %v184 = vunpack.c.l.b16 %v33
  %v185 = vunpack.c.l.b16 %v34
  %v186 = vunpack.c.l.b16 %v35
  %v187 = vunpack.c.l.b16 %v36
  %v188 = vunpack.c.l.b16 %v37
  %v189 = vunpack.c.l.b16 %v38
  %v190 = vunpack.c.l.b16 %v39
  %v191 = vunpack.c.l.b16 %v40
  %v192 = vunpack.c.l.b16 %v41
  %v193 = vunpack.c.l.b16 %v42
  %v194 = vunpack.c.l.b16 %v43
  %v195 = vunpack.c.l.b16 %v44
  %v196 = vunpack.c.l.b16 %v45
  %v197 = vunpack.c.l.b16 %v46
  %v198 = vunpack.c.l.b16 %v47
  %v199 = vunpack.c.l.b16 %v48
  %v200 = vunpack.c.l.b16 %v49
  %v201 = vunpack.c.l.b16 %v50
  %v202 = vunpack.c.l.b16 %v51
  %v203 = vunpack.c.l.b16 %v52
  %v204 = vunpack.c.l.b16 %v53
  %v205 = vunpack.c.l.b16 %v54
  %v206 = vunpack.c.l.b16 %v55
  %v207 = vunpack.c.l.b16 %v56
  %v208 = vunpack.c.l.b16 %v57
  %v209 = vunpack.c.l.b16 %v58
  %v210 = vunpack.c.l.b16 %v59
  %v211 = vunpack.c.l.b16 %v60
  %v212 = vunpack.c.l.b16 %v61
  %v213 = vunpack.c.l.b16 %v62
  %v214 = vunpack.c.l.b16 %v63
  %v215 = vunpack.c.l.b16 %v64
  %v216 = vunpack.c.l.b16 %v65
  %v217 = vunpack.c.l.b16 %v66
  %v218 = vunpack.c.l.b16 %v67
  %v219 = vunpack.c.l.b16 %v68
  %v220 = vunpack.c.l.b16 %v69
  %v221 = vunpack.c.l.b16 %v70
  %v222 = vunpack.c.l.b16 %v71
  %v223 = vunpack.c.l.b16 %v72
  %v224 = vunpack.c.l.b16 %v73
  %v225 = vunpack.c.l.b16 %v74
  %v226 = vunpack.c.l.b16 %v75
  %v227 = vunpack.c.l.b16 %v76
  %v228 = vunpack.c.l.b16 %v77
  %v229 = vunpack.c.l.b16 %v78
  %v230 = vunpack.c.l.b16 %v79
  %v231 = vunpack.c.l.b16 %v80
  %v232 = vunpack.c.l.b16 %v81
  %v233 = vunpack.c.l.b16 %v82
  %v234 = vunpack.c.l.b16 %v83
  %v235 = vunpack.c.l.b16 %v84
  %v236 = vunpack.c.l.b16 %v85
  %v237 = vunpack.c.l.b16 %v86
  %v238 = vunpack.c.l.b16 %v87
  %v239 = vpack.c.b16 %v176, %v175
  %v240 = vpack.c.b16 %v178, %v177
  %v241 = vpack.c.b16 %v180, %v179
  %v242 = vpack.c.b16 %v182, %v181
  %v243 = vpack.c.b16 %v184, %v183
  %v244 = vpack.c.b16 %v186, %v185
  %v245 = vpack.c.b16 %v188, %v187
  %v246 = vpack.c.b16 %v190, %v189
  %v247 = vpack.c.b16 %v192, %v191
  %v248 = vpack.c.b16 %v194, %v193
  %v249 = vpack.c.b16 %v196, %v195
  %v250 = vpack.c.b16 %v198, %v197
  %v251 = vpack.c.b16 %v200, %v199
  %v252 = vpack.c.b16 %v202, %v201
  %v253 = vpack.c.b16 %v204, %v203
  %v254 = vpack.c.b16 %v206, %v205
  %v255 = vpack.c.b16 %v208, %v207
  %v256 = vpack.c.b16 %v210, %v209
  %v257 = vpack.c.b16 %v212, %v211
  %v258 = vpack.c.b16 %v214, %v213
  %v259 = vpack.c.b16 %v216, %v215
  %v260 = vpack.c.b16 %v218, %v217
  %v261 = vpack.c.b16 %v220, %v219
  %v262 = vpack.c.b16 %v222, %v221
  %v263 = vpack.c.b16 %v224, %v223
  %v264 = vpack.c.b16 %v226, %v225
  %v265 = vpack.c.b16 %v228, %v227
  %v266 = vpack.c.b16 %v230, %v229
  %v267 = vpack.c.b16 %v232, %v231
  %v268 = vpack.c.b16 %v234, %v233
  %v269 = vpack.c.b16 %v236, %v235
  %v270 = vpack.c.b16 %v238, %v237
  %v319 = vunpack.c.l.b16 %v88
  %v320 = vunpack.c.l.b16 %v89
  %v321 = vunpack.c.l.b16 %v90
  %v322 = vunpack.c.l.b16 %v91
  %v323 = vunpack.c.l.b16 %v92
  %v324 = vunpack.c.l.b16 %v93
  %v325 = vunpack.c.l.b16 %v94
  %v326 = vunpack.c.l.b16 %v95
  %v327 = vunpack.c.l.b16 %v96
  %v328 = vunpack.c.l.b16 %v97
  %v329 = vunpack.c.l.b16 %v98
  %v330 = vunpack.c.l.b16 %v99
  %v331 = vunpack.c.l.b16 %v100
  %v332 = vunpack.c.l.b16 %v101
  %v333 = vunpack.c.l.b16 %v102
  %v334 = vunpack.c.l.b16 %v103
  %v335 = vpack.c.b16 %v320, %v319
  %v336 = vpack.c.b16 %v322, %v321
  %v337 = vpack.c.b16 %v324, %v323
  %v338 = vpack.c.b16 %v326, %v325
  %v339 = vpack.c.b16 %v328, %v327
  %v340 = vpack.c.b16 %v330, %v329
  %v341 = vpack.c.b16 %v332, %v331
  %v342 = vpack.c.b16 %v334, %v333
  %351 = vmatprep.subr.bf16.mxu0 0
  %352 = vmatpush1.bf16.msra.mxu0 %v342
  %353 = vmatprep.subr.bf16.mxu0 0
  %354 = vmatpush1.bf16.msra.mxu0 %v341
  %355 = vmatprep.subr.bf16.mxu0 0
  %356 = vmatpush1.bf16.msra.mxu0 %v340
  %357 = vmatprep.subr.bf16.mxu0 0
  %358 = vmatpush1.bf16.msra.mxu0 %v339
  %359 = vmatprep.subr.bf16.mxu0 0
  %360 = vmatpush1.bf16.msra.mxu0 %v338
  %361 = vmatprep.subr.bf16.mxu0 0
  %362 = vmatpush1.bf16.msra.mxu0 %v337
  %363 = vmatprep.subr.bf16.mxu0 0
  %364 = vmatpush1.bf16.msra.mxu0 %v336
  %365 = vmatprep.subr.bf16.mxu0 0
  %366 = vmatpush1.bf16.msra.mxu0 %v335
  %367 = vmatprep.subr.bf16.mxu0 0
  %368 = vmatpush2.bf16.msra.mxu0 0
  %369 = vmatprep.subr.bf16.mxu0 0
  %370 = vmatpush2.bf16.msra.mxu0 0
  %371 = vmatprep.subr.bf16.mxu0 0
  %372 = vmatpush2.bf16.msra.mxu0 0
  %373 = vmatprep.subr.bf16.mxu0 0
  %374 = vmatpush2.bf16.msra.mxu0 0
  %375 = vmatprep.subr.bf16.mxu0 0
  %376 = vmatpush2.bf16.msra.mxu0 0
  %377 = vmatprep.subr.bf16.mxu0 0
  %378 = vmatpush2.bf16.msra.mxu0 0
  %379 = vmatprep.subr.bf16.mxu0 0
  %380 = vmatpush2.bf16.msra.mxu0 0
  %381 = vmatprep.subr.bf16.mxu0 0
  %382 = vmatpush2.bf16.msra.mxu0 0
  %383 = vmatprep.mubr.bf16.mxu0 0
  %384 = vmatmul.mubr.bf16.gmra.mxu0 %v239
  %v385 = vpop.f32.mrf.mxu0
  %v386 = vadd.f32 %v109, %v385
  %v387 = vpop.f32.mrf.mxu0
  %v388 = vpop.f32.mrf.mxu0
  %v389 = vadd.f32 %v109, %v388
  %v390 = vpop.f32.mrf.mxu0
  %391 = vmatprep.mubr.bf16.mxu0 0
  %392 = vmatmul.mubr.bf16.gmra.mxu0 %v240
  %v393 = vpop.f32.mrf.mxu0
  %v394 = vadd.f32 %v109, %v393
  %v395 = vpop.f32.mrf.mxu0
  %v396 = vpop.f32.mrf.mxu0
  %v397 = vadd.f32 %v109, %v396
  %v398 = vpop.f32.mrf.mxu0
  %399 = vmatprep.mubr.bf16.mxu0 0
  %400 = vmatmul.mubr.bf16.gmra.mxu0 %v241
  %v401 = vpop.f32.mrf.mxu0
  %v402 = vadd.f32 %v109, %v401
  %v403 = vpop.f32.mrf.mxu0
  %v404 = vpop.f32.mrf.mxu0
  %v405 = vadd.f32 %v109, %v404
  %v406 = vpop.f32.mrf.mxu0
  %407 = vmatprep.mubr.bf16.mxu0 0
  %408 = vmatmul.mubr.bf16.gmra.mxu0 %v242
  %v409 = vpop.f32.mrf.mxu0
  %v410 = vadd.f32 %v109, %v409
  %v411 = vpop.f32.mrf.mxu0
  %v412 = vpop.f32.mrf.mxu0
  %v413 = vadd.f32 %v109, %v412
  %v414 = vpop.f32.mrf.mxu0
  %415 = vmatprep.mubr.bf16.mxu0 0
  %416 = vmatmul.mubr.bf16.gmra.mxu0 %v243
  %v417 = vpop.f32.mrf.mxu0
  %v418 = vadd.f32 %v109, %v417
  %v419 = vpop.f32.mrf.mxu0
  %v420 = vpop.f32.mrf.mxu0
  %v421 = vadd.f32 %v109, %v420
  %v422 = vpop.f32.mrf.mxu0
  %423 = vmatprep.mubr.bf16.mxu0 0
  %424 = vmatmul.mubr.bf16.gmra.mxu0 %v244
  %v425 = vpop.f32.mrf.mxu0
  %v426 = vadd.f32 %v109, %v425
  %v427 = vpop.f32.mrf.mxu0
  %v428 = vpop.f32.mrf.mxu0
  %v429 = vadd.f32 %v109, %v428
  %v430 = vpop.f32.mrf.mxu0
  %431 = vmatprep.mubr.bf16.mxu0 0
  %432 = vmatmul.mubr.bf16.gmra.mxu0 %v245
  %v433 = vpop.f32.mrf.mxu0
  %v434 = vadd.f32 %v109, %v433
  %v435 = vpop.f32.mrf.mxu0
  %v436 = vpop.f32.mrf.mxu0
  %v437 = vadd.f32 %v109, %v436
  %v438 = vpop.f32.mrf.mxu0
  %439 = vmatprep.mubr.bf16.mxu0 0
  %440 = vmatmul.mubr.bf16.gmra.mxu0 %v246
  %v441 = vpop.f32.mrf.mxu0
  %v442 = vadd.f32 %v109, %v441
  %v443 = vpop.f32.mrf.mxu0
  %v444 = vpop.f32.mrf.mxu0
  %v445 = vadd.f32 %v109, %v444
  %v446 = vpop.f32.mrf.mxu0
  %447 = vmatprep.mubr.bf16.mxu0 0
  %448 = vmatmul.mubr.bf16.gmra.mxu0 %v247
  %v449 = vpop.f32.mrf.mxu0
  %v450 = vadd.f32 %v109, %v449
  %v451 = vpop.f32.mrf.mxu0
  %v452 = vpop.f32.mrf.mxu0
  %v453 = vadd.f32 %v109, %v452
  %v454 = vpop.f32.mrf.mxu0
  %455 = vmatprep.mubr.bf16.mxu0 0
  %456 = vmatmul.mubr.bf16.gmra.mxu0 %v248
  %v457 = vpop.f32.mrf.mxu0
  %v458 = vadd.f32 %v109, %v457
  %v459 = vpop.f32.mrf.mxu0
  %v460 = vpop.f32.mrf.mxu0
  %v461 = vadd.f32 %v109, %v460
  %v462 = vpop.f32.mrf.mxu0
  %463 = vmatprep.mubr.bf16.mxu0 0
  %464 = vmatmul.mubr.bf16.gmra.mxu0 %v249
  %v465 = vpop.f32.mrf.mxu0
  %v466 = vadd.f32 %v109, %v465
  %v467 = vpop.f32.mrf.mxu0
  %v468 = vpop.f32.mrf.mxu0
  %v469 = vadd.f32 %v109, %v468
  %v470 = vpop.f32.mrf.mxu0
  %471 = vmatprep.mubr.bf16.mxu0 0
  %472 = vmatmul.mubr.bf16.gmra.mxu0 %v250
  %v473 = vpop.f32.mrf.mxu0
  %v474 = vadd.f32 %v109, %v473
  %v475 = vpop.f32.mrf.mxu0
  %v476 = vpop.f32.mrf.mxu0
  %v477 = vadd.f32 %v109, %v476
  %v478 = vpop.f32.mrf.mxu0
  %479 = vmatprep.mubr.bf16.mxu0 0
  %480 = vmatmul.mubr.bf16.gmra.mxu0 %v251
  %v481 = vpop.f32.mrf.mxu0
  %v482 = vadd.f32 %v109, %v481
  %v483 = vpop.f32.mrf.mxu0
  %v484 = vpop.f32.mrf.mxu0
  %v485 = vadd.f32 %v109, %v484
  %v486 = vpop.f32.mrf.mxu0
  %487 = vmatprep.mubr.bf16.mxu0 0
  %488 = vmatmul.mubr.bf16.gmra.mxu0 %v252
  %v489 = vpop.f32.mrf.mxu0
  %v490 = vadd.f32 %v109, %v489
  %v491 = vpop.f32.mrf.mxu0
  %v492 = vpop.f32.mrf.mxu0
  %v493 = vadd.f32 %v109, %v492
  %v494 = vpop.f32.mrf.mxu0
  %495 = vmatprep.mubr.bf16.mxu0 0
  %496 = vmatmul.mubr.bf16.gmra.mxu0 %v253
  %v497 = vpop.f32.mrf.mxu0
  %v498 = vadd.f32 %v109, %v497
  %v499 = vpop.f32.mrf.mxu0
  %v500 = vpop.f32.mrf.mxu0
  %v501 = vadd.f32 %v109, %v500
  %v502 = vpop.f32.mrf.mxu0
  %503 = vmatprep.mubr.bf16.mxu0 0
  %504 = vmatmul.mubr.bf16.gmra.mxu0 %v254
  %v505 = vpop.f32.mrf.mxu0
  %v506 = vadd.f32 %v109, %v505
  %v507 = vpop.f32.mrf.mxu0
  %v508 = vpop.f32.mrf.mxu0
  %v509 = vadd.f32 %v109, %v508
  %v510 = vpop.f32.mrf.mxu0
  %511 = vmatprep.mubr.bf16.mxu0 0
  %512 = vmatmul.mubr.bf16.gmra.mxu0 %v255
  %v513 = vpop.f32.mrf.mxu0
  %v514 = vadd.f32 %v109, %v513
  %v515 = vpop.f32.mrf.mxu0
  %v516 = vpop.f32.mrf.mxu0
  %v517 = vadd.f32 %v109, %v516
  %v518 = vpop.f32.mrf.mxu0
  %519 = vmatprep.mubr.bf16.mxu0 0
  %520 = vmatmul.mubr.bf16.gmra.mxu0 %v256
  %v521 = vpop.f32.mrf.mxu0
  %v522 = vadd.f32 %v109, %v521
  %v523 = vpop.f32.mrf.mxu0
  %v524 = vpop.f32.mrf.mxu0
  %v525 = vadd.f32 %v109, %v524
  %v526 = vpop.f32.mrf.mxu0
  %527 = vmatprep.mubr.bf16.mxu0 0
  %528 = vmatmul.mubr.bf16.gmra.mxu0 %v257
  %v529 = vpop.f32.mrf.mxu0
  %v530 = vadd.f32 %v109, %v529
  %v531 = vpop.f32.mrf.mxu0
  %v532 = vpop.f32.mrf.mxu0
  %v533 = vadd.f32 %v109, %v532
  %v534 = vpop.f32.mrf.mxu0
  %535 = vmatprep.mubr.bf16.mxu0 0
  %536 = vmatmul.mubr.bf16.gmra.mxu0 %v258
  %v537 = vpop.f32.mrf.mxu0
  %v538 = vadd.f32 %v109, %v537
  %v539 = vpop.f32.mrf.mxu0
  %v540 = vpop.f32.mrf.mxu0
  %v541 = vadd.f32 %v109, %v540
  %v542 = vpop.f32.mrf.mxu0
  %543 = vmatprep.mubr.bf16.mxu0 0
  %544 = vmatmul.mubr.bf16.gmra.mxu0 %v259
  %v545 = vpop.f32.mrf.mxu0
  %v546 = vadd.f32 %v109, %v545
  %v547 = vpop.f32.mrf.mxu0
  %v548 = vpop.f32.mrf.mxu0
  %v549 = vadd.f32 %v109, %v548
  %v550 = vpop.f32.mrf.mxu0
  %551 = vmatprep.mubr.bf16.mxu0 0
  %552 = vmatmul.mubr.bf16.gmra.mxu0 %v260
  %v553 = vpop.f32.mrf.mxu0
  %v554 = vadd.f32 %v109, %v553
  %v555 = vpop.f32.mrf.mxu0
  %v556 = vpop.f32.mrf.mxu0
  %v557 = vadd.f32 %v109, %v556
  %v558 = vpop.f32.mrf.mxu0
  %559 = vmatprep.mubr.bf16.mxu0 0
  %560 = vmatmul.mubr.bf16.gmra.mxu0 %v261
  %v561 = vpop.f32.mrf.mxu0
  %v562 = vadd.f32 %v109, %v561
  %v563 = vpop.f32.mrf.mxu0
  %v564 = vpop.f32.mrf.mxu0
  %v565 = vadd.f32 %v109, %v564
  %v566 = vpop.f32.mrf.mxu0
  %567 = vmatprep.mubr.bf16.mxu0 0
  %568 = vmatmul.mubr.bf16.gmra.mxu0 %v262
  %v569 = vpop.f32.mrf.mxu0
  %v570 = vadd.f32 %v109, %v569
  %v571 = vpop.f32.mrf.mxu0
  %v572 = vpop.f32.mrf.mxu0
  %v573 = vadd.f32 %v109, %v572
  %v574 = vpop.f32.mrf.mxu0
  %575 = vmatprep.mubr.bf16.mxu0 0
  %576 = vmatmul.mubr.bf16.gmra.mxu0 %v263
  %v577 = vpop.f32.mrf.mxu0
  %v578 = vadd.f32 %v109, %v577
  %v579 = vpop.f32.mrf.mxu0
  %v580 = vpop.f32.mrf.mxu0
  %v581 = vadd.f32 %v109, %v580
  %v582 = vpop.f32.mrf.mxu0
  %583 = vmatprep.mubr.bf16.mxu0 0
  %584 = vmatmul.mubr.bf16.gmra.mxu0 %v264
  %v585 = vpop.f32.mrf.mxu0
  %v586 = vadd.f32 %v109, %v585
  %v587 = vpop.f32.mrf.mxu0
  %v588 = vpop.f32.mrf.mxu0
  %v589 = vadd.f32 %v109, %v588
  %v590 = vpop.f32.mrf.mxu0
  %591 = vmatprep.mubr.bf16.mxu0 0
  %592 = vmatmul.mubr.bf16.gmra.mxu0 %v265
  %v593 = vpop.f32.mrf.mxu0
  %v594 = vadd.f32 %v109, %v593
  %v595 = vpop.f32.mrf.mxu0
  %v596 = vpop.f32.mrf.mxu0
  %v597 = vadd.f32 %v109, %v596
  %v598 = vpop.f32.mrf.mxu0
  %599 = vmatprep.mubr.bf16.mxu0 0
  %600 = vmatmul.mubr.bf16.gmra.mxu0 %v266
  %v601 = vpop.f32.mrf.mxu0
  %v602 = vadd.f32 %v109, %v601
  %v603 = vpop.f32.mrf.mxu0
  %v604 = vpop.f32.mrf.mxu0
  %v605 = vadd.f32 %v109, %v604
  %v606 = vpop.f32.mrf.mxu0
  %607 = vmatprep.mubr.bf16.mxu0 0
  %608 = vmatmul.mubr.bf16.gmra.mxu0 %v267
  %v609 = vpop.f32.mrf.mxu0
  %v610 = vadd.f32 %v109, %v609
  %v611 = vpop.f32.mrf.mxu0
  %v612 = vpop.f32.mrf.mxu0
  %v613 = vadd.f32 %v109, %v612
  %v614 = vpop.f32.mrf.mxu0
  %615 = vmatprep.mubr.bf16.mxu0 0
  %616 = vmatmul.mubr.bf16.gmra.mxu0 %v268
  %v617 = vpop.f32.mrf.mxu0
  %v618 = vadd.f32 %v109, %v617
  %v619 = vpop.f32.mrf.mxu0
  %v620 = vpop.f32.mrf.mxu0
  %v621 = vadd.f32 %v109, %v620
  %v622 = vpop.f32.mrf.mxu0
  %623 = vmatprep.mubr.bf16.mxu0 0
  %624 = vmatmul.mubr.bf16.gmra.mxu0 %v269
  %v625 = vpop.f32.mrf.mxu0
  %v626 = vadd.f32 %v109, %v625
  %v627 = vpop.f32.mrf.mxu0
  %v628 = vpop.f32.mrf.mxu0
  %v629 = vadd.f32 %v109, %v628
  %v630 = vpop.f32.mrf.mxu0
  %631 = vmatprep.mubr.bf16.mxu0 0
  %632 = vmatmul.mubr.bf16.gmra.mxu0 %v270
  %v633 = vpop.f32.mrf.mxu0
  %v634 = vadd.f32 %v109, %v633
  %v635 = vpop.f32.mrf.mxu0
  %v636 = vpop.f32.mrf.mxu0
  %v637 = vadd.f32 %v109, %v636
  %v638 = vpop.f32.mrf.mxu0
  %639 = vdwg.mxu0
  %v640 = vld [vmem:[%s3] sm:$0xf]
  %v641 = vld [vmem:[%s3 + $0x4] sm:$0xf]
  %v642 = vld [vmem:[%s3 + $0x8] sm:$0xf]
  %v643 = vld [vmem:[%s3 + $0xc] sm:$0xf]
  %v644 = vld [vmem:[%s3 + $0x10] sm:$0xf]
  %v645 = vld [vmem:[%s3 + $0x14] sm:$0xf]
  %v646 = vld [vmem:[%s3 + $0x18] sm:$0xf]
  %v647 = vld [vmem:[%s3 + $0x1c] sm:$0xf]
  %v648 = vld [vmem:[%s3 + $0x20] sm:$0xf]
  %v649 = vld [vmem:[%s3 + $0x24] sm:$0xf]
  %v650 = vld [vmem:[%s3 + $0x28] sm:$0xf]
  %v651 = vld [vmem:[%s3 + $0x2c] sm:$0xf]
  %v652 = vld [vmem:[%s3 + $0x30] sm:$0xf]
  %v653 = vld [vmem:[%s3 + $0x34] sm:$0xf]
  %v654 = vld [vmem:[%s3 + $0x38] sm:$0xf]
  %v655 = vld [vmem:[%s3 + $0x3c] sm:$0xf]
  %v656 = vld [vmem:[%s3 + $0x40] sm:$0xf]
  %v657 = vld [vmem:[%s3 + $0x44] sm:$0xf]
  %v658 = vld [vmem:[%s3 + $0x48] sm:$0xf]
  %v659 = vld [vmem:[%s3 + $0x4c] sm:$0xf]
  %v660 = vld [vmem:[%s3 + $0x50] sm:$0xf]
  %v661 = vld [vmem:[%s3 + $0x54] sm:$0xf]
  %v662 = vld [vmem:[%s3 + $0x58] sm:$0xf]
  %v663 = vld [vmem:[%s3 + $0x5c] sm:$0xf]
  %v664 = vld [vmem:[%s3 + $0x60] sm:$0xf]
  %v665 = vld [vmem:[%s3 + $0x64] sm:$0xf]
  %v666 = vld [vmem:[%s3 + $0x68] sm:$0xf]
  %v667 = vld [vmem:[%s3 + $0x6c] sm:$0xf]
  %v668 = vld [vmem:[%s3 + $0x70] sm:$0xf]
  %v669 = vld [vmem:[%s3 + $0x74] sm:$0xf]
  %v670 = vld [vmem:[%s3 + $0x78] sm:$0xf]
  %v671 = vld [vmem:[%s3 + $0x7c] sm:$0xf]
  %v672 = vld [vmem:[%s3 + $0x80] sm:$0xf]
  %v673 = vld [vmem:[%s3 + $0x84] sm:$0xf]
  %v674 = vld [vmem:[%s3 + $0x88] sm:$0xf]
  %v675 = vld [vmem:[%s3 + $0x8c] sm:$0xf]
  %v676 = vld [vmem:[%s3 + $0x90] sm:$0xf]
  %v677 = vld [vmem:[%s3 + $0x94] sm:$0xf]
  %v678 = vld [vmem:[%s3 + $0x98] sm:$0xf]
  %v679 = vld [vmem:[%s3 + $0x9c] sm:$0xf]
  %v680 = vld [vmem:[%s3 + $0xa0] sm:$0xf]
  %v681 = vld [vmem:[%s3 + $0xa4] sm:$0xf]
  %v682 = vld [vmem:[%s3 + $0xa8] sm:$0xf]
  %v683 = vld [vmem:[%s3 + $0xac] sm:$0xf]
  %v684 = vld [vmem:[%s3 + $0xb0] sm:$0xf]
  %v685 = vld [vmem:[%s3 + $0xb4] sm:$0xf]
  %v686 = vld [vmem:[%s3 + $0xb8] sm:$0xf]
  %v687 = vld [vmem:[%s3 + $0xbc] sm:$0xf]
  %v688 = vld [vmem:[%s3 + $0xc0] sm:$0xf]
  %v689 = vld [vmem:[%s3 + $0xc4] sm:$0xf]
  %v690 = vld [vmem:[%s3 + $0xc8] sm:$0xf]
  %v691 = vld [vmem:[%s3 + $0xcc] sm:$0xf]
  %v692 = vld [vmem:[%s3 + $0xd0] sm:$0xf]
  %v693 = vld [vmem:[%s3 + $0xd4] sm:$0xf]
  %v694 = vld [vmem:[%s3 + $0xd8] sm:$0xf]
  %v695 = vld [vmem:[%s3 + $0xdc] sm:$0xf]
  %v696 = vld [vmem:[%s3 + $0xe0] sm:$0xf]
  %v697 = vld [vmem:[%s3 + $0xe4] sm:$0xf]
  %v698 = vld [vmem:[%s3 + $0xe8] sm:$0xf]
  %v699 = vld [vmem:[%s3 + $0xec] sm:$0xf]
  %v700 = vld [vmem:[%s3 + $0xf0] sm:$0xf]
  %v701 = vld [vmem:[%s3 + $0xf4] sm:$0xf]
  %v702 = vld [vmem:[%s3 + $0xf8] sm:$0xf]
  %v703 = vld [vmem:[%s3 + $0xfc] sm:$0xf]
  %v704 = vld [vmem:[%s4] sm:$0xf]
  %v705 = vld [vmem:[%s4 + $0x4] sm:$0xf]
  %v706 = vld [vmem:[%s4 + $0x8] sm:$0xf]
  %v707 = vld [vmem:[%s4 + $0xc] sm:$0xf]
  %v708 = vld [vmem:[%s4 + $0x10] sm:$0xf]
  %v709 = vld [vmem:[%s4 + $0x14] sm:$0xf]
  %v710 = vld [vmem:[%s4 + $0x18] sm:$0xf]
  %v711 = vld [vmem:[%s4 + $0x1c] sm:$0xf]
  %v712 = vld [vmem:[%s4 + $0x20] sm:$0xf]
  %v713 = vld [vmem:[%s4 + $0x24] sm:$0xf]
  %v714 = vld [vmem:[%s4 + $0x28] sm:$0xf]
  %v715 = vld [vmem:[%s4 + $0x2c] sm:$0xf]
  %v716 = vld [vmem:[%s4 + $0x30] sm:$0xf]
  %v717 = vld [vmem:[%s4 + $0x34] sm:$0xf]
  %v718 = vld [vmem:[%s4 + $0x38] sm:$0xf]
  %v719 = vld [vmem:[%s4 + $0x3c] sm:$0xf]
  %v720 = vld [vmem:[%s5] sm:$0x1]
  %v722 = vlaneseq
  %v723 = vshrl.u32 %v722, 7
  %v724 = vsub.s32 0, %v723
  %v725 = vrot.slane %v720, %v724
  %v791 = vunpack.c.l.b16 %v640
  %v792 = vunpack.c.l.b16 %v641
  %v793 = vunpack.c.l.b16 %v642
  %v794 = vunpack.c.l.b16 %v643
  %v795 = vunpack.c.l.b16 %v644
  %v796 = vunpack.c.l.b16 %v645
  %v797 = vunpack.c.l.b16 %v646
  %v798 = vunpack.c.l.b16 %v647
  %v799 = vunpack.c.l.b16 %v648
  %v800 = vunpack.c.l.b16 %v649
  %v801 = vunpack.c.l.b16 %v650
  %v802 = vunpack.c.l.b16 %v651
  %v803 = vunpack.c.l.b16 %v652
  %v804 = vunpack.c.l.b16 %v653
  %v805 = vunpack.c.l.b16 %v654
  %v806 = vunpack.c.l.b16 %v655
  %v807 = vunpack.c.l.b16 %v656
  %v808 = vunpack.c.l.b16 %v657
  %v809 = vunpack.c.l.b16 %v658
  %v810 = vunpack.c.l.b16 %v659
  %v811 = vunpack.c.l.b16 %v660
  %v812 = vunpack.c.l.b16 %v661
  %v813 = vunpack.c.l.b16 %v662
  %v814 = vunpack.c.l.b16 %v663
  %v815 = vunpack.c.l.b16 %v664
  %v816 = vunpack.c.l.b16 %v665
  %v817 = vunpack.c.l.b16 %v666
  %v818 = vunpack.c.l.b16 %v667
  %v819 = vunpack.c.l.b16 %v668
  %v820 = vunpack.c.l.b16 %v669
  %v821 = vunpack.c.l.b16 %v670
  %v822 = vunpack.c.l.b16 %v671
  %v823 = vunpack.c.l.b16 %v672
  %v824 = vunpack.c.l.b16 %v673
  %v825 = vunpack.c.l.b16 %v674
  %v826 = vunpack.c.l.b16 %v675
  %v827 = vunpack.c.l.b16 %v676
  %v828 = vunpack.c.l.b16 %v677
  %v829 = vunpack.c.l.b16 %v678
  %v830 = vunpack.c.l.b16 %v679
  %v831 = vunpack.c.l.b16 %v680
  %v832 = vunpack.c.l.b16 %v681
  %v833 = vunpack.c.l.b16 %v682
  %v834 = vunpack.c.l.b16 %v683
  %v835 = vunpack.c.l.b16 %v684
  %v836 = vunpack.c.l.b16 %v685
  %v837 = vunpack.c.l.b16 %v686
  %v838 = vunpack.c.l.b16 %v687
  %v839 = vunpack.c.l.b16 %v688
  %v840 = vunpack.c.l.b16 %v689
  %v841 = vunpack.c.l.b16 %v690
  %v842 = vunpack.c.l.b16 %v691
  %v843 = vunpack.c.l.b16 %v692
  %v844 = vunpack.c.l.b16 %v693
  %v845 = vunpack.c.l.b16 %v694
  %v846 = vunpack.c.l.b16 %v695
  %v847 = vunpack.c.l.b16 %v696
  %v848 = vunpack.c.l.b16 %v697
  %v849 = vunpack.c.l.b16 %v698
  %v850 = vunpack.c.l.b16 %v699
  %v851 = vunpack.c.l.b16 %v700
  %v852 = vunpack.c.l.b16 %v701
  %v853 = vunpack.c.l.b16 %v702
  %v854 = vunpack.c.l.b16 %v703
  %v855 = vpack.c.b16 %v792, %v791
  %v856 = vpack.c.b16 %v794, %v793
  %v857 = vpack.c.b16 %v796, %v795
  %v858 = vpack.c.b16 %v798, %v797
  %v859 = vpack.c.b16 %v800, %v799
  %v860 = vpack.c.b16 %v802, %v801
  %v861 = vpack.c.b16 %v804, %v803
  %v862 = vpack.c.b16 %v806, %v805
  %v863 = vpack.c.b16 %v808, %v807
  %v864 = vpack.c.b16 %v810, %v809
  %v865 = vpack.c.b16 %v812, %v811
  %v866 = vpack.c.b16 %v814, %v813
  %v867 = vpack.c.b16 %v816, %v815
  %v868 = vpack.c.b16 %v818, %v817
  %v869 = vpack.c.b16 %v820, %v819
  %v870 = vpack.c.b16 %v822, %v821
  %v871 = vpack.c.b16 %v824, %v823
  %v872 = vpack.c.b16 %v826, %v825
  %v873 = vpack.c.b16 %v828, %v827
  %v874 = vpack.c.b16 %v830, %v829
  %v875 = vpack.c.b16 %v832, %v831
  %v876 = vpack.c.b16 %v834, %v833
  %v877 = vpack.c.b16 %v836, %v835
  %v878 = vpack.c.b16 %v838, %v837
  %v879 = vpack.c.b16 %v840, %v839
  %v880 = vpack.c.b16 %v842, %v841
  %v881 = vpack.c.b16 %v844, %v843
  %v882 = vpack.c.b16 %v846, %v845
  %v883 = vpack.c.b16 %v848, %v847
  %v884 = vpack.c.b16 %v850, %v849
  %v885 = vpack.c.b16 %v852, %v851
  %v886 = vpack.c.b16 %v854, %v853
  %v935 = vunpack.c.l.b16 %v704
  %v936 = vunpack.c.l.b16 %v705
  %v937 = vunpack.c.l.b16 %v706
  %v938 = vunpack.c.l.b16 %v707
  %v939 = vunpack.c.l.b16 %v708
  %v940 = vunpack.c.l.b16 %v709
  %v941 = vunpack.c.l.b16 %v710
  %v942 = vunpack.c.l.b16 %v711
  %v943 = vunpack.c.l.b16 %v712
  %v944 = vunpack.c.l.b16 %v713
  %v945 = vunpack.c.l.b16 %v714
  %v946 = vunpack.c.l.b16 %v715
  %v947 = vunpack.c.l.b16 %v716
  %v948 = vunpack.c.l.b16 %v717
  %v949 = vunpack.c.l.b16 %v718
  %v950 = vunpack.c.l.b16 %v719
  %v951 = vpack.c.b16 %v936, %v935
  %v952 = vpack.c.b16 %v938, %v937
  %v953 = vpack.c.b16 %v940, %v939
  %v954 = vpack.c.b16 %v942, %v941
  %v955 = vpack.c.b16 %v944, %v943
  %v956 = vpack.c.b16 %v946, %v945
  %v957 = vpack.c.b16 %v948, %v947
  %v958 = vpack.c.b16 %v950, %v949
  %967 = vmatprep.subr.bf16.mxu0 0
  %968 = vmatpush1.bf16.msra.mxu0 %v958
  %969 = vmatprep.subr.bf16.mxu0 0
  %970 = vmatpush1.bf16.msra.mxu0 %v957
  %971 = vmatprep.subr.bf16.mxu0 0
  %972 = vmatpush1.bf16.msra.mxu0 %v956
  %973 = vmatprep.subr.bf16.mxu0 0
  %974 = vmatpush1.bf16.msra.mxu0 %v955
  %975 = vmatprep.subr.bf16.mxu0 0
  %976 = vmatpush1.bf16.msra.mxu0 %v954
  %977 = vmatprep.subr.bf16.mxu0 0
  %978 = vmatpush1.bf16.msra.mxu0 %v953
  %979 = vmatprep.subr.bf16.mxu0 0
  %980 = vmatpush1.bf16.msra.mxu0 %v952
  %981 = vmatprep.subr.bf16.mxu0 0
  %982 = vmatpush1.bf16.msra.mxu0 %v951
  %983 = vmatprep.subr.bf16.mxu0 0
  %984 = vmatpush2.bf16.msra.mxu0 0
  %985 = vmatprep.subr.bf16.mxu0 0
  %986 = vmatpush2.bf16.msra.mxu0 0
  %987 = vmatprep.subr.bf16.mxu0 0
  %988 = vmatpush2.bf16.msra.mxu0 0
  %989 = vmatprep.subr.bf16.mxu0 0
  %990 = vmatpush2.bf16.msra.mxu0 0
  %991 = vmatprep.subr.bf16.mxu0 0
  %992 = vmatpush2.bf16.msra.mxu0 0
  %993 = vmatprep.subr.bf16.mxu0 0
  %994 = vmatpush2.bf16.msra.mxu0 0
  %995 = vmatprep.subr.bf16.mxu0 0
  %996 = vmatpush2.bf16.msra.mxu0 0
  %997 = vmatprep.subr.bf16.mxu0 0
  %998 = vmatpush2.bf16.msra.mxu0 0
  %999 = vmatprep.mubr.bf16.mxu0 0
  %1000 = vmatmul.mubr.bf16.gmra.mxu0 %v855
  %v1001 = vpop.f32.mrf.mxu0
  %v1002 = vadd.f32 %v725, %v1001
  %v1003 = vpop.f32.mrf.mxu0
  %v1004 = vpop.f32.mrf.mxu0
  %v1005 = vadd.f32 %v725, %v1004
  %v1006 = vpop.f32.mrf.mxu0
  %1007 = vmatprep.mubr.bf16.mxu0 0
  %1008 = vmatmul.mubr.bf16.gmra.mxu0 %v856
  %v1009 = vpop.f32.mrf.mxu0
  %v1010 = vadd.f32 %v725, %v1009
  %v1011 = vpop.f32.mrf.mxu0
  %v1012 = vpop.f32.mrf.mxu0
  %v1013 = vadd.f32 %v725, %v1012
  %v1014 = vpop.f32.mrf.mxu0
  %1015 = vmatprep.mubr.bf16.mxu0 0
  %1016 = vmatmul.mubr.bf16.gmra.mxu0 %v857
  %v1017 = vpop.f32.mrf.mxu0
  %v1018 = vadd.f32 %v725, %v1017
  %v1019 = vpop.f32.mrf.mxu0
  %v1020 = vpop.f32.mrf.mxu0
  %v1021 = vadd.f32 %v725, %v1020
  %v1022 = vpop.f32.mrf.mxu0
  %1023 = vmatprep.mubr.bf16.mxu0 0
  %1024 = vmatmul.mubr.bf16.gmra.mxu0 %v858
  %v1025 = vpop.f32.mrf.mxu0
  %v1026 = vadd.f32 %v725, %v1025
  %v1027 = vpop.f32.mrf.mxu0
  %v1028 = vpop.f32.mrf.mxu0
  %v1029 = vadd.f32 %v725, %v1028
  %v1030 = vpop.f32.mrf.mxu0
  %1031 = vmatprep.mubr.bf16.mxu0 0
  %1032 = vmatmul.mubr.bf16.gmra.mxu0 %v859
  %v1033 = vpop.f32.mrf.mxu0
  %v1034 = vadd.f32 %v725, %v1033
  %v1035 = vpop.f32.mrf.mxu0
  %v1036 = vpop.f32.mrf.mxu0
  %v1037 = vadd.f32 %v725, %v1036
  %v1038 = vpop.f32.mrf.mxu0
  %1039 = vmatprep.mubr.bf16.mxu0 0
  %1040 = vmatmul.mubr.bf16.gmra.mxu0 %v860
  %v1041 = vpop.f32.mrf.mxu0
  %v1042 = vadd.f32 %v725, %v1041
  %v1043 = vpop.f32.mrf.mxu0
  %v1044 = vpop.f32.mrf.mxu0
  %v1045 = vadd.f32 %v725, %v1044
  %v1046 = vpop.f32.mrf.mxu0
  %1047 = vmatprep.mubr.bf16.mxu0 0
  %1048 = vmatmul.mubr.bf16.gmra.mxu0 %v861
  %v1049 = vpop.f32.mrf.mxu0
  %v1050 = vadd.f32 %v725, %v1049
  %v1051 = vpop.f32.mrf.mxu0
  %v1052 = vpop.f32.mrf.mxu0
  %v1053 = vadd.f32 %v725, %v1052
  %v1054 = vpop.f32.mrf.mxu0
  %1055 = vmatprep.mubr.bf16.mxu0 0
  %1056 = vmatmul.mubr.bf16.gmra.mxu0 %v862
  %v1057 = vpop.f32.mrf.mxu0
  %v1058 = vadd.f32 %v725, %v1057
  %v1059 = vpop.f32.mrf.mxu0
  %v1060 = vpop.f32.mrf.mxu0
  %v1061 = vadd.f32 %v725, %v1060
  %v1062 = vpop.f32.mrf.mxu0
  %1063 = vmatprep.mubr.bf16.mxu0 0
  %1064 = vmatmul.mubr.bf16.gmra.mxu0 %v863
  %v1065 = vpop.f32.mrf.mxu0
  %v1066 = vadd.f32 %v725, %v1065
  %v1067 = vpop.f32.mrf.mxu0
  %v1068 = vpop.f32.mrf.mxu0
  %v1069 = vadd.f32 %v725, %v1068
  %v1070 = vpop.f32.mrf.mxu0
  %1071 = vmatprep.mubr.bf16.mxu0 0
  %1072 = vmatmul.mubr.bf16.gmra.mxu0 %v864
  %v1073 = vpop.f32.mrf.mxu0
  %v1074 = vadd.f32 %v725, %v1073
  %v1075 = vpop.f32.mrf.mxu0
  %v1076 = vpop.f32.mrf.mxu0
  %v1077 = vadd.f32 %v725, %v1076
  %v1078 = vpop.f32.mrf.mxu0
  %1079 = vmatprep.mubr.bf16.mxu0 0
  %1080 = vmatmul.mubr.bf16.gmra.mxu0 %v865
  %v1081 = vpop.f32.mrf.mxu0
  %v1082 = vadd.f32 %v725, %v1081
  %v1083 = vpop.f32.mrf.mxu0
  %v1084 = vpop.f32.mrf.mxu0
  %v1085 = vadd.f32 %v725, %v1084
  %v1086 = vpop.f32.mrf.mxu0
  %1087 = vmatprep.mubr.bf16.mxu0 0
  %1088 = vmatmul.mubr.bf16.gmra.mxu0 %v866
  %v1089 = vpop.f32.mrf.mxu0
  %v1090 = vadd.f32 %v725, %v1089
  %v1091 = vpop.f32.mrf.mxu0
  %v1092 = vpop.f32.mrf.mxu0
  %v1093 = vadd.f32 %v725, %v1092
  %v1094 = vpop.f32.mrf.mxu0
  %1095 = vmatprep.mubr.bf16.mxu0 0
  %1096 = vmatmul.mubr.bf16.gmra.mxu0 %v867
  %v1097 = vpop.f32.mrf.mxu0
  %v1098 = vadd.f32 %v725, %v1097
  %v1099 = vpop.f32.mrf.mxu0
  %v1100 = vpop.f32.mrf.mxu0
  %v1101 = vadd.f32 %v725, %v1100
  %v1102 = vpop.f32.mrf.mxu0
  %1103 = vmatprep.mubr.bf16.mxu0 0
  %1104 = vmatmul.mubr.bf16.gmra.mxu0 %v868
  %v1105 = vpop.f32.mrf.mxu0
  %v1106 = vadd.f32 %v725, %v1105
  %v1107 = vpop.f32.mrf.mxu0
  %v1108 = vpop.f32.mrf.mxu0
  %v1109 = vadd.f32 %v725, %v1108
  %v1110 = vpop.f32.mrf.mxu0
  %1111 = vmatprep.mubr.bf16.mxu0 0
  %1112 = vmatmul.mubr.bf16.gmra.mxu0 %v869
  %v1113 = vpop.f32.mrf.mxu0
  %v1114 = vadd.f32 %v725, %v1113
  %v1115 = vpop.f32.mrf.mxu0
  %v1116 = vpop.f32.mrf.mxu0
  %v1117 = vadd.f32 %v725, %v1116
  %v1118 = vpop.f32.mrf.mxu0
  %1119 = vmatprep.mubr.bf16.mxu0 0
  %1120 = vmatmul.mubr.bf16.gmra.mxu0 %v870
  %v1121 = vpop.f32.mrf.mxu0
  %v1122 = vadd.f32 %v725, %v1121
  %v1123 = vpop.f32.mrf.mxu0
  %v1124 = vpop.f32.mrf.mxu0
  %v1125 = vadd.f32 %v725, %v1124
  %v1126 = vpop.f32.mrf.mxu0
  %1127 = vmatprep.mubr.bf16.mxu0 0
  %1128 = vmatmul.mubr.bf16.gmra.mxu0 %v871
  %v1129 = vpop.f32.mrf.mxu0
  %v1130 = vadd.f32 %v725, %v1129
  %v1131 = vpop.f32.mrf.mxu0
  %v1132 = vpop.f32.mrf.mxu0
  %v1133 = vadd.f32 %v725, %v1132
  %v1134 = vpop.f32.mrf.mxu0
  %1135 = vmatprep.mubr.bf16.mxu0 0
  %1136 = vmatmul.mubr.bf16.gmra.mxu0 %v872
  %v1137 = vpop.f32.mrf.mxu0
  %v1138 = vadd.f32 %v725, %v1137
  %v1139 = vpop.f32.mrf.mxu0
  %v1140 = vpop.f32.mrf.mxu0
  %v1141 = vadd.f32 %v725, %v1140
  %v1142 = vpop.f32.mrf.mxu0
  %1143 = vmatprep.mubr.bf16.mxu0 0
  %1144 = vmatmul.mubr.bf16.gmra.mxu0 %v873
  %v1145 = vpop.f32.mrf.mxu0
  %v1146 = vadd.f32 %v725, %v1145
  %v1147 = vpop.f32.mrf.mxu0
  %v1148 = vpop.f32.mrf.mxu0
  %v1149 = vadd.f32 %v725, %v1148
  %v1150 = vpop.f32.mrf.mxu0
  %1151 = vmatprep.mubr.bf16.mxu0 0
  %1152 = vmatmul.mubr.bf16.gmra.mxu0 %v874
  %v1153 = vpop.f32.mrf.mxu0
  %v1154 = vadd.f32 %v725, %v1153
  %v1155 = vpop.f32.mrf.mxu0
  %v1156 = vpop.f32.mrf.mxu0
  %v1157 = vadd.f32 %v725, %v1156
  %v1158 = vpop.f32.mrf.mxu0
  %1159 = vmatprep.mubr.bf16.mxu0 0
  %1160 = vmatmul.mubr.bf16.gmra.mxu0 %v875
  %v1161 = vpop.f32.mrf.mxu0
  %v1162 = vadd.f32 %v725, %v1161
  %v1163 = vpop.f32.mrf.mxu0
  %v1164 = vpop.f32.mrf.mxu0
  %v1165 = vadd.f32 %v725, %v1164
  %v1166 = vpop.f32.mrf.mxu0
  %1167 = vmatprep.mubr.bf16.mxu0 0
  %1168 = vmatmul.mubr.bf16.gmra.mxu0 %v876
  %v1169 = vpop.f32.mrf.mxu0
  %v1170 = vadd.f32 %v725, %v1169
  %v1171 = vpop.f32.mrf.mxu0
  %v1172 = vpop.f32.mrf.mxu0
  %v1173 = vadd.f32 %v725, %v1172
  %v1174 = vpop.f32.mrf.mxu0
  %1175 = vmatprep.mubr.bf16.mxu0 0
  %1176 = vmatmul.mubr.bf16.gmra.mxu0 %v877
  %v1177 = vpop.f32.mrf.mxu0
  %v1178 = vadd.f32 %v725, %v1177
  %v1179 = vpop.f32.mrf.mxu0
  %v1180 = vpop.f32.mrf.mxu0
  %v1181 = vadd.f32 %v725, %v1180
  %v1182 = vpop.f32.mrf.mxu0
  %1183 = vmatprep.mubr.bf16.mxu0 0
  %1184 = vmatmul.mubr.bf16.gmra.mxu0 %v878
  %v1185 = vpop.f32.mrf.mxu0
  %v1186 = vadd.f32 %v725, %v1185
  %v1187 = vpop.f32.mrf.mxu0
  %v1188 = vpop.f32.mrf.mxu0
  %v1189 = vadd.f32 %v725, %v1188
  %v1190 = vpop.f32.mrf.mxu0
  %1191 = vmatprep.mubr.bf16.mxu0 0
  %1192 = vmatmul.mubr.bf16.gmra.mxu0 %v879
  %v1193 = vpop.f32.mrf.mxu0
  %v1194 = vadd.f32 %v725, %v1193
  %v1195 = vpop.f32.mrf.mxu0
  %v1196 = vpop.f32.mrf.mxu0
  %v1197 = vadd.f32 %v725, %v1196
  %v1198 = vpop.f32.mrf.mxu0
  %1199 = vmatprep.mubr.bf16.mxu0 0
  %1200 = vmatmul.mubr.bf16.gmra.mxu0 %v880
  %v1201 = vpop.f32.mrf.mxu0
  %v1202 = vadd.f32 %v725, %v1201
  %v1203 = vpop.f32.mrf.mxu0
  %v1204 = vpop.f32.mrf.mxu0
  %v1205 = vadd.f32 %v725, %v1204
  %v1206 = vpop.f32.mrf.mxu0
  %1207 = vmatprep.mubr.bf16.mxu0 0
  %1208 = vmatmul.mubr.bf16.gmra.mxu0 %v881
  %v1209 = vpop.f32.mrf.mxu0
  %v1210 = vadd.f32 %v725, %v1209
  %v1211 = vpop.f32.mrf.mxu0
  %v1212 = vpop.f32.mrf.mxu0
  %v1213 = vadd.f32 %v725, %v1212
  %v1214 = vpop.f32.mrf.mxu0
  %1215 = vmatprep.mubr.bf16.mxu0 0
  %1216 = vmatmul.mubr.bf16.gmra.mxu0 %v882
  %v1217 = vpop.f32.mrf.mxu0
  %v1218 = vadd.f32 %v725, %v1217
  %v1219 = vpop.f32.mrf.mxu0
  %v1220 = vpop.f32.mrf.mxu0
  %v1221 = vadd.f32 %v725, %v1220
  %v1222 = vpop.f32.mrf.mxu0
  %1223 = vmatprep.mubr.bf16.mxu0 0
  %1224 = vmatmul.mubr.bf16.gmra.mxu0 %v883
  %v1225 = vpop.f32.mrf.mxu0
  %v1226 = vadd.f32 %v725, %v1225
  %v1227 = vpop.f32.mrf.mxu0
  %v1228 = vpop.f32.mrf.mxu0
  %v1229 = vadd.f32 %v725, %v1228
  %v1230 = vpop.f32.mrf.mxu0
  %1231 = vmatprep.mubr.bf16.mxu0 0
  %1232 = vmatmul.mubr.bf16.gmra.mxu0 %v884
  %v1233 = vpop.f32.mrf.mxu0
  %v1234 = vadd.f32 %v725, %v1233
  %v1235 = vpop.f32.mrf.mxu0
  %v1236 = vpop.f32.mrf.mxu0
  %v1237 = vadd.f32 %v725, %v1236
  %v1238 = vpop.f32.mrf.mxu0
  %1239 = vmatprep.mubr.bf16.mxu0 0
  %1240 = vmatmul.mubr.bf16.gmra.mxu0 %v885
  %v1241 = vpop.f32.mrf.mxu0
  %v1242 = vadd.f32 %v725, %v1241
  %v1243 = vpop.f32.mrf.mxu0
  %v1244 = vpop.f32.mrf.mxu0
  %v1245 = vadd.f32 %v725, %v1244
  %v1246 = vpop.f32.mrf.mxu0
  %1247 = vmatprep.mubr.bf16.mxu0 0
  %1248 = vmatmul.mubr.bf16.gmra.mxu0 %v886
  %v1249 = vpop.f32.mrf.mxu0
  %v1250 = vadd.f32 %v725, %v1249
  %v1251 = vpop.f32.mrf.mxu0
  %v1252 = vpop.f32.mrf.mxu0
  %v1253 = vadd.f32 %v725, %v1252
  %v1254 = vpop.f32.mrf.mxu0
  %1255 = vdwg.mxu0
  %v1256 = vadd.f32 %v386, %v1002
  %v1257 = vadd.f32 %v389, %v1005
  %v1258 = vadd.f32 %v394, %v1010
  %v1259 = vadd.f32 %v397, %v1013
  %v1260 = vadd.f32 %v402, %v1018
  %v1261 = vadd.f32 %v405, %v1021
  %v1262 = vadd.f32 %v410, %v1026
  %v1263 = vadd.f32 %v413, %v1029
  %v1264 = vadd.f32 %v418, %v1034
  %v1265 = vadd.f32 %v421, %v1037
  %v1266 = vadd.f32 %v426, %v1042
  %v1267 = vadd.f32 %v429, %v1045
  %v1268 = vadd.f32 %v434, %v1050
  %v1269 = vadd.f32 %v437, %v1053
  %v1270 = vadd.f32 %v442, %v1058
  %v1271 = vadd.f32 %v445, %v1061
  %v1272 = vadd.f32 %v450, %v1066
  %v1273 = vadd.f32 %v453, %v1069
  %v1274 = vadd.f32 %v458, %v1074
  %v1275 = vadd.f32 %v461, %v1077
  %v1276 = vadd.f32 %v466, %v1082
  %v1277 = vadd.f32 %v469, %v1085
  %v1278 = vadd.f32 %v474, %v1090
  %v1279 = vadd.f32 %v477, %v1093
  %v1280 = vadd.f32 %v482, %v1098
  %v1281 = vadd.f32 %v485, %v1101
  %v1282 = vadd.f32 %v490, %v1106
  %v1283 = vadd.f32 %v493, %v1109
  %v1284 = vadd.f32 %v498, %v1114
  %v1285 = vadd.f32 %v501, %v1117
  %v1286 = vadd.f32 %v506, %v1122
  %v1287 = vadd.f32 %v509, %v1125
  %v1288 = vadd.f32 %v514, %v1130
  %v1289 = vadd.f32 %v517, %v1133
  %v1290 = vadd.f32 %v522, %v1138
  %v1291 = vadd.f32 %v525, %v1141
  %v1292 = vadd.f32 %v530, %v1146
  %v1293 = vadd.f32 %v533, %v1149
  %v1294 = vadd.f32 %v538, %v1154
  %v1295 = vadd.f32 %v541, %v1157
  %v1296 = vadd.f32 %v546, %v1162
  %v1297 = vadd.f32 %v549, %v1165
  %v1298 = vadd.f32 %v554, %v1170
  %v1299 = vadd.f32 %v557, %v1173
  %v1300 = vadd.f32 %v562, %v1178
  %v1301 = vadd.f32 %v565, %v1181
  %v1302 = vadd.f32 %v570, %v1186
  %v1303 = vadd.f32 %v573, %v1189
  %v1304 = vadd.f32 %v578, %v1194
  %v1305 = vadd.f32 %v581, %v1197
  %v1306 = vadd.f32 %v586, %v1202
  %v1307 = vadd.f32 %v589, %v1205
  %v1308 = vadd.f32 %v594, %v1210
  %v1309 = vadd.f32 %v597, %v1213
  %v1310 = vadd.f32 %v602, %v1218
  %v1311 = vadd.f32 %v605, %v1221
  %v1312 = vadd.f32 %v610, %v1226
  %v1313 = vadd.f32 %v613, %v1229
  %v1314 = vadd.f32 %v618, %v1234
  %v1315 = vadd.f32 %v621, %v1237
  %v1316 = vadd.f32 %v626, %v1242
  %v1317 = vadd.f32 %v629, %v1245
  %v1318 = vadd.f32 %v634, %v1250
  %v1319 = vadd.f32 %v637, %v1253
  %v1320 = vmax.f32 %v1256, 0.0
  %v1321 = vmax.f32 %v1257, 0.0
  %v1322 = vmax.f32 %v1258, 0.0
  %v1323 = vmax.f32 %v1259, 0.0
  %v1324 = vmax.f32 %v1260, 0.0
  %v1325 = vmax.f32 %v1261, 0.0
  %v1326 = vmax.f32 %v1262, 0.0
  %v1327 = vmax.f32 %v1263, 0.0
  %v1328 = vmax.f32 %v1264, 0.0
  %v1329 = vmax.f32 %v1265, 0.0
  %v1330 = vmax.f32 %v1266, 0.0
  %v1331 = vmax.f32 %v1267, 0.0
  %v1332 = vmax.f32 %v1268, 0.0
  %v1333 = vmax.f32 %v1269, 0.0
  %v1334 = vmax.f32 %v1270, 0.0
  %v1335 = vmax.f32 %v1271, 0.0
  %v1336 = vmax.f32 %v1272, 0.0
  %v1337 = vmax.f32 %v1273, 0.0
  %v1338 = vmax.f32 %v1274, 0.0
  %v1339 = vmax.f32 %v1275, 0.0
  %v1340 = vmax.f32 %v1276, 0.0
  %v1341 = vmax.f32 %v1277, 0.0
  %v1342 = vmax.f32 %v1278, 0.0
  %v1343 = vmax.f32 %v1279, 0.0
  %v1344 = vmax.f32 %v1280, 0.0
  %v1345 = vmax.f32 %v1281, 0.0
  %v1346 = vmax.f32 %v1282, 0.0
  %v1347 = vmax.f32 %v1283, 0.0
  %v1348 = vmax.f32 %v1284, 0.0
  %v1349 = vmax.f32 %v1285, 0.0
  %v1350 = vmax.f32 %v1286, 0.0
  %v1351 = vmax.f32 %v1287, 0.0
  %v1352 = vmax.f32 %v1288, 0.0
  %v1353 = vmax.f32 %v1289, 0.0
  %v1354 = vmax.f32 %v1290, 0.0
  %v1355 = vmax.f32 %v1291, 0.0
  %v1356 = vmax.f32 %v1292, 0.0
  %v1357 = vmax.f32 %v1293, 0.0
  %v1358 = vmax.f32 %v1294, 0.0
  %v1359 = vmax.f32 %v1295, 0.0
  %v1360 = vmax.f32 %v1296, 0.0
  %v1361 = vmax.f32 %v1297, 0.0
  %v1362 = vmax.f32 %v1298, 0.0
  %v1363 = vmax.f32 %v1299, 0.0
  %v1364 = vmax.f32 %v1300, 0.0
  %v1365 = vmax.f32 %v1301, 0.0
  %v1366 = vmax.f32 %v1302, 0.0
  %v1367 = vmax.f32 %v1303, 0.0
  %v1368 = vmax.f32 %v1304, 0.0
  %v1369 = vmax.f32 %v1305, 0.0
  %v1370 = vmax.f32 %v1306, 0.0
  %v1371 = vmax.f32 %v1307, 0.0
  %v1372 = vmax.f32 %v1308, 0.0
  %v1373 = vmax.f32 %v1309, 0.0
  %v1374 = vmax.f32 %v1310, 0.0
  %v1375 = vmax.f32 %v1311, 0.0
  %v1376 = vmax.f32 %v1312, 0.0
  %v1377 = vmax.f32 %v1313, 0.0
  %v1378 = vmax.f32 %v1314, 0.0
  %v1379 = vmax.f32 %v1315, 0.0
  %v1380 = vmax.f32 %v1316, 0.0
  %v1381 = vmax.f32 %v1317, 0.0
  %v1382 = vmax.f32 %v1318, 0.0
  %v1383 = vmax.f32 %v1319, 0.0
  %v1384 = vpack.c.bf16 %v1321, %v1320
  %v1385 = vpack.c.bf16 %v1323, %v1322
  %v1386 = vpack.c.bf16 %v1325, %v1324
  %v1387 = vpack.c.bf16 %v1327, %v1326
  %v1388 = vpack.c.bf16 %v1329, %v1328
  %v1389 = vpack.c.bf16 %v1331, %v1330
  %v1390 = vpack.c.bf16 %v1333, %v1332
  %v1391 = vpack.c.bf16 %v1335, %v1334
  %v1392 = vpack.c.bf16 %v1337, %v1336
  %v1393 = vpack.c.bf16 %v1339, %v1338
  %v1394 = vpack.c.bf16 %v1341, %v1340
  %v1395 = vpack.c.bf16 %v1343, %v1342
  %v1396 = vpack.c.bf16 %v1345, %v1344
  %v1397 = vpack.c.bf16 %v1347, %v1346
  %v1398 = vpack.c.bf16 %v1349, %v1348
  %v1399 = vpack.c.bf16 %v1351, %v1350
  %v1400 = vpack.c.bf16 %v1353, %v1352
  %v1401 = vpack.c.bf16 %v1355, %v1354
  %v1402 = vpack.c.bf16 %v1357, %v1356
  %v1403 = vpack.c.bf16 %v1359, %v1358
  %v1404 = vpack.c.bf16 %v1361, %v1360
  %v1405 = vpack.c.bf16 %v1363, %v1362
  %v1406 = vpack.c.bf16 %v1365, %v1364
  %v1407 = vpack.c.bf16 %v1367, %v1366
  %v1408 = vpack.c.bf16 %v1369, %v1368
  %v1409 = vpack.c.bf16 %v1371, %v1370
  %v1410 = vpack.c.bf16 %v1373, %v1372
  %v1411 = vpack.c.bf16 %v1375, %v1374
  %v1412 = vpack.c.bf16 %v1377, %v1376
  %v1413 = vpack.c.bf16 %v1379, %v1378
  %v1414 = vpack.c.bf16 %v1381, %v1380
  %v1415 = vpack.c.bf16 %v1383, %v1382
  %v1448 = vunpack.c.l.b16 %v1384
  %v1449 = vunpack.c.h.b16 %v1384
  %v1450 = vunpack.c.l.b16 %v1385
  %v1451 = vunpack.c.h.b16 %v1385
  %v1452 = vunpack.c.l.b16 %v1386
  %v1453 = vunpack.c.h.b16 %v1386
  %v1454 = vunpack.c.l.b16 %v1387
  %v1455 = vunpack.c.h.b16 %v1387
  %v1456 = vunpack.c.l.b16 %v1388
  %v1457 = vunpack.c.h.b16 %v1388
  %v1458 = vunpack.c.l.b16 %v1389
  %v1459 = vunpack.c.h.b16 %v1389
  %v1460 = vunpack.c.l.b16 %v1390
  %v1461 = vunpack.c.h.b16 %v1390
  %v1462 = vunpack.c.l.b16 %v1391
  %v1463 = vunpack.c.h.b16 %v1391
  %v1464 = vunpack.c.l.b16 %v1392
  %v1465 = vunpack.c.h.b16 %v1392
  %v1466 = vunpack.c.l.b16 %v1393
  %v1467 = vunpack.c.h.b16 %v1393
  %v1468 = vunpack.c.l.b16 %v1394
  %v1469 = vunpack.c.h.b16 %v1394
  %v1470 = vunpack.c.l.b16 %v1395
  %v1471 = vunpack.c.h.b16 %v1395
  %v1472 = vunpack.c.l.b16 %v1396
  %v1473 = vunpack.c.h.b16 %v1396
  %v1474 = vunpack.c.l.b16 %v1397
  %v1475 = vunpack.c.h.b16 %v1397
  %v1476 = vunpack.c.l.b16 %v1398
  %v1477 = vunpack.c.h.b16 %v1398
  %v1478 = vunpack.c.l.b16 %v1399
  %v1479 = vunpack.c.h.b16 %v1399
  %v1480 = vunpack.c.l.b16 %v1400
  %v1481 = vunpack.c.h.b16 %v1400
  %v1482 = vunpack.c.l.b16 %v1401
  %v1483 = vunpack.c.h.b16 %v1401
  %v1484 = vunpack.c.l.b16 %v1402
  %v1485 = vunpack.c.h.b16 %v1402
  %v1486 = vunpack.c.l.b16 %v1403
  %v1487 = vunpack.c.h.b16 %v1403
  %v1488 = vunpack.c.l.b16 %v1404
  %v1489 = vunpack.c.h.b16 %v1404
  %v1490 = vunpack.c.l.b16 %v1405
  %v1491 = vunpack.c.h.b16 %v1405
  %v1492 = vunpack.c.l.b16 %v1406
  %v1493 = vunpack.c.h.b16 %v1406
  %v1494 = vunpack.c.l.b16 %v1407
  %v1495 = vunpack.c.h.b16 %v1407
  %v1496 = vunpack.c.l.b16 %v1408
  %v1497 = vunpack.c.h.b16 %v1408
  %v1498 = vunpack.c.l.b16 %v1409
  %v1499 = vunpack.c.h.b16 %v1409
  %v1500 = vunpack.c.l.b16 %v1410
  %v1501 = vunpack.c.h.b16 %v1410
  %v1502 = vunpack.c.l.b16 %v1411
  %v1503 = vunpack.c.h.b16 %v1411
  %v1504 = vunpack.c.l.b16 %v1412
  %v1505 = vunpack.c.h.b16 %v1412
  %v1506 = vunpack.c.l.b16 %v1413
  %v1507 = vunpack.c.h.b16 %v1413
  %v1508 = vunpack.c.l.b16 %v1414
  %v1509 = vunpack.c.h.b16 %v1414
  %v1510 = vunpack.c.l.b16 %v1415
  %v1511 = vunpack.c.h.b16 %v1415
  %v1512 = vpack.c.b16 %v1448, %v1448
  %v1513 = vpack.c.b16 %v1449, %v1449
  %v1514 = vpack.c.b16 %v1450, %v1450
  %v1515 = vpack.c.b16 %v1451, %v1451
  %v1516 = vpack.c.b16 %v1452, %v1452
  %v1517 = vpack.c.b16 %v1453, %v1453
  %v1518 = vpack.c.b16 %v1454, %v1454
  %v1519 = vpack.c.b16 %v1455, %v1455
  %v1520 = vpack.c.b16 %v1456, %v1456
  %v1521 = vpack.c.b16 %v1457, %v1457
  %v1522 = vpack.c.b16 %v1458, %v1458
  %v1523 = vpack.c.b16 %v1459, %v1459
  %v1524 = vpack.c.b16 %v1460, %v1460
  %v1525 = vpack.c.b16 %v1461, %v1461
  %v1526 = vpack.c.b16 %v1462, %v1462
  %v1527 = vpack.c.b16 %v1463, %v1463
  %v1528 = vpack.c.b16 %v1464, %v1464
  %v1529 = vpack.c.b16 %v1465, %v1465
  %v1530 = vpack.c.b16 %v1466, %v1466
  %v1531 = vpack.c.b16 %v1467, %v1467
  %v1532 = vpack.c.b16 %v1468, %v1468
  %v1533 = vpack.c.b16 %v1469, %v1469
  %v1534 = vpack.c.b16 %v1470, %v1470
  %v1535 = vpack.c.b16 %v1471, %v1471
  %v1536 = vpack.c.b16 %v1472, %v1472
  %v1537 = vpack.c.b16 %v1473, %v1473
  %v1538 = vpack.c.b16 %v1474, %v1474
  %v1539 = vpack.c.b16 %v1475, %v1475
  %v1540 = vpack.c.b16 %v1476, %v1476
  %v1541 = vpack.c.b16 %v1477, %v1477
  %v1542 = vpack.c.b16 %v1478, %v1478
  %v1543 = vpack.c.b16 %v1479, %v1479
  %v1544 = vpack.c.b16 %v1480, %v1480
  %v1545 = vpack.c.b16 %v1481, %v1481
  %v1546 = vpack.c.b16 %v1482, %v1482
  %v1547 = vpack.c.b16 %v1483, %v1483
  %v1548 = vpack.c.b16 %v1484, %v1484
  %v1549 = vpack.c.b16 %v1485, %v1485
  %v1550 = vpack.c.b16 %v1486, %v1486
  %v1551 = vpack.c.b16 %v1487, %v1487
  %v1552 = vpack.c.b16 %v1488, %v1488
  %v1553 = vpack.c.b16 %v1489, %v1489
  %v1554 = vpack.c.b16 %v1490, %v1490
  %v1555 = vpack.c.b16 %v1491, %v1491
  %v1556 = vpack.c.b16 %v1492, %v1492
  %v1557 = vpack.c.b16 %v1493, %v1493
  %v1558 = vpack.c.b16 %v1494, %v1494
  %v1559 = vpack.c.b16 %v1495, %v1495
  %v1560 = vpack.c.b16 %v1496, %v1496
  %v1561 = vpack.c.b16 %v1497, %v1497
  %v1562 = vpack.c.b16 %v1498, %v1498
  %v1563 = vpack.c.b16 %v1499, %v1499
  %v1564 = vpack.c.b16 %v1500, %v1500
  %v1565 = vpack.c.b16 %v1501, %v1501
  %v1566 = vpack.c.b16 %v1502, %v1502
  %v1567 = vpack.c.b16 %v1503, %v1503
  %v1568 = vpack.c.b16 %v1504, %v1504
  %v1569 = vpack.c.b16 %v1505, %v1505
  %v1570 = vpack.c.b16 %v1506, %v1506
  %v1571 = vpack.c.b16 %v1507, %v1507
  %v1572 = vpack.c.b16 %v1508, %v1508
  %v1573 = vpack.c.b16 %v1509, %v1509
  %v1574 = vpack.c.b16 %v1510, %v1510
  %v1575 = vpack.c.b16 %v1511, %v1511
  %1640 = vst [vmem:[%s6] sm:$0xf] %v1512
  %1641 = vst [vmem:[%s6 + $0x4] sm:$0xf] %v1513
  %1642 = vst [vmem:[%s6 + $0x8] sm:$0xf] %v1514
  %1643 = vst [vmem:[%s6 + $0xc] sm:$0xf] %v1515
  %1644 = vst [vmem:[%s6 + $0x10] sm:$0xf] %v1516
  %1645 = vst [vmem:[%s6 + $0x14] sm:$0xf] %v1517
  %1646 = vst [vmem:[%s6 + $0x18] sm:$0xf] %v1518
  %1647 = vst [vmem:[%s6 + $0x1c] sm:$0xf] %v1519
  %1648 = vst [vmem:[%s6 + $0x20] sm:$0xf] %v1520
  %1649 = vst [vmem:[%s6 + $0x24] sm:$0xf] %v1521
  %1650 = vst [vmem:[%s6 + $0x28] sm:$0xf] %v1522
  %1651 = vst [vmem:[%s6 + $0x2c] sm:$0xf] %v1523
  %1652 = vst [vmem:[%s6 + $0x30] sm:$0xf] %v1524
  %1653 = vst [vmem:[%s6 + $0x34] sm:$0xf] %v1525
  %1654 = vst [vmem:[%s6 + $0x38] sm:$0xf] %v1526
  %1655 = vst [vmem:[%s6 + $0x3c] sm:$0xf] %v1527
  %1656 = vst [vmem:[%s6 + $0x40] sm:$0xf] %v1528
  %1657 = vst [vmem:[%s6 + $0x44] sm:$0xf] %v1529
  %1658 = vst [vmem:[%s6 + $0x48] sm:$0xf] %v1530
  %1659 = vst [vmem:[%s6 + $0x4c] sm:$0xf] %v1531
  %1660 = vst [vmem:[%s6 + $0x50] sm:$0xf] %v1532
  %1661 = vst [vmem:[%s6 + $0x54] sm:$0xf] %v1533
  %1662 = vst [vmem:[%s6 + $0x58] sm:$0xf] %v1534
  %1663 = vst [vmem:[%s6 + $0x5c] sm:$0xf] %v1535
  %1664 = vst [vmem:[%s6 + $0x60] sm:$0xf] %v1536
  %1665 = vst [vmem:[%s6 + $0x64] sm:$0xf] %v1537
  %1666 = vst [vmem:[%s6 + $0x68] sm:$0xf] %v1538
  %1667 = vst [vmem:[%s6 + $0x6c] sm:$0xf] %v1539
  %1668 = vst [vmem:[%s6 + $0x70] sm:$0xf] %v1540
  %1669 = vst [vmem:[%s6 + $0x74] sm:$0xf] %v1541
  %1670 = vst [vmem:[%s6 + $0x78] sm:$0xf] %v1542
  %1671 = vst [vmem:[%s6 + $0x7c] sm:$0xf] %v1543
  %1672 = vst [vmem:[%s6 + $0x80] sm:$0xf] %v1544
  %1673 = vst [vmem:[%s6 + $0x84] sm:$0xf] %v1545
  %1674 = vst [vmem:[%s6 + $0x88] sm:$0xf] %v1546
  %1675 = vst [vmem:[%s6 + $0x8c] sm:$0xf] %v1547
  %1676 = vst [vmem:[%s6 + $0x90] sm:$0xf] %v1548
  %1677 = vst [vmem:[%s6 + $0x94] sm:$0xf] %v1549
  %1678 = vst [vmem:[%s6 + $0x98] sm:$0xf] %v1550
  %1679 = vst [vmem:[%s6 + $0x9c] sm:$0xf] %v1551
  %1680 = vst [vmem:[%s6 + $0xa0] sm:$0xf] %v1552
  %1681 = vst [vmem:[%s6 + $0xa4] sm:$0xf] %v1553
  %1682 = vst [vmem:[%s6 + $0xa8] sm:$0xf] %v1554
  %1683 = vst [vmem:[%s6 + $0xac] sm:$0xf] %v1555
  %1684 = vst [vmem:[%s6 + $0xb0] sm:$0xf] %v1556
  %1685 = vst [vmem:[%s6 + $0xb4] sm:$0xf] %v1557
  %1686 = vst [vmem:[%s6 + $0xb8] sm:$0xf] %v1558
  %1687 = vst [vmem:[%s6 + $0xbc] sm:$0xf] %v1559
  %1688 = vst [vmem:[%s6 + $0xc0] sm:$0xf] %v1560
  %1689 = vst [vmem:[%s6 + $0xc4] sm:$0xf] %v1561
  %1690 = vst [vmem:[%s6 + $0xc8] sm:$0xf] %v1562
  %1691 = vst [vmem:[%s6 + $0xcc] sm:$0xf] %v1563
  %1692 = vst [vmem:[%s6 + $0xd0] sm:$0xf] %v1564
  %1693 = vst [vmem:[%s6 + $0xd4] sm:$0xf] %v1565
  %1694 = vst [vmem:[%s6 + $0xd8] sm:$0xf] %v1566
  %1695 = vst [vmem:[%s6 + $0xdc] sm:$0xf] %v1567
  %1696 = vst [vmem:[%s6 + $0xe0] sm:$0xf] %v1568
  %1697 = vst [vmem:[%s6 + $0xe4] sm:$0xf] %v1569
  %1698 = vst [vmem:[%s6 + $0xe8] sm:$0xf] %v1570
  %1699 = vst [vmem:[%s6 + $0xec] sm:$0xf] %v1571
  %1700 = vst [vmem:[%s6 + $0xf0] sm:$0xf] %v1572
  %1701 = vst [vmem:[%s6 + $0xf4] sm:$0xf] %v1573
  %1702 = vst [vmem:[%s6 + $0xf8] sm:$0xf] %v1574
  %1703 = vst [vmem:[%s6 + $0xfc] sm:$0xf] %v1575
  // Predicated region
  $region26: #{_lambda_.17} parent=0 // pred_check
    _
  $region27: #{_lambda_.17} parent=0 // pred_check_branch
    %1705 = sbr.rel (0) target = $region29
  $region28: #{_lambda_.17} parent=0 // pred_region
    _
  $region29: #{_lambda_.17} parent=0 // pred_fallthru
    _
  // Predicated region
  $region30: #{_lambda_.17} parent=0 // pred_check
    _
  $region31: #{_lambda_.17} parent=0 // pred_check_branch
    %1707 = sbr.rel (0) target = $region33
  $region32: #{_lambda_.17} parent=0 // pred_region
    _
  $region33: #{_lambda_.17} parent=0 // pred_fallthru
    _

// kernel: _lambda_.23
$region0: #{_lambda_.23}
  #allocation0 [shape = 'u32[]', space=smem, size = 0x4, offset = 0x4, fixed_abs, tag = 'smem constant byte address 0x4 - core index']
  #allocation1 [shape = 'u32[144,128]{1,0:T(1,128)}', space=vmem, size = 0x12000, scoped, tag = 'internal scratch']
  %s0 = inlined_call_operand.vmem [shape: bf16[128,128], index: 0, kind: input, shape index: {}]
  %s1 = inlined_call_operand.vmem [shape: bf16[128,128], index: 1, kind: input, shape index: {}]
  %s2 = inlined_call_operand.vmem [shape: f32[1,128], index: 2, kind: input, shape index: {}]
  %s3 = inlined_call_operand.vmem [shape: bf16[128,128], index: 3, kind: input, shape index: {}]
  %s4 = inlined_call_operand.vmem [shape: bf16[128,128], index: 4, kind: input, shape index: {}]
  %s5 = inlined_call_operand.vmem [shape: f32[1,128], index: 5, kind: input, shape index: {}]
  %s6 = inlined_call_operand.vmem [shape: bf16[128,128], index: 6, kind: output, shape index: {}]
  %s7 = sld [smem:[#allocation0]]
  $region34: #{_lambda_.23} parent=0
    _
  %s9 = ssub.s32 1, %s7
  %s10 = scalar_select 0, %s9, %s7
  // Predicated region
  $region2: #{_lambda_.23} parent=0 // pred_check
    _
  $region3: #{_lambda_.23} parent=0 // pred_check_branch
    %12 = sbr.rel (0) target = $region5
  $region4: #{_lambda_.23} parent=0 // pred_region
    _
  $region5: #{_lambda_.23} parent=0 // pred_fallthru
    _
  // Predicated region
  $region6: #{_lambda_.23} parent=0 // pred_check
    _
  $region7: #{_lambda_.23} parent=0 // pred_check_branch
    %14 = sbr.rel (0) target = $region9
  $region8: #{_lambda_.23} parent=0 // pred_region
    _
  $region9: #{_lambda_.23} parent=0 // pred_fallthru
    _
  // Predicated region
  $region10: #{_lambda_.23} parent=0 // pred_check
    _
  $region11: #{_lambda_.23} parent=0 // pred_check_branch
    %16 = sbr.rel (0) target = $region13
  $region12: #{_lambda_.23} parent=0 // pred_region
    _
  $region13: #{_lambda_.23} parent=0 // pred_fallthru
    _
  // Predicated region
  $region14: #{_lambda_.23} parent=0 // pred_check
    _
  $region15: #{_lambda_.23} parent=0 // pred_check_branch
    %18 = sbr.rel (0) target = $region17
  $region16: #{_lambda_.23} parent=0 // pred_region
    _
  $region17: #{_lambda_.23} parent=0 // pred_fallthru
    _
  // Predicated region
  $region18: #{_lambda_.23} parent=0 // pred_check
    _
  $region19: #{_lambda_.23} parent=0 // pred_check_branch
    %20 = sbr.rel (0) target = $region21
  $region20: #{_lambda_.23} parent=0 // pred_region
    _
  $region21: #{_lambda_.23} parent=0 // pred_fallthru
    _
  // Predicated region
  $region22: #{_lambda_.23} parent=0 // pred_check
    _
  $region23: #{_lambda_.23} parent=0 // pred_check_branch
    %22 = sbr.rel (0) target = $region25
  $region24: #{_lambda_.23} parent=0 // pred_region
    _
  $region25: #{_lambda_.23} parent=0 // pred_fallthru
    _
  %v24 = vld [vmem:[%s0] sm:$0xf]
  %v25 = vld [vmem:[%s0 + $0x4] sm:$0xf]
  %v26 = vld [vmem:[%s0 + $0x8] sm:$0xf]
  %v27 = vld [vmem:[%s0 + $0xc] sm:$0xf]
  %v28 = vld [vmem:[%s0 + $0x10] sm:$0xf]
  %v29 = vld [vmem:[%s0 + $0x14] sm:$0xf]
  %v30 = vld [vmem:[%s0 + $0x18] sm:$0xf]
  %v31 = vld [vmem:[%s0 + $0x1c] sm:$0xf]
  %v32 = vld [vmem:[%s0 + $0x20] sm:$0xf]
  %v33 = vld [vmem:[%s0 + $0x24] sm:$0xf]
  %v34 = vld [vmem:[%s0 + $0x28] sm:$0xf]
  %v35 = vld [vmem:[%s0 + $0x2c] sm:$0xf]
  %v36 = vld [vmem:[%s0 + $0x30] sm:$0xf]
  %v37 = vld [vmem:[%s0 + $0x34] sm:$0xf]
  %v38 = vld [vmem:[%s0 + $0x38] sm:$0xf]
  %v39 = vld [vmem:[%s0 + $0x3c] sm:$0xf]
  %v40 = vld [vmem:[%s1] sm:$0xf]
  %v41 = vld [vmem:[%s1 + $0x4] sm:$0xf]
  %v42 = vld [vmem:[%s1 + $0x8] sm:$0xf]
  %v43 = vld [vmem:[%s1 + $0xc] sm:$0xf]
  %v44 = vld [vmem:[%s1 + $0x10] sm:$0xf]
  %v45 = vld [vmem:[%s1 + $0x14] sm:$0xf]
  %v46 = vld [vmem:[%s1 + $0x18] sm:$0xf]
  %v47 = vld [vmem:[%s1 + $0x1c] sm:$0xf]
  %v48 = vld [vmem:[%s1 + $0x20] sm:$0xf]
  %v49 = vld [vmem:[%s1 + $0x24] sm:$0xf]
  %v50 = vld [vmem:[%s1 + $0x28] sm:$0xf]
  %v51 = vld [vmem:[%s1 + $0x2c] sm:$0xf]
  %v52 = vld [vmem:[%s1 + $0x30] sm:$0xf]
  %v53 = vld [vmem:[%s1 + $0x34] sm:$0xf]
  %v54 = vld [vmem:[%s1 + $0x38] sm:$0xf]
  %v55 = vld [vmem:[%s1 + $0x3c] sm:$0xf]
  %v56 = vld [vmem:[%s2] sm:$0x1]
  %v58 = vlaneseq
  %v59 = vshrl.u32 %v58, 7
  %v60 = vsub.s32 0, %v59
  %v61 = vrot.slane %v56, %v60
  %v79 = vunpack.c.l.b16 %v24
  %v80 = vunpack.c.l.b16 %v25
  %v81 = vunpack.c.l.b16 %v26
  %v82 = vunpack.c.l.b16 %v27
  %v83 = vunpack.c.l.b16 %v28
  %v84 = vunpack.c.l.b16 %v29
  %v85 = vunpack.c.l.b16 %v30
  %v86 = vunpack.c.l.b16 %v31
  %v87 = vunpack.c.l.b16 %v32
  %v88 = vunpack.c.l.b16 %v33
  %v89 = vunpack.c.l.b16 %v34
  %v90 = vunpack.c.l.b16 %v35
  %v91 = vunpack.c.l.b16 %v36
  %v92 = vunpack.c.l.b16 %v37
  %v93 = vunpack.c.l.b16 %v38
  %v94 = vunpack.c.l.b16 %v39
  %v95 = vpack.c.b16 %v80, %v79
  %v96 = vpack.c.b16 %v82, %v81
  %v97 = vpack.c.b16 %v84, %v83
  %v98 = vpack.c.b16 %v86, %v85
  %v99 = vpack.c.b16 %v88, %v87
  %v100 = vpack.c.b16 %v90, %v89
  %v101 = vpack.c.b16 %v92, %v91
  %v102 = vpack.c.b16 %v94, %v93
  %v127 = vunpack.c.l.b16 %v40
  %v128 = vunpack.c.l.b16 %v41
  %v129 = vunpack.c.l.b16 %v42
  %v130 = vunpack.c.l.b16 %v43
  %v131 = vunpack.c.l.b16 %v44
  %v132 = vunpack.c.l.b16 %v45
  %v133 = vunpack.c.l.b16 %v46
  %v134 = vunpack.c.l.b16 %v47
  %v135 = vunpack.c.l.b16 %v48
  %v136 = vunpack.c.l.b16 %v49
  %v137 = vunpack.c.l.b16 %v50
  %v138 = vunpack.c.l.b16 %v51
  %v139 = vunpack.c.l.b16 %v52
  %v140 = vunpack.c.l.b16 %v53
  %v141 = vunpack.c.l.b16 %v54
  %v142 = vunpack.c.l.b16 %v55
  %v143 = vpack.c.b16 %v128, %v127
  %v144 = vpack.c.b16 %v130, %v129
  %v145 = vpack.c.b16 %v132, %v131
  %v146 = vpack.c.b16 %v134, %v133
  %v147 = vpack.c.b16 %v136, %v135
  %v148 = vpack.c.b16 %v138, %v137
  %v149 = vpack.c.b16 %v140, %v139
  %v150 = vpack.c.b16 %v142, %v141
  %159 = vmatprep.subr.bf16.mxu0 0
  %160 = vmatpush1.bf16.msra.mxu0 %v150
  %161 = vmatprep.subr.bf16.mxu0 0
  %162 = vmatpush1.bf16.msra.mxu0 %v149
  %163 = vmatprep.subr.bf16.mxu0 0
  %164 = vmatpush1.bf16.msra.mxu0 %v148
  %165 = vmatprep.subr.bf16.mxu0 0
  %166 = vmatpush1.bf16.msra.mxu0 %v147
  %167 = vmatprep.subr.bf16.mxu0 0
  %168 = vmatpush1.bf16.msra.mxu0 %v146
  %169 = vmatprep.subr.bf16.mxu0 0
  %170 = vmatpush1.bf16.msra.mxu0 %v145
  %171 = vmatprep.subr.bf16.mxu0 0
  %172 = vmatpush1.bf16.msra.mxu0 %v144
  %173 = vmatprep.subr.bf16.mxu0 0
  %174 = vmatpush1.bf16.msra.mxu0 %v143
  %175 = vmatprep.subr.bf16.mxu0 0
  %176 = vmatpush2.bf16.msra.mxu0 0
  %177 = vmatprep.subr.bf16.mxu0 0
  %178 = vmatpush2.bf16.msra.mxu0 0
  %179 = vmatprep.subr.bf16.mxu0 0
  %180 = vmatpush2.bf16.msra.mxu0 0
  %181 = vmatprep.subr.bf16.mxu0 0
  %182 = vmatpush2.bf16.msra.mxu0 0
  %183 = vmatprep.subr.bf16.mxu0 0
  %184 = vmatpush2.bf16.msra.mxu0 0
  %185 = vmatprep.subr.bf16.mxu0 0
  %186 = vmatpush2.bf16.msra.mxu0 0
  %187 = vmatprep.subr.bf16.mxu0 0
  %188 = vmatpush2.bf16.msra.mxu0 0
  %189 = vmatprep.subr.bf16.mxu0 0
  %190 = vmatpush2.bf16.msra.mxu0 0
  %191 = vmatprep.mubr.bf16.mxu0 0
  %192 = vmatmul.mubr.bf16.gmra.mxu0 %v95
  %v193 = vpop.f32.mrf.mxu0
  %v194 = vadd.f32 %v61, %v193
  %v195 = vpop.f32.mrf.mxu0
  %v196 = vpop.f32.mrf.mxu0
  %v197 = vadd.f32 %v61, %v196
  %v198 = vpop.f32.mrf.mxu0
  %199 = vmatprep.mubr.bf16.mxu0 0
  %200 = vmatmul.mubr.bf16.gmra.mxu0 %v96
  %v201 = vpop.f32.mrf.mxu0
  %v202 = vadd.f32 %v61, %v201
  %v203 = vpop.f32.mrf.mxu0
  %v204 = vpop.f32.mrf.mxu0
  %v205 = vadd.f32 %v61, %v204
  %v206 = vpop.f32.mrf.mxu0
  %207 = vmatprep.mubr.bf16.mxu0 0
  %208 = vmatmul.mubr.bf16.gmra.mxu0 %v97
  %v209 = vpop.f32.mrf.mxu0
  %v210 = vadd.f32 %v61, %v209
  %v211 = vpop.f32.mrf.mxu0
  %v212 = vpop.f32.mrf.mxu0
  %v213 = vadd.f32 %v61, %v212
  %v214 = vpop.f32.mrf.mxu0
  %215 = vmatprep.mubr.bf16.mxu0 0
  %216 = vmatmul.mubr.bf16.gmra.mxu0 %v98
  %v217 = vpop.f32.mrf.mxu0
  %v218 = vadd.f32 %v61, %v217
  %v219 = vpop.f32.mrf.mxu0
  %v220 = vpop.f32.mrf.mxu0
  %v221 = vadd.f32 %v61, %v220
  %v222 = vpop.f32.mrf.mxu0
  %223 = vmatprep.mubr.bf16.mxu0 0
  %224 = vmatmul.mubr.bf16.gmra.mxu0 %v99
  %v225 = vpop.f32.mrf.mxu0
  %v226 = vadd.f32 %v61, %v225
  %v227 = vpop.f32.mrf.mxu0
  %v228 = vpop.f32.mrf.mxu0
  %v229 = vadd.f32 %v61, %v228
  %v230 = vpop.f32.mrf.mxu0
  %231 = vmatprep.mubr.bf16.mxu0 0
  %232 = vmatmul.mubr.bf16.gmra.mxu0 %v100
  %v233 = vpop.f32.mrf.mxu0
  %v234 = vadd.f32 %v61, %v233
  %v235 = vpop.f32.mrf.mxu0
  %v236 = vpop.f32.mrf.mxu0
  %v237 = vadd.f32 %v61, %v236
  %v238 = vpop.f32.mrf.mxu0
  %239 = vmatprep.mubr.bf16.mxu0 0
  %240 = vmatmul.mubr.bf16.gmra.mxu0 %v101
  %v241 = vpop.f32.mrf.mxu0
  %v242 = vadd.f32 %v61, %v241
  %v243 = vpop.f32.mrf.mxu0
  %v244 = vpop.f32.mrf.mxu0
  %v245 = vadd.f32 %v61, %v244
  %v246 = vpop.f32.mrf.mxu0
  %247 = vmatprep.mubr.bf16.mxu0 0
  %248 = vmatmul.mubr.bf16.gmra.mxu0 %v102
  %v249 = vpop.f32.mrf.mxu0
  %v250 = vadd.f32 %v61, %v249
  %v251 = vpop.f32.mrf.mxu0
  %v252 = vpop.f32.mrf.mxu0
  %v253 = vadd.f32 %v61, %v252
  %v254 = vpop.f32.mrf.mxu0
  %255 = vdwg.mxu0
  %v256 = vld [vmem:[%s3] sm:$0xf]
  %v257 = vld [vmem:[%s3 + $0x4] sm:$0xf]
  %v258 = vld [vmem:[%s3 + $0x8] sm:$0xf]
  %v259 = vld [vmem:[%s3 + $0xc] sm:$0xf]
  %v260 = vld [vmem:[%s3 + $0x10] sm:$0xf]
  %v261 = vld [vmem:[%s3 + $0x14] sm:$0xf]
  %v262 = vld [vmem:[%s3 + $0x18] sm:$0xf]
  %v263 = vld [vmem:[%s3 + $0x1c] sm:$0xf]
  %v264 = vld [vmem:[%s3 + $0x20] sm:$0xf]
  %v265 = vld [vmem:[%s3 + $0x24] sm:$0xf]
  %v266 = vld [vmem:[%s3 + $0x28] sm:$0xf]
  %v267 = vld [vmem:[%s3 + $0x2c] sm:$0xf]
  %v268 = vld [vmem:[%s3 + $0x30] sm:$0xf]
  %v269 = vld [vmem:[%s3 + $0x34] sm:$0xf]
  %v270 = vld [vmem:[%s3 + $0x38] sm:$0xf]
  %v271 = vld [vmem:[%s3 + $0x3c] sm:$0xf]
  %v272 = vld [vmem:[%s4] sm:$0xf]
  %v273 = vld [vmem:[%s4 + $0x4] sm:$0xf]
  %v274 = vld [vmem:[%s4 + $0x8] sm:$0xf]
  %v275 = vld [vmem:[%s4 + $0xc] sm:$0xf]
  %v276 = vld [vmem:[%s4 + $0x10] sm:$0xf]
  %v277 = vld [vmem:[%s4 + $0x14] sm:$0xf]
  %v278 = vld [vmem:[%s4 + $0x18] sm:$0xf]
  %v279 = vld [vmem:[%s4 + $0x1c] sm:$0xf]
  %v280 = vld [vmem:[%s4 + $0x20] sm:$0xf]
  %v281 = vld [vmem:[%s4 + $0x24] sm:$0xf]
  %v282 = vld [vmem:[%s4 + $0x28] sm:$0xf]
  %v283 = vld [vmem:[%s4 + $0x2c] sm:$0xf]
  %v284 = vld [vmem:[%s4 + $0x30] sm:$0xf]
  %v285 = vld [vmem:[%s4 + $0x34] sm:$0xf]
  %v286 = vld [vmem:[%s4 + $0x38] sm:$0xf]
  %v287 = vld [vmem:[%s4 + $0x3c] sm:$0xf]
  %v288 = vld [vmem:[%s5] sm:$0x1]
  %v290 = vlaneseq
  %v291 = vshrl.u32 %v290, 7
  %v292 = vsub.s32 0, %v291
  %v293 = vrot.slane %v288, %v292
  %v311 = vunpack.c.l.b16 %v256
  %v312 = vunpack.c.l.b16 %v257
  %v313 = vunpack.c.l.b16 %v258
  %v314 = vunpack.c.l.b16 %v259
  %v315 = vunpack.c.l.b16 %v260
  %v316 = vunpack.c.l.b16 %v261
  %v317 = vunpack.c.l.b16 %v262
  %v318 = vunpack.c.l.b16 %v263
  %v319 = vunpack.c.l.b16 %v264
  %v320 = vunpack.c.l.b16 %v265
  %v321 = vunpack.c.l.b16 %v266
  %v322 = vunpack.c.l.b16 %v267
  %v323 = vunpack.c.l.b16 %v268
  %v324 = vunpack.c.l.b16 %v269
  %v325 = vunpack.c.l.b16 %v270
  %v326 = vunpack.c.l.b16 %v271
  %v327 = vpack.c.b16 %v312, %v311
  %v328 = vpack.c.b16 %v314, %v313
  %v329 = vpack.c.b16 %v316, %v315
  %v330 = vpack.c.b16 %v318, %v317
  %v331 = vpack.c.b16 %v320, %v319
  %v332 = vpack.c.b16 %v322, %v321
  %v333 = vpack.c.b16 %v324, %v323
  %v334 = vpack.c.b16 %v326, %v325
  %v359 = vunpack.c.l.b16 %v272
  %v360 = vunpack.c.l.b16 %v273
  %v361 = vunpack.c.l.b16 %v274
  %v362 = vunpack.c.l.b16 %v275
  %v363 = vunpack.c.l.b16 %v276
  %v364 = vunpack.c.l.b16 %v277
  %v365 = vunpack.c.l.b16 %v278
  %v366 = vunpack.c.l.b16 %v279
  %v367 = vunpack.c.l.b16 %v280
  %v368 = vunpack.c.l.b16 %v281
  %v369 = vunpack.c.l.b16 %v282
  %v370 = vunpack.c.l.b16 %v283
  %v371 = vunpack.c.l.b16 %v284
  %v372 = vunpack.c.l.b16 %v285
  %v373 = vunpack.c.l.b16 %v286
  %v374 = vunpack.c.l.b16 %v287
  %v375 = vpack.c.b16 %v360, %v359
  %v376 = vpack.c.b16 %v362, %v361
  %v377 = vpack.c.b16 %v364, %v363
  %v378 = vpack.c.b16 %v366, %v365
  %v379 = vpack.c.b16 %v368, %v367
  %v380 = vpack.c.b16 %v370, %v369
  %v381 = vpack.c.b16 %v372, %v371
  %v382 = vpack.c.b16 %v374, %v373
  %391 = vmatprep.subr.bf16.mxu0 0
  %392 = vmatpush1.bf16.msra.mxu0 %v382
  %393 = vmatprep.subr.bf16.mxu0 0
  %394 = vmatpush1.bf16.msra.mxu0 %v381
  %395 = vmatprep.subr.bf16.mxu0 0
  %396 = vmatpush1.bf16.msra.mxu0 %v380
  %397 = vmatprep.subr.bf16.mxu0 0
  %398 = vmatpush1.bf16.msra.mxu0 %v379
  %399 = vmatprep.subr.bf16.mxu0 0
  %400 = vmatpush1.bf16.msra.mxu0 %v378
  %401 = vmatprep.subr.bf16.mxu0 0
  %402 = vmatpush1.bf16.msra.mxu0 %v377
  %403 = vmatprep.subr.bf16.mxu0 0
  %404 = vmatpush1.bf16.msra.mxu0 %v376
  %405 = vmatprep.subr.bf16.mxu0 0
  %406 = vmatpush1.bf16.msra.mxu0 %v375
  %407 = vmatprep.subr.bf16.mxu0 0
  %408 = vmatpush2.bf16.msra.mxu0 0
  %409 = vmatprep.subr.bf16.mxu0 0
  %410 = vmatpush2.bf16.msra.mxu0 0
  %411 = vmatprep.subr.bf16.mxu0 0
  %412 = vmatpush2.bf16.msra.mxu0 0
  %413 = vmatprep.subr.bf16.mxu0 0
  %414 = vmatpush2.bf16.msra.mxu0 0
  %415 = vmatprep.subr.bf16.mxu0 0
  %416 = vmatpush2.bf16.msra.mxu0 0
  %417 = vmatprep.subr.bf16.mxu0 0
  %418 = vmatpush2.bf16.msra.mxu0 0
  %419 = vmatprep.subr.bf16.mxu0 0
  %420 = vmatpush2.bf16.msra.mxu0 0
  %421 = vmatprep.subr.bf16.mxu0 0
  %422 = vmatpush2.bf16.msra.mxu0 0
  %423 = vmatprep.mubr.bf16.mxu0 0
  %424 = vmatmul.mubr.bf16.gmra.mxu0 %v327
  %v425 = vpop.f32.mrf.mxu0
  %v426 = vadd.f32 %v293, %v425
  %v427 = vpop.f32.mrf.mxu0
  %v428 = vpop.f32.mrf.mxu0
  %v429 = vadd.f32 %v293, %v428
  %v430 = vpop.f32.mrf.mxu0
  %431 = vmatprep.mubr.bf16.mxu0 0
  %432 = vmatmul.mubr.bf16.gmra.mxu0 %v328
  %v433 = vpop.f32.mrf.mxu0
  %v434 = vadd.f32 %v293, %v433
  %v435 = vpop.f32.mrf.mxu0
  %v436 = vpop.f32.mrf.mxu0
  %v437 = vadd.f32 %v293, %v436
  %v438 = vpop.f32.mrf.mxu0
  %439 = vmatprep.mubr.bf16.mxu0 0
  %440 = vmatmul.mubr.bf16.gmra.mxu0 %v329
  %v441 = vpop.f32.mrf.mxu0
  %v442 = vadd.f32 %v293, %v441
  %v443 = vpop.f32.mrf.mxu0
  %v444 = vpop.f32.mrf.mxu0
  %v445 = vadd.f32 %v293, %v444
  %v446 = vpop.f32.mrf.mxu0
  %447 = vmatprep.mubr.bf16.mxu0 0
  %448 = vmatmul.mubr.bf16.gmra.mxu0 %v330
  %v449 = vpop.f32.mrf.mxu0
  %v450 = vadd.f32 %v293, %v449
  %v451 = vpop.f32.mrf.mxu0
  %v452 = vpop.f32.mrf.mxu0
  %v453 = vadd.f32 %v293, %v452
  %v454 = vpop.f32.mrf.mxu0
  %455 = vmatprep.mubr.bf16.mxu0 0
  %456 = vmatmul.mubr.bf16.gmra.mxu0 %v331
  %v457 = vpop.f32.mrf.mxu0
  %v458 = vadd.f32 %v293, %v457
  %v459 = vpop.f32.mrf.mxu0
  %v460 = vpop.f32.mrf.mxu0
  %v461 = vadd.f32 %v293, %v460
  %v462 = vpop.f32.mrf.mxu0
  %463 = vmatprep.mubr.bf16.mxu0 0
  %464 = vmatmul.mubr.bf16.gmra.mxu0 %v332
  %v465 = vpop.f32.mrf.mxu0
  %v466 = vadd.f32 %v293, %v465
  %v467 = vpop.f32.mrf.mxu0
  %v468 = vpop.f32.mrf.mxu0
  %v469 = vadd.f32 %v293, %v468
  %v470 = vpop.f32.mrf.mxu0
  %471 = vmatprep.mubr.bf16.mxu0 0
  %472 = vmatmul.mubr.bf16.gmra.mxu0 %v333
  %v473 = vpop.f32.mrf.mxu0
  %v474 = vadd.f32 %v293, %v473
  %v475 = vpop.f32.mrf.mxu0
  %v476 = vpop.f32.mrf.mxu0
  %v477 = vadd.f32 %v293, %v476
  %v478 = vpop.f32.mrf.mxu0
  %479 = vmatprep.mubr.bf16.mxu0 0
  %480 = vmatmul.mubr.bf16.gmra.mxu0 %v334
  %v481 = vpop.f32.mrf.mxu0
  %v482 = vadd.f32 %v293, %v481
  %v483 = vpop.f32.mrf.mxu0
  %v484 = vpop.f32.mrf.mxu0
  %v485 = vadd.f32 %v293, %v484
  %v486 = vpop.f32.mrf.mxu0
  %487 = vdwg.mxu0
  %v488 = vadd.f32 %v194, %v426
  %v489 = vadd.f32 %v197, %v429
  %v490 = vadd.f32 %v202, %v434
  %v491 = vadd.f32 %v205, %v437
  %v492 = vadd.f32 %v210, %v442
  %v493 = vadd.f32 %v213, %v445
  %v494 = vadd.f32 %v218, %v450
  %v495 = vadd.f32 %v221, %v453
  %v496 = vadd.f32 %v226, %v458
  %v497 = vadd.f32 %v229, %v461
  %v498 = vadd.f32 %v234, %v466
  %v499 = vadd.f32 %v237, %v469
  %v500 = vadd.f32 %v242, %v474
  %v501 = vadd.f32 %v245, %v477
  %v502 = vadd.f32 %v250, %v482
  %v503 = vadd.f32 %v253, %v485
  %v504 = vmax.f32 %v488, 0.0
  %v505 = vmax.f32 %v489, 0.0
  %v506 = vmax.f32 %v490, 0.0
  %v507 = vmax.f32 %v491, 0.0
  %v508 = vmax.f32 %v492, 0.0
  %v509 = vmax.f32 %v493, 0.0
  %v510 = vmax.f32 %v494, 0.0
  %v511 = vmax.f32 %v495, 0.0
  %v512 = vmax.f32 %v496, 0.0
  %v513 = vmax.f32 %v497, 0.0
  %v514 = vmax.f32 %v498, 0.0
  %v515 = vmax.f32 %v499, 0.0
  %v516 = vmax.f32 %v500, 0.0
  %v517 = vmax.f32 %v501, 0.0
  %v518 = vmax.f32 %v502, 0.0
  %v519 = vmax.f32 %v503, 0.0
  %v520 = vpack.c.bf16 %v505, %v504
  %v521 = vpack.c.bf16 %v507, %v506
  %v522 = vpack.c.bf16 %v509, %v508
  %v523 = vpack.c.bf16 %v511, %v510
  %v524 = vpack.c.bf16 %v513, %v512
  %v525 = vpack.c.bf16 %v515, %v514
  %v526 = vpack.c.bf16 %v517, %v516
  %v527 = vpack.c.bf16 %v519, %v518
  %v536 = vunpack.c.l.b16 %v520
  %v537 = vunpack.c.h.b16 %v520
  %v538 = vunpack.c.l.b16 %v521
  %v539 = vunpack.c.h.b16 %v521
  %v540 = vunpack.c.l.b16 %v522
  %v541 = vunpack.c.h.b16 %v522
  %v542 = vunpack.c.l.b16 %v523
  %v543 = vunpack.c.h.b16 %v523
  %v544 = vunpack.c.l.b16 %v524
  %v545 = vunpack.c.h.b16 %v524
  %v546 = vunpack.c.l.b16 %v525
  %v547 = vunpack.c.h.b16 %v525
  %v548 = vunpack.c.l.b16 %v526
  %v549 = vunpack.c.h.b16 %v526
  %v550 = vunpack.c.l.b16 %v527
  %v551 = vunpack.c.h.b16 %v527
  %v552 = vpack.c.b16 %v536, %v536
  %v553 = vpack.c.b16 %v537, %v537
  %v554 = vpack.c.b16 %v538, %v538
  %v555 = vpack.c.b16 %v539, %v539
  %v556 = vpack.c.b16 %v540, %v540
  %v557 = vpack.c.b16 %v541, %v541
  %v558 = vpack.c.b16 %v542, %v542
  %v559 = vpack.c.b16 %v543, %v543
  %v560 = vpack.c.b16 %v544, %v544
  %v561 = vpack.c.b16 %v545, %v545
  %v562 = vpack.c.b16 %v546, %v546
  %v563 = vpack.c.b16 %v547, %v547
  %v564 = vpack.c.b16 %v548, %v548
  %v565 = vpack.c.b16 %v549, %v549
  %v566 = vpack.c.b16 %v550, %v550
  %v567 = vpack.c.b16 %v551, %v551
  %584 = vst [vmem:[%s6] sm:$0xf] %v552
  %585 = vst [vmem:[%s6 + $0x4] sm:$0xf] %v553
  %586 = vst [vmem:[%s6 + $0x8] sm:$0xf] %v554
  %587 = vst [vmem:[%s6 + $0xc] sm:$0xf] %v555
  %588 = vst [vmem:[%s6 + $0x10] sm:$0xf] %v556
  %589 = vst [vmem:[%s6 + $0x14] sm:$0xf] %v557
  %590 = vst [vmem:[%s6 + $0x18] sm:$0xf] %v558
  %591 = vst [vmem:[%s6 + $0x1c] sm:$0xf] %v559
  %592 = vst [vmem:[%s6 + $0x20] sm:$0xf] %v560
  %593 = vst [vmem:[%s6 + $0x24] sm:$0xf] %v561
  %594 = vst [vmem:[%s6 + $0x28] sm:$0xf] %v562
  %595 = vst [vmem:[%s6 + $0x2c] sm:$0xf] %v563
  %596 = vst [vmem:[%s6 + $0x30] sm:$0xf] %v564
  %597 = vst [vmem:[%s6 + $0x34] sm:$0xf] %v565
  %598 = vst [vmem:[%s6 + $0x38] sm:$0xf] %v566
  %599 = vst [vmem:[%s6 + $0x3c] sm:$0xf] %v567
  // Predicated region
  $region26: #{_lambda_.23} parent=0 // pred_check
    _
  $region27: #{_lambda_.23} parent=0 // pred_check_branch
    %601 = sbr.rel (0) target = $region29
  $region28: #{_lambda_.23} parent=0 // pred_region
    _
  $region29: #{_lambda_.23} parent=0 // pred_fallthru
    _
  // Predicated region
  $region30: #{_lambda_.23} parent=0 // pred_check
    _
  $region31: #{_lambda_.23} parent=0 // pred_check_branch
    %603 = sbr.rel (0) target = $region33
  $region32: #{_lambda_.23} parent=0 // pred_region
    _
  $region33: #{_lambda_.23} parent=0 // pred_fallthru
    _

// kernel: _lambda_.24
$region0: #{_lambda_.24}
  #allocation0 [shape = 'u32[]', space=smem, size = 0x4, offset = 0x4, fixed_abs, tag = 'smem constant byte address 0x4 - core index']
  #allocation1 [shape = 'u32[144,128]{1,0:T(1,128)}', space=vmem, size = 0x12000, scoped, tag = 'internal scratch']
  %s0 = inlined_call_operand.vmem [shape: bf16[128,128], index: 0, kind: input, shape index: {}]
  %s1 = inlined_call_operand.vmem [shape: bf16[128,128], index: 1, kind: input, shape index: {}]
  %s2 = inlined_call_operand.vmem [shape: f32[1,128], index: 2, kind: input, shape index: {}]
  %s3 = inlined_call_operand.vmem [shape: bf16[128,128], index: 3, kind: output, shape index: {}]
  %s4 = sld [smem:[#allocation0]]
  $region22: #{_lambda_.24} parent=0
    _
  %s6 = ssub.s32 1, %s4
  %s7 = scalar_select 0, %s6, %s4
  // Predicated region
  $region2: #{_lambda_.24} parent=0 // pred_check
    _
  $region3: #{_lambda_.24} parent=0 // pred_check_branch
    %9 = sbr.rel (0) target = $region5
  $region4: #{_lambda_.24} parent=0 // pred_region
    _
  $region5: #{_lambda_.24} parent=0 // pred_fallthru
    _
  // Predicated region
  $region6: #{_lambda_.24} parent=0 // pred_check
    _
  $region7: #{_lambda_.24} parent=0 // pred_check_branch
    %11 = sbr.rel (0) target = $region9
  $region8: #{_lambda_.24} parent=0 // pred_region
    _
  $region9: #{_lambda_.24} parent=0 // pred_fallthru
    _
  // Predicated region
  $region10: #{_lambda_.24} parent=0 // pred_check
    _
  $region11: #{_lambda_.24} parent=0 // pred_check_branch
    %13 = sbr.rel (0) target = $region13
  $region12: #{_lambda_.24} parent=0 // pred_region
    _
  $region13: #{_lambda_.24} parent=0 // pred_fallthru
    _
  %v15 = vld [vmem:[%s0] sm:$0xf]
  %v16 = vld [vmem:[%s0 + $0x4] sm:$0xf]
  %v17 = vld [vmem:[%s0 + $0x8] sm:$0xf]
  %v18 = vld [vmem:[%s0 + $0xc] sm:$0xf]
  %v19 = vld [vmem:[%s0 + $0x10] sm:$0xf]
  %v20 = vld [vmem:[%s0 + $0x14] sm:$0xf]
  %v21 = vld [vmem:[%s0 + $0x18] sm:$0xf]
  %v22 = vld [vmem:[%s0 + $0x1c] sm:$0xf]
  %v23 = vld [vmem:[%s0 + $0x20] sm:$0xf]
  %v24 = vld [vmem:[%s0 + $0x24] sm:$0xf]
  %v25 = vld [vmem:[%s0 + $0x28] sm:$0xf]
  %v26 = vld [vmem:[%s0 + $0x2c] sm:$0xf]
  %v27 = vld [vmem:[%s0 + $0x30] sm:$0xf]
  %v28 = vld [vmem:[%s0 + $0x34] sm:$0xf]
  %v29 = vld [vmem:[%s0 + $0x38] sm:$0xf]
  %v30 = vld [vmem:[%s0 + $0x3c] sm:$0xf]
  %v31 = vld [vmem:[%s1] sm:$0xf]
  %v32 = vld [vmem:[%s1 + $0x4] sm:$0xf]
  %v33 = vld [vmem:[%s1 + $0x8] sm:$0xf]
  %v34 = vld [vmem:[%s1 + $0xc] sm:$0xf]
  %v35 = vld [vmem:[%s1 + $0x10] sm:$0xf]
  %v36 = vld [vmem:[%s1 + $0x14] sm:$0xf]
  %v37 = vld [vmem:[%s1 + $0x18] sm:$0xf]
  %v38 = vld [vmem:[%s1 + $0x1c] sm:$0xf]
  %v39 = vld [vmem:[%s1 + $0x20] sm:$0xf]
  %v40 = vld [vmem:[%s1 + $0x24] sm:$0xf]
  %v41 = vld [vmem:[%s1 + $0x28] sm:$0xf]
  %v42 = vld [vmem:[%s1 + $0x2c] sm:$0xf]
  %v43 = vld [vmem:[%s1 + $0x30] sm:$0xf]
  %v44 = vld [vmem:[%s1 + $0x34] sm:$0xf]
  %v45 = vld [vmem:[%s1 + $0x38] sm:$0xf]
  %v46 = vld [vmem:[%s1 + $0x3c] sm:$0xf]
  %v47 = vld [vmem:[%s2] sm:$0x1]
  %v49 = vlaneseq
  %v50 = vshrl.u32 %v49, 7
  %v51 = vsub.s32 0, %v50
  %v52 = vrot.slane %v47, %v51
  %v70 = vunpack.c.l.b16 %v15
  %v71 = vunpack.c.l.b16 %v16
  %v72 = vunpack.c.l.b16 %v17
  %v73 = vunpack.c.l.b16 %v18
  %v74 = vunpack.c.l.b16 %v19
  %v75 = vunpack.c.l.b16 %v20
  %v76 = vunpack.c.l.b16 %v21
  %v77 = vunpack.c.l.b16 %v22
  %v78 = vunpack.c.l.b16 %v23
  %v79 = vunpack.c.l.b16 %v24
  %v80 = vunpack.c.l.b16 %v25
  %v81 = vunpack.c.l.b16 %v26
  %v82 = vunpack.c.l.b16 %v27
  %v83 = vunpack.c.l.b16 %v28
  %v84 = vunpack.c.l.b16 %v29
  %v85 = vunpack.c.l.b16 %v30
  %v86 = vpack.c.b16 %v71, %v70
  %v87 = vpack.c.b16 %v73, %v72
  %v88 = vpack.c.b16 %v75, %v74
  %v89 = vpack.c.b16 %v77, %v76
  %v90 = vpack.c.b16 %v79, %v78
  %v91 = vpack.c.b16 %v81, %v80
  %v92 = vpack.c.b16 %v83, %v82
  %v93 = vpack.c.b16 %v85, %v84
  %v118 = vunpack.c.l.b16 %v31
  %v119 = vunpack.c.l.b16 %v32
  %v120 = vunpack.c.l.b16 %v33
  %v121 = vunpack.c.l.b16 %v34
  %v122 = vunpack.c.l.b16 %v35
  %v123 = vunpack.c.l.b16 %v36
  %v124 = vunpack.c.l.b16 %v37
  %v125 = vunpack.c.l.b16 %v38
  %v126 = vunpack.c.l.b16 %v39
  %v127 = vunpack.c.l.b16 %v40
  %v128 = vunpack.c.l.b16 %v41
  %v129 = vunpack.c.l.b16 %v42
  %v130 = vunpack.c.l.b16 %v43
  %v131 = vunpack.c.l.b16 %v44
  %v132 = vunpack.c.l.b16 %v45
  %v133 = vunpack.c.l.b16 %v46
  %v134 = vpack.c.b16 %v119, %v118
  %v135 = vpack.c.b16 %v121, %v120
  %v136 = vpack.c.b16 %v123, %v122
  %v137 = vpack.c.b16 %v125, %v124
  %v138 = vpack.c.b16 %v127, %v126
  %v139 = vpack.c.b16 %v129, %v128
  %v140 = vpack.c.b16 %v131, %v130
  %v141 = vpack.c.b16 %v133, %v132
  %150 = vmatprep.subr.bf16.mxu0 0
  %151 = vmatpush1.bf16.msra.mxu0 %v141
  %152 = vmatprep.subr.bf16.mxu0 0
  %153 = vmatpush1.bf16.msra.mxu0 %v140
  %154 = vmatprep.subr.bf16.mxu0 0
  %155 = vmatpush1.bf16.msra.mxu0 %v139
  %156 = vmatprep.subr.bf16.mxu0 0
  %157 = vmatpush1.bf16.msra.mxu0 %v138
  %158 = vmatprep.subr.bf16.mxu0 0
  %159 = vmatpush1.bf16.msra.mxu0 %v137
  %160 = vmatprep.subr.bf16.mxu0 0
  %161 = vmatpush1.bf16.msra.mxu0 %v136
  %162 = vmatprep.subr.bf16.mxu0 0
  %163 = vmatpush1.bf16.msra.mxu0 %v135
  %164 = vmatprep.subr.bf16.mxu0 0
  %165 = vmatpush1.bf16.msra.mxu0 %v134
  %166 = vmatprep.subr.bf16.mxu0 0
  %167 = vmatpush2.bf16.msra.mxu0 0
  %168 = vmatprep.subr.bf16.mxu0 0
  %169 = vmatpush2.bf16.msra.mxu0 0
  %170 = vmatprep.subr.bf16.mxu0 0
  %171 = vmatpush2.bf16.msra.mxu0 0
  %172 = vmatprep.subr.bf16.mxu0 0
  %173 = vmatpush2.bf16.msra.mxu0 0
  %174 = vmatprep.subr.bf16.mxu0 0
  %175 = vmatpush2.bf16.msra.mxu0 0
  %176 = vmatprep.subr.bf16.mxu0 0
  %177 = vmatpush2.bf16.msra.mxu0 0
  %178 = vmatprep.subr.bf16.mxu0 0
  %179 = vmatpush2.bf16.msra.mxu0 0
  %180 = vmatprep.subr.bf16.mxu0 0
  %181 = vmatpush2.bf16.msra.mxu0 0
  %182 = vmatprep.mubr.bf16.mxu0 0
  %183 = vmatmul.mubr.bf16.gmra.mxu0 %v86
  %v184 = vpop.f32.mrf.mxu0
  %v185 = vadd.f32 %v52, %v184
  %v186 = vpop.f32.mrf.mxu0
  %v187 = vpop.f32.mrf.mxu0
  %v188 = vadd.f32 %v52, %v187
  %v189 = vpop.f32.mrf.mxu0
  %190 = vmatprep.mubr.bf16.mxu0 0
  %191 = vmatmul.mubr.bf16.gmra.mxu0 %v87
  %v192 = vpop.f32.mrf.mxu0
  %v193 = vadd.f32 %v52, %v192
  %v194 = vpop.f32.mrf.mxu0
  %v195 = vpop.f32.mrf.mxu0
  %v196 = vadd.f32 %v52, %v195
  %v197 = vpop.f32.mrf.mxu0
  %198 = vmatprep.mubr.bf16.mxu0 0
  %199 = vmatmul.mubr.bf16.gmra.mxu0 %v88
  %v200 = vpop.f32.mrf.mxu0
  %v201 = vadd.f32 %v52, %v200
  %v202 = vpop.f32.mrf.mxu0
  %v203 = vpop.f32.mrf.mxu0
  %v204 = vadd.f32 %v52, %v203
  %v205 = vpop.f32.mrf.mxu0
  %206 = vmatprep.mubr.bf16.mxu0 0
  %207 = vmatmul.mubr.bf16.gmra.mxu0 %v89
  %v208 = vpop.f32.mrf.mxu0
  %v209 = vadd.f32 %v52, %v208
  %v210 = vpop.f32.mrf.mxu0
  %v211 = vpop.f32.mrf.mxu0
  %v212 = vadd.f32 %v52, %v211
  %v213 = vpop.f32.mrf.mxu0
  %214 = vmatprep.mubr.bf16.mxu0 0
  %215 = vmatmul.mubr.bf16.gmra.mxu0 %v90
  %v216 = vpop.f32.mrf.mxu0
  %v217 = vadd.f32 %v52, %v216
  %v218 = vpop.f32.mrf.mxu0
  %v219 = vpop.f32.mrf.mxu0
  %v220 = vadd.f32 %v52, %v219
  %v221 = vpop.f32.mrf.mxu0
  %222 = vmatprep.mubr.bf16.mxu0 0
  %223 = vmatmul.mubr.bf16.gmra.mxu0 %v91
  %v224 = vpop.f32.mrf.mxu0
  %v225 = vadd.f32 %v52, %v224
  %v226 = vpop.f32.mrf.mxu0
  %v227 = vpop.f32.mrf.mxu0
  %v228 = vadd.f32 %v52, %v227
  %v229 = vpop.f32.mrf.mxu0
  %230 = vmatprep.mubr.bf16.mxu0 0
  %231 = vmatmul.mubr.bf16.gmra.mxu0 %v92
  %v232 = vpop.f32.mrf.mxu0
  %v233 = vadd.f32 %v52, %v232
  %v234 = vpop.f32.mrf.mxu0
  %v235 = vpop.f32.mrf.mxu0
  %v236 = vadd.f32 %v52, %v235
  %v237 = vpop.f32.mrf.mxu0
  %238 = vmatprep.mubr.bf16.mxu0 0
  %239 = vmatmul.mubr.bf16.gmra.mxu0 %v93
  %v240 = vpop.f32.mrf.mxu0
  %v241 = vadd.f32 %v52, %v240
  %v242 = vpop.f32.mrf.mxu0
  %v243 = vpop.f32.mrf.mxu0
  %v244 = vadd.f32 %v52, %v243
  %v245 = vpop.f32.mrf.mxu0
  %246 = vdwg.mxu0
  %v247 = vmax.f32 %v185, 0.0
  %v248 = vmax.f32 %v188, 0.0
  %v249 = vmax.f32 %v193, 0.0
  %v250 = vmax.f32 %v196, 0.0
  %v251 = vmax.f32 %v201, 0.0
  %v252 = vmax.f32 %v204, 0.0
  %v253 = vmax.f32 %v209, 0.0
  %v254 = vmax.f32 %v212, 0.0
  %v255 = vmax.f32 %v217, 0.0
  %v256 = vmax.f32 %v220, 0.0
  %v257 = vmax.f32 %v225, 0.0
  %v258 = vmax.f32 %v228, 0.0
  %v259 = vmax.f32 %v233, 0.0
  %v260 = vmax.f32 %v236, 0.0
  %v261 = vmax.f32 %v241, 0.0
  %v262 = vmax.f32 %v244, 0.0
  %v263 = vpack.c.bf16 %v248, %v247
  %v264 = vpack.c.bf16 %v250, %v249
  %v265 = vpack.c.bf16 %v252, %v251
  %v266 = vpack.c.bf16 %v254, %v253
  %v267 = vpack.c.bf16 %v256, %v255
  %v268 = vpack.c.bf16 %v258, %v257
  %v269 = vpack.c.bf16 %v260, %v259
  %v270 = vpack.c.bf16 %v262, %v261
  %v279 = vunpack.c.l.b16 %v263
  %v280 = vunpack.c.h.b16 %v263
  %v281 = vunpack.c.l.b16 %v264
  %v282 = vunpack.c.h.b16 %v264
  %v283 = vunpack.c.l.b16 %v265
  %v284 = vunpack.c.h.b16 %v265
  %v285 = vunpack.c.l.b16 %v266
  %v286 = vunpack.c.h.b16 %v266
  %v287 = vunpack.c.l.b16 %v267
  %v288 = vunpack.c.h.b16 %v267
  %v289 = vunpack.c.l.b16 %v268
  %v290 = vunpack.c.h.b16 %v268
  %v291 = vunpack.c.l.b16 %v269
  %v292 = vunpack.c.h.b16 %v269
  %v293 = vunpack.c.l.b16 %v270
  %v294 = vunpack.c.h.b16 %v270
  %v295 = vpack.c.b16 %v279, %v279
  %v296 = vpack.c.b16 %v280, %v280
  %v297 = vpack.c.b16 %v281, %v281
  %v298 = vpack.c.b16 %v282, %v282
  %v299 = vpack.c.b16 %v283, %v283
  %v300 = vpack.c.b16 %v284, %v284
  %v301 = vpack.c.b16 %v285, %v285
  %v302 = vpack.c.b16 %v286, %v286
  %v303 = vpack.c.b16 %v287, %v287
  %v304 = vpack.c.b16 %v288, %v288
  %v305 = vpack.c.b16 %v289, %v289
  %v306 = vpack.c.b16 %v290, %v290
  %v307 = vpack.c.b16 %v291, %v291
  %v308 = vpack.c.b16 %v292, %v292
  %v309 = vpack.c.b16 %v293, %v293
  %v310 = vpack.c.b16 %v294, %v294
  %327 = vst [vmem:[%s3] sm:$0xf] %v295
  %328 = vst [vmem:[%s3 + $0x4] sm:$0xf] %v296
  %329 = vst [vmem:[%s3 + $0x8] sm:$0xf] %v297
  %330 = vst [vmem:[%s3 + $0xc] sm:$0xf] %v298
  %331 = vst [vmem:[%s3 + $0x10] sm:$0xf] %v299
  %332 = vst [vmem:[%s3 + $0x14] sm:$0xf] %v300
  %333 = vst [vmem:[%s3 + $0x18] sm:$0xf] %v301
  %334 = vst [vmem:[%s3 + $0x1c] sm:$0xf] %v302
  %335 = vst [vmem:[%s3 + $0x20] sm:$0xf] %v303
  %336 = vst [vmem:[%s3 + $0x24] sm:$0xf] %v304
  %337 = vst [vmem:[%s3 + $0x28] sm:$0xf] %v305
  %338 = vst [vmem:[%s3 + $0x2c] sm:$0xf] %v306
  %339 = vst [vmem:[%s3 + $0x30] sm:$0xf] %v307
  %340 = vst [vmem:[%s3 + $0x34] sm:$0xf] %v308
  %341 = vst [vmem:[%s3 + $0x38] sm:$0xf] %v309
  %342 = vst [vmem:[%s3 + $0x3c] sm:$0xf] %v310
  // Predicated region
  $region14: #{_lambda_.24} parent=0 // pred_check
    _
  $region15: #{_lambda_.24} parent=0 // pred_check_branch
    %344 = sbr.rel (0) target = $region17
  $region16: #{_lambda_.24} parent=0 // pred_region
    _
  $region17: #{_lambda_.24} parent=0 // pred_fallthru
    _
  // Predicated region
  $region18: #{_lambda_.24} parent=0 // pred_check
    _
  $region19: #{_lambda_.24} parent=0 // pred_check_branch
    %346 = sbr.rel (0) target = $region21
  $region20: #{_lambda_.24} parent=0 // pred_region
    _
  $region21: #{_lambda_.24} parent=0 // pred_fallthru
    _

// kernel: _lambda_.27
$region0: #{_lambda_.27}
  #allocation0 [shape = 'u32[]', space=smem, size = 0x4, offset = 0x4, fixed_abs, tag = 'smem constant byte address 0x4 - core index']
  #allocation1 [shape = 'u32[144,128]{1,0:T(1,128)}', space=vmem, size = 0x12000, scoped, tag = 'internal scratch']
  %s0 = inlined_call_operand.vmem [shape: bf16[32,128], index: 0, kind: input, shape index: {}]
  %s1 = inlined_call_operand.vmem [shape: bf16[128,128], index: 1, kind: input, shape index: {}]
  %s2 = inlined_call_operand.vmem [shape: f32[1,128], index: 2, kind: input, shape index: {}]
  %s3 = inlined_call_operand.vmem [shape: bf16[32,128], index: 3, kind: output, shape index: {}]
  %s4 = sld [smem:[#allocation0]]
  $region22: #{_lambda_.27} parent=0
    _
  %s6 = ssub.s32 1, %s4
  %s7 = scalar_select 0, %s6, %s4
  // Predicated region
  $region2: #{_lambda_.27} parent=0 // pred_check
    _
  $region3: #{_lambda_.27} parent=0 // pred_check_branch
    %9 = sbr.rel (0) target = $region5
  $region4: #{_lambda_.27} parent=0 // pred_region
    _
  $region5: #{_lambda_.27} parent=0 // pred_fallthru
    _
  // Predicated region
  $region6: #{_lambda_.27} parent=0 // pred_check
    _
  $region7: #{_lambda_.27} parent=0 // pred_check_branch
    %11 = sbr.rel (0) target = $region9
  $region8: #{_lambda_.27} parent=0 // pred_region
    _
  $region9: #{_lambda_.27} parent=0 // pred_fallthru
    _
  // Predicated region
  $region10: #{_lambda_.27} parent=0 // pred_check
    _
  $region11: #{_lambda_.27} parent=0 // pred_check_branch
    %13 = sbr.rel (0) target = $region13
  $region12: #{_lambda_.27} parent=0 // pred_region
    _
  $region13: #{_lambda_.27} parent=0 // pred_fallthru
    _
  %v15 = vld [vmem:[%s0] sm:$0xf]
  %v16 = vld [vmem:[%s0 + $0x4] sm:$0xf]
  %v17 = vld [vmem:[%s0 + $0x8] sm:$0xf]
  %v18 = vld [vmem:[%s0 + $0xc] sm:$0xf]
  %v19 = vld [vmem:[%s1] sm:$0xf]
  %v20 = vld [vmem:[%s1 + $0x4] sm:$0xf]
  %v21 = vld [vmem:[%s1 + $0x8] sm:$0xf]
  %v22 = vld [vmem:[%s1 + $0xc] sm:$0xf]
  %v23 = vld [vmem:[%s1 + $0x10] sm:$0xf]
  %v24 = vld [vmem:[%s1 + $0x14] sm:$0xf]
  %v25 = vld [vmem:[%s1 + $0x18] sm:$0xf]
  %v26 = vld [vmem:[%s1 + $0x1c] sm:$0xf]
  %v27 = vld [vmem:[%s1 + $0x20] sm:$0xf]
  %v28 = vld [vmem:[%s1 + $0x24] sm:$0xf]
  %v29 = vld [vmem:[%s1 + $0x28] sm:$0xf]
  %v30 = vld [vmem:[%s1 + $0x2c] sm:$0xf]
  %v31 = vld [vmem:[%s1 + $0x30] sm:$0xf]
  %v32 = vld [vmem:[%s1 + $0x34] sm:$0xf]
  %v33 = vld [vmem:[%s1 + $0x38] sm:$0xf]
  %v34 = vld [vmem:[%s1 + $0x3c] sm:$0xf]
  %v35 = vld [vmem:[%s2] sm:$0x1]
  %v37 = vlaneseq
  %v38 = vshrl.u32 %v37, 7
  %v39 = vsub.s32 0, %v38
  %v40 = vrot.slane %v35, %v39
  %v46 = vunpack.c.l.b16 %v15
  %v47 = vunpack.c.l.b16 %v16
  %v48 = vunpack.c.l.b16 %v17
  %v49 = vunpack.c.l.b16 %v18
  %v50 = vpack.c.b16 %v47, %v46
  %v51 = vpack.c.b16 %v49, %v48
  %v70 = vunpack.c.l.b16 %v19
  %v71 = vunpack.c.l.b16 %v20
  %v72 = vunpack.c.l.b16 %v21
  %v73 = vunpack.c.l.b16 %v22
  %v74 = vunpack.c.l.b16 %v23
  %v75 = vunpack.c.l.b16 %v24
  %v76 = vunpack.c.l.b16 %v25
  %v77 = vunpack.c.l.b16 %v26
  %v78 = vunpack.c.l.b16 %v27
  %v79 = vunpack.c.l.b16 %v28
  %v80 = vunpack.c.l.b16 %v29
  %v81 = vunpack.c.l.b16 %v30
  %v82 = vunpack.c.l.b16 %v31
  %v83 = vunpack.c.l.b16 %v32
  %v84 = vunpack.c.l.b16 %v33
  %v85 = vunpack.c.l.b16 %v34
  %v86 = vpack.c.b16 %v71, %v70
  %v87 = vpack.c.b16 %v73, %v72
  %v88 = vpack.c.b16 %v75, %v74
  %v89 = vpack.c.b16 %v77, %v76
  %v90 = vpack.c.b16 %v79, %v78
  %v91 = vpack.c.b16 %v81, %v80
  %v92 = vpack.c.b16 %v83, %v82
  %v93 = vpack.c.b16 %v85, %v84
  %102 = vmatprep.subr.bf16.mxu0 0
  %103 = vmatpush1.bf16.msra.mxu0 %v93
  %104 = vmatprep.subr.bf16.mxu0 0
  %105 = vmatpush1.bf16.msra.mxu0 %v92
  %106 = vmatprep.subr.bf16.mxu0 0
  %107 = vmatpush1.bf16.msra.mxu0 %v91
  %108 = vmatprep.subr.bf16.mxu0 0
  %109 = vmatpush1.bf16.msra.mxu0 %v90
  %110 = vmatprep.subr.bf16.mxu0 0
  %111 = vmatpush1.bf16.msra.mxu0 %v89
  %112 = vmatprep.subr.bf16.mxu0 0
  %113 = vmatpush1.bf16.msra.mxu0 %v88
  %114 = vmatprep.subr.bf16.mxu0 0
  %115 = vmatpush1.bf16.msra.mxu0 %v87
  %116 = vmatprep.subr.bf16.mxu0 0
  %117 = vmatpush1.bf16.msra.mxu0 %v86
  %118 = vmatprep.subr.bf16.mxu0 0
  %119 = vmatpush2.bf16.msra.mxu0 0
  %120 = vmatprep.subr.bf16.mxu0 0
  %121 = vmatpush2.bf16.msra.mxu0 0
  %122 = vmatprep.subr.bf16.mxu0 0
  %123 = vmatpush2.bf16.msra.mxu0 0
  %124 = vmatprep.subr.bf16.mxu0 0
  %125 = vmatpush2.bf16.msra.mxu0 0
  %126 = vmatprep.subr.bf16.mxu0 0
  %127 = vmatpush2.bf16.msra.mxu0 0
  %128 = vmatprep.subr.bf16.mxu0 0
  %129 = vmatpush2.bf16.msra.mxu0 0
  %130 = vmatprep.subr.bf16.mxu0 0
  %131 = vmatpush2.bf16.msra.mxu0 0
  %132 = vmatprep.subr.bf16.mxu0 0
  %133 = vmatpush2.bf16.msra.mxu0 0
  %134 = vmatprep.mubr.bf16.mxu0 0
  %135 = vmatmul.mubr.bf16.gmra.mxu0 %v50
  %v136 = vpop.f32.mrf.mxu0
  %v137 = vadd.f32 %v40, %v136
  %v138 = vpop.f32.mrf.mxu0
  %v139 = vpop.f32.mrf.mxu0
  %v140 = vadd.f32 %v40, %v139
  %v141 = vpop.f32.mrf.mxu0
  %142 = vmatprep.mubr.bf16.mxu0 0
  %143 = vmatmul.mubr.bf16.gmra.mxu0 %v51
  %v144 = vpop.f32.mrf.mxu0
  %v145 = vadd.f32 %v40, %v144
  %v146 = vpop.f32.mrf.mxu0
  %v147 = vpop.f32.mrf.mxu0
  %v148 = vadd.f32 %v40, %v147
  %v149 = vpop.f32.mrf.mxu0
  %150 = vdwg.mxu0
  %v151 = vmax.f32 %v137, 0.0
  %v152 = vmax.f32 %v140, 0.0
  %v153 = vmax.f32 %v145, 0.0
  %v154 = vmax.f32 %v148, 0.0
  %v155 = vpack.c.bf16 %v152, %v151
  %v156 = vpack.c.bf16 %v154, %v153
  %v159 = vunpack.c.l.b16 %v155
  %v160 = vunpack.c.h.b16 %v155
  %v161 = vunpack.c.l.b16 %v156
  %v162 = vunpack.c.h.b16 %v156
  %v163 = vpack.c.b16 %v159, %v159
  %v164 = vpack.c.b16 %v160, %v160
  %v165 = vpack.c.b16 %v161, %v161
  %v166 = vpack.c.b16 %v162, %v162
  %171 = vst [vmem:[%s3] sm:$0xf] %v163
  %172 = vst [vmem:[%s3 + $0x4] sm:$0xf] %v164
  %173 = vst [vmem:[%s3 + $0x8] sm:$0xf] %v165
  %174 = vst [vmem:[%s3 + $0xc] sm:$0xf] %v166
  // Predicated region
  $region14: #{_lambda_.27} parent=0 // pred_check
    _
  $region15: #{_lambda_.27} parent=0 // pred_check_branch
    %176 = sbr.rel (0) target = $region17
  $region16: #{_lambda_.27} parent=0 // pred_region
    _
  $region17: #{_lambda_.27} parent=0 // pred_fallthru
    _
  // Predicated region
  $region18: #{_lambda_.27} parent=0 // pred_check
    _
  $region19: #{_lambda_.27} parent=0 // pred_check_branch
    %178 = sbr.rel (0) target = $region21
  $region20: #{_lambda_.27} parent=0 // pred_region
    _
  $region21: #{_lambda_.27} parent=0 // pred_fallthru
    _

// kernel: _lambda_.26
$region0: #{_lambda_.26}
  #allocation0 [shape = 'u32[]', space=smem, size = 0x4, offset = 0x4, fixed_abs, tag = 'smem constant byte address 0x4 - core index']
  #allocation1 [shape = 'u32[144,128]{1,0:T(1,128)}', space=vmem, size = 0x12000, scoped, tag = 'internal scratch']
  %s0 = inlined_call_operand.vmem [shape: bf16[32,128], index: 0, kind: input, shape index: {}]
  %s1 = inlined_call_operand.vmem [shape: bf16[128,128], index: 1, kind: input, shape index: {}]
  %s2 = inlined_call_operand.vmem [shape: f32[1,128], index: 2, kind: input, shape index: {}]
  %s3 = inlined_call_operand.vmem [shape: bf16[32,128], index: 3, kind: input, shape index: {}]
  %s4 = inlined_call_operand.vmem [shape: bf16[128,128], index: 4, kind: input, shape index: {}]
  %s5 = inlined_call_operand.vmem [shape: f32[1,128], index: 5, kind: input, shape index: {}]
  %s6 = inlined_call_operand.vmem [shape: bf16[32,128], index: 6, kind: output, shape index: {}]
  %s7 = sld [smem:[#allocation0]]
  $region34: #{_lambda_.26} parent=0
    _
  %s9 = ssub.s32 1, %s7
  %s10 = scalar_select 0, %s9, %s7
  // Predicated region
  $region2: #{_lambda_.26} parent=0 // pred_check
    _
  $region3: #{_lambda_.26} parent=0 // pred_check_branch
    %12 = sbr.rel (0) target = $region5
  $region4: #{_lambda_.26} parent=0 // pred_region
    _
  $region5: #{_lambda_.26} parent=0 // pred_fallthru
    _
  // Predicated region
  $region6: #{_lambda_.26} parent=0 // pred_check
    _
  $region7: #{_lambda_.26} parent=0 // pred_check_branch
    %14 = sbr.rel (0) target = $region9
  $region8: #{_lambda_.26} parent=0 // pred_region
    _
  $region9: #{_lambda_.26} parent=0 // pred_fallthru
    _
  // Predicated region
  $region10: #{_lambda_.26} parent=0 // pred_check
    _
  $region11: #{_lambda_.26} parent=0 // pred_check_branch
    %16 = sbr.rel (0) target = $region13
  $region12: #{_lambda_.26} parent=0 // pred_region
    _
  $region13: #{_lambda_.26} parent=0 // pred_fallthru
    _
  // Predicated region
  $region14: #{_lambda_.26} parent=0 // pred_check
    _
  $region15: #{_lambda_.26} parent=0 // pred_check_branch
    %18 = sbr.rel (0) target = $region17
  $region16: #{_lambda_.26} parent=0 // pred_region
    _
  $region17: #{_lambda_.26} parent=0 // pred_fallthru
    _
  // Predicated region
  $region18: #{_lambda_.26} parent=0 // pred_check
    _
  $region19: #{_lambda_.26} parent=0 // pred_check_branch
    %20 = sbr.rel (0) target = $region21
  $region20: #{_lambda_.26} parent=0 // pred_region
    _
  $region21: #{_lambda_.26} parent=0 // pred_fallthru
    _
  // Predicated region
  $region22: #{_lambda_.26} parent=0 // pred_check
    _
  $region23: #{_lambda_.26} parent=0 // pred_check_branch
    %22 = sbr.rel (0) target = $region25
  $region24: #{_lambda_.26} parent=0 // pred_region
    _
  $region25: #{_lambda_.26} parent=0 // pred_fallthru
    _
  %v24 = vld [vmem:[%s0] sm:$0xf]
  %v25 = vld [vmem:[%s0 + $0x4] sm:$0xf]
  %v26 = vld [vmem:[%s0 + $0x8] sm:$0xf]
  %v27 = vld [vmem:[%s0 + $0xc] sm:$0xf]
  %v28 = vld [vmem:[%s1] sm:$0xf]
  %v29 = vld [vmem:[%s1 + $0x4] sm:$0xf]
  %v30 = vld [vmem:[%s1 + $0x8] sm:$0xf]
  %v31 = vld [vmem:[%s1 + $0xc] sm:$0xf]
  %v32 = vld [vmem:[%s1 + $0x10] sm:$0xf]
  %v33 = vld [vmem:[%s1 + $0x14] sm:$0xf]
  %v34 = vld [vmem:[%s1 + $0x18] sm:$0xf]
  %v35 = vld [vmem:[%s1 + $0x1c] sm:$0xf]
  %v36 = vld [vmem:[%s1 + $0x20] sm:$0xf]
  %v37 = vld [vmem:[%s1 + $0x24] sm:$0xf]
  %v38 = vld [vmem:[%s1 + $0x28] sm:$0xf]
  %v39 = vld [vmem:[%s1 + $0x2c] sm:$0xf]
  %v40 = vld [vmem:[%s1 + $0x30] sm:$0xf]
  %v41 = vld [vmem:[%s1 + $0x34] sm:$0xf]
  %v42 = vld [vmem:[%s1 + $0x38] sm:$0xf]
  %v43 = vld [vmem:[%s1 + $0x3c] sm:$0xf]
  %v44 = vld [vmem:[%s2] sm:$0x1]
  %v46 = vlaneseq
  %v47 = vshrl.u32 %v46, 7
  %v48 = vsub.s32 0, %v47
  %v49 = vrot.slane %v44, %v48
  %v55 = vunpack.c.l.b16 %v24
  %v56 = vunpack.c.l.b16 %v25
  %v57 = vunpack.c.l.b16 %v26
  %v58 = vunpack.c.l.b16 %v27
  %v59 = vpack.c.b16 %v56, %v55
  %v60 = vpack.c.b16 %v58, %v57
  %v79 = vunpack.c.l.b16 %v28
  %v80 = vunpack.c.l.b16 %v29
  %v81 = vunpack.c.l.b16 %v30
  %v82 = vunpack.c.l.b16 %v31
  %v83 = vunpack.c.l.b16 %v32
  %v84 = vunpack.c.l.b16 %v33
  %v85 = vunpack.c.l.b16 %v34
  %v86 = vunpack.c.l.b16 %v35
  %v87 = vunpack.c.l.b16 %v36
  %v88 = vunpack.c.l.b16 %v37
  %v89 = vunpack.c.l.b16 %v38
  %v90 = vunpack.c.l.b16 %v39
  %v91 = vunpack.c.l.b16 %v40
  %v92 = vunpack.c.l.b16 %v41
  %v93 = vunpack.c.l.b16 %v42
  %v94 = vunpack.c.l.b16 %v43
  %v95 = vpack.c.b16 %v80, %v79
  %v96 = vpack.c.b16 %v82, %v81
  %v97 = vpack.c.b16 %v84, %v83
  %v98 = vpack.c.b16 %v86, %v85
  %v99 = vpack.c.b16 %v88, %v87
  %v100 = vpack.c.b16 %v90, %v89
  %v101 = vpack.c.b16 %v92, %v91
  %v102 = vpack.c.b16 %v94, %v93
  %111 = vmatprep.subr.bf16.mxu0 0
  %112 = vmatpush1.bf16.msra.mxu0 %v102
  %113 = vmatprep.subr.bf16.mxu0 0
  %114 = vmatpush1.bf16.msra.mxu0 %v101
  %115 = vmatprep.subr.bf16.mxu0 0
  %116 = vmatpush1.bf16.msra.mxu0 %v100
  %117 = vmatprep.subr.bf16.mxu0 0
  %118 = vmatpush1.bf16.msra.mxu0 %v99
  %119 = vmatprep.subr.bf16.mxu0 0
  %120 = vmatpush1.bf16.msra.mxu0 %v98
  %121 = vmatprep.subr.bf16.mxu0 0
  %122 = vmatpush1.bf16.msra.mxu0 %v97
  %123 = vmatprep.subr.bf16.mxu0 0
  %124 = vmatpush1.bf16.msra.mxu0 %v96
  %125 = vmatprep.subr.bf16.mxu0 0
  %126 = vmatpush1.bf16.msra.mxu0 %v95
  %127 = vmatprep.subr.bf16.mxu0 0
  %128 = vmatpush2.bf16.msra.mxu0 0
  %129 = vmatprep.subr.bf16.mxu0 0
  %130 = vmatpush2.bf16.msra.mxu0 0
  %131 = vmatprep.subr.bf16.mxu0 0
  %132 = vmatpush2.bf16.msra.mxu0 0
  %133 = vmatprep.subr.bf16.mxu0 0
  %134 = vmatpush2.bf16.msra.mxu0 0
  %135 = vmatprep.subr.bf16.mxu0 0
  %136 = vmatpush2.bf16.msra.mxu0 0
  %137 = vmatprep.subr.bf16.mxu0 0
  %138 = vmatpush2.bf16.msra.mxu0 0
  %139 = vmatprep.subr.bf16.mxu0 0
  %140 = vmatpush2.bf16.msra.mxu0 0
  %141 = vmatprep.subr.bf16.mxu0 0
  %142 = vmatpush2.bf16.msra.mxu0 0
  %143 = vmatprep.mubr.bf16.mxu0 0
  %144 = vmatmul.mubr.bf16.gmra.mxu0 %v59
  %v145 = vpop.f32.mrf.mxu0
  %v146 = vadd.f32 %v49, %v145
  %v147 = vpop.f32.mrf.mxu0
  %v148 = vpop.f32.mrf.mxu0
  %v149 = vadd.f32 %v49, %v148
  %v150 = vpop.f32.mrf.mxu0
  %151 = vmatprep.mubr.bf16.mxu0 0
  %152 = vmatmul.mubr.bf16.gmra.mxu0 %v60
  %v153 = vpop.f32.mrf.mxu0
  %v154 = vadd.f32 %v49, %v153
  %v155 = vpop.f32.mrf.mxu0
  %v156 = vpop.f32.mrf.mxu0
  %v157 = vadd.f32 %v49, %v156
  %v158 = vpop.f32.mrf.mxu0
  %159 = vdwg.mxu0
  %v160 = vld [vmem:[%s3] sm:$0xf]
  %v161 = vld [vmem:[%s3 + $0x4] sm:$0xf]
  %v162 = vld [vmem:[%s3 + $0x8] sm:$0xf]
  %v163 = vld [vmem:[%s3 + $0xc] sm:$0xf]
  %v164 = vld [vmem:[%s4] sm:$0xf]
  %v165 = vld [vmem:[%s4 + $0x4] sm:$0xf]
  %v166 = vld [vmem:[%s4 + $0x8] sm:$0xf]
  %v167 = vld [vmem:[%s4 + $0xc] sm:$0xf]
  %v168 = vld [vmem:[%s4 + $0x10] sm:$0xf]
  %v169 = vld [vmem:[%s4 + $0x14] sm:$0xf]
  %v170 = vld [vmem:[%s4 + $0x18] sm:$0xf]
  %v171 = vld [vmem:[%s4 + $0x1c] sm:$0xf]
  %v172 = vld [vmem:[%s4 + $0x20] sm:$0xf]
  %v173 = vld [vmem:[%s4 + $0x24] sm:$0xf]
  %v174 = vld [vmem:[%s4 + $0x28] sm:$0xf]
  %v175 = vld [vmem:[%s4 + $0x2c] sm:$0xf]
  %v176 = vld [vmem:[%s4 + $0x30] sm:$0xf]
  %v177 = vld [vmem:[%s4 + $0x34] sm:$0xf]
  %v178 = vld [vmem:[%s4 + $0x38] sm:$0xf]
  %v179 = vld [vmem:[%s4 + $0x3c] sm:$0xf]
  %v180 = vld [vmem:[%s5] sm:$0x1]
  %v182 = vlaneseq
  %v183 = vshrl.u32 %v182, 7
  %v184 = vsub.s32 0, %v183
  %v185 = vrot.slane %v180, %v184
  %v191 = vunpack.c.l.b16 %v160
  %v192 = vunpack.c.l.b16 %v161
  %v193 = vunpack.c.l.b16 %v162
  %v194 = vunpack.c.l.b16 %v163
  %v195 = vpack.c.b16 %v192, %v191
  %v196 = vpack.c.b16 %v194, %v193
  %v215 = vunpack.c.l.b16 %v164
  %v216 = vunpack.c.l.b16 %v165
  %v217 = vunpack.c.l.b16 %v166
  %v218 = vunpack.c.l.b16 %v167
  %v219 = vunpack.c.l.b16 %v168
  %v220 = vunpack.c.l.b16 %v169
  %v221 = vunpack.c.l.b16 %v170
  %v222 = vunpack.c.l.b16 %v171
  %v223 = vunpack.c.l.b16 %v172
  %v224 = vunpack.c.l.b16 %v173
  %v225 = vunpack.c.l.b16 %v174
  %v226 = vunpack.c.l.b16 %v175
  %v227 = vunpack.c.l.b16 %v176
  %v228 = vunpack.c.l.b16 %v177
  %v229 = vunpack.c.l.b16 %v178
  %v230 = vunpack.c.l.b16 %v179
  %v231 = vpack.c.b16 %v216, %v215
  %v232 = vpack.c.b16 %v218, %v217
  %v233 = vpack.c.b16 %v220, %v219
  %v234 = vpack.c.b16 %v222, %v221
  %v235 = vpack.c.b16 %v224, %v223
  %v236 = vpack.c.b16 %v226, %v225
  %v237 = vpack.c.b16 %v228, %v227
  %v238 = vpack.c.b16 %v230, %v229
  %247 = vmatprep.subr.bf16.mxu0 0
  %248 = vmatpush1.bf16.msra.mxu0 %v238
  %249 = vmatprep.subr.bf16.mxu0 0
  %250 = vmatpush1.bf16.msra.mxu0 %v237
  %251 = vmatprep.subr.bf16.mxu0 0
  %252 = vmatpush1.bf16.msra.mxu0 %v236
  %253 = vmatprep.subr.bf16.mxu0 0
  %254 = vmatpush1.bf16.msra.mxu0 %v235
  %255 = vmatprep.subr.bf16.mxu0 0
  %256 = vmatpush1.bf16.msra.mxu0 %v234
  %257 = vmatprep.subr.bf16.mxu0 0
  %258 = vmatpush1.bf16.msra.mxu0 %v233
  %259 = vmatprep.subr.bf16.mxu0 0
  %260 = vmatpush1.bf16.msra.mxu0 %v232
  %261 = vmatprep.subr.bf16.mxu0 0
  %262 = vmatpush1.bf16.msra.mxu0 %v231
  %263 = vmatprep.subr.bf16.mxu0 0
  %264 = vmatpush2.bf16.msra.mxu0 0
  %265 = vmatprep.subr.bf16.mxu0 0
  %266 = vmatpush2.bf16.msra.mxu0 0
  %267 = vmatprep.subr.bf16.mxu0 0
  %268 = vmatpush2.bf16.msra.mxu0 0
  %269 = vmatprep.subr.bf16.mxu0 0
  %270 = vmatpush2.bf16.msra.mxu0 0
  %271 = vmatprep.subr.bf16.mxu0 0
  %272 = vmatpush2.bf16.msra.mxu0 0
  %273 = vmatprep.subr.bf16.mxu0 0
  %274 = vmatpush2.bf16.msra.mxu0 0
  %275 = vmatprep.subr.bf16.mxu0 0
  %276 = vmatpush2.bf16.msra.mxu0 0
  %277 = vmatprep.subr.bf16.mxu0 0
  %278 = vmatpush2.bf16.msra.mxu0 0
  %279 = vmatprep.mubr.bf16.mxu0 0
  %280 = vmatmul.mubr.bf16.gmra.mxu0 %v195
  %v281 = vpop.f32.mrf.mxu0
  %v282 = vadd.f32 %v185, %v281
  %v283 = vpop.f32.mrf.mxu0
  %v284 = vpop.f32.mrf.mxu0
  %v285 = vadd.f32 %v185, %v284
  %v286 = vpop.f32.mrf.mxu0
  %287 = vmatprep.mubr.bf16.mxu0 0
  %288 = vmatmul.mubr.bf16.gmra.mxu0 %v196
  %v289 = vpop.f32.mrf.mxu0
  %v290 = vadd.f32 %v185, %v289
  %v291 = vpop.f32.mrf.mxu0
  %v292 = vpop.f32.mrf.mxu0
  %v293 = vadd.f32 %v185, %v292
  %v294 = vpop.f32.mrf.mxu0
  %295 = vdwg.mxu0
  %v296 = vadd.f32 %v146, %v282
  %v297 = vadd.f32 %v149, %v285
  %v298 = vadd.f32 %v154, %v290
  %v299 = vadd.f32 %v157, %v293
  %v300 = vmax.f32 %v296, 0.0
  %v301 = vmax.f32 %v297, 0.0
  %v302 = vmax.f32 %v298, 0.0
  %v303 = vmax.f32 %v299, 0.0
  %v304 = vpack.c.bf16 %v301, %v300
  %v305 = vpack.c.bf16 %v303, %v302
  %v308 = vunpack.c.l.b16 %v304
  %v309 = vunpack.c.h.b16 %v304
  %v310 = vunpack.c.l.b16 %v305
  %v311 = vunpack.c.h.b16 %v305
  %v312 = vpack.c.b16 %v308, %v308
  %v313 = vpack.c.b16 %v309, %v309
  %v314 = vpack.c.b16 %v310, %v310
  %v315 = vpack.c.b16 %v311, %v311
  %320 = vst [vmem:[%s6] sm:$0xf] %v312
  %321 = vst [vmem:[%s6 + $0x4] sm:$0xf] %v313
  %322 = vst [vmem:[%s6 + $0x8] sm:$0xf] %v314
  %323 = vst [vmem:[%s6 + $0xc] sm:$0xf] %v315
  // Predicated region
  $region26: #{_lambda_.26} parent=0 // pred_check
    _
  $region27: #{_lambda_.26} parent=0 // pred_check_branch
    %325 = sbr.rel (0) target = $region29
  $region28: #{_lambda_.26} parent=0 // pred_region
    _
  $region29: #{_lambda_.26} parent=0 // pred_fallthru
    _
  // Predicated region
  $region30: #{_lambda_.26} parent=0 // pred_check
    _
  $region31: #{_lambda_.26} parent=0 // pred_check_branch
    %327 = sbr.rel (0) target = $region33
  $region32: #{_lambda_.26} parent=0 // pred_region
    _
  $region33: #{_lambda_.26} parent=0 // pred_fallthru
    _

// kernel: _lambda_.25
$region0: #{_lambda_.25}
  #allocation0 [shape = 'u32[]', space=smem, size = 0x4, offset = 0x4, fixed_abs, tag = 'smem constant byte address 0x4 - core index']
  #allocation1 [shape = 'u32[144,128]{1,0:T(1,128)}', space=vmem, size = 0x12000, scoped, tag = 'internal scratch']
  %s0 = inlined_call_operand.vmem [shape: bf16[2,110,128], index: 0, kind: input, shape index: {}]
  %s1 = inlined_call_operand.vmem [shape: bf16[3,384,128], index: 1, kind: input, shape index: {}]
  %s2 = inlined_call_operand.vmem [shape: f32[1,128], index: 2, kind: input, shape index: {}]
  %s3 = inlined_call_operand.vmem [shape: bf16[2,80,128], index: 3, kind: output, shape index: {}]
  %s4 = sld [smem:[#allocation0]]
  $region45: #{_lambda_.25} parent=0
    _
  %s6 = ssub.s32 1, %s4
  %s7 = scalar_select 0, %s6, %s4
  loop: start=0, step=1, limit=4
  $region2: #{_lambda_.25} parent=0 // loop_pre_header
    _
  $region3: #{_lambda_.25} parent=0 // loop_header
    %s9 = sphi 0, %s13
    %p10 = scmp.ge.s32.totalorder %s9, 4
    %s16 = sphi 0, %s28
    %s17 = sphi 0, %s24
    %s18 = sphi 0, %s16
    %s19 = sphi 0, %s17
    %s20 = sphi 0, %s18
    %s21 = sphi 0, %s19
    %s31 = sphi 0, %s33
    %s34 = sphi 0, %s31
    %s35 = sphi 0, %s34
    %s51 = sphi 0, %s35
    %s57 = sphi 0, %s59
    %s60 = sphi 0, %s57
    %s61 = sphi 0, %s60
    %s77 = sphi 0, %s61
    %s83 = sphi 0, %s85
    %s86 = sphi 0, %s83
    %s87 = sphi 0, %s86
    %s103 = sphi 0, %s87
    %s111 = sphi 0, %s113
    %s114 = sphi 0, %s111
    %s115 = sphi 0, %s114
    %s131 = sphi 0, %s115
  $region4: #{_lambda_.25} parent=0 // loop_header_branch
    %12 = sbr.rel (%p10) target = $region8
  $region5: #{_lambda_.25} parent=0 // loop_body
    %s14 = ssub.s32 %s9, 1
    %s15 = ssub.s32 %s9, 2
    %s22 = sadd.s32 1, %s17
    %p23 = scmp.ge.s32.totalorder %s22, 1
    %s24 = scalar_select %p23, 0, %s22
    %s25 = sadd.s32 1, %s16
    %s26 = scalar_select %p23, %s25, %s16
    %p27 = scmp.ge.s32.totalorder %s26, 2
    %s28 = scalar_select %p27, 0, %s26
    %s29 = ssub.s32 %s16, %s28
    %p30 = scmp.eq.s32.totalorder %s29, 0
    %s32 = sadd.s32 %s31, 1
    %s33 = scalar_select %p30, %s31, %s32
    %p36 = pneg %p30
    %p37 = scmp.eq.s32.totalorder %s9, 1
    %p38 = por %p36, %p37
    %p39 = scmp.ne.s32.totalorder %s31, %s34
    %p40 = scmp.eq.s32.totalorder %s9, 0
    %p41 = por %p39, %p40
    %p42 = scmp.ne.s32.totalorder %s31, %s34
    %p43 = scmp.eq.s32.totalorder %s14, 1
    %p44 = por %p42, %p43
    %p45 = scmp.ne.s32.totalorder %s34, %s35
    %p46 = scmp.eq.s32.totalorder %s14, 0
    %p47 = por %p45, %p46
    %p48 = scmp.ne.s32.totalorder %s34, %s35
    %p49 = scmp.eq.s32.totalorder %s15, 1
    %p50 = por %p48, %p49
    %p52 = scmp.ne.s32.totalorder %s35, %s51
    %p53 = scmp.eq.s32.totalorder %s15, 0
    %p54 = por %p52, %p53
    %s55 = ssub.s32 %s17, %s24
    %p56 = scmp.eq.s32.totalorder %s55, 0
    %s58 = sadd.s32 %s57, 1
    %s59 = scalar_select %p56, %s57, %s58
    %p62 = pneg %p56
    %p63 = scmp.eq.s32.totalorder %s9, 1
    %p64 = por %p62, %p63
    %p65 = scmp.ne.s32.totalorder %s57, %s60
    %p66 = scmp.eq.s32.totalorder %s9, 0
    %p67 = por %p65, %p66
    %p68 = scmp.ne.s32.totalorder %s57, %s60
    %p69 = scmp.eq.s32.totalorder %s14, 1
    %p70 = por %p68, %p69
    %p71 = scmp.ne.s32.totalorder %s60, %s61
    %p72 = scmp.eq.s32.totalorder %s14, 0
    %p73 = por %p71, %p72
    %p74 = scmp.ne.s32.totalorder %s60, %s61
    %p75 = scmp.eq.s32.totalorder %s15, 1
    %p76 = por %p74, %p75
    %p78 = scmp.ne.s32.totalorder %s61, %s77
    %p79 = scmp.eq.s32.totalorder %s15, 0
    %p80 = por %p78, %p79
    %s81 = ssub.s32 %s17, %s24
    %p82 = scmp.eq.s32.totalorder %s81, 0
    %s84 = sadd.s32 %s83, 1
    %s85 = scalar_select %p82, %s83, %s84
    %p88 = pneg %p82
    %p89 = scmp.eq.s32.totalorder %s9, 1
    %p90 = por %p88, %p89
    %p91 = scmp.ne.s32.totalorder %s83, %s86
    %p92 = scmp.eq.s32.totalorder %s9, 0
    %p93 = por %p91, %p92
    %p94 = scmp.ne.s32.totalorder %s83, %s86
    %p95 = scmp.eq.s32.totalorder %s14, 1
    %p96 = por %p94, %p95
    %p97 = scmp.ne.s32.totalorder %s86, %s87
    %p98 = scmp.eq.s32.totalorder %s14, 0
    %p99 = por %p97, %p98
    %p100 = scmp.ne.s32.totalorder %s86, %s87
    %p101 = scmp.eq.s32.totalorder %s15, 1
    %p102 = por %p100, %p101
    %p104 = scmp.ne.s32.totalorder %s87, %s103
    %p105 = scmp.eq.s32.totalorder %s15, 0
    %p106 = por %p104, %p105
    %s107 = ssub.s32 %s16, %s28
    %s108 = ssub.s32 %s17, %s24
    %s109 = sor.u32 %s107, %s108
    %p110 = scmp.eq.s32.totalorder %s109, 0
    %s112 = sadd.s32 %s111, 1
    %s113 = scalar_select %p110, %s111, %s112
    %p116 = pneg %p110
    %p117 = scmp.eq.s32.totalorder %s9, 1
    %p118 = por %p116, %p117
    %p119 = scmp.ne.s32.totalorder %s111, %s114
    %p120 = scmp.eq.s32.totalorder %s9, 0
    %p121 = por %p119, %p120
    %p122 = scmp.ne.s32.totalorder %s111, %s114
    %p123 = scmp.eq.s32.totalorder %s14, 1
    %p124 = por %p122, %p123
    %p125 = scmp.ne.s32.totalorder %s114, %s115
    %p126 = scmp.eq.s32.totalorder %s14, 0
    %p127 = por %p125, %p126
    %p128 = scmp.ne.s32.totalorder %s114, %s115
    %p129 = scmp.eq.s32.totalorder %s15, 1
    %p130 = por %p128, %p129
    %p132 = scmp.ne.s32.totalorder %s115, %s131
    %p133 = scmp.eq.s32.totalorder %s15, 0
    %p134 = por %p132, %p133
    %p135 = scmp.le.s32.totalorder 1, %s9
    %p136 = scmp.lt.s32.totalorder %s9, 3
    %p137 = pnand %p135, %p136
    %p138 = pneg %p137
    // Predicated region
    $region9: #{_lambda_.25} parent=5 // pred_check
      _
    $region10: #{_lambda_.25} parent=5 // pred_check_branch
      %140 = sbr.rel (%p137) target = $region12
    $region11: #{_lambda_.25} parent=5 // pred_region
      %s141 = ssub.s32 %s9, 1
      // Predicated region
      $region13: #{_lambda_.25} parent=11 // pred_check
        %p142 = pneg %p73
      $region14: #{_lambda_.25} parent=11 // pred_check_branch
        %144 = sbr.rel (%p142) target = $region16
      $region15: #{_lambda_.25} parent=11 // pred_region
        %p145 = scmp.lt.s32.totalorder %s19, 0
        %s146 = scalar_select %p145, %s19, 0
        %s147 = smul.addr %s146, 4
        %s148 = scalar_lea.vmem %s1, %s147
      $region16: #{_lambda_.25} parent=11 // pred_fallthru
        _
      // Predicated region
      $region17: #{_lambda_.25} parent=11 // pred_check
        %p149 = pneg %p99
      $region18: #{_lambda_.25} parent=11 // pred_check_branch
        %151 = sbr.rel (%p149) target = $region20
      $region19: #{_lambda_.25} parent=11 // pred_region
        %p152 = scmp.lt.s32.totalorder %s19, 0
        %s153 = scalar_select %p152, %s19, 0
        %s154 = scalar_lea.vmem %s2, %s153
      $region20: #{_lambda_.25} parent=11 // pred_fallthru
        _
    $region12: #{_lambda_.25} parent=5 // pred_fallthru
      _
    %p155 = scmp.lt.s32.totalorder %s9, 2
    // Predicated region
    $region21: #{_lambda_.25} parent=5 // pred_check
      %p156 = pneg %p155
    $region22: #{_lambda_.25} parent=5 // pred_check_branch
      %158 = sbr.rel (%p156) target = $region24
    $region23: #{_lambda_.25} parent=5 // pred_region
      // Predicated region
      $region25: #{_lambda_.25} parent=23 // pred_check
        %p159 = pneg %p41
      $region26: #{_lambda_.25} parent=23 // pred_check_branch
        %161 = sbr.rel (%p159) target = $region28
      $region27: #{_lambda_.25} parent=23 // pred_region
        %p162 = scmp.lt.s32.totalorder %s16, 1
        %s163 = scalar_select %p162, %s16, 1
        %s164 = smul.addr %s163, 14
        %s165 = smul.addr %s164, 4
        %s166 = scalar_lea.vmem %s0, %s165
      $region28: #{_lambda_.25} parent=23 // pred_fallthru
        _
    $region24: #{_lambda_.25} parent=5 // pred_fallthru
      _
    %p167 = scmp.le.s32.totalorder 1, %s9
    %p168 = scmp.lt.s32.totalorder %s9, 3
    %p169 = pnand %p167, %p168
    %p170 = pneg %p169
    // Predicated region
    $region29: #{_lambda_.25} parent=5 // pred_check
      _
    $region30: #{_lambda_.25} parent=5 // pred_check_branch
      %172 = sbr.rel (%p169) target = $region32
    $region31: #{_lambda_.25} parent=5 // pred_region
      %s173 = ssub.s32 %s9, 1
      %p174 = scmp.lt.s32.totalorder %s18, 1
      %s175 = scalar_select %p174, %s18, 1
      %s176 = smul.addr %s175, 14
      %s177 = smul.addr %s176, 4
      %s178 = scalar_lea.vmem %s0, %s177
      %p179 = pneg %p47
      %p180 = pneg %p44
      %p181 = scmp.lt.s32.totalorder %s19, 0
      %s182 = scalar_select %p181, %s19, 0
      %s183 = smul.addr %s182, 4
      %s184 = scalar_lea.vmem %s1, %s183
      %p185 = pneg %p73
      %p186 = pneg %p70
      %p187 = scmp.lt.s32.totalorder %s19, 0
      %s188 = scalar_select %p187, %s19, 0
      %s189 = scalar_lea.vmem %s2, %s188
      %p190 = pneg %p99
      %p191 = pneg %p96
      %p192 = pneg %p127
      %p193 = pneg %p124
      %p194 = scmp.lt.s32.totalorder %s18, 1
      %s195 = scalar_select %p194, %s18, 1
      %p196 = scmp.lt.s32.totalorder %s19, 0
      %s197 = scalar_select %p196, %s19, 0
      %s198 = smul.addr %s195, 10
      %s199 = sadd.s32 %s197, %s198
      %s200 = smul.addr %s199, 4
      %s201 = scalar_lea.vmem %s3, %s200
      %p202 = scmp.lt.s32.totalorder %s18, 1
      %s203 = scalar_select %p202, %s18, 1
      %s204 = smul.addr %s203, 14
      %s205 = smul.addr %s204, 4
      %s206 = scalar_lea.vmem %s0, %s205
      %p207 = scmp.lt.s32.totalorder %s19, 0
      %s208 = scalar_select %p207, %s19, 0
      %s209 = smul.addr %s208, 4
      %s210 = scalar_lea.vmem %s1, %s209
      %p211 = scmp.lt.s32.totalorder %s19, 0
      %s212 = scalar_select %p211, %s19, 0
      %s213 = scalar_lea.vmem %s2, %s212
      %p214 = scmp.lt.s32.totalorder %s18, 1
      %s215 = scalar_select %p214, %s18, 1
      %p216 = scmp.lt.s32.totalorder %s19, 0
      %s217 = scalar_select %p216, %s19, 0
      %s218 = smul.addr %s215, 10
      %s219 = sadd.s32 %s217, %s218
      %s220 = smul.addr %s219, 4
      %s221 = scalar_lea.vmem %s3, %s220
      %v223 = vld [vmem:[%s206] sm:$0xf]
      %v224 = vld [vmem:[%s206 + $0x4] sm:$0xf]
      %v225 = vld [vmem:[%s206 + $0x8] sm:$0xf]
      %v226 = vld [vmem:[%s206 + $0xc] sm:$0xf]
      %v227 = vld [vmem:[%s206 + $0x10] sm:$0xf]
      %v228 = vld [vmem:[%s206 + $0x14] sm:$0xf]
      %v229 = vld [vmem:[%s206 + $0x18] sm:$0xf]
      %v230 = vld [vmem:[%s206 + $0x1c] sm:$0xf]
      %v231 = vld [vmem:[%s206 + $0x20] sm:$0xf]
      %v232 = vld [vmem:[%s206 + $0x24] sm:$0xf]
      %v233 = vld [vmem:[%s206 + $0x28] sm:$0x1]
      %v234 = vld [vmem:[%s206] sm:$0xe]
      %v245 = vunpack.c.l.b16 %v223
      %v246 = vunpack.c.l.b16 %v224
      %v247 = vunpack.c.l.b16 %v225
      %v248 = vunpack.c.l.b16 %v226
      %v249 = vunpack.c.l.b16 %v227
      %v250 = vunpack.c.l.b16 %v228
      %v251 = vunpack.c.l.b16 %v229
      %v252 = vunpack.c.l.b16 %v230
      %v253 = vunpack.c.l.b16 %v231
      %v254 = vunpack.c.l.b16 %v232
      %v255 = vpack.c.b16 %v246, %v245
      %v256 = vpack.c.b16 %v248, %v247
      %v257 = vpack.c.b16 %v250, %v249
      %v258 = vpack.c.b16 %v252, %v251
      %v259 = vpack.c.b16 %v254, %v253
      %v266 = vunpack.c.l.b16 %v233
      %v267 = vpack.c.b16 %v266, %v266
      %vm268 = vsmask.f32 7424
      %v270 = vshrl.u32 %v255, 16
      %v272 = vshll.u32 %v255, 16
      %v274 = vrot.slane %v272, 1
      %v275 = vor.u32 %v270, %v274
      %v277 = vshll.u32 %v256, 16
      %v279 = vrot.slane %v277, 1
      %v280 = vsel %vm268, %v275, %v279
      %v281 = vshrl.u32 %v256, 16
      %v283 = vor.u32 %v281, %v279
      %v285 = vshll.u32 %v257, 16
      %v287 = vrot.slane %v285, 1
      %v288 = vsel %vm268, %v283, %v287
      %v289 = vshrl.u32 %v257, 16
      %v291 = vor.u32 %v289, %v287
      %v293 = vshll.u32 %v258, 16
      %v295 = vrot.slane %v293, 1
      %v296 = vsel %vm268, %v291, %v295
      %v297 = vshrl.u32 %v258, 16
      %v299 = vor.u32 %v297, %v295
      %v301 = vshll.u32 %v259, 16
      %v303 = vrot.slane %v301, 1
      %v304 = vsel %vm268, %v299, %v303
      %v305 = vshrl.u32 %v259, 16
      %v307 = vor.u32 %v305, %v303
      %v309 = vshll.u32 %v267, 16
      %v311 = vrot.slane %v309, 1
      %v312 = vsel %vm268, %v307, %v311
      %v319 = vunpack.c.l.b16 %v234
      %v320 = vpack.c.b16 %v246, %v319
      %vm321 = vcmask 1046528
      %v322 = vrot.slane %v320, 1
      %v323 = vrot.slane %v256, 1
      %v324 = vsel %vm321, %v322, %v323
      %v325 = vrot.slane %v257, 1
      %v326 = vsel %vm321, %v323, %v325
      %v327 = vrot.slane %v258, 1
      %v328 = vsel %vm321, %v325, %v327
      %v329 = vrot.slane %v259, 1
      %v330 = vsel %vm321, %v327, %v329
      %v331 = vrot.slane %v267, 1
      %v332 = vsel %vm321, %v329, %v331
      %v338 = vld [vmem:[%s210] sm:$0xf]
      %v339 = vld [vmem:[%s210 + $0x4] sm:$0xf]
      %v340 = vld [vmem:[%s210 + $0x8] sm:$0xf]
      %v341 = vld [vmem:[%s210 + $0xc] sm:$0xf]
      %v342 = vld [vmem:[%s210 + $0x10] sm:$0xf]
      %v343 = vld [vmem:[%s210 + $0x14] sm:$0xf]
      %v344 = vld [vmem:[%s210 + $0x18] sm:$0xf]
      %v345 = vld [vmem:[%s210 + $0x1c] sm:$0xf]
      %v346 = vld [vmem:[%s210 + $0x20] sm:$0xf]
      %v347 = vld [vmem:[%s210 + $0x24] sm:$0xf]
      %v348 = vld [vmem:[%s210 + $0x28] sm:$0xf]
      %v349 = vld [vmem:[%s210 + $0x2c] sm:$0xf]
      %v350 = vld [vmem:[%s210 + $0x30] sm:$0xf]
      %v351 = vld [vmem:[%s210 + $0x34] sm:$0xf]
      %v352 = vld [vmem:[%s210 + $0x38] sm:$0xf]
      %v353 = vld [vmem:[%s210 + $0x3c] sm:$0xf]
      %v354 = vld [vmem:[%s210 + $0x40] sm:$0xf]
      %v355 = vld [vmem:[%s210 + $0x44] sm:$0xf]
      %v356 = vld [vmem:[%s210 + $0x48] sm:$0xf]
      %v357 = vld [vmem:[%s210 + $0x4c] sm:$0xf]
      %v358 = vld [vmem:[%s210 + $0x50] sm:$0xf]
      %v359 = vld [vmem:[%s210 + $0x54] sm:$0xf]
      %v360 = vld [vmem:[%s210 + $0x58] sm:$0xf]
      %v361 = vld [vmem:[%s210 + $0x5c] sm:$0xf]
      %v362 = vld [vmem:[%s210 + $0x60] sm:$0xf]
      %v363 = vld [vmem:[%s210 + $0x64] sm:$0xf]
      %v364 = vld [vmem:[%s210 + $0x68] sm:$0xf]
      %v365 = vld [vmem:[%s210 + $0x6c] sm:$0xf]
      %v366 = vld [vmem:[%s210 + $0x70] sm:$0xf]
      %v367 = vld [vmem:[%s210 + $0x74] sm:$0xf]
      %v368 = vld [vmem:[%s210 + $0x78] sm:$0xf]
      %v369 = vld [vmem:[%s210 + $0x7c] sm:$0xf]
      %v370 = vld [vmem:[%s210 + $0x80] sm:$0xf]
      %v371 = vld [vmem:[%s210 + $0x84] sm:$0xf]
      %v372 = vld [vmem:[%s210 + $0x88] sm:$0xf]
      %v373 = vld [vmem:[%s210 + $0x8c] sm:$0xf]
      %v374 = vld [vmem:[%s210 + $0x90] sm:$0xf]
      %v375 = vld [vmem:[%s210 + $0x94] sm:$0xf]
      %v376 = vld [vmem:[%s210 + $0x98] sm:$0xf]
      %v377 = vld [vmem:[%s210 + $0x9c] sm:$0xf]
      %v378 = vld [vmem:[%s210 + $0xa0] sm:$0xf]
      %v379 = vld [vmem:[%s210 + $0xa4] sm:$0xf]
      %v380 = vld [vmem:[%s210 + $0xa8] sm:$0xf]
      %v381 = vld [vmem:[%s210 + $0xac] sm:$0xf]
      %v382 = vld [vmem:[%s210 + $0xb0] sm:$0xf]
      %v383 = vld [vmem:[%s210 + $0xb4] sm:$0xf]
      %v384 = vld [vmem:[%s210 + $0xb8] sm:$0xf]
      %v385 = vld [vmem:[%s210 + $0xbc] sm:$0xf]
      %v386 = vld [vmem:[%s206 + $0x4] sm:$0xe]
      %v387 = vld [vmem:[%s206 + $0x28] sm:$0xf]
      %v388 = vld [vmem:[%s206 + $0x2c] sm:$0x1]
      %v389 = vld [vmem:[%s206 + $0x2c] sm:$0x3]
      %v390 = vld [vmem:[%s206 + $0x4] sm:$0xc]
      %v394 = vunpack.c.l.b16 %v386
      %v395 = vunpack.c.l.b16 %v387
      %v396 = vunpack.c.l.b16 %v388
      %v397 = vpack.c.b16 %v247, %v394
      %v398 = vpack.c.b16 %v249, %v248
      %v399 = vpack.c.b16 %v251, %v250
      %v400 = vpack.c.b16 %v253, %v252
      %v401 = vpack.c.b16 %v395, %v254
      %v402 = vpack.c.b16 %v396, %v396
      %v404 = vunpack.c.l.b16 %v389
      %v405 = vpack.c.b16 %v404, %v404
      %v407 = vshrl.u32 %v397, 16
      %v409 = vshll.u32 %v397, 16
      %v411 = vrot.slane %v409, 1
      %v412 = vor.u32 %v407, %v411
      %v414 = vshll.u32 %v398, 16
      %v416 = vrot.slane %v414, 1
      %v417 = vsel %vm268, %v412, %v416
      %v418 = vshrl.u32 %v398, 16
      %v420 = vor.u32 %v418, %v416
      %v422 = vshll.u32 %v399, 16
      %v424 = vrot.slane %v422, 1
      %v425 = vsel %vm268, %v420, %v424
      %v426 = vshrl.u32 %v399, 16
      %v428 = vor.u32 %v426, %v424
      %v430 = vshll.u32 %v400, 16
      %v432 = vrot.slane %v430, 1
      %v433 = vsel %vm268, %v428, %v432
      %v434 = vshrl.u32 %v400, 16
      %v436 = vor.u32 %v434, %v432
      %v438 = vshll.u32 %v401, 16
      %v440 = vrot.slane %v438, 1
      %v441 = vsel %vm268, %v436, %v440
      %v442 = vshrl.u32 %v401, 16
      %v444 = vor.u32 %v442, %v440
      %v446 = vshll.u32 %v405, 16
      %v448 = vrot.slane %v446, 1
      %v449 = vsel %vm268, %v444, %v448
      %v450 = vshrl.u32 %v405, 16
      %v452 = vor.u32 %v450, %v448
      %v454 = vunpack.c.l.b16 %v390
      %v455 = vpack.c.b16 %v247, %v454
      %v456 = vrot.slane %v455, 1
      %v457 = vrot.slane %v398, 1
      %v458 = vsel %vm321, %v456, %v457
      %v459 = vrot.slane %v399, 1
      %v460 = vsel %vm321, %v457, %v459
      %v461 = vrot.slane %v400, 1
      %v462 = vsel %vm321, %v459, %v461
      %v463 = vrot.slane %v401, 1
      %v464 = vsel %vm321, %v461, %v463
      %v465 = vrot.slane %v405, 1
      %v466 = vsel %vm321, %v463, %v465
      %s467 = scalar_lea.vmem %s210, 192
      %v468 = vld [vmem:[%s467] sm:$0xf]
      %v469 = vld [vmem:[%s467 + $0x4] sm:$0xf]
      %v470 = vld [vmem:[%s467 + $0x8] sm:$0xf]
      %v471 = vld [vmem:[%s467 + $0xc] sm:$0xf]
      %v472 = vld [vmem:[%s467 + $0x10] sm:$0xf]
      %v473 = vld [vmem:[%s467 + $0x14] sm:$0xf]
      %v474 = vld [vmem:[%s467 + $0x18] sm:$0xf]
      %v475 = vld [vmem:[%s467 + $0x1c] sm:$0xf]
      %v476 = vld [vmem:[%s467 + $0x20] sm:$0xf]
      %v477 = vld [vmem:[%s467 + $0x24] sm:$0xf]
      %v478 = vld [vmem:[%s467 + $0x28] sm:$0xf]
      %v479 = vld [vmem:[%s467 + $0x2c] sm:$0xf]
      %v480 = vld [vmem:[%s467 + $0x30] sm:$0xf]
      %v481 = vld [vmem:[%s467 + $0x34] sm:$0xf]
      %v482 = vld [vmem:[%s467 + $0x38] sm:$0xf]
      %v483 = vld [vmem:[%s467 + $0x3c] sm:$0xf]
      %v484 = vld [vmem:[%s467 + $0x40] sm:$0xf]
      %v485 = vld [vmem:[%s467 + $0x44] sm:$0xf]
      %v486 = vld [vmem:[%s467 + $0x48] sm:$0xf]
      %v487 = vld [vmem:[%s467 + $0x4c] sm:$0xf]
      %v488 = vld [vmem:[%s467 + $0x50] sm:$0xf]
      %v489 = vld [vmem:[%s467 + $0x54] sm:$0xf]
      %v490 = vld [vmem:[%s467 + $0x58] sm:$0xf]
      %v491 = vld [vmem:[%s467 + $0x5c] sm:$0xf]
      %v492 = vld [vmem:[%s467 + $0x60] sm:$0xf]
      %v493 = vld [vmem:[%s467 + $0x64] sm:$0xf]
      %v494 = vld [vmem:[%s467 + $0x68] sm:$0xf]
      %v495 = vld [vmem:[%s467 + $0x6c] sm:$0xf]
      %v496 = vld [vmem:[%s467 + $0x70] sm:$0xf]
      %v497 = vld [vmem:[%s467 + $0x74] sm:$0xf]
      %v498 = vld [vmem:[%s467 + $0x78] sm:$0xf]
      %v499 = vld [vmem:[%s467 + $0x7c] sm:$0xf]
      %v500 = vld [vmem:[%s467 + $0x80] sm:$0xf]
      %v501 = vld [vmem:[%s467 + $0x84] sm:$0xf]
      %v502 = vld [vmem:[%s467 + $0x88] sm:$0xf]
      %v503 = vld [vmem:[%s467 + $0x8c] sm:$0xf]
      %v504 = vld [vmem:[%s467 + $0x90] sm:$0xf]
      %v505 = vld [vmem:[%s467 + $0x94] sm:$0xf]
      %v506 = vld [vmem:[%s467 + $0x98] sm:$0xf]
      %v507 = vld [vmem:[%s467 + $0x9c] sm:$0xf]
      %v508 = vld [vmem:[%s467 + $0xa0] sm:$0xf]
      %v509 = vld [vmem:[%s467 + $0xa4] sm:$0xf]
      %v510 = vld [vmem:[%s467 + $0xa8] sm:$0xf]
      %v511 = vld [vmem:[%s467 + $0xac] sm:$0xf]
      %v512 = vld [vmem:[%s467 + $0xb0] sm:$0xf]
      %v513 = vld [vmem:[%s467 + $0xb4] sm:$0xf]
      %v514 = vld [vmem:[%s467 + $0xb8] sm:$0xf]
      %v515 = vld [vmem:[%s467 + $0xbc] sm:$0xf]
      %v516 = vrot.slane %v397, 1
      %v517 = vsel %vm321, %v516, %v457
      %v518 = vrot.slane %v417, 1
      %v519 = vrot.slane %v425, 1
      %v520 = vsel %vm321, %v518, %v519
      %v521 = vrot.slane %v458, 1
      %v522 = vrot.slane %v460, 1
      %v523 = vsel %vm321, %v521, %v522
      %v524 = vrot.slane %v433, 1
      %v525 = vsel %vm321, %v519, %v524
      %v526 = vrot.slane %v462, 1
      %v527 = vsel %vm321, %v522, %v526
      %v528 = vrot.slane %v441, 1
      %v529 = vsel %vm321, %v524, %v528
      %v530 = vrot.slane %v464, 1
      %v531 = vsel %vm321, %v526, %v530
      %v532 = vrot.slane %v449, 1
      %v533 = vsel %vm321, %v528, %v532
      %v534 = vrot.slane %v466, 1
      %v535 = vsel %vm321, %v530, %v534
      %v536 = vrot.slane %v402, 1
      %v537 = vsel %vm321, %v463, %v536
      %v538 = vrot.slane %v452, 1
      %v539 = vsel %vm321, %v532, %v538
      %v540 = vrot.slane %v465, 1
      %v541 = vsel %vm321, %v534, %v540
      %v605 = vunpack.c.l.b16 %v468
      %v606 = vunpack.c.l.b16 %v469
      %v607 = vunpack.c.l.b16 %v470
      %v608 = vunpack.c.l.b16 %v471
      %v609 = vunpack.c.l.b16 %v472
      %v610 = vunpack.c.l.b16 %v473
      %v611 = vunpack.c.l.b16 %v474
      %v612 = vunpack.c.l.b16 %v475
      %v613 = vunpack.c.l.b16 %v476
      %v614 = vunpack.c.l.b16 %v477
      %v615 = vunpack.c.l.b16 %v478
      %v616 = vunpack.c.l.b16 %v479
      %v617 = vunpack.c.l.b16 %v480
      %v618 = vunpack.c.l.b16 %v481
      %v619 = vunpack.c.l.b16 %v482
      %v620 = vunpack.c.l.b16 %v483
      %v621 = vunpack.c.l.b16 %v484
      %v622 = vunpack.c.l.b16 %v485
      %v623 = vunpack.c.l.b16 %v486
      %v624 = vunpack.c.l.b16 %v487
      %v625 = vunpack.c.l.b16 %v488
      %v626 = vunpack.c.l.b16 %v489
      %v627 = vunpack.c.l.b16 %v490
      %v628 = vunpack.c.l.b16 %v491
      %v629 = vunpack.c.l.b16 %v492
      %v630 = vunpack.c.l.b16 %v493
      %v631 = vunpack.c.l.b16 %v494
      %v632 = vunpack.c.l.b16 %v495
      %v633 = vunpack.c.l.b16 %v496
      %v634 = vunpack.c.l.b16 %v497
      %v635 = vunpack.c.l.b16 %v498
      %v636 = vunpack.c.l.b16 %v499
      %v637 = vunpack.c.l.b16 %v500
      %v638 = vunpack.c.l.b16 %v501
      %v639 = vunpack.c.l.b16 %v502
      %v640 = vunpack.c.l.b16 %v503
      %v641 = vunpack.c.l.b16 %v504
      %v642 = vunpack.c.l.b16 %v505
      %v643 = vunpack.c.l.b16 %v506
      %v644 = vunpack.c.l.b16 %v507
      %v645 = vunpack.c.l.b16 %v508
      %v646 = vunpack.c.l.b16 %v509
      %v647 = vunpack.c.l.b16 %v510
      %v648 = vunpack.c.l.b16 %v511
      %v649 = vunpack.c.l.b16 %v512
      %v650 = vunpack.c.l.b16 %v513
      %v651 = vunpack.c.l.b16 %v514
      %v652 = vunpack.c.l.b16 %v515
      %v653 = vpack.c.b16 %v606, %v605
      %v654 = vpack.c.b16 %v608, %v607
      %v655 = vpack.c.b16 %v610, %v609
      %v656 = vpack.c.b16 %v612, %v611
      %v657 = vpack.c.b16 %v614, %v613
      %v658 = vpack.c.b16 %v616, %v615
      %v659 = vpack.c.b16 %v618, %v617
      %v660 = vpack.c.b16 %v620, %v619
      %v661 = vpack.c.b16 %v622, %v621
      %v662 = vpack.c.b16 %v624, %v623
      %v663 = vpack.c.b16 %v626, %v625
      %v664 = vpack.c.b16 %v628, %v627
      %v665 = vpack.c.b16 %v630, %v629
      %v666 = vpack.c.b16 %v632, %v631
      %v667 = vpack.c.b16 %v634, %v633
      %v668 = vpack.c.b16 %v636, %v635
      %v669 = vpack.c.b16 %v638, %v637
      %v670 = vpack.c.b16 %v640, %v639
      %v671 = vpack.c.b16 %v642, %v641
      %v672 = vpack.c.b16 %v644, %v643
      %v673 = vpack.c.b16 %v646, %v645
      %v674 = vpack.c.b16 %v648, %v647
      %v675 = vpack.c.b16 %v650, %v649
      %v676 = vpack.c.b16 %v652, %v651
      %701 = vmatprep.subr.bf16.mxu0 0
      %702 = vmatpush1.bf16.msra.mxu0 %v660
      %703 = vmatprep.subr.bf16.mxu0 0
      %704 = vmatpush1.bf16.msra.mxu0 %v659
      %705 = vmatprep.subr.bf16.mxu0 0
      %706 = vmatpush1.bf16.msra.mxu0 %v658
      %707 = vmatprep.subr.bf16.mxu0 0
      %708 = vmatpush1.bf16.msra.mxu0 %v657
      %709 = vmatprep.subr.bf16.mxu0 0
      %710 = vmatpush1.bf16.msra.mxu0 %v656
      %711 = vmatprep.subr.bf16.mxu0 0
      %712 = vmatpush1.bf16.msra.mxu0 %v655
      %713 = vmatprep.subr.bf16.mxu0 0
      %714 = vmatpush1.bf16.msra.mxu0 %v654
      %715 = vmatprep.subr.bf16.mxu0 0
      %716 = vmatpush1.bf16.msra.mxu0 %v653
      %717 = vmatprep.subr.bf16.mxu0 0
      %718 = vmatpush2.bf16.msra.mxu0 %v668
      %719 = vmatprep.subr.bf16.mxu0 0
      %720 = vmatpush2.bf16.msra.mxu0 %v667
      %721 = vmatprep.subr.bf16.mxu0 0
      %722 = vmatpush2.bf16.msra.mxu0 %v666
      %723 = vmatprep.subr.bf16.mxu0 0
      %724 = vmatpush2.bf16.msra.mxu0 %v665
      %725 = vmatprep.subr.bf16.mxu0 0
      %726 = vmatpush2.bf16.msra.mxu0 %v664
      %727 = vmatprep.subr.bf16.mxu0 0
      %728 = vmatpush2.bf16.msra.mxu0 %v663
      %729 = vmatprep.subr.bf16.mxu0 0
      %730 = vmatpush2.bf16.msra.mxu0 %v662
      %731 = vmatprep.subr.bf16.mxu0 0
      %732 = vmatpush2.bf16.msra.mxu0 %v661
      %733 = vmatprep.mubr.bf16.mxu0 %v520
      %734 = vmatmul.mubr.bf16.gmra.mxu0 %v517
      %v735 = vpop.f32.mrf.mxu0
      %v736 = vadd.f32 0.0, %v735
      %v737 = vpop.f32.mrf.mxu0
      %v738 = vpop.f32.mrf.mxu0
      %v739 = vadd.f32 0.0, %v738
      %v740 = vpop.f32.mrf.mxu0
      %741 = vmatprep.mubr.bf16.mxu0 %v525
      %742 = vmatmul.mubr.bf16.gmra.mxu0 %v460
      %v743 = vpop.f32.mrf.mxu0
      %v744 = vadd.f32 0.0, %v743
      %v745 = vpop.f32.mrf.mxu0
      %v746 = vpop.f32.mrf.mxu0
      %v747 = vadd.f32 0.0, %v746
      %v748 = vpop.f32.mrf.mxu0
      %749 = vmatprep.mubr.bf16.mxu0 %v529
      %750 = vmatmul.mubr.bf16.gmra.mxu0 %v462
      %v751 = vpop.f32.mrf.mxu0
      %v752 = vadd.f32 0.0, %v751
      %v753 = vpop.f32.mrf.mxu0
      %v754 = vpop.f32.mrf.mxu0
      %v755 = vadd.f32 0.0, %v754
      %v756 = vpop.f32.mrf.mxu0
      %757 = vmatprep.mubr.bf16.mxu0 %v533
      %758 = vmatmul.mubr.bf16.gmra.mxu0 %v464
      %v759 = vpop.f32.mrf.mxu0
      %v760 = vadd.f32 0.0, %v759
      %v761 = vpop.f32.mrf.mxu0
      %v762 = vpop.f32.mrf.mxu0
      %v763 = vadd.f32 0.0, %v762
      %v764 = vpop.f32.mrf.mxu0
      %765 = vmatprep.mubr.bf16.mxu0 %v539
      %766 = vmatmul.mubr.bf16.gmra.mxu0 %v537
      %v767 = vpop.f32.mrf.mxu0
      %v768 = vadd.f32 0.0, %v767
      %v769 = vpop.f32.mrf.mxu0
      %v770 = vpop.f32.mrf.mxu0
      %v771 = vadd.f32 0.0, %v770
      %v772 = vpop.f32.mrf.mxu0
      %773 = vdwg.mxu0
      %774 = vmatprep.subr.bf16.mxu0 0
      %775 = vmatpush1.bf16.msra.mxu0 %v676
      %776 = vmatprep.subr.bf16.mxu0 0
      %777 = vmatpush1.bf16.msra.mxu0 %v675
      %778 = vmatprep.subr.bf16.mxu0 0
      %779 = vmatpush1.bf16.msra.mxu0 %v674
      %780 = vmatprep.subr.bf16.mxu0 0
      %781 = vmatpush1.bf16.msra.mxu0 %v673
      %782 = vmatprep.subr.bf16.mxu0 0
      %783 = vmatpush1.bf16.msra.mxu0 %v672
      %784 = vmatprep.subr.bf16.mxu0 0
      %785 = vmatpush1.bf16.msra.mxu0 %v671
      %786 = vmatprep.subr.bf16.mxu0 0
      %787 = vmatpush1.bf16.msra.mxu0 %v670
      %788 = vmatprep.subr.bf16.mxu0 0
      %789 = vmatpush1.bf16.msra.mxu0 %v669
      %790 = vmatprep.subr.bf16.mxu0 0
      %791 = vmatpush2.bf16.msra.mxu0 0
      %792 = vmatprep.subr.bf16.mxu0 0
      %793 = vmatpush2.bf16.msra.mxu0 0
      %794 = vmatprep.subr.bf16.mxu0 0
      %795 = vmatpush2.bf16.msra.mxu0 0
      %796 = vmatprep.subr.bf16.mxu0 0
      %797 = vmatpush2.bf16.msra.mxu0 0
      %798 = vmatprep.subr.bf16.mxu0 0
      %799 = vmatpush2.bf16.msra.mxu0 0
      %800 = vmatprep.subr.bf16.mxu0 0
      %801 = vmatpush2.bf16.msra.mxu0 0
      %802 = vmatprep.subr.bf16.mxu0 0
      %803 = vmatpush2.bf16.msra.mxu0 0
      %804 = vmatprep.subr.bf16.mxu0 0
      %805 = vmatpush2.bf16.msra.mxu0 0
      %806 = vmatprep.mubr.bf16.mxu0 0
      %807 = vmatmul.mubr.bf16.gmra.mxu0 %v523
      %v808 = vpop.f32.mrf.mxu0
      %v809 = vadd.f32 %v736, %v808
      %v810 = vpop.f32.mrf.mxu0
      %v811 = vpop.f32.mrf.mxu0
      %v812 = vadd.f32 %v739, %v811
      %v813 = vpop.f32.mrf.mxu0
      %814 = vmatprep.mubr.bf16.mxu0 0
      %815 = vmatmul.mubr.bf16.gmra.mxu0 %v527
      %v816 = vpop.f32.mrf.mxu0
      %v817 = vadd.f32 %v744, %v816
      %v818 = vpop.f32.mrf.mxu0
      %v819 = vpop.f32.mrf.mxu0
      %v820 = vadd.f32 %v747, %v819
      %v821 = vpop.f32.mrf.mxu0
      %822 = vmatprep.mubr.bf16.mxu0 0
      %823 = vmatmul.mubr.bf16.gmra.mxu0 %v531
      %v824 = vpop.f32.mrf.mxu0
      %v825 = vadd.f32 %v752, %v824
      %v826 = vpop.f32.mrf.mxu0
      %v827 = vpop.f32.mrf.mxu0
      %v828 = vadd.f32 %v755, %v827
      %v829 = vpop.f32.mrf.mxu0
      %830 = vmatprep.mubr.bf16.mxu0 0
      %831 = vmatmul.mubr.bf16.gmra.mxu0 %v535
      %v832 = vpop.f32.mrf.mxu0
      %v833 = vadd.f32 %v760, %v832
      %v834 = vpop.f32.mrf.mxu0
      %v835 = vpop.f32.mrf.mxu0
      %v836 = vadd.f32 %v763, %v835
      %v837 = vpop.f32.mrf.mxu0
      %838 = vmatprep.mubr.bf16.mxu0 0
      %839 = vmatmul.mubr.bf16.gmra.mxu0 %v541
      %v840 = vpop.f32.mrf.mxu0
      %v841 = vadd.f32 %v768, %v840
      %v842 = vpop.f32.mrf.mxu0
      %v843 = vpop.f32.mrf.mxu0
      %v844 = vadd.f32 %v771, %v843
      %v845 = vpop.f32.mrf.mxu0
      %846 = vdwg.mxu0
      %v895 = vunpack.c.l.b16 %v338
      %v896 = vunpack.c.l.b16 %v339
      %v897 = vunpack.c.l.b16 %v340
      %v898 = vunpack.c.l.b16 %v341
      %v899 = vunpack.c.l.b16 %v342
      %v900 = vunpack.c.l.b16 %v343
      %v901 = vunpack.c.l.b16 %v344
      %v902 = vunpack.c.l.b16 %v345
      %v903 = vunpack.c.l.b16 %v346
      %v904 = vunpack.c.l.b16 %v347
      %v905 = vunpack.c.l.b16 %v348
      %v906 = vunpack.c.l.b16 %v349
      %v907 = vunpack.c.l.b16 %v350
      %v908 = vunpack.c.l.b16 %v351
      %v909 = vunpack.c.l.b16 %v352
      %v910 = vunpack.c.l.b16 %v353
      %v911 = vunpack.c.l.b16 %v354
      %v912 = vunpack.c.l.b16 %v355
      %v913 = vunpack.c.l.b16 %v356
      %v914 = vunpack.c.l.b16 %v357
      %v915 = vunpack.c.l.b16 %v358
      %v916 = vunpack.c.l.b16 %v359
      %v917 = vunpack.c.l.b16 %v360
      %v918 = vunpack.c.l.b16 %v361
      %v919 = vunpack.c.l.b16 %v362
      %v920 = vunpack.c.l.b16 %v363
      %v921 = vunpack.c.l.b16 %v364
      %v922 = vunpack.c.l.b16 %v365
      %v923 = vunpack.c.l.b16 %v366
      %v924 = vunpack.c.l.b16 %v367
      %v925 = vunpack.c.l.b16 %v368
      %v926 = vunpack.c.l.b16 %v369
      %v927 = vunpack.c.l.b16 %v370
      %v928 = vunpack.c.l.b16 %v371
      %v929 = vunpack.c.l.b16 %v372
      %v930 = vunpack.c.l.b16 %v373
      %v931 = vunpack.c.l.b16 %v374
      %v932 = vunpack.c.l.b16 %v375
      %v933 = vunpack.c.l.b16 %v376
      %v934 = vunpack.c.l.b16 %v377
      %v935 = vunpack.c.l.b16 %v378
      %v936 = vunpack.c.l.b16 %v379
      %v937 = vunpack.c.l.b16 %v380
      %v938 = vunpack.c.l.b16 %v381
      %v939 = vunpack.c.l.b16 %v382
      %v940 = vunpack.c.l.b16 %v383
      %v941 = vunpack.c.l.b16 %v384
      %v942 = vunpack.c.l.b16 %v385
      %v943 = vpack.c.b16 %v896, %v895
      %v944 = vpack.c.b16 %v898, %v897
      %v945 = vpack.c.b16 %v900, %v899
      %v946 = vpack.c.b16 %v902, %v901
      %v947 = vpack.c.b16 %v904, %v903
      %v948 = vpack.c.b16 %v906, %v905
      %v949 = vpack.c.b16 %v908, %v907
      %v950 = vpack.c.b16 %v910, %v909
      %v951 = vpack.c.b16 %v912, %v911
      %v952 = vpack.c.b16 %v914, %v913
      %v953 = vpack.c.b16 %v916, %v915
      %v954 = vpack.c.b16 %v918, %v917
      %v955 = vpack.c.b16 %v920, %v919
      %v956 = vpack.c.b16 %v922, %v921
      %v957 = vpack.c.b16 %v924, %v923
      %v958 = vpack.c.b16 %v926, %v925
      %v959 = vpack.c.b16 %v928, %v927
      %v960 = vpack.c.b16 %v930, %v929
      %v961 = vpack.c.b16 %v932, %v931
      %v962 = vpack.c.b16 %v934, %v933
      %v963 = vpack.c.b16 %v936, %v935
      %v964 = vpack.c.b16 %v938, %v937
      %v965 = vpack.c.b16 %v940, %v939
      %v966 = vpack.c.b16 %v942, %v941
      %991 = vmatprep.subr.bf16.mxu0 0
      %992 = vmatpush1.bf16.msra.mxu0 %v950
      %993 = vmatprep.subr.bf16.mxu0 0
      %994 = vmatpush1.bf16.msra.mxu0 %v949
      %995 = vmatprep.subr.bf16.mxu0 0
      %996 = vmatpush1.bf16.msra.mxu0 %v948
      %997 = vmatprep.subr.bf16.mxu0 0
      %998 = vmatpush1.bf16.msra.mxu0 %v947
      %999 = vmatprep.subr.bf16.mxu0 0
      %1000 = vmatpush1.bf16.msra.mxu0 %v946
      %1001 = vmatprep.subr.bf16.mxu0 0
      %1002 = vmatpush1.bf16.msra.mxu0 %v945
      %1003 = vmatprep.subr.bf16.mxu0 0
      %1004 = vmatpush1.bf16.msra.mxu0 %v944
      %1005 = vmatprep.subr.bf16.mxu0 0
      %1006 = vmatpush1.bf16.msra.mxu0 %v943
      %1007 = vmatprep.subr.bf16.mxu0 0
      %1008 = vmatpush2.bf16.msra.mxu0 %v958
      %1009 = vmatprep.subr.bf16.mxu0 0
      %1010 = vmatpush2.bf16.msra.mxu0 %v957
      %1011 = vmatprep.subr.bf16.mxu0 0
      %1012 = vmatpush2.bf16.msra.mxu0 %v956
      %1013 = vmatprep.subr.bf16.mxu0 0
      %1014 = vmatpush2.bf16.msra.mxu0 %v955
      %1015 = vmatprep.subr.bf16.mxu0 0
      %1016 = vmatpush2.bf16.msra.mxu0 %v954
      %1017 = vmatprep.subr.bf16.mxu0 0
      %1018 = vmatpush2.bf16.msra.mxu0 %v953
      %1019 = vmatprep.subr.bf16.mxu0 0
      %1020 = vmatpush2.bf16.msra.mxu0 %v952
      %1021 = vmatprep.subr.bf16.mxu0 0
      %1022 = vmatpush2.bf16.msra.mxu0 %v951
      %1023 = vmatprep.mubr.bf16.mxu0 %v280
      %1024 = vmatmul.mubr.bf16.gmra.mxu0 %v255
      %v1025 = vpop.f32.mrf.mxu0
      %v1026 = vadd.f32 %v809, %v1025
      %v1027 = vpop.f32.mrf.mxu0
      %v1028 = vpop.f32.mrf.mxu0
      %v1029 = vadd.f32 %v812, %v1028
      %v1030 = vpop.f32.mrf.mxu0
      %1031 = vmatprep.mubr.bf16.mxu0 %v288
      %1032 = vmatmul.mubr.bf16.gmra.mxu0 %v256
      %v1033 = vpop.f32.mrf.mxu0
      %v1034 = vadd.f32 %v817, %v1033
      %v1035 = vpop.f32.mrf.mxu0
      %v1036 = vpop.f32.mrf.mxu0
      %v1037 = vadd.f32 %v820, %v1036
      %v1038 = vpop.f32.mrf.mxu0
      %1039 = vmatprep.mubr.bf16.mxu0 %v296
      %1040 = vmatmul.mubr.bf16.gmra.mxu0 %v257
      %v1041 = vpop.f32.mrf.mxu0
      %v1042 = vadd.f32 %v825, %v1041
      %v1043 = vpop.f32.mrf.mxu0
      %v1044 = vpop.f32.mrf.mxu0
      %v1045 = vadd.f32 %v828, %v1044
      %v1046 = vpop.f32.mrf.mxu0
      %1047 = vmatprep.mubr.bf16.mxu0 %v304
      %1048 = vmatmul.mubr.bf16.gmra.mxu0 %v258
      %v1049 = vpop.f32.mrf.mxu0
      %v1050 = vadd.f32 %v833, %v1049
      %v1051 = vpop.f32.mrf.mxu0
      %v1052 = vpop.f32.mrf.mxu0
      %v1053 = vadd.f32 %v836, %v1052
      %v1054 = vpop.f32.mrf.mxu0
      %1055 = vmatprep.mubr.bf16.mxu0 %v312
      %1056 = vmatmul.mubr.bf16.gmra.mxu0 %v259
      %v1057 = vpop.f32.mrf.mxu0
      %v1058 = vadd.f32 %v841, %v1057
      %v1059 = vpop.f32.mrf.mxu0
      %v1060 = vpop.f32.mrf.mxu0
      %v1061 = vadd.f32 %v844, %v1060
      %v1062 = vpop.f32.mrf.mxu0
      %1063 = vdwg.mxu0
      %1064 = vmatprep.subr.bf16.mxu0 0
      %1065 = vmatpush1.bf16.msra.mxu0 %v966
      %1066 = vmatprep.subr.bf16.mxu0 0
      %1067 = vmatpush1.bf16.msra.mxu0 %v965
      %1068 = vmatprep.subr.bf16.mxu0 0
      %1069 = vmatpush1.bf16.msra.mxu0 %v964
      %1070 = vmatprep.subr.bf16.mxu0 0
      %1071 = vmatpush1.bf16.msra.mxu0 %v963
      %1072 = vmatprep.subr.bf16.mxu0 0
      %1073 = vmatpush1.bf16.msra.mxu0 %v962
      %1074 = vmatprep.subr.bf16.mxu0 0
      %1075 = vmatpush1.bf16.msra.mxu0 %v961
      %1076 = vmatprep.subr.bf16.mxu0 0
      %1077 = vmatpush1.bf16.msra.mxu0 %v960
      %1078 = vmatprep.subr.bf16.mxu0 0
      %1079 = vmatpush1.bf16.msra.mxu0 %v959
      %1080 = vmatprep.subr.bf16.mxu0 0
      %1081 = vmatpush2.bf16.msra.mxu0 0
      %1082 = vmatprep.subr.bf16.mxu0 0
      %1083 = vmatpush2.bf16.msra.mxu0 0
      %1084 = vmatprep.subr.bf16.mxu0 0
      %1085 = vmatpush2.bf16.msra.mxu0 0
      %1086 = vmatprep.subr.bf16.mxu0 0
      %1087 = vmatpush2.bf16.msra.mxu0 0
      %1088 = vmatprep.subr.bf16.mxu0 0
      %1089 = vmatpush2.bf16.msra.mxu0 0
      %1090 = vmatprep.subr.bf16.mxu0 0
      %1091 = vmatpush2.bf16.msra.mxu0 0
      %1092 = vmatprep.subr.bf16.mxu0 0
      %1093 = vmatpush2.bf16.msra.mxu0 0
      %1094 = vmatprep.subr.bf16.mxu0 0
      %1095 = vmatpush2.bf16.msra.mxu0 0
      %1096 = vmatprep.mubr.bf16.mxu0 0
      %1097 = vmatmul.mubr.bf16.gmra.mxu0 %v324
      %v1098 = vpop.f32.mrf.mxu0
      %v1099 = vadd.f32 %v1026, %v1098
      %v1100 = vpop.f32.mrf.mxu0
      %v1101 = vpop.f32.mrf.mxu0
      %v1102 = vadd.f32 %v1029, %v1101
      %v1103 = vpop.f32.mrf.mxu0
      %1104 = vmatprep.mubr.bf16.mxu0 0
      %1105 = vmatmul.mubr.bf16.gmra.mxu0 %v326
      %v1106 = vpop.f32.mrf.mxu0
      %v1107 = vadd.f32 %v1034, %v1106
      %v1108 = vpop.f32.mrf.mxu0
      %v1109 = vpop.f32.mrf.mxu0
      %v1110 = vadd.f32 %v1037, %v1109
      %v1111 = vpop.f32.mrf.mxu0
      %1112 = vmatprep.mubr.bf16.mxu0 0
      %1113 = vmatmul.mubr.bf16.gmra.mxu0 %v328
      %v1114 = vpop.f32.mrf.mxu0
      %v1115 = vadd.f32 %v1042, %v1114
      %v1116 = vpop.f32.mrf.mxu0
      %v1117 = vpop.f32.mrf.mxu0
      %v1118 = vadd.f32 %v1045, %v1117
      %v1119 = vpop.f32.mrf.mxu0
      %1120 = vmatprep.mubr.bf16.mxu0 0
      %1121 = vmatmul.mubr.bf16.gmra.mxu0 %v330
      %v1122 = vpop.f32.mrf.mxu0
      %v1123 = vadd.f32 %v1050, %v1122
      %v1124 = vpop.f32.mrf.mxu0
      %v1125 = vpop.f32.mrf.mxu0
      %v1126 = vadd.f32 %v1053, %v1125
      %v1127 = vpop.f32.mrf.mxu0
      %1128 = vmatprep.mubr.bf16.mxu0 0
      %1129 = vmatmul.mubr.bf16.gmra.mxu0 %v332
      %v1130 = vpop.f32.mrf.mxu0
      %v1131 = vadd.f32 %v1058, %v1130
      %v1132 = vpop.f32.mrf.mxu0
      %v1133 = vpop.f32.mrf.mxu0
      %v1134 = vadd.f32 %v1061, %v1133
      %v1135 = vpop.f32.mrf.mxu0
      %1136 = vdwg.mxu0
      %v1137 = vld [vmem:[%s206 + $0x8] sm:$0xc]
      %v1138 = vld [vmem:[%s206 + $0xc] sm:$0xf]
      %v1139 = vld [vmem:[%s206 + $0x10] sm:$0xf]
      %v1140 = vld [vmem:[%s206 + $0x14] sm:$0xf]
      %v1141 = vld [vmem:[%s206 + $0x18] sm:$0xf]
      %v1142 = vld [vmem:[%s206 + $0x1c] sm:$0xf]
      %v1143 = vld [vmem:[%s206 + $0x20] sm:$0xf]
      %v1144 = vld [vmem:[%s206 + $0x24] sm:$0xf]
      %v1145 = vld [vmem:[%s206 + $0x28] sm:$0xf]
      %v1146 = vld [vmem:[%s206 + $0x2c] sm:$0xf]
      %v1147 = vld [vmem:[%s206 + $0x30] sm:$0x3]
      %v1148 = vld [vmem:[%s206 + $0x30] sm:$0x7]
      %v1149 = vld [vmem:[%s206 + $0x8] sm:$0x8]
      %v1161 = vunpack.c.l.b16 %v1137
      %v1162 = vunpack.c.l.b16 %v1138
      %v1163 = vunpack.c.l.b16 %v1139
      %v1164 = vunpack.c.l.b16 %v1140
      %v1165 = vunpack.c.l.b16 %v1141
      %v1166 = vunpack.c.l.b16 %v1142
      %v1167 = vunpack.c.l.b16 %v1143
      %v1168 = vunpack.c.l.b16 %v1144
      %v1169 = vunpack.c.l.b16 %v1145
      %v1170 = vunpack.c.l.b16 %v1146
      %v1171 = vunpack.c.l.b16 %v1147
      %v1172 = vpack.c.b16 %v1162, %v1161
      %v1173 = vpack.c.b16 %v1164, %v1163
      %v1174 = vpack.c.b16 %v1166, %v1165
      %v1175 = vpack.c.b16 %v1168, %v1167
      %v1176 = vpack.c.b16 %v1170, %v1169
      %v1177 = vpack.c.b16 %v1171, %v1171
      %v1179 = vunpack.c.l.b16 %v1148
      %v1180 = vpack.c.b16 %v1179, %v1179
      %v1182 = vshrl.u32 %v1172, 16
      %v1184 = vshll.u32 %v1172, 16
      %v1186 = vrot.slane %v1184, 1
      %v1187 = vor.u32 %v1182, %v1186
      %v1189 = vshll.u32 %v1173, 16
      %v1191 = vrot.slane %v1189, 1
      %v1192 = vsel %vm268, %v1187, %v1191
      %v1193 = vshrl.u32 %v1173, 16
      %v1195 = vor.u32 %v1193, %v1191
      %v1197 = vshll.u32 %v1174, 16
      %v1199 = vrot.slane %v1197, 1
      %v1200 = vsel %vm268, %v1195, %v1199
      %v1201 = vshrl.u32 %v1174, 16
      %v1203 = vor.u32 %v1201, %v1199
      %v1205 = vshll.u32 %v1175, 16
      %v1207 = vrot.slane %v1205, 1
      %v1208 = vsel %vm268, %v1203, %v1207
      %v1209 = vshrl.u32 %v1175, 16
      %v1211 = vor.u32 %v1209, %v1207
      %v1213 = vshll.u32 %v1176, 16
      %v1215 = vrot.slane %v1213, 1
      %v1216 = vsel %vm268, %v1211, %v1215
      %v1217 = vshrl.u32 %v1176, 16
      %v1219 = vor.u32 %v1217, %v1215
      %v1221 = vshll.u32 %v1180, 16
      %v1223 = vrot.slane %v1221, 1
      %v1224 = vsel %vm268, %v1219, %v1223
      %v1225 = vshrl.u32 %v1180, 16
      %v1227 = vor.u32 %v1225, %v1223
      %v1229 = vunpack.c.l.b16 %v1149
      %v1230 = vpack.c.b16 %v1162, %v1229
      %v1231 = vrot.slane %v1230, 1
      %v1232 = vrot.slane %v1173, 1
      %v1233 = vsel %vm321, %v1231, %v1232
      %v1234 = vrot.slane %v1174, 1
      %v1235 = vsel %vm321, %v1232, %v1234
      %v1236 = vrot.slane %v1175, 1
      %v1237 = vsel %vm321, %v1234, %v1236
      %v1238 = vrot.slane %v1176, 1
      %v1239 = vsel %vm321, %v1236, %v1238
      %v1240 = vrot.slane %v1180, 1
      %v1241 = vsel %vm321, %v1238, %v1240
      %s1242 = scalar_lea.vmem %s210, 384
      %v1243 = vld [vmem:[%s1242] sm:$0xf]
      %v1244 = vld [vmem:[%s1242 + $0x4] sm:$0xf]
      %v1245 = vld [vmem:[%s1242 + $0x8] sm:$0xf]
      %v1246 = vld [vmem:[%s1242 + $0xc] sm:$0xf]
      %v1247 = vld [vmem:[%s1242 + $0x10] sm:$0xf]
      %v1248 = vld [vmem:[%s1242 + $0x14] sm:$0xf]
      %v1249 = vld [vmem:[%s1242 + $0x18] sm:$0xf]
      %v1250 = vld [vmem:[%s1242 + $0x1c] sm:$0xf]
      %v1251 = vld [vmem:[%s1242 + $0x20] sm:$0xf]
      %v1252 = vld [vmem:[%s1242 + $0x24] sm:$0xf]
      %v1253 = vld [vmem:[%s1242 + $0x28] sm:$0xf]
      %v1254 = vld [vmem:[%s1242 + $0x2c] sm:$0xf]
      %v1255 = vld [vmem:[%s1242 + $0x30] sm:$0xf]
      %v1256 = vld [vmem:[%s1242 + $0x34] sm:$0xf]
      %v1257 = vld [vmem:[%s1242 + $0x38] sm:$0xf]
      %v1258 = vld [vmem:[%s1242 + $0x3c] sm:$0xf]
      %v1259 = vld [vmem:[%s1242 + $0x40] sm:$0xf]
      %v1260 = vld [vmem:[%s1242 + $0x44] sm:$0xf]
      %v1261 = vld [vmem:[%s1242 + $0x48] sm:$0xf]
      %v1262 = vld [vmem:[%s1242 + $0x4c] sm:$0xf]
      %v1263 = vld [vmem:[%s1242 + $0x50] sm:$0xf]
      %v1264 = vld [vmem:[%s1242 + $0x54] sm:$0xf]
      %v1265 = vld [vmem:[%s1242 + $0x58] sm:$0xf]
      %v1266 = vld [vmem:[%s1242 + $0x5c] sm:$0xf]
      %v1267 = vld [vmem:[%s1242 + $0x60] sm:$0xf]
      %v1268 = vld [vmem:[%s1242 + $0x64] sm:$0xf]
      %v1269 = vld [vmem:[%s1242 + $0x68] sm:$0xf]
      %v1270 = vld [vmem:[%s1242 + $0x6c] sm:$0xf]
      %v1271 = vld [vmem:[%s1242 + $0x70] sm:$0xf]
      %v1272 = vld [vmem:[%s1242 + $0x74] sm:$0xf]
      %v1273 = vld [vmem:[%s1242 + $0x78] sm:$0xf]
      %v1274 = vld [vmem:[%s1242 + $0x7c] sm:$0xf]
      %v1275 = vld [vmem:[%s1242 + $0x80] sm:$0xf]
      %v1276 = vld [vmem:[%s1242 + $0x84] sm:$0xf]
      %v1277 = vld [vmem:[%s1242 + $0x88] sm:$0xf]
      %v1278 = vld [vmem:[%s1242 + $0x8c] sm:$0xf]
      %v1279 = vld [vmem:[%s1242 + $0x90] sm:$0xf]
      %v1280 = vld [vmem:[%s1242 + $0x94] sm:$0xf]
      %v1281 = vld [vmem:[%s1242 + $0x98] sm:$0xf]
      %v1282 = vld [vmem:[%s1242 + $0x9c] sm:$0xf]
      %v1283 = vld [vmem:[%s1242 + $0xa0] sm:$0xf]
      %v1284 = vld [vmem:[%s1242 + $0xa4] sm:$0xf]
      %v1285 = vld [vmem:[%s1242 + $0xa8] sm:$0xf]
      %v1286 = vld [vmem:[%s1242 + $0xac] sm:$0xf]
      %v1287 = vld [vmem:[%s1242 + $0xb0] sm:$0xf]
      %v1288 = vld [vmem:[%s1242 + $0xb4] sm:$0xf]
      %v1289 = vld [vmem:[%s1242 + $0xb8] sm:$0xf]
      %v1290 = vld [vmem:[%s1242 + $0xbc] sm:$0xf]
      %vm1291 = vcmask 1045504
      %v1292 = vrot.slane %v1172, 2
      %v1293 = vrot.slane %v1173, 2
      %v1294 = vsel %vm1291, %v1292, %v1293
      %v1295 = vrot.slane %v1192, 2
      %v1296 = vrot.slane %v1200, 2
      %v1297 = vsel %vm1291, %v1295, %v1296
      %v1298 = vrot.slane %v1233, 2
      %v1299 = vrot.slane %v1235, 2
      %v1300 = vsel %vm1291, %v1298, %v1299
      %v1301 = vrot.slane %v1174, 2
      %v1302 = vsel %vm1291, %v1293, %v1301
      %v1303 = vrot.slane %v1208, 2
      %v1304 = vsel %vm1291, %v1296, %v1303
      %v1305 = vrot.slane %v1237, 2
      %v1306 = vsel %vm1291, %v1299, %v1305
      %v1307 = vrot.slane %v1175, 2
      %v1308 = vsel %vm1291, %v1301, %v1307
      %v1309 = vrot.slane %v1216, 2
      %v1310 = vsel %vm1291, %v1303, %v1309
      %v1311 = vrot.slane %v1239, 2
      %v1312 = vsel %vm1291, %v1305, %v1311
      %v1313 = vrot.slane %v1176, 2
      %v1314 = vsel %vm1291, %v1307, %v1313
      %v1315 = vrot.slane %v1224, 2
      %v1316 = vsel %vm1291, %v1309, %v1315
      %v1317 = vrot.slane %v1241, 2
      %v1318 = vsel %vm1291, %v1311, %v1317
      %v1319 = vrot.slane %v1177, 2
      %v1320 = vsel %vm1291, %v1313, %v1319
      %v1321 = vrot.slane %v1227, 2
      %v1322 = vsel %vm1291, %v1315, %v1321
      %v1323 = vrot.slane %v1240, 2
      %v1324 = vsel %vm1291, %v1317, %v1323
      %v1388 = vunpack.c.l.b16 %v1243
      %v1389 = vunpack.c.l.b16 %v1244
      %v1390 = vunpack.c.l.b16 %v1245
      %v1391 = vunpack.c.l.b16 %v1246
      %v1392 = vunpack.c.l.b16 %v1247
      %v1393 = vunpack.c.l.b16 %v1248
      %v1394 = vunpack.c.l.b16 %v1249
      %v1395 = vunpack.c.l.b16 %v1250
      %v1396 = vunpack.c.l.b16 %v1251
      %v1397 = vunpack.c.l.b16 %v1252
      %v1398 = vunpack.c.l.b16 %v1253
      %v1399 = vunpack.c.l.b16 %v1254
      %v1400 = vunpack.c.l.b16 %v1255
      %v1401 = vunpack.c.l.b16 %v1256
      %v1402 = vunpack.c.l.b16 %v1257
      %v1403 = vunpack.c.l.b16 %v1258
      %v1404 = vunpack.c.l.b16 %v1259
      %v1405 = vunpack.c.l.b16 %v1260
      %v1406 = vunpack.c.l.b16 %v1261
      %v1407 = vunpack.c.l.b16 %v1262
      %v1408 = vunpack.c.l.b16 %v1263
      %v1409 = vunpack.c.l.b16 %v1264
      %v1410 = vunpack.c.l.b16 %v1265
      %v1411 = vunpack.c.l.b16 %v1266
      %v1412 = vunpack.c.l.b16 %v1267
      %v1413 = vunpack.c.l.b16 %v1268
      %v1414 = vunpack.c.l.b16 %v1269
      %v1415 = vunpack.c.l.b16 %v1270
      %v1416 = vunpack.c.l.b16 %v1271
      %v1417 = vunpack.c.l.b16 %v1272
      %v1418 = vunpack.c.l.b16 %v1273
      %v1419 = vunpack.c.l.b16 %v1274
      %v1420 = vunpack.c.l.b16 %v1275
      %v1421 = vunpack.c.l.b16 %v1276
      %v1422 = vunpack.c.l.b16 %v1277
      %v1423 = vunpack.c.l.b16 %v1278
      %v1424 = vunpack.c.l.b16 %v1279
      %v1425 = vunpack.c.l.b16 %v1280
      %v1426 = vunpack.c.l.b16 %v1281
      %v1427 = vunpack.c.l.b16 %v1282
      %v1428 = vunpack.c.l.b16 %v1283
      %v1429 = vunpack.c.l.b16 %v1284
      %v1430 = vunpack.c.l.b16 %v1285
      %v1431 = vunpack.c.l.b16 %v1286
      %v1432 = vunpack.c.l.b16 %v1287
      %v1433 = vunpack.c.l.b16 %v1288
      %v1434 = vunpack.c.l.b16 %v1289
      %v1435 = vunpack.c.l.b16 %v1290
      %v1436 = vpack.c.b16 %v1389, %v1388
      %v1437 = vpack.c.b16 %v1391, %v1390
      %v1438 = vpack.c.b16 %v1393, %v1392
      %v1439 = vpack.c.b16 %v1395, %v1394
      %v1440 = vpack.c.b16 %v1397, %v1396
      %v1441 = vpack.c.b16 %v1399, %v1398
      %v1442 = vpack.c.b16 %v1401, %v1400
      %v1443 = vpack.c.b16 %v1403, %v1402
      %v1444 = vpack.c.b16 %v1405, %v1404
      %v1445 = vpack.c.b16 %v1407, %v1406
      %v1446 = vpack.c.b16 %v1409, %v1408
      %v1447 = vpack.c.b16 %v1411, %v1410
      %v1448 = vpack.c.b16 %v1413, %v1412
      %v1449 = vpack.c.b16 %v1415, %v1414
      %v1450 = vpack.c.b16 %v1417, %v1416
      %v1451 = vpack.c.b16 %v1419, %v1418
      %v1452 = vpack.c.b16 %v1421, %v1420
      %v1453 = vpack.c.b16 %v1423, %v1422
      %v1454 = vpack.c.b16 %v1425, %v1424
      %v1455 = vpack.c.b16 %v1427, %v1426
      %v1456 = vpack.c.b16 %v1429, %v1428
      %v1457 = vpack.c.b16 %v1431, %v1430
      %v1458 = vpack.c.b16 %v1433, %v1432
      %v1459 = vpack.c.b16 %v1435, %v1434
      %1484 = vmatprep.subr.bf16.mxu0 0
      %1485 = vmatpush1.bf16.msra.mxu0 %v1443
      %1486 = vmatprep.subr.bf16.mxu0 0
      %1487 = vmatpush1.bf16.msra.mxu0 %v1442
      %1488 = vmatprep.subr.bf16.mxu0 0
      %1489 = vmatpush1.bf16.msra.mxu0 %v1441
      %1490 = vmatprep.subr.bf16.mxu0 0
      %1491 = vmatpush1.bf16.msra.mxu0 %v1440
      %1492 = vmatprep.subr.bf16.mxu0 0
      %1493 = vmatpush1.bf16.msra.mxu0 %v1439
      %1494 = vmatprep.subr.bf16.mxu0 0
      %1495 = vmatpush1.bf16.msra.mxu0 %v1438
      %1496 = vmatprep.subr.bf16.mxu0 0
      %1497 = vmatpush1.bf16.msra.mxu0 %v1437
      %1498 = vmatprep.subr.bf16.mxu0 0
      %1499 = vmatpush1.bf16.msra.mxu0 %v1436
      %1500 = vmatprep.subr.bf16.mxu0 0
      %1501 = vmatpush2.bf16.msra.mxu0 %v1451
      %1502 = vmatprep.subr.bf16.mxu0 0
      %1503 = vmatpush2.bf16.msra.mxu0 %v1450
      %1504 = vmatprep.subr.bf16.mxu0 0
      %1505 = vmatpush2.bf16.msra.mxu0 %v1449
      %1506 = vmatprep.subr.bf16.mxu0 0
      %1507 = vmatpush2.bf16.msra.mxu0 %v1448
      %1508 = vmatprep.subr.bf16.mxu0 0
      %1509 = vmatpush2.bf16.msra.mxu0 %v1447
      %1510 = vmatprep.subr.bf16.mxu0 0
      %1511 = vmatpush2.bf16.msra.mxu0 %v1446
      %1512 = vmatprep.subr.bf16.mxu0 0
      %1513 = vmatpush2.bf16.msra.mxu0 %v1445
      %1514 = vmatprep.subr.bf16.mxu0 0
      %1515 = vmatpush2.bf16.msra.mxu0 %v1444
      %1516 = vmatprep.mubr.bf16.mxu0 %v1297
      %1517 = vmatmul.mubr.bf16.gmra.mxu0 %v1294
      %v1518 = vpop.f32.mrf.mxu0
      %v1519 = vadd.f32 0.0, %v1518
      %v1520 = vpop.f32.mrf.mxu0
      %v1521 = vpop.f32.mrf.mxu0
      %v1522 = vadd.f32 0.0, %v1521
      %v1523 = vpop.f32.mrf.mxu0
      %1524 = vmatprep.mubr.bf16.mxu0 %v1304
      %1525 = vmatmul.mubr.bf16.gmra.mxu0 %v1302
      %v1526 = vpop.f32.mrf.mxu0
      %v1527 = vadd.f32 0.0, %v1526
      %v1528 = vpop.f32.mrf.mxu0
      %v1529 = vpop.f32.mrf.mxu0
      %v1530 = vadd.f32 0.0, %v1529
      %v1531 = vpop.f32.mrf.mxu0
      %1532 = vmatprep.mubr.bf16.mxu0 %v1310
      %1533 = vmatmul.mubr.bf16.gmra.mxu0 %v1308
      %v1534 = vpop.f32.mrf.mxu0
      %v1535 = vadd.f32 0.0, %v1534
      %v1536 = vpop.f32.mrf.mxu0
      %v1537 = vpop.f32.mrf.mxu0
      %v1538 = vadd.f32 0.0, %v1537
      %v1539 = vpop.f32.mrf.mxu0
      %1540 = vmatprep.mubr.bf16.mxu0 %v1316
      %1541 = vmatmul.mubr.bf16.gmra.mxu0 %v1314
      %v1542 = vpop.f32.mrf.mxu0
      %v1543 = vadd.f32 0.0, %v1542
      %v1544 = vpop.f32.mrf.mxu0
      %v1545 = vpop.f32.mrf.mxu0
      %v1546 = vadd.f32 0.0, %v1545
      %v1547 = vpop.f32.mrf.mxu0
      %1548 = vmatprep.mubr.bf16.mxu0 %v1322
      %1549 = vmatmul.mubr.bf16.gmra.mxu0 %v1320
      %v1550 = vpop.f32.mrf.mxu0
      %v1551 = vadd.f32 0.0, %v1550
      %v1552 = vpop.f32.mrf.mxu0
      %v1553 = vpop.f32.mrf.mxu0
      %v1554 = vadd.f32 0.0, %v1553
      %v1555 = vpop.f32.mrf.mxu0
      %1556 = vdwg.mxu0
      %1557 = vmatprep.subr.bf16.mxu0 0
      %1558 = vmatpush1.bf16.msra.mxu0 %v1459
      %1559 = vmatprep.subr.bf16.mxu0 0
      %1560 = vmatpush1.bf16.msra.mxu0 %v1458
      %1561 = vmatprep.subr.bf16.mxu0 0
      %1562 = vmatpush1.bf16.msra.mxu0 %v1457
      %1563 = vmatprep.subr.bf16.mxu0 0
      %1564 = vmatpush1.bf16.msra.mxu0 %v1456
      %1565 = vmatprep.subr.bf16.mxu0 0
      %1566 = vmatpush1.bf16.msra.mxu0 %v1455
      %1567 = vmatprep.subr.bf16.mxu0 0
      %1568 = vmatpush1.bf16.msra.mxu0 %v1454
      %1569 = vmatprep.subr.bf16.mxu0 0
      %1570 = vmatpush1.bf16.msra.mxu0 %v1453
      %1571 = vmatprep.subr.bf16.mxu0 0
      %1572 = vmatpush1.bf16.msra.mxu0 %v1452
      %1573 = vmatprep.subr.bf16.mxu0 0
      %1574 = vmatpush2.bf16.msra.mxu0 0
      %1575 = vmatprep.subr.bf16.mxu0 0
      %1576 = vmatpush2.bf16.msra.mxu0 0
      %1577 = vmatprep.subr.bf16.mxu0 0
      %1578 = vmatpush2.bf16.msra.mxu0 0
      %1579 = vmatprep.subr.bf16.mxu0 0
      %1580 = vmatpush2.bf16.msra.mxu0 0
      %1581 = vmatprep.subr.bf16.mxu0 0
      %1582 = vmatpush2.bf16.msra.mxu0 0
      %1583 = vmatprep.subr.bf16.mxu0 0
      %1584 = vmatpush2.bf16.msra.mxu0 0
      %1585 = vmatprep.subr.bf16.mxu0 0
      %1586 = vmatpush2.bf16.msra.mxu0 0
      %1587 = vmatprep.subr.bf16.mxu0 0
      %1588 = vmatpush2.bf16.msra.mxu0 0
      %1589 = vmatprep.mubr.bf16.mxu0 0
      %1590 = vmatmul.mubr.bf16.gmra.mxu0 %v1300
      %v1591 = vpop.f32.mrf.mxu0
      %v1592 = vadd.f32 %v1519, %v1591
      %v1593 = vpop.f32.mrf.mxu0
      %v1594 = vpop.f32.mrf.mxu0
      %v1595 = vadd.f32 %v1522, %v1594
      %v1596 = vpop.f32.mrf.mxu0
      %1597 = vmatprep.mubr.bf16.mxu0 0
      %1598 = vmatmul.mubr.bf16.gmra.mxu0 %v1306
      %v1599 = vpop.f32.mrf.mxu0
      %v1600 = vadd.f32 %v1527, %v1599
      %v1601 = vpop.f32.mrf.mxu0
      %v1602 = vpop.f32.mrf.mxu0
      %v1603 = vadd.f32 %v1530, %v1602
      %v1604 = vpop.f32.mrf.mxu0
      %1605 = vmatprep.mubr.bf16.mxu0 0
      %1606 = vmatmul.mubr.bf16.gmra.mxu0 %v1312
      %v1607 = vpop.f32.mrf.mxu0
      %v1608 = vadd.f32 %v1535, %v1607
      %v1609 = vpop.f32.mrf.mxu0
      %v1610 = vpop.f32.mrf.mxu0
      %v1611 = vadd.f32 %v1538, %v1610
      %v1612 = vpop.f32.mrf.mxu0
      %1613 = vmatprep.mubr.bf16.mxu0 0
      %1614 = vmatmul.mubr.bf16.gmra.mxu0 %v1318
      %v1615 = vpop.f32.mrf.mxu0
      %v1616 = vadd.f32 %v1543, %v1615
      %v1617 = vpop.f32.mrf.mxu0
      %v1618 = vpop.f32.mrf.mxu0
      %v1619 = vadd.f32 %v1546, %v1618
      %v1620 = vpop.f32.mrf.mxu0
      %1621 = vmatprep.mubr.bf16.mxu0 0
      %1622 = vmatmul.mubr.bf16.gmra.mxu0 %v1324
      %v1623 = vpop.f32.mrf.mxu0
      %v1624 = vadd.f32 %v1551, %v1623
      %v1625 = vpop.f32.mrf.mxu0
      %v1626 = vpop.f32.mrf.mxu0
      %v1627 = vadd.f32 %v1554, %v1626
      %v1628 = vpop.f32.mrf.mxu0
      %1629 = vdwg.mxu0
      %v1630 = vadd.f32 %v1099, %v1592
      %v1631 = vadd.f32 %v1102, %v1595
      %v1632 = vadd.f32 %v1107, %v1600
      %v1633 = vadd.f32 %v1110, %v1603
      %v1634 = vadd.f32 %v1115, %v1608
      %v1635 = vadd.f32 %v1118, %v1611
      %v1636 = vadd.f32 %v1123, %v1616
      %v1637 = vadd.f32 %v1126, %v1619
      %v1638 = vadd.f32 %v1131, %v1624
      %v1639 = vadd.f32 %v1134, %v1627
      %v1640 = vld [vmem:[%s213] sm:$0x1]
      %v1642 = vlaneseq
      %v1643 = vshrl.u32 %v1642, 7
      %v1644 = vsub.s32 0, %v1643
      %v1645 = vrot.slane %v1640, %v1644
      %v1647 = vadd.f32 %v1630, %v1645
      %v1648 = vadd.f32 %v1631, %v1645
      %v1649 = vadd.f32 %v1632, %v1645
      %v1650 = vadd.f32 %v1633, %v1645
      %v1651 = vadd.f32 %v1634, %v1645
      %v1652 = vadd.f32 %v1635, %v1645
      %v1653 = vadd.f32 %v1636, %v1645
      %v1654 = vadd.f32 %v1637, %v1645
      %v1655 = vadd.f32 %v1638, %v1645
      %v1656 = vadd.f32 %v1639, %v1645
      %v1657 = vmax.f32 %v1647, 0.0
      %v1658 = vmax.f32 %v1648, 0.0
      %v1659 = vmax.f32 %v1649, 0.0
      %v1660 = vmax.f32 %v1650, 0.0
      %v1661 = vmax.f32 %v1651, 0.0
      %v1662 = vmax.f32 %v1652, 0.0
      %v1663 = vmax.f32 %v1653, 0.0
      %v1664 = vmax.f32 %v1654, 0.0
      %v1665 = vmax.f32 %v1655, 0.0
      %v1666 = vmax.f32 %v1656, 0.0
      %v1667 = vpack.c.bf16 %v1658, %v1657
      %v1668 = vpack.c.bf16 %v1660, %v1659
      %v1669 = vpack.c.bf16 %v1662, %v1661
      %v1670 = vpack.c.bf16 %v1664, %v1663
      %v1671 = vpack.c.bf16 %v1666, %v1665
      %v1677 = vunpack.c.l.b16 %v1667
      %v1678 = vunpack.c.h.b16 %v1667
      %v1679 = vunpack.c.l.b16 %v1668
      %v1680 = vunpack.c.h.b16 %v1668
      %v1681 = vunpack.c.l.b16 %v1669
      %v1682 = vunpack.c.h.b16 %v1669
      %v1683 = vunpack.c.l.b16 %v1670
      %v1684 = vunpack.c.h.b16 %v1670
      %v1685 = vunpack.c.l.b16 %v1671
      %v1686 = vunpack.c.h.b16 %v1671
      %v1687 = vpack.c.b16 %v1677, %v1677
      %v1688 = vpack.c.b16 %v1678, %v1678
      %v1689 = vpack.c.b16 %v1679, %v1679
      %v1690 = vpack.c.b16 %v1680, %v1680
      %v1691 = vpack.c.b16 %v1681, %v1681
      %v1692 = vpack.c.b16 %v1682, %v1682
      %v1693 = vpack.c.b16 %v1683, %v1683
      %v1694 = vpack.c.b16 %v1684, %v1684
      %v1695 = vpack.c.b16 %v1685, %v1685
      %v1696 = vpack.c.b16 %v1686, %v1686
      %1707 = vst [vmem:[%s221] sm:$0xf] %v1687
      %1708 = vst [vmem:[%s221 + $0x4] sm:$0xf] %v1688
      %1709 = vst [vmem:[%s221 + $0x8] sm:$0xf] %v1689
      %1710 = vst [vmem:[%s221 + $0xc] sm:$0xf] %v1690
      %1711 = vst [vmem:[%s221 + $0x10] sm:$0xf] %v1691
      %1712 = vst [vmem:[%s221 + $0x14] sm:$0xf] %v1692
      %1713 = vst [vmem:[%s221 + $0x18] sm:$0xf] %v1693
      %1714 = vst [vmem:[%s221 + $0x1c] sm:$0xf] %v1694
      %1715 = vst [vmem:[%s221 + $0x20] sm:$0xf] %v1695
      %1716 = vst [vmem:[%s221 + $0x24] sm:$0xf] %v1696
      %p1717 = scmp.lt.s32.totalorder %s18, 1
      %s1718 = scalar_select %p1717, %s18, 1
      %p1719 = scmp.lt.s32.totalorder %s19, 0
      %s1720 = scalar_select %p1719, %s19, 0
      %s1721 = smul.addr %s1718, 10
      %s1722 = sadd.s32 %s1720, %s1721
      %s1723 = smul.addr %s1722, 4
      %s1724 = scalar_lea.vmem %s3, %s1723
      // Predicated region
      $region33: #{_lambda_.25} parent=31 // pred_check
        %p1725 = pneg %p124
      $region34: #{_lambda_.25} parent=31 // pred_check_branch
        %1727 = sbr.rel (%p1725) target = $region36
      $region35: #{_lambda_.25} parent=31 // pred_region
        _
      $region36: #{_lambda_.25} parent=31 // pred_fallthru
        _
    $region32: #{_lambda_.25} parent=5 // pred_fallthru
      _
    %p1728 = scmp.le.s32.totalorder 2, %s9
    // Predicated region
    $region37: #{_lambda_.25} parent=5 // pred_check
      %p1729 = pneg %p1728
    $region38: #{_lambda_.25} parent=5 // pred_check_branch
      %1731 = sbr.rel (%p1729) target = $region40
    $region39: #{_lambda_.25} parent=5 // pred_region
      %s1732 = ssub.s32 %s9, 2
      // Predicated region
      $region41: #{_lambda_.25} parent=39 // pred_check
        %p1733 = pneg %p130
      $region42: #{_lambda_.25} parent=39 // pred_check_branch
        %1735 = sbr.rel (%p1733) target = $region44
      $region43: #{_lambda_.25} parent=39 // pred_region
        %p1736 = scmp.lt.s32.totalorder %s20, 1
        %s1737 = scalar_select %p1736, %s20, 1
        %p1738 = scmp.lt.s32.totalorder %s21, 0
        %s1739 = scalar_select %p1738, %s21, 0
        %s1740 = smul.addr %s1737, 10
        %s1741 = sadd.s32 %s1739, %s1740
        %s1742 = smul.addr %s1741, 4
        %s1743 = scalar_lea.vmem %s3, %s1742
      $region44: #{_lambda_.25} parent=39 // pred_fallthru
        _
    $region40: #{_lambda_.25} parent=5 // pred_fallthru
      _
  $region6: #{_lambda_.25} parent=0 // loop_footer
    %s13 = sadd.s32 1, %s9
  $region7: #{_lambda_.25} parent=0 // loop_footer_branch
    %8 = sbr.rel target = $region3
  $region8: #{_lambda_.25} parent=0 // loop_exit
    _

// kernel: _lambda_.29
$region0: #{_lambda_.29}
  #allocation0 [shape = 'u32[]', space=smem, size = 0x4, offset = 0x4, fixed_abs, tag = 'smem constant byte address 0x4 - core index']
  #allocation1 [shape = 'u32[144,128]{1,0:T(1,128)}', space=vmem, size = 0x12000, scoped, tag = 'internal scratch']
  %s0 = inlined_call_operand.vmem [shape: bf16[8,128], index: 0, kind: input, shape index: {}]
  %s1 = inlined_call_operand.vmem [shape: bf16[128,256], index: 1, kind: input, shape index: {}]
  %s2 = inlined_call_operand.vmem [shape: f32[1,256], index: 2, kind: input, shape index: {}]
  %s3 = inlined_call_operand.vmem [shape: bf16[8,128], index: 3, kind: input, shape index: {}]
  %s4 = inlined_call_operand.vmem [shape: bf16[128,256], index: 4, kind: input, shape index: {}]
  %s5 = inlined_call_operand.vmem [shape: f32[1,256], index: 5, kind: input, shape index: {}]
  %s6 = inlined_call_operand.vmem [shape: bf16[8,256], index: 6, kind: output, shape index: {}]
  %s7 = sld [smem:[#allocation0]]
  $region34: #{_lambda_.29} parent=0
    _
  %s9 = ssub.s32 1, %s7
  %s10 = scalar_select 0, %s9, %s7
  // Predicated region
  $region2: #{_lambda_.29} parent=0 // pred_check
    _
  $region3: #{_lambda_.29} parent=0 // pred_check_branch
    %12 = sbr.rel (0) target = $region5
  $region4: #{_lambda_.29} parent=0 // pred_region
    _
  $region5: #{_lambda_.29} parent=0 // pred_fallthru
    _
  // Predicated region
  $region6: #{_lambda_.29} parent=0 // pred_check
    _
  $region7: #{_lambda_.29} parent=0 // pred_check_branch
    %14 = sbr.rel (0) target = $region9
  $region8: #{_lambda_.29} parent=0 // pred_region
    _
  $region9: #{_lambda_.29} parent=0 // pred_fallthru
    _
  // Predicated region
  $region10: #{_lambda_.29} parent=0 // pred_check
    _
  $region11: #{_lambda_.29} parent=0 // pred_check_branch
    %16 = sbr.rel (0) target = $region13
  $region12: #{_lambda_.29} parent=0 // pred_region
    _
  $region13: #{_lambda_.29} parent=0 // pred_fallthru
    _
  // Predicated region
  $region14: #{_lambda_.29} parent=0 // pred_check
    _
  $region15: #{_lambda_.29} parent=0 // pred_check_branch
    %18 = sbr.rel (0) target = $region17
  $region16: #{_lambda_.29} parent=0 // pred_region
    _
  $region17: #{_lambda_.29} parent=0 // pred_fallthru
    _
  // Predicated region
  $region18: #{_lambda_.29} parent=0 // pred_check
    _
  $region19: #{_lambda_.29} parent=0 // pred_check_branch
    %20 = sbr.rel (0) target = $region21
  $region20: #{_lambda_.29} parent=0 // pred_region
    _
  $region21: #{_lambda_.29} parent=0 // pred_fallthru
    _
  // Predicated region
  $region22: #{_lambda_.29} parent=0 // pred_check
    _
  $region23: #{_lambda_.29} parent=0 // pred_check_branch
    %22 = sbr.rel (0) target = $region25
  $region24: #{_lambda_.29} parent=0 // pred_region
    _
  $region25: #{_lambda_.29} parent=0 // pred_fallthru
    _
  %v24 = vld [vmem:[%s0] sm:$0xf]
  %v25 = vld [vmem:[%s1] sm:$0xff]
  %v26 = vld [vmem:[%s1 + $0x8] sm:$0xff]
  %v27 = vld [vmem:[%s1 + $0x10] sm:$0xff]
  %v28 = vld [vmem:[%s1 + $0x18] sm:$0xff]
  %v29 = vld [vmem:[%s1 + $0x20] sm:$0xff]
  %v30 = vld [vmem:[%s1 + $0x28] sm:$0xff]
  %v31 = vld [vmem:[%s1 + $0x30] sm:$0xff]
  %v32 = vld [vmem:[%s1 + $0x38] sm:$0xff]
  %v33 = vld [vmem:[%s1 + $0x40] sm:$0xff]
  %v34 = vld [vmem:[%s1 + $0x48] sm:$0xff]
  %v35 = vld [vmem:[%s1 + $0x50] sm:$0xff]
  %v36 = vld [vmem:[%s1 + $0x58] sm:$0xff]
  %v37 = vld [vmem:[%s1 + $0x60] sm:$0xff]
  %v38 = vld [vmem:[%s1 + $0x68] sm:$0xff]
  %v39 = vld [vmem:[%s1 + $0x70] sm:$0xff]
  %v40 = vld [vmem:[%s1 + $0x78] sm:$0xff]
  %v41 = vld [vmem:[%s2] sm:$0x3]
  %v43 = vlaneseq
  %v44 = vshrl.u32 %v43, 7
  %v45 = vsub.s32 0, %v44
  %v46 = vrot.slane %v41, %v45
  %v47 = vlaneseq
  %v48 = vshrl.u32 %v47, 7
  %v49 = vsub.s32 1, %v48
  %v50 = vrot.slane %v41, %v49
  %v69 = vunpack.c.l.b16 %v25
  %v70 = vunpack.c.h.b16 %v25
  %v71 = vunpack.c.l.b16 %v26
  %v72 = vunpack.c.h.b16 %v26
  %v73 = vunpack.c.l.b16 %v27
  %v74 = vunpack.c.h.b16 %v27
  %v75 = vunpack.c.l.b16 %v28
  %v76 = vunpack.c.h.b16 %v28
  %v77 = vunpack.c.l.b16 %v29
  %v78 = vunpack.c.h.b16 %v29
  %v79 = vunpack.c.l.b16 %v30
  %v80 = vunpack.c.h.b16 %v30
  %v81 = vunpack.c.l.b16 %v31
  %v82 = vunpack.c.h.b16 %v31
  %v83 = vunpack.c.l.b16 %v32
  %v84 = vunpack.c.h.b16 %v32
  %v85 = vunpack.c.l.b16 %v33
  %v86 = vunpack.c.h.b16 %v33
  %v87 = vunpack.c.l.b16 %v34
  %v88 = vunpack.c.h.b16 %v34
  %v89 = vunpack.c.l.b16 %v35
  %v90 = vunpack.c.h.b16 %v35
  %v91 = vunpack.c.l.b16 %v36
  %v92 = vunpack.c.h.b16 %v36
  %v93 = vunpack.c.l.b16 %v37
  %v94 = vunpack.c.h.b16 %v37
  %v95 = vunpack.c.l.b16 %v38
  %v96 = vunpack.c.h.b16 %v38
  %v97 = vunpack.c.l.b16 %v39
  %v98 = vunpack.c.h.b16 %v39
  %v99 = vunpack.c.l.b16 %v40
  %v100 = vunpack.c.h.b16 %v40
  %v101 = vpack.c.b16 %v71, %v69
  %v102 = vpack.c.b16 %v72, %v70
  %v103 = vpack.c.b16 %v75, %v73
  %v104 = vpack.c.b16 %v76, %v74
  %v105 = vpack.c.b16 %v79, %v77
  %v106 = vpack.c.b16 %v80, %v78
  %v107 = vpack.c.b16 %v83, %v81
  %v108 = vpack.c.b16 %v84, %v82
  %v109 = vpack.c.b16 %v87, %v85
  %v110 = vpack.c.b16 %v88, %v86
  %v111 = vpack.c.b16 %v91, %v89
  %v112 = vpack.c.b16 %v92, %v90
  %v113 = vpack.c.b16 %v95, %v93
  %v114 = vpack.c.b16 %v96, %v94
  %v115 = vpack.c.b16 %v99, %v97
  %v116 = vpack.c.b16 %v100, %v98
  %133 = vmatprep.subr.bf16.mxu0 %v116
  %134 = vmatpush1.bf16.msra.mxu0 %v115
  %135 = vmatprep.subr.bf16.mxu0 %v114
  %136 = vmatpush1.bf16.msra.mxu0 %v113
  %137 = vmatprep.subr.bf16.mxu0 %v112
  %138 = vmatpush1.bf16.msra.mxu0 %v111
  %139 = vmatprep.subr.bf16.mxu0 %v110
  %140 = vmatpush1.bf16.msra.mxu0 %v109
  %141 = vmatprep.subr.bf16.mxu0 %v108
  %142 = vmatpush1.bf16.msra.mxu0 %v107
  %143 = vmatprep.subr.bf16.mxu0 %v106
  %144 = vmatpush1.bf16.msra.mxu0 %v105
  %145 = vmatprep.subr.bf16.mxu0 %v104
  %146 = vmatpush1.bf16.msra.mxu0 %v103
  %147 = vmatprep.subr.bf16.mxu0 %v102
  %148 = vmatpush1.bf16.msra.mxu0 %v101
  %149 = vmatprep.subr.bf16.mxu0 0
  %150 = vmatpush2.bf16.msra.mxu0 0
  %151 = vmatprep.subr.bf16.mxu0 0
  %152 = vmatpush2.bf16.msra.mxu0 0
  %153 = vmatprep.subr.bf16.mxu0 0
  %154 = vmatpush2.bf16.msra.mxu0 0
  %155 = vmatprep.subr.bf16.mxu0 0
  %156 = vmatpush2.bf16.msra.mxu0 0
  %157 = vmatprep.subr.bf16.mxu0 0
  %158 = vmatpush2.bf16.msra.mxu0 0
  %159 = vmatprep.subr.bf16.mxu0 0
  %160 = vmatpush2.bf16.msra.mxu0 0
  %161 = vmatprep.subr.bf16.mxu0 0
  %162 = vmatpush2.bf16.msra.mxu0 0
  %163 = vmatprep.subr.bf16.mxu0 0
  %164 = vmatpush2.bf16.msra.mxu0 0
  %165 = vmatprep.mubr.bf16.mxu0 0
  %166 = vmatmul.mubr.bf16.gmra.mxu0 %v24
  %v167 = vpop.f32.mrf.mxu0
  %v168 = vadd.f32 %v46, %v167
  %v169 = vpop.f32.mrf.mxu0
  %v170 = vadd.f32 %v50, %v169
  %v171 = vpop.f32.mrf.mxu0
  %v172 = vpop.f32.mrf.mxu0
  %173 = vdwg.mxu0
  %v174 = vld [vmem:[%s3] sm:$0xf]
  %v175 = vld [vmem:[%s4] sm:$0xff]
  %v176 = vld [vmem:[%s4 + $0x8] sm:$0xff]
  %v177 = vld [vmem:[%s4 + $0x10] sm:$0xff]
  %v178 = vld [vmem:[%s4 + $0x18] sm:$0xff]
  %v179 = vld [vmem:[%s4 + $0x20] sm:$0xff]
  %v180 = vld [vmem:[%s4 + $0x28] sm:$0xff]
  %v181 = vld [vmem:[%s4 + $0x30] sm:$0xff]
  %v182 = vld [vmem:[%s4 + $0x38] sm:$0xff]
  %v183 = vld [vmem:[%s4 + $0x40] sm:$0xff]
  %v184 = vld [vmem:[%s4 + $0x48] sm:$0xff]
  %v185 = vld [vmem:[%s4 + $0x50] sm:$0xff]
  %v186 = vld [vmem:[%s4 + $0x58] sm:$0xff]
  %v187 = vld [vmem:[%s4 + $0x60] sm:$0xff]
  %v188 = vld [vmem:[%s4 + $0x68] sm:$0xff]
  %v189 = vld [vmem:[%s4 + $0x70] sm:$0xff]
  %v190 = vld [vmem:[%s4 + $0x78] sm:$0xff]
  %v191 = vld [vmem:[%s5] sm:$0x3]
  %v193 = vlaneseq
  %v194 = vshrl.u32 %v193, 7
  %v195 = vsub.s32 0, %v194
  %v196 = vrot.slane %v191, %v195
  %v197 = vlaneseq
  %v198 = vshrl.u32 %v197, 7
  %v199 = vsub.s32 1, %v198
  %v200 = vrot.slane %v191, %v199
  %v219 = vunpack.c.l.b16 %v175
  %v220 = vunpack.c.h.b16 %v175
  %v221 = vunpack.c.l.b16 %v176
  %v222 = vunpack.c.h.b16 %v176
  %v223 = vunpack.c.l.b16 %v177
  %v224 = vunpack.c.h.b16 %v177
  %v225 = vunpack.c.l.b16 %v178
  %v226 = vunpack.c.h.b16 %v178
  %v227 = vunpack.c.l.b16 %v179
  %v228 = vunpack.c.h.b16 %v179
  %v229 = vunpack.c.l.b16 %v180
  %v230 = vunpack.c.h.b16 %v180
  %v231 = vunpack.c.l.b16 %v181
  %v232 = vunpack.c.h.b16 %v181
  %v233 = vunpack.c.l.b16 %v182
  %v234 = vunpack.c.h.b16 %v182
  %v235 = vunpack.c.l.b16 %v183
  %v236 = vunpack.c.h.b16 %v183
  %v237 = vunpack.c.l.b16 %v184
  %v238 = vunpack.c.h.b16 %v184
  %v239 = vunpack.c.l.b16 %v185
  %v240 = vunpack.c.h.b16 %v185
  %v241 = vunpack.c.l.b16 %v186
  %v242 = vunpack.c.h.b16 %v186
  %v243 = vunpack.c.l.b16 %v187
  %v244 = vunpack.c.h.b16 %v187
  %v245 = vunpack.c.l.b16 %v188
  %v246 = vunpack.c.h.b16 %v188
  %v247 = vunpack.c.l.b16 %v189
  %v248 = vunpack.c.h.b16 %v189
  %v249 = vunpack.c.l.b16 %v190
  %v250 = vunpack.c.h.b16 %v190
  %v251 = vpack.c.b16 %v221, %v219
  %v252 = vpack.c.b16 %v222, %v220
  %v253 = vpack.c.b16 %v225, %v223
  %v254 = vpack.c.b16 %v226, %v224
  %v255 = vpack.c.b16 %v229, %v227
  %v256 = vpack.c.b16 %v230, %v228
  %v257 = vpack.c.b16 %v233, %v231
  %v258 = vpack.c.b16 %v234, %v232
  %v259 = vpack.c.b16 %v237, %v235
  %v260 = vpack.c.b16 %v238, %v236
  %v261 = vpack.c.b16 %v241, %v239
  %v262 = vpack.c.b16 %v242, %v240
  %v263 = vpack.c.b16 %v245, %v243
  %v264 = vpack.c.b16 %v246, %v244
  %v265 = vpack.c.b16 %v249, %v247
  %v266 = vpack.c.b16 %v250, %v248
  %283 = vmatprep.subr.bf16.mxu0 %v266
  %284 = vmatpush1.bf16.msra.mxu0 %v265
  %285 = vmatprep.subr.bf16.mxu0 %v264
  %286 = vmatpush1.bf16.msra.mxu0 %v263
  %287 = vmatprep.subr.bf16.mxu0 %v262
  %288 = vmatpush1.bf16.msra.mxu0 %v261
  %289 = vmatprep.subr.bf16.mxu0 %v260
  %290 = vmatpush1.bf16.msra.mxu0 %v259
  %291 = vmatprep.subr.bf16.mxu0 %v258
  %292 = vmatpush1.bf16.msra.mxu0 %v257
  %293 = vmatprep.subr.bf16.mxu0 %v256
  %294 = vmatpush1.bf16.msra.mxu0 %v255
  %295 = vmatprep.subr.bf16.mxu0 %v254
  %296 = vmatpush1.bf16.msra.mxu0 %v253
  %297 = vmatprep.subr.bf16.mxu0 %v252
  %298 = vmatpush1.bf16.msra.mxu0 %v251
  %299 = vmatprep.subr.bf16.mxu0 0
  %300 = vmatpush2.bf16.msra.mxu0 0
  %301 = vmatprep.subr.bf16.mxu0 0
  %302 = vmatpush2.bf16.msra.mxu0 0
  %303 = vmatprep.subr.bf16.mxu0 0
  %304 = vmatpush2.bf16.msra.mxu0 0
  %305 = vmatprep.subr.bf16.mxu0 0
  %306 = vmatpush2.bf16.msra.mxu0 0
  %307 = vmatprep.subr.bf16.mxu0 0
  %308 = vmatpush2.bf16.msra.mxu0 0
  %309 = vmatprep.subr.bf16.mxu0 0
  %310 = vmatpush2.bf16.msra.mxu0 0
  %311 = vmatprep.subr.bf16.mxu0 0
  %312 = vmatpush2.bf16.msra.mxu0 0
  %313 = vmatprep.subr.bf16.mxu0 0
  %314 = vmatpush2.bf16.msra.mxu0 0
  %315 = vmatprep.mubr.bf16.mxu0 0
  %316 = vmatmul.mubr.bf16.gmra.mxu0 %v174
  %v317 = vpop.f32.mrf.mxu0
  %v318 = vadd.f32 %v196, %v317
  %v319 = vpop.f32.mrf.mxu0
  %v320 = vadd.f32 %v200, %v319
  %v321 = vpop.f32.mrf.mxu0
  %v322 = vpop.f32.mrf.mxu0
  %323 = vdwg.mxu0
  %v324 = vadd.f32 %v168, %v318
  %v325 = vadd.f32 %v170, %v320
  %v326 = vmax.f32 %v324, 0.0
  %v327 = vmax.f32 %v325, 0.0
  %v328 = vpack.c.bf16 %v326, %v326
  %v329 = vpack.c.bf16 %v327, %v327
  %v332 = vunpack.c.l.b16 %v328
  %v333 = vunpack.c.l.b16 %v329
  %v334 = vpack.c.b16 %v333, %v332
  %336 = vst [vmem:[%s6] sm:$0xff] %v334
  // Predicated region
  $region26: #{_lambda_.29} parent=0 // pred_check
    _
  $region27: #{_lambda_.29} parent=0 // pred_check_branch
    %338 = sbr.rel (0) target = $region29
  $region28: #{_lambda_.29} parent=0 // pred_region
    _
  $region29: #{_lambda_.29} parent=0 // pred_fallthru
    _
  // Predicated region
  $region30: #{_lambda_.29} parent=0 // pred_check
    _
  $region31: #{_lambda_.29} parent=0 // pred_check_branch
    %340 = sbr.rel (0) target = $region33
  $region32: #{_lambda_.29} parent=0 // pred_region
    _
  $region33: #{_lambda_.29} parent=0 // pred_fallthru
    _

// kernel: _lambda_.28
$region0: #{_lambda_.28}
  #allocation0 [shape = 'u32[]', space=smem, size = 0x4, offset = 0x4, fixed_abs, tag = 'smem constant byte address 0x4 - core index']
  #allocation1 [shape = 'u32[144,128]{1,0:T(1,128)}', space=vmem, size = 0x12000, scoped, tag = 'internal scratch']
  %s0 = inlined_call_operand.vmem [shape: bf16[2,42,128], index: 0, kind: input, shape index: {}]
  %s1 = inlined_call_operand.vmem [shape: bf16[3,384,128], index: 1, kind: input, shape index: {}]
  %s2 = inlined_call_operand.vmem [shape: f32[1,128], index: 2, kind: input, shape index: {}]
  %s3 = inlined_call_operand.vmem [shape: bf16[2,24,128], index: 3, kind: output, shape index: {}]
  %s4 = sld [smem:[#allocation0]]
  $region45: #{_lambda_.28} parent=0
    _
  %s6 = ssub.s32 1, %s4
  %s7 = scalar_select 0, %s6, %s4
  loop: start=0, step=1, limit=4
  $region2: #{_lambda_.28} parent=0 // loop_pre_header
    _
  $region3: #{_lambda_.28} parent=0 // loop_header
    %s9 = sphi 0, %s13
    %p10 = scmp.ge.s32.totalorder %s9, 4
    %s16 = sphi 0, %s28
    %s17 = sphi 0, %s24
    %s18 = sphi 0, %s16
    %s19 = sphi 0, %s17
    %s20 = sphi 0, %s18
    %s21 = sphi 0, %s19
    %s31 = sphi 0, %s33
    %s34 = sphi 0, %s31
    %s35 = sphi 0, %s34
    %s51 = sphi 0, %s35
    %s57 = sphi 0, %s59
    %s60 = sphi 0, %s57
    %s61 = sphi 0, %s60
    %s77 = sphi 0, %s61
    %s83 = sphi 0, %s85
    %s86 = sphi 0, %s83
    %s87 = sphi 0, %s86
    %s103 = sphi 0, %s87
    %s111 = sphi 0, %s113
    %s114 = sphi 0, %s111
    %s115 = sphi 0, %s114
    %s131 = sphi 0, %s115
  $region4: #{_lambda_.28} parent=0 // loop_header_branch
    %12 = sbr.rel (%p10) target = $region8
  $region5: #{_lambda_.28} parent=0 // loop_body
    %s14 = ssub.s32 %s9, 1
    %s15 = ssub.s32 %s9, 2
    %s22 = sadd.s32 1, %s17
    %p23 = scmp.ge.s32.totalorder %s22, 1
    %s24 = scalar_select %p23, 0, %s22
    %s25 = sadd.s32 1, %s16
    %s26 = scalar_select %p23, %s25, %s16
    %p27 = scmp.ge.s32.totalorder %s26, 2
    %s28 = scalar_select %p27, 0, %s26
    %s29 = ssub.s32 %s16, %s28
    %p30 = scmp.eq.s32.totalorder %s29, 0
    %s32 = sadd.s32 %s31, 1
    %s33 = scalar_select %p30, %s31, %s32
    %p36 = pneg %p30
    %p37 = scmp.eq.s32.totalorder %s9, 1
    %p38 = por %p36, %p37
    %p39 = scmp.ne.s32.totalorder %s31, %s34
    %p40 = scmp.eq.s32.totalorder %s9, 0
    %p41 = por %p39, %p40
    %p42 = scmp.ne.s32.totalorder %s31, %s34
    %p43 = scmp.eq.s32.totalorder %s14, 1
    %p44 = por %p42, %p43
    %p45 = scmp.ne.s32.totalorder %s34, %s35
    %p46 = scmp.eq.s32.totalorder %s14, 0
    %p47 = por %p45, %p46
    %p48 = scmp.ne.s32.totalorder %s34, %s35
    %p49 = scmp.eq.s32.totalorder %s15, 1
    %p50 = por %p48, %p49
    %p52 = scmp.ne.s32.totalorder %s35, %s51
    %p53 = scmp.eq.s32.totalorder %s15, 0
    %p54 = por %p52, %p53
    %s55 = ssub.s32 %s17, %s24
    %p56 = scmp.eq.s32.totalorder %s55, 0
    %s58 = sadd.s32 %s57, 1
    %s59 = scalar_select %p56, %s57, %s58
    %p62 = pneg %p56
    %p63 = scmp.eq.s32.totalorder %s9, 1
    %p64 = por %p62, %p63
    %p65 = scmp.ne.s32.totalorder %s57, %s60
    %p66 = scmp.eq.s32.totalorder %s9, 0
    %p67 = por %p65, %p66
    %p68 = scmp.ne.s32.totalorder %s57, %s60
    %p69 = scmp.eq.s32.totalorder %s14, 1
    %p70 = por %p68, %p69
    %p71 = scmp.ne.s32.totalorder %s60, %s61
    %p72 = scmp.eq.s32.totalorder %s14, 0
    %p73 = por %p71, %p72
    %p74 = scmp.ne.s32.totalorder %s60, %s61
    %p75 = scmp.eq.s32.totalorder %s15, 1
    %p76 = por %p74, %p75
    %p78 = scmp.ne.s32.totalorder %s61, %s77
    %p79 = scmp.eq.s32.totalorder %s15, 0
    %p80 = por %p78, %p79
    %s81 = ssub.s32 %s17, %s24
    %p82 = scmp.eq.s32.totalorder %s81, 0
    %s84 = sadd.s32 %s83, 1
    %s85 = scalar_select %p82, %s83, %s84
    %p88 = pneg %p82
    %p89 = scmp.eq.s32.totalorder %s9, 1
    %p90 = por %p88, %p89
    %p91 = scmp.ne.s32.totalorder %s83, %s86
    %p92 = scmp.eq.s32.totalorder %s9, 0
    %p93 = por %p91, %p92
    %p94 = scmp.ne.s32.totalorder %s83, %s86
    %p95 = scmp.eq.s32.totalorder %s14, 1
    %p96 = por %p94, %p95
    %p97 = scmp.ne.s32.totalorder %s86, %s87
    %p98 = scmp.eq.s32.totalorder %s14, 0
    %p99 = por %p97, %p98
    %p100 = scmp.ne.s32.totalorder %s86, %s87
    %p101 = scmp.eq.s32.totalorder %s15, 1
    %p102 = por %p100, %p101
    %p104 = scmp.ne.s32.totalorder %s87, %s103
    %p105 = scmp.eq.s32.totalorder %s15, 0
    %p106 = por %p104, %p105
    %s107 = ssub.s32 %s16, %s28
    %s108 = ssub.s32 %s17, %s24
    %s109 = sor.u32 %s107, %s108
    %p110 = scmp.eq.s32.totalorder %s109, 0
    %s112 = sadd.s32 %s111, 1
    %s113 = scalar_select %p110, %s111, %s112
    %p116 = pneg %p110
    %p117 = scmp.eq.s32.totalorder %s9, 1
    %p118 = por %p116, %p117
    %p119 = scmp.ne.s32.totalorder %s111, %s114
    %p120 = scmp.eq.s32.totalorder %s9, 0
    %p121 = por %p119, %p120
    %p122 = scmp.ne.s32.totalorder %s111, %s114
    %p123 = scmp.eq.s32.totalorder %s14, 1
    %p124 = por %p122, %p123
    %p125 = scmp.ne.s32.totalorder %s114, %s115
    %p126 = scmp.eq.s32.totalorder %s14, 0
    %p127 = por %p125, %p126
    %p128 = scmp.ne.s32.totalorder %s114, %s115
    %p129 = scmp.eq.s32.totalorder %s15, 1
    %p130 = por %p128, %p129
    %p132 = scmp.ne.s32.totalorder %s115, %s131
    %p133 = scmp.eq.s32.totalorder %s15, 0
    %p134 = por %p132, %p133
    %p135 = scmp.le.s32.totalorder 1, %s9
    %p136 = scmp.lt.s32.totalorder %s9, 3
    %p137 = pnand %p135, %p136
    %p138 = pneg %p137
    // Predicated region
    $region9: #{_lambda_.28} parent=5 // pred_check
      _
    $region10: #{_lambda_.28} parent=5 // pred_check_branch
      %140 = sbr.rel (%p137) target = $region12
    $region11: #{_lambda_.28} parent=5 // pred_region
      %s141 = ssub.s32 %s9, 1
      // Predicated region
      $region13: #{_lambda_.28} parent=11 // pred_check
        %p142 = pneg %p73
      $region14: #{_lambda_.28} parent=11 // pred_check_branch
        %144 = sbr.rel (%p142) target = $region16
      $region15: #{_lambda_.28} parent=11 // pred_region
        %p145 = scmp.lt.s32.totalorder %s19, 0
        %s146 = scalar_select %p145, %s19, 0
        %s147 = smul.addr %s146, 4
        %s148 = scalar_lea.vmem %s1, %s147
      $region16: #{_lambda_.28} parent=11 // pred_fallthru
        _
      // Predicated region
      $region17: #{_lambda_.28} parent=11 // pred_check
        %p149 = pneg %p99
      $region18: #{_lambda_.28} parent=11 // pred_check_branch
        %151 = sbr.rel (%p149) target = $region20
      $region19: #{_lambda_.28} parent=11 // pred_region
        %p152 = scmp.lt.s32.totalorder %s19, 0
        %s153 = scalar_select %p152, %s19, 0
        %s154 = scalar_lea.vmem %s2, %s153
      $region20: #{_lambda_.28} parent=11 // pred_fallthru
        _
    $region12: #{_lambda_.28} parent=5 // pred_fallthru
      _
    %p155 = scmp.lt.s32.totalorder %s9, 2
    // Predicated region
    $region21: #{_lambda_.28} parent=5 // pred_check
      %p156 = pneg %p155
    $region22: #{_lambda_.28} parent=5 // pred_check_branch
      %158 = sbr.rel (%p156) target = $region24
    $region23: #{_lambda_.28} parent=5 // pred_region
      // Predicated region
      $region25: #{_lambda_.28} parent=23 // pred_check
        %p159 = pneg %p41
      $region26: #{_lambda_.28} parent=23 // pred_check_branch
        %161 = sbr.rel (%p159) target = $region28
      $region27: #{_lambda_.28} parent=23 // pred_region
        %p162 = scmp.lt.s32.totalorder %s16, 1
        %s163 = scalar_select %p162, %s16, 1
        %s164 = smul.addr %s163, 6
        %s165 = smul.addr %s164, 4
        %s166 = scalar_lea.vmem %s0, %s165
      $region28: #{_lambda_.28} parent=23 // pred_fallthru
        _
    $region24: #{_lambda_.28} parent=5 // pred_fallthru
      _
    %p167 = scmp.le.s32.totalorder 1, %s9
    %p168 = scmp.lt.s32.totalorder %s9, 3
    %p169 = pnand %p167, %p168
    %p170 = pneg %p169
    // Predicated region
    $region29: #{_lambda_.28} parent=5 // pred_check
      _
    $region30: #{_lambda_.28} parent=5 // pred_check_branch
      %172 = sbr.rel (%p169) target = $region32
    $region31: #{_lambda_.28} parent=5 // pred_region
      %s173 = ssub.s32 %s9, 1
      %p174 = scmp.lt.s32.totalorder %s18, 1
      %s175 = scalar_select %p174, %s18, 1
      %s176 = smul.addr %s175, 6
      %s177 = smul.addr %s176, 4
      %s178 = scalar_lea.vmem %s0, %s177
      %p179 = pneg %p47
      %p180 = pneg %p44
      %p181 = scmp.lt.s32.totalorder %s19, 0
      %s182 = scalar_select %p181, %s19, 0
      %s183 = smul.addr %s182, 4
      %s184 = scalar_lea.vmem %s1, %s183
      %p185 = pneg %p73
      %p186 = pneg %p70
      %p187 = scmp.lt.s32.totalorder %s19, 0
      %s188 = scalar_select %p187, %s19, 0
      %s189 = scalar_lea.vmem %s2, %s188
      %p190 = pneg %p99
      %p191 = pneg %p96
      %p192 = pneg %p127
      %p193 = pneg %p124
      %p194 = scmp.lt.s32.totalorder %s18, 1
      %s195 = scalar_select %p194, %s18, 1
      %p196 = scmp.lt.s32.totalorder %s19, 0
      %s197 = scalar_select %p196, %s19, 0
      %s198 = smul.addr %s195, 3
      %s199 = sadd.s32 %s197, %s198
      %s200 = smul.addr %s199, 4
      %s201 = scalar_lea.vmem %s3, %s200
      %p202 = scmp.lt.s32.totalorder %s18, 1
      %s203 = scalar_select %p202, %s18, 1
      %s204 = smul.addr %s203, 6
      %s205 = smul.addr %s204, 4
      %s206 = scalar_lea.vmem %s0, %s205
      %p207 = scmp.lt.s32.totalorder %s19, 0
      %s208 = scalar_select %p207, %s19, 0
      %s209 = smul.addr %s208, 4
      %s210 = scalar_lea.vmem %s1, %s209
      %p211 = scmp.lt.s32.totalorder %s19, 0
      %s212 = scalar_select %p211, %s19, 0
      %s213 = scalar_lea.vmem %s2, %s212
      %p214 = scmp.lt.s32.totalorder %s18, 1
      %s215 = scalar_select %p214, %s18, 1
      %p216 = scmp.lt.s32.totalorder %s19, 0
      %s217 = scalar_select %p216, %s19, 0
      %s218 = smul.addr %s215, 3
      %s219 = sadd.s32 %s217, %s218
      %s220 = smul.addr %s219, 4
      %s221 = scalar_lea.vmem %s3, %s220
      %v223 = vld [vmem:[%s206] sm:$0xf]
      %v224 = vld [vmem:[%s206 + $0x4] sm:$0xf]
      %v225 = vld [vmem:[%s206 + $0x8] sm:$0xf]
      %v226 = vld [vmem:[%s206 + $0xc] sm:$0x1]
      %v227 = vld [vmem:[%s206] sm:$0xe]
      %v231 = vunpack.c.l.b16 %v223
      %v232 = vunpack.c.l.b16 %v224
      %v233 = vunpack.c.l.b16 %v225
      %v234 = vpack.c.b16 %v232, %v231
      %v235 = vpack.c.b16 %v233, %v233
      %v239 = vunpack.c.l.b16 %v226
      %v240 = vpack.c.b16 %v239, %v233
      %vm241 = vsmask.f32 7424
      %v243 = vshrl.u32 %v234, 16
      %v245 = vshll.u32 %v234, 16
      %v247 = vrot.slane %v245, 1
      %v248 = vor.u32 %v243, %v247
      %v250 = vshll.u32 %v240, 16
      %v252 = vrot.slane %v250, 1
      %v253 = vsel %vm241, %v248, %v252
      %v254 = vshrl.u32 %v240, 16
      %v256 = vor.u32 %v254, %v252
      %v260 = vunpack.c.l.b16 %v227
      %v261 = vpack.c.b16 %v232, %v260
      %vm262 = vcmask 1046528
      %v263 = vrot.slane %v261, 1
      %v264 = vrot.slane %v240, 1
      %v265 = vsel %vm262, %v263, %v264
      %v268 = vld [vmem:[%s210] sm:$0xf]
      %v269 = vld [vmem:[%s210 + $0x4] sm:$0xf]
      %v270 = vld [vmem:[%s210 + $0x8] sm:$0xf]
      %v271 = vld [vmem:[%s210 + $0xc] sm:$0xf]
      %v272 = vld [vmem:[%s210 + $0x10] sm:$0xf]
      %v273 = vld [vmem:[%s210 + $0x14] sm:$0xf]
      %v274 = vld [vmem:[%s210 + $0x18] sm:$0xf]
      %v275 = vld [vmem:[%s210 + $0x1c] sm:$0xf]
      %v276 = vld [vmem:[%s210 + $0x20] sm:$0xf]
      %v277 = vld [vmem:[%s210 + $0x24] sm:$0xf]
      %v278 = vld [vmem:[%s210 + $0x28] sm:$0xf]
      %v279 = vld [vmem:[%s210 + $0x2c] sm:$0xf]
      %v280 = vld [vmem:[%s210 + $0x30] sm:$0xf]
      %v281 = vld [vmem:[%s210 + $0x34] sm:$0xf]
      %v282 = vld [vmem:[%s210 + $0x38] sm:$0xf]
      %v283 = vld [vmem:[%s210 + $0x3c] sm:$0xf]
      %v284 = vld [vmem:[%s210 + $0x40] sm:$0xf]
      %v285 = vld [vmem:[%s210 + $0x44] sm:$0xf]
      %v286 = vld [vmem:[%s210 + $0x48] sm:$0xf]
      %v287 = vld [vmem:[%s210 + $0x4c] sm:$0xf]
      %v288 = vld [vmem:[%s210 + $0x50] sm:$0xf]
      %v289 = vld [vmem:[%s210 + $0x54] sm:$0xf]
      %v290 = vld [vmem:[%s210 + $0x58] sm:$0xf]
      %v291 = vld [vmem:[%s210 + $0x5c] sm:$0xf]
      %v292 = vld [vmem:[%s210 + $0x60] sm:$0xf]
      %v293 = vld [vmem:[%s210 + $0x64] sm:$0xf]
      %v294 = vld [vmem:[%s210 + $0x68] sm:$0xf]
      %v295 = vld [vmem:[%s210 + $0x6c] sm:$0xf]
      %v296 = vld [vmem:[%s210 + $0x70] sm:$0xf]
      %v297 = vld [vmem:[%s210 + $0x74] sm:$0xf]
      %v298 = vld [vmem:[%s210 + $0x78] sm:$0xf]
      %v299 = vld [vmem:[%s210 + $0x7c] sm:$0xf]
      %v300 = vld [vmem:[%s210 + $0x80] sm:$0xf]
      %v301 = vld [vmem:[%s210 + $0x84] sm:$0xf]
      %v302 = vld [vmem:[%s210 + $0x88] sm:$0xf]
      %v303 = vld [vmem:[%s210 + $0x8c] sm:$0xf]
      %v304 = vld [vmem:[%s210 + $0x90] sm:$0xf]
      %v305 = vld [vmem:[%s210 + $0x94] sm:$0xf]
      %v306 = vld [vmem:[%s210 + $0x98] sm:$0xf]
      %v307 = vld [vmem:[%s210 + $0x9c] sm:$0xf]
      %v308 = vld [vmem:[%s210 + $0xa0] sm:$0xf]
      %v309 = vld [vmem:[%s210 + $0xa4] sm:$0xf]
      %v310 = vld [vmem:[%s210 + $0xa8] sm:$0xf]
      %v311 = vld [vmem:[%s210 + $0xac] sm:$0xf]
      %v312 = vld [vmem:[%s210 + $0xb0] sm:$0xf]
      %v313 = vld [vmem:[%s210 + $0xb4] sm:$0xf]
      %v314 = vld [vmem:[%s210 + $0xb8] sm:$0xf]
      %v315 = vld [vmem:[%s210 + $0xbc] sm:$0xf]
      %v316 = vld [vmem:[%s206] sm:$0x8]
      %v317 = vld [vmem:[%s206 + $0xc] sm:$0x7]
      %v318 = vld [vmem:[%s206 + $0xc] sm:$0xf]
      %v321 = vunpack.c.l.b16 %v316
      %v322 = vunpack.c.l.b16 %v317
      %v323 = vpack.c.b16 %v232, %v321
      %v324 = vpack.c.b16 %v322, %v233
      %v326 = vunpack.c.l.b16 %v318
      %v327 = vpack.c.b16 %v326, %v233
      %v329 = vshrl.u32 %v323, 16
      %v331 = vshll.u32 %v323, 16
      %v333 = vrot.slane %v331, 1
      %v334 = vor.u32 %v329, %v333
      %v336 = vshll.u32 %v327, 16
      %v338 = vrot.slane %v336, 1
      %v339 = vsel %vm241, %v334, %v338
      %v340 = vshrl.u32 %v327, 16
      %v342 = vor.u32 %v340, %v338
      %v343 = vpack.c.b16 %v233, %v232
      %v344 = vpack.c.b16 %v326, %v326
      %vm345 = vcmask 1042432
      %v346 = vrot.slane %v343, 5
      %v347 = vrot.slane %v344, 5
      %v348 = vsel %vm345, %v346, %v347
      %s349 = scalar_lea.vmem %s210, 192
      %v350 = vld [vmem:[%s349] sm:$0xf]
      %v351 = vld [vmem:[%s349 + $0x4] sm:$0xf]
      %v352 = vld [vmem:[%s349 + $0x8] sm:$0xf]
      %v353 = vld [vmem:[%s349 + $0xc] sm:$0xf]
      %v354 = vld [vmem:[%s349 + $0x10] sm:$0xf]
      %v355 = vld [vmem:[%s349 + $0x14] sm:$0xf]
      %v356 = vld [vmem:[%s349 + $0x18] sm:$0xf]
      %v357 = vld [vmem:[%s349 + $0x1c] sm:$0xf]
      %v358 = vld [vmem:[%s349 + $0x20] sm:$0xf]
      %v359 = vld [vmem:[%s349 + $0x24] sm:$0xf]
      %v360 = vld [vmem:[%s349 + $0x28] sm:$0xf]
      %v361 = vld [vmem:[%s349 + $0x2c] sm:$0xf]
      %v362 = vld [vmem:[%s349 + $0x30] sm:$0xf]
      %v363 = vld [vmem:[%s349 + $0x34] sm:$0xf]
      %v364 = vld [vmem:[%s349 + $0x38] sm:$0xf]
      %v365 = vld [vmem:[%s349 + $0x3c] sm:$0xf]
      %v366 = vld [vmem:[%s349 + $0x40] sm:$0xf]
      %v367 = vld [vmem:[%s349 + $0x44] sm:$0xf]
      %v368 = vld [vmem:[%s349 + $0x48] sm:$0xf]
      %v369 = vld [vmem:[%s349 + $0x4c] sm:$0xf]
      %v370 = vld [vmem:[%s349 + $0x50] sm:$0xf]
      %v371 = vld [vmem:[%s349 + $0x54] sm:$0xf]
      %v372 = vld [vmem:[%s349 + $0x58] sm:$0xf]
      %v373 = vld [vmem:[%s349 + $0x5c] sm:$0xf]
      %v374 = vld [vmem:[%s349 + $0x60] sm:$0xf]
      %v375 = vld [vmem:[%s349 + $0x64] sm:$0xf]
      %v376 = vld [vmem:[%s349 + $0x68] sm:$0xf]
      %v377 = vld [vmem:[%s349 + $0x6c] sm:$0xf]
      %v378 = vld [vmem:[%s349 + $0x70] sm:$0xf]
      %v379 = vld [vmem:[%s349 + $0x74] sm:$0xf]
      %v380 = vld [vmem:[%s349 + $0x78] sm:$0xf]
      %v381 = vld [vmem:[%s349 + $0x7c] sm:$0xf]
      %v382 = vld [vmem:[%s349 + $0x80] sm:$0xf]
      %v383 = vld [vmem:[%s349 + $0x84] sm:$0xf]
      %v384 = vld [vmem:[%s349 + $0x88] sm:$0xf]
      %v385 = vld [vmem:[%s349 + $0x8c] sm:$0xf]
      %v386 = vld [vmem:[%s349 + $0x90] sm:$0xf]
      %v387 = vld [vmem:[%s349 + $0x94] sm:$0xf]
      %v388 = vld [vmem:[%s349 + $0x98] sm:$0xf]
      %v389 = vld [vmem:[%s349 + $0x9c] sm:$0xf]
      %v390 = vld [vmem:[%s349 + $0xa0] sm:$0xf]
      %v391 = vld [vmem:[%s349 + $0xa4] sm:$0xf]
      %v392 = vld [vmem:[%s349 + $0xa8] sm:$0xf]
      %v393 = vld [vmem:[%s349 + $0xac] sm:$0xf]
      %v394 = vld [vmem:[%s349 + $0xb0] sm:$0xf]
      %v395 = vld [vmem:[%s349 + $0xb4] sm:$0xf]
      %v396 = vld [vmem:[%s349 + $0xb8] sm:$0xf]
      %v397 = vld [vmem:[%s349 + $0xbc] sm:$0xf]
      %vm398 = vcmask 1044480
      %v399 = vrot.slane %v323, 3
      %v400 = vrot.slane %v324, 3
      %v401 = vsel %vm398, %v399, %v400
      %v402 = vrot.slane %v339, 3
      %v403 = vrot.slane %v342, 3
      %v404 = vsel %vm398, %v402, %v403
      %v405 = vrot.slane %v346, 3
      %v406 = vrot.slane %v348, 3
      %v407 = vsel %vm398, %v405, %v406
      %v462 = vunpack.c.l.b16 %v350
      %v463 = vunpack.c.l.b16 %v351
      %v464 = vunpack.c.l.b16 %v352
      %v465 = vunpack.c.l.b16 %v353
      %v466 = vunpack.c.l.b16 %v354
      %v467 = vunpack.c.l.b16 %v355
      %v468 = vunpack.c.l.b16 %v356
      %v469 = vunpack.c.l.b16 %v357
      %v470 = vunpack.c.l.b16 %v358
      %v471 = vunpack.c.l.b16 %v359
      %v472 = vunpack.c.l.b16 %v360
      %v473 = vunpack.c.l.b16 %v361
      %v474 = vunpack.c.l.b16 %v362
      %v475 = vunpack.c.l.b16 %v363
      %v476 = vunpack.c.l.b16 %v364
      %v477 = vunpack.c.l.b16 %v365
      %v478 = vunpack.c.l.b16 %v366
      %v479 = vunpack.c.l.b16 %v367
      %v480 = vunpack.c.l.b16 %v368
      %v481 = vunpack.c.l.b16 %v369
      %v482 = vunpack.c.l.b16 %v370
      %v483 = vunpack.c.l.b16 %v371
      %v484 = vunpack.c.l.b16 %v372
      %v485 = vunpack.c.l.b16 %v373
      %v486 = vunpack.c.l.b16 %v374
      %v487 = vunpack.c.l.b16 %v375
      %v488 = vunpack.c.l.b16 %v376
      %v489 = vunpack.c.l.b16 %v377
      %v490 = vunpack.c.l.b16 %v378
      %v491 = vunpack.c.l.b16 %v379
      %v492 = vunpack.c.l.b16 %v380
      %v493 = vunpack.c.l.b16 %v381
      %v494 = vunpack.c.l.b16 %v382
      %v495 = vunpack.c.l.b16 %v383
      %v496 = vunpack.c.l.b16 %v384
      %v497 = vunpack.c.l.b16 %v385
      %v498 = vunpack.c.l.b16 %v386
      %v499 = vunpack.c.l.b16 %v387
      %v500 = vunpack.c.l.b16 %v388
      %v501 = vunpack.c.l.b16 %v389
      %v502 = vunpack.c.l.b16 %v390
      %v503 = vunpack.c.l.b16 %v391
      %v504 = vunpack.c.l.b16 %v392
      %v505 = vunpack.c.l.b16 %v393
      %v506 = vunpack.c.l.b16 %v394
      %v507 = vunpack.c.l.b16 %v395
      %v508 = vunpack.c.l.b16 %v396
      %v509 = vunpack.c.l.b16 %v397
      %v510 = vpack.c.b16 %v463, %v462
      %v511 = vpack.c.b16 %v465, %v464
      %v512 = vpack.c.b16 %v467, %v466
      %v513 = vpack.c.b16 %v469, %v468
      %v514 = vpack.c.b16 %v471, %v470
      %v515 = vpack.c.b16 %v473, %v472
      %v516 = vpack.c.b16 %v475, %v474
      %v517 = vpack.c.b16 %v477, %v476
      %v518 = vpack.c.b16 %v479, %v478
      %v519 = vpack.c.b16 %v481, %v480
      %v520 = vpack.c.b16 %v483, %v482
      %v521 = vpack.c.b16 %v485, %v484
      %v522 = vpack.c.b16 %v487, %v486
      %v523 = vpack.c.b16 %v489, %v488
      %v524 = vpack.c.b16 %v491, %v490
      %v525 = vpack.c.b16 %v493, %v492
      %v526 = vpack.c.b16 %v495, %v494
      %v527 = vpack.c.b16 %v497, %v496
      %v528 = vpack.c.b16 %v499, %v498
      %v529 = vpack.c.b16 %v501, %v500
      %v530 = vpack.c.b16 %v503, %v502
      %v531 = vpack.c.b16 %v505, %v504
      %v532 = vpack.c.b16 %v507, %v506
      %v533 = vpack.c.b16 %v509, %v508
      %558 = vmatprep.subr.bf16.mxu0 0
      %559 = vmatpush1.bf16.msra.mxu0 %v517
      %560 = vmatprep.subr.bf16.mxu0 0
      %561 = vmatpush1.bf16.msra.mxu0 %v516
      %562 = vmatprep.subr.bf16.mxu0 0
      %563 = vmatpush1.bf16.msra.mxu0 %v515
      %564 = vmatprep.subr.bf16.mxu0 0
      %565 = vmatpush1.bf16.msra.mxu0 %v514
      %566 = vmatprep.subr.bf16.mxu0 0
      %567 = vmatpush1.bf16.msra.mxu0 %v513
      %568 = vmatprep.subr.bf16.mxu0 0
      %569 = vmatpush1.bf16.msra.mxu0 %v512
      %570 = vmatprep.subr.bf16.mxu0 0
      %571 = vmatpush1.bf16.msra.mxu0 %v511
      %572 = vmatprep.subr.bf16.mxu0 0
      %573 = vmatpush1.bf16.msra.mxu0 %v510
      %574 = vmatprep.subr.bf16.mxu0 0
      %575 = vmatpush2.bf16.msra.mxu0 %v525
      %576 = vmatprep.subr.bf16.mxu0 0
      %577 = vmatpush2.bf16.msra.mxu0 %v524
      %578 = vmatprep.subr.bf16.mxu0 0
      %579 = vmatpush2.bf16.msra.mxu0 %v523
      %580 = vmatprep.subr.bf16.mxu0 0
      %581 = vmatpush2.bf16.msra.mxu0 %v522
      %582 = vmatprep.subr.bf16.mxu0 0
      %583 = vmatpush2.bf16.msra.mxu0 %v521
      %584 = vmatprep.subr.bf16.mxu0 0
      %585 = vmatpush2.bf16.msra.mxu0 %v520
      %586 = vmatprep.subr.bf16.mxu0 0
      %587 = vmatpush2.bf16.msra.mxu0 %v519
      %588 = vmatprep.subr.bf16.mxu0 0
      %589 = vmatpush2.bf16.msra.mxu0 %v518
      %590 = vmatprep.mubr.bf16.mxu0 %v404
      %591 = vmatmul.mubr.bf16.gmra.mxu0 %v401
      %v592 = vpop.f32.mrf.mxu0
      %v593 = vadd.f32 0.0, %v592
      %v594 = vpop.f32.mrf.mxu0
      %v595 = vpop.f32.mrf.mxu0
      %v596 = vadd.f32 0.0, %v595
      %v597 = vpop.f32.mrf.mxu0
      %598 = vmatprep.mubr.bf16.mxu0 %v403
      %599 = vmatmul.mubr.bf16.gmra.mxu0 %v400
      %v600 = vpop.f32.mrf.mxu0
      %v601 = vadd.f32 0.0, %v600
      %v602 = vpop.f32.mrf.mxu0
      %v603 = vpop.f32.mrf.mxu0
      %v604 = vpop.f32.mrf.mxu0
      %605 = vdwg.mxu0
      %606 = vmatprep.subr.bf16.mxu0 0
      %607 = vmatpush1.bf16.msra.mxu0 %v533
      %608 = vmatprep.subr.bf16.mxu0 0
      %609 = vmatpush1.bf16.msra.mxu0 %v532
      %610 = vmatprep.subr.bf16.mxu0 0
      %611 = vmatpush1.bf16.msra.mxu0 %v531
      %612 = vmatprep.subr.bf16.mxu0 0
      %613 = vmatpush1.bf16.msra.mxu0 %v530
      %614 = vmatprep.subr.bf16.mxu0 0
      %615 = vmatpush1.bf16.msra.mxu0 %v529
      %616 = vmatprep.subr.bf16.mxu0 0
      %617 = vmatpush1.bf16.msra.mxu0 %v528
      %618 = vmatprep.subr.bf16.mxu0 0
      %619 = vmatpush1.bf16.msra.mxu0 %v527
      %620 = vmatprep.subr.bf16.mxu0 0
      %621 = vmatpush1.bf16.msra.mxu0 %v526
      %622 = vmatprep.subr.bf16.mxu0 0
      %623 = vmatpush2.bf16.msra.mxu0 0
      %624 = vmatprep.subr.bf16.mxu0 0
      %625 = vmatpush2.bf16.msra.mxu0 0
      %626 = vmatprep.subr.bf16.mxu0 0
      %627 = vmatpush2.bf16.msra.mxu0 0
      %628 = vmatprep.subr.bf16.mxu0 0
      %629 = vmatpush2.bf16.msra.mxu0 0
      %630 = vmatprep.subr.bf16.mxu0 0
      %631 = vmatpush2.bf16.msra.mxu0 0
      %632 = vmatprep.subr.bf16.mxu0 0
      %633 = vmatpush2.bf16.msra.mxu0 0
      %634 = vmatprep.subr.bf16.mxu0 0
      %635 = vmatpush2.bf16.msra.mxu0 0
      %636 = vmatprep.subr.bf16.mxu0 0
      %637 = vmatpush2.bf16.msra.mxu0 0
      %638 = vmatprep.mubr.bf16.mxu0 0
      %639 = vmatmul.mubr.bf16.gmra.mxu0 %v407
      %v640 = vpop.f32.mrf.mxu0
      %v641 = vadd.f32 %v593, %v640
      %v642 = vpop.f32.mrf.mxu0
      %v643 = vpop.f32.mrf.mxu0
      %v644 = vadd.f32 %v596, %v643
      %v645 = vpop.f32.mrf.mxu0
      %646 = vmatprep.mubr.bf16.mxu0 0
      %647 = vmatmul.mubr.bf16.gmra.mxu0 %v406
      %v648 = vpop.f32.mrf.mxu0
      %v649 = vadd.f32 %v601, %v648
      %v650 = vpop.f32.mrf.mxu0
      %v651 = vpop.f32.mrf.mxu0
      %v652 = vpop.f32.mrf.mxu0
      %653 = vdwg.mxu0
      %v702 = vunpack.c.l.b16 %v268
      %v703 = vunpack.c.l.b16 %v269
      %v704 = vunpack.c.l.b16 %v270
      %v705 = vunpack.c.l.b16 %v271
      %v706 = vunpack.c.l.b16 %v272
      %v707 = vunpack.c.l.b16 %v273
      %v708 = vunpack.c.l.b16 %v274
      %v709 = vunpack.c.l.b16 %v275
      %v710 = vunpack.c.l.b16 %v276
      %v711 = vunpack.c.l.b16 %v277
      %v712 = vunpack.c.l.b16 %v278
      %v713 = vunpack.c.l.b16 %v279
      %v714 = vunpack.c.l.b16 %v280
      %v715 = vunpack.c.l.b16 %v281
      %v716 = vunpack.c.l.b16 %v282
      %v717 = vunpack.c.l.b16 %v283
      %v718 = vunpack.c.l.b16 %v284
      %v719 = vunpack.c.l.b16 %v285
      %v720 = vunpack.c.l.b16 %v286
      %v721 = vunpack.c.l.b16 %v287
      %v722 = vunpack.c.l.b16 %v288
      %v723 = vunpack.c.l.b16 %v289
      %v724 = vunpack.c.l.b16 %v290
      %v725 = vunpack.c.l.b16 %v291
      %v726 = vunpack.c.l.b16 %v292
      %v727 = vunpack.c.l.b16 %v293
      %v728 = vunpack.c.l.b16 %v294
      %v729 = vunpack.c.l.b16 %v295
      %v730 = vunpack.c.l.b16 %v296
      %v731 = vunpack.c.l.b16 %v297
      %v732 = vunpack.c.l.b16 %v298
      %v733 = vunpack.c.l.b16 %v299
      %v734 = vunpack.c.l.b16 %v300
      %v735 = vunpack.c.l.b16 %v301
      %v736 = vunpack.c.l.b16 %v302
      %v737 = vunpack.c.l.b16 %v303
      %v738 = vunpack.c.l.b16 %v304
      %v739 = vunpack.c.l.b16 %v305
      %v740 = vunpack.c.l.b16 %v306
      %v741 = vunpack.c.l.b16 %v307
      %v742 = vunpack.c.l.b16 %v308
      %v743 = vunpack.c.l.b16 %v309
      %v744 = vunpack.c.l.b16 %v310
      %v745 = vunpack.c.l.b16 %v311
      %v746 = vunpack.c.l.b16 %v312
      %v747 = vunpack.c.l.b16 %v313
      %v748 = vunpack.c.l.b16 %v314
      %v749 = vunpack.c.l.b16 %v315
      %v750 = vpack.c.b16 %v703, %v702
      %v751 = vpack.c.b16 %v705, %v704
      %v752 = vpack.c.b16 %v707, %v706
      %v753 = vpack.c.b16 %v709, %v708
      %v754 = vpack.c.b16 %v711, %v710
      %v755 = vpack.c.b16 %v713, %v712
      %v756 = vpack.c.b16 %v715, %v714
      %v757 = vpack.c.b16 %v717, %v716
      %v758 = vpack.c.b16 %v719, %v718
      %v759 = vpack.c.b16 %v721, %v720
      %v760 = vpack.c.b16 %v723, %v722
      %v761 = vpack.c.b16 %v725, %v724
      %v762 = vpack.c.b16 %v727, %v726
      %v763 = vpack.c.b16 %v729, %v728
      %v764 = vpack.c.b16 %v731, %v730
      %v765 = vpack.c.b16 %v733, %v732
      %v766 = vpack.c.b16 %v735, %v734
      %v767 = vpack.c.b16 %v737, %v736
      %v768 = vpack.c.b16 %v739, %v738
      %v769 = vpack.c.b16 %v741, %v740
      %v770 = vpack.c.b16 %v743, %v742
      %v771 = vpack.c.b16 %v745, %v744
      %v772 = vpack.c.b16 %v747, %v746
      %v773 = vpack.c.b16 %v749, %v748
      %798 = vmatprep.subr.bf16.mxu0 0
      %799 = vmatpush1.bf16.msra.mxu0 %v757
      %800 = vmatprep.subr.bf16.mxu0 0
      %801 = vmatpush1.bf16.msra.mxu0 %v756
      %802 = vmatprep.subr.bf16.mxu0 0
      %803 = vmatpush1.bf16.msra.mxu0 %v755
      %804 = vmatprep.subr.bf16.mxu0 0
      %805 = vmatpush1.bf16.msra.mxu0 %v754
      %806 = vmatprep.subr.bf16.mxu0 0
      %807 = vmatpush1.bf16.msra.mxu0 %v753
      %808 = vmatprep.subr.bf16.mxu0 0
      %809 = vmatpush1.bf16.msra.mxu0 %v752
      %810 = vmatprep.subr.bf16.mxu0 0
      %811 = vmatpush1.bf16.msra.mxu0 %v751
      %812 = vmatprep.subr.bf16.mxu0 0
      %813 = vmatpush1.bf16.msra.mxu0 %v750
      %814 = vmatprep.subr.bf16.mxu0 0
      %815 = vmatpush2.bf16.msra.mxu0 %v765
      %816 = vmatprep.subr.bf16.mxu0 0
      %817 = vmatpush2.bf16.msra.mxu0 %v764
      %818 = vmatprep.subr.bf16.mxu0 0
      %819 = vmatpush2.bf16.msra.mxu0 %v763
      %820 = vmatprep.subr.bf16.mxu0 0
      %821 = vmatpush2.bf16.msra.mxu0 %v762
      %822 = vmatprep.subr.bf16.mxu0 0
      %823 = vmatpush2.bf16.msra.mxu0 %v761
      %824 = vmatprep.subr.bf16.mxu0 0
      %825 = vmatpush2.bf16.msra.mxu0 %v760
      %826 = vmatprep.subr.bf16.mxu0 0
      %827 = vmatpush2.bf16.msra.mxu0 %v759
      %828 = vmatprep.subr.bf16.mxu0 0
      %829 = vmatpush2.bf16.msra.mxu0 %v758
      %830 = vmatprep.mubr.bf16.mxu0 %v253
      %831 = vmatmul.mubr.bf16.gmra.mxu0 %v234
      %v832 = vpop.f32.mrf.mxu0
      %v833 = vadd.f32 %v641, %v832
      %v834 = vpop.f32.mrf.mxu0
      %v835 = vpop.f32.mrf.mxu0
      %v836 = vadd.f32 %v644, %v835
      %v837 = vpop.f32.mrf.mxu0
      %838 = vmatprep.mubr.bf16.mxu0 %v256
      %839 = vmatmul.mubr.bf16.gmra.mxu0 %v235
      %v840 = vpop.f32.mrf.mxu0
      %v841 = vadd.f32 %v649, %v840
      %v842 = vpop.f32.mrf.mxu0
      %v843 = vpop.f32.mrf.mxu0
      %v844 = vpop.f32.mrf.mxu0
      %845 = vdwg.mxu0
      %846 = vmatprep.subr.bf16.mxu0 0
      %847 = vmatpush1.bf16.msra.mxu0 %v773
      %848 = vmatprep.subr.bf16.mxu0 0
      %849 = vmatpush1.bf16.msra.mxu0 %v772
      %850 = vmatprep.subr.bf16.mxu0 0
      %851 = vmatpush1.bf16.msra.mxu0 %v771
      %852 = vmatprep.subr.bf16.mxu0 0
      %853 = vmatpush1.bf16.msra.mxu0 %v770
      %854 = vmatprep.subr.bf16.mxu0 0
      %855 = vmatpush1.bf16.msra.mxu0 %v769
      %856 = vmatprep.subr.bf16.mxu0 0
      %857 = vmatpush1.bf16.msra.mxu0 %v768
      %858 = vmatprep.subr.bf16.mxu0 0
      %859 = vmatpush1.bf16.msra.mxu0 %v767
      %860 = vmatprep.subr.bf16.mxu0 0
      %861 = vmatpush1.bf16.msra.mxu0 %v766
      %862 = vmatprep.subr.bf16.mxu0 0
      %863 = vmatpush2.bf16.msra.mxu0 0
      %864 = vmatprep.subr.bf16.mxu0 0
      %865 = vmatpush2.bf16.msra.mxu0 0
      %866 = vmatprep.subr.bf16.mxu0 0
      %867 = vmatpush2.bf16.msra.mxu0 0
      %868 = vmatprep.subr.bf16.mxu0 0
      %869 = vmatpush2.bf16.msra.mxu0 0
      %870 = vmatprep.subr.bf16.mxu0 0
      %871 = vmatpush2.bf16.msra.mxu0 0
      %872 = vmatprep.subr.bf16.mxu0 0
      %873 = vmatpush2.bf16.msra.mxu0 0
      %874 = vmatprep.subr.bf16.mxu0 0
      %875 = vmatpush2.bf16.msra.mxu0 0
      %876 = vmatprep.subr.bf16.mxu0 0
      %877 = vmatpush2.bf16.msra.mxu0 0
      %878 = vmatprep.mubr.bf16.mxu0 0
      %879 = vmatmul.mubr.bf16.gmra.mxu0 %v265
      %v880 = vpop.f32.mrf.mxu0
      %v881 = vadd.f32 %v833, %v880
      %v882 = vpop.f32.mrf.mxu0
      %v883 = vpop.f32.mrf.mxu0
      %v884 = vadd.f32 %v836, %v883
      %v885 = vpop.f32.mrf.mxu0
      %886 = vmatprep.mubr.bf16.mxu0 0
      %887 = vmatmul.mubr.bf16.gmra.mxu0 %v264
      %v888 = vpop.f32.mrf.mxu0
      %v889 = vadd.f32 %v841, %v888
      %v890 = vpop.f32.mrf.mxu0
      %v891 = vpop.f32.mrf.mxu0
      %v892 = vpop.f32.mrf.mxu0
      %893 = vdwg.mxu0
      %v894 = vld [vmem:[%s206 + $0x4] sm:$0xc]
      %v895 = vld [vmem:[%s206 + $0x8] sm:$0xf]
      %v896 = vld [vmem:[%s206 + $0xc] sm:$0xf]
      %v897 = vld [vmem:[%s206 + $0x10] sm:$0x3]
      %v898 = vld [vmem:[%s206 + $0x10] sm:$0x7]
      %v899 = vld [vmem:[%s206 + $0x4] sm:$0x8]
      %v904 = vunpack.c.l.b16 %v894
      %v905 = vunpack.c.l.b16 %v895
      %v906 = vunpack.c.l.b16 %v896
      %v907 = vunpack.c.l.b16 %v897
      %v908 = vpack.c.b16 %v905, %v904
      %v909 = vpack.c.b16 %v907, %v906
      %v911 = vunpack.c.l.b16 %v898
      %v912 = vpack.c.b16 %v911, %v906
      %v914 = vshrl.u32 %v908, 16
      %v916 = vshll.u32 %v908, 16
      %v918 = vrot.slane %v916, 1
      %v919 = vor.u32 %v914, %v918
      %v921 = vshll.u32 %v912, 16
      %v923 = vrot.slane %v921, 1
      %v924 = vsel %vm241, %v919, %v923
      %v925 = vshrl.u32 %v912, 16
      %v927 = vor.u32 %v925, %v923
      %v929 = vunpack.c.l.b16 %v899
      %v930 = vpack.c.b16 %v905, %v929
      %v931 = vrot.slane %v930, 1
      %v932 = vrot.slane %v912, 1
      %v933 = vsel %vm262, %v931, %v932
      %s934 = scalar_lea.vmem %s210, 384
      %v935 = vld [vmem:[%s934] sm:$0xf]
      %v936 = vld [vmem:[%s934 + $0x4] sm:$0xf]
      %v937 = vld [vmem:[%s934 + $0x8] sm:$0xf]
      %v938 = vld [vmem:[%s934 + $0xc] sm:$0xf]
      %v939 = vld [vmem:[%s934 + $0x10] sm:$0xf]
      %v940 = vld [vmem:[%s934 + $0x14] sm:$0xf]
      %v941 = vld [vmem:[%s934 + $0x18] sm:$0xf]
      %v942 = vld [vmem:[%s934 + $0x1c] sm:$0xf]
      %v943 = vld [vmem:[%s934 + $0x20] sm:$0xf]
      %v944 = vld [vmem:[%s934 + $0x24] sm:$0xf]
      %v945 = vld [vmem:[%s934 + $0x28] sm:$0xf]
      %v946 = vld [vmem:[%s934 + $0x2c] sm:$0xf]
      %v947 = vld [vmem:[%s934 + $0x30] sm:$0xf]
      %v948 = vld [vmem:[%s934 + $0x34] sm:$0xf]
      %v949 = vld [vmem:[%s934 + $0x38] sm:$0xf]
      %v950 = vld [vmem:[%s934 + $0x3c] sm:$0xf]
      %v951 = vld [vmem:[%s934 + $0x40] sm:$0xf]
      %v952 = vld [vmem:[%s934 + $0x44] sm:$0xf]
      %v953 = vld [vmem:[%s934 + $0x48] sm:$0xf]
      %v954 = vld [vmem:[%s934 + $0x4c] sm:$0xf]
      %v955 = vld [vmem:[%s934 + $0x50] sm:$0xf]
      %v956 = vld [vmem:[%s934 + $0x54] sm:$0xf]
      %v957 = vld [vmem:[%s934 + $0x58] sm:$0xf]
      %v958 = vld [vmem:[%s934 + $0x5c] sm:$0xf]
      %v959 = vld [vmem:[%s934 + $0x60] sm:$0xf]
      %v960 = vld [vmem:[%s934 + $0x64] sm:$0xf]
      %v961 = vld [vmem:[%s934 + $0x68] sm:$0xf]
      %v962 = vld [vmem:[%s934 + $0x6c] sm:$0xf]
      %v963 = vld [vmem:[%s934 + $0x70] sm:$0xf]
      %v964 = vld [vmem:[%s934 + $0x74] sm:$0xf]
      %v965 = vld [vmem:[%s934 + $0x78] sm:$0xf]
      %v966 = vld [vmem:[%s934 + $0x7c] sm:$0xf]
      %v967 = vld [vmem:[%s934 + $0x80] sm:$0xf]
      %v968 = vld [vmem:[%s934 + $0x84] sm:$0xf]
      %v969 = vld [vmem:[%s934 + $0x88] sm:$0xf]
      %v970 = vld [vmem:[%s934 + $0x8c] sm:$0xf]
      %v971 = vld [vmem:[%s934 + $0x90] sm:$0xf]
      %v972 = vld [vmem:[%s934 + $0x94] sm:$0xf]
      %v973 = vld [vmem:[%s934 + $0x98] sm:$0xf]
      %v974 = vld [vmem:[%s934 + $0x9c] sm:$0xf]
      %v975 = vld [vmem:[%s934 + $0xa0] sm:$0xf]
      %v976 = vld [vmem:[%s934 + $0xa4] sm:$0xf]
      %v977 = vld [vmem:[%s934 + $0xa8] sm:$0xf]
      %v978 = vld [vmem:[%s934 + $0xac] sm:$0xf]
      %v979 = vld [vmem:[%s934 + $0xb0] sm:$0xf]
      %v980 = vld [vmem:[%s934 + $0xb4] sm:$0xf]
      %v981 = vld [vmem:[%s934 + $0xb8] sm:$0xf]
      %v982 = vld [vmem:[%s934 + $0xbc] sm:$0xf]
      %vm983 = vcmask 1045504
      %v984 = vrot.slane %v908, 2
      %v985 = vrot.slane %v909, 2
      %v986 = vsel %vm983, %v984, %v985
      %v987 = vrot.slane %v924, 2
      %v988 = vrot.slane %v927, 2
      %v989 = vsel %vm983, %v987, %v988
      %v990 = vrot.slane %v933, 2
      %v991 = vrot.slane %v932, 2
      %v992 = vsel %vm983, %v990, %v991
      %v1047 = vunpack.c.l.b16 %v935
      %v1048 = vunpack.c.l.b16 %v936
      %v1049 = vunpack.c.l.b16 %v937
      %v1050 = vunpack.c.l.b16 %v938
      %v1051 = vunpack.c.l.b16 %v939
      %v1052 = vunpack.c.l.b16 %v940
      %v1053 = vunpack.c.l.b16 %v941
      %v1054 = vunpack.c.l.b16 %v942
      %v1055 = vunpack.c.l.b16 %v943
      %v1056 = vunpack.c.l.b16 %v944
      %v1057 = vunpack.c.l.b16 %v945
      %v1058 = vunpack.c.l.b16 %v946
      %v1059 = vunpack.c.l.b16 %v947
      %v1060 = vunpack.c.l.b16 %v948
      %v1061 = vunpack.c.l.b16 %v949
      %v1062 = vunpack.c.l.b16 %v950
      %v1063 = vunpack.c.l.b16 %v951
      %v1064 = vunpack.c.l.b16 %v952
      %v1065 = vunpack.c.l.b16 %v953
      %v1066 = vunpack.c.l.b16 %v954
      %v1067 = vunpack.c.l.b16 %v955
      %v1068 = vunpack.c.l.b16 %v956
      %v1069 = vunpack.c.l.b16 %v957
      %v1070 = vunpack.c.l.b16 %v958
      %v1071 = vunpack.c.l.b16 %v959
      %v1072 = vunpack.c.l.b16 %v960
      %v1073 = vunpack.c.l.b16 %v961
      %v1074 = vunpack.c.l.b16 %v962
      %v1075 = vunpack.c.l.b16 %v963
      %v1076 = vunpack.c.l.b16 %v964
      %v1077 = vunpack.c.l.b16 %v965
      %v1078 = vunpack.c.l.b16 %v966
      %v1079 = vunpack.c.l.b16 %v967
      %v1080 = vunpack.c.l.b16 %v968
      %v1081 = vunpack.c.l.b16 %v969
      %v1082 = vunpack.c.l.b16 %v970
      %v1083 = vunpack.c.l.b16 %v971
      %v1084 = vunpack.c.l.b16 %v972
      %v1085 = vunpack.c.l.b16 %v973
      %v1086 = vunpack.c.l.b16 %v974
      %v1087 = vunpack.c.l.b16 %v975
      %v1088 = vunpack.c.l.b16 %v976
      %v1089 = vunpack.c.l.b16 %v977
      %v1090 = vunpack.c.l.b16 %v978
      %v1091 = vunpack.c.l.b16 %v979
      %v1092 = vunpack.c.l.b16 %v980
      %v1093 = vunpack.c.l.b16 %v981
      %v1094 = vunpack.c.l.b16 %v982
      %v1095 = vpack.c.b16 %v1048, %v1047
      %v1096 = vpack.c.b16 %v1050, %v1049
      %v1097 = vpack.c.b16 %v1052, %v1051
      %v1098 = vpack.c.b16 %v1054, %v1053
      %v1099 = vpack.c.b16 %v1056, %v1055
      %v1100 = vpack.c.b16 %v1058, %v1057
      %v1101 = vpack.c.b16 %v1060, %v1059
      %v1102 = vpack.c.b16 %v1062, %v1061
      %v1103 = vpack.c.b16 %v1064, %v1063
      %v1104 = vpack.c.b16 %v1066, %v1065
      %v1105 = vpack.c.b16 %v1068, %v1067
      %v1106 = vpack.c.b16 %v1070, %v1069
      %v1107 = vpack.c.b16 %v1072, %v1071
      %v1108 = vpack.c.b16 %v1074, %v1073
      %v1109 = vpack.c.b16 %v1076, %v1075
      %v1110 = vpack.c.b16 %v1078, %v1077
      %v1111 = vpack.c.b16 %v1080, %v1079
      %v1112 = vpack.c.b16 %v1082, %v1081
      %v1113 = vpack.c.b16 %v1084, %v1083
      %v1114 = vpack.c.b16 %v1086, %v1085
      %v1115 = vpack.c.b16 %v1088, %v1087
      %v1116 = vpack.c.b16 %v1090, %v1089
      %v1117 = vpack.c.b16 %v1092, %v1091
      %v1118 = vpack.c.b16 %v1094, %v1093
      %1143 = vmatprep.subr.bf16.mxu0 0
      %1144 = vmatpush1.bf16.msra.mxu0 %v1102
      %1145 = vmatprep.subr.bf16.mxu0 0
      %1146 = vmatpush1.bf16.msra.mxu0 %v1101
      %1147 = vmatprep.subr.bf16.mxu0 0
      %1148 = vmatpush1.bf16.msra.mxu0 %v1100
      %1149 = vmatprep.subr.bf16.mxu0 0
      %1150 = vmatpush1.bf16.msra.mxu0 %v1099
      %1151 = vmatprep.subr.bf16.mxu0 0
      %1152 = vmatpush1.bf16.msra.mxu0 %v1098
      %1153 = vmatprep.subr.bf16.mxu0 0
      %1154 = vmatpush1.bf16.msra.mxu0 %v1097
      %1155 = vmatprep.subr.bf16.mxu0 0
      %1156 = vmatpush1.bf16.msra.mxu0 %v1096
      %1157 = vmatprep.subr.bf16.mxu0 0
      %1158 = vmatpush1.bf16.msra.mxu0 %v1095
      %1159 = vmatprep.subr.bf16.mxu0 0
      %1160 = vmatpush2.bf16.msra.mxu0 %v1110
      %1161 = vmatprep.subr.bf16.mxu0 0
      %1162 = vmatpush2.bf16.msra.mxu0 %v1109
      %1163 = vmatprep.subr.bf16.mxu0 0
      %1164 = vmatpush2.bf16.msra.mxu0 %v1108
      %1165 = vmatprep.subr.bf16.mxu0 0
      %1166 = vmatpush2.bf16.msra.mxu0 %v1107
      %1167 = vmatprep.subr.bf16.mxu0 0
      %1168 = vmatpush2.bf16.msra.mxu0 %v1106
      %1169 = vmatprep.subr.bf16.mxu0 0
      %1170 = vmatpush2.bf16.msra.mxu0 %v1105
      %1171 = vmatprep.subr.bf16.mxu0 0
      %1172 = vmatpush2.bf16.msra.mxu0 %v1104
      %1173 = vmatprep.subr.bf16.mxu0 0
      %1174 = vmatpush2.bf16.msra.mxu0 %v1103
      %1175 = vmatprep.mubr.bf16.mxu0 %v989
      %1176 = vmatmul.mubr.bf16.gmra.mxu0 %v986
      %v1177 = vpop.f32.mrf.mxu0
      %v1178 = vadd.f32 0.0, %v1177
      %v1179 = vpop.f32.mrf.mxu0
      %v1180 = vpop.f32.mrf.mxu0
      %v1181 = vadd.f32 0.0, %v1180
      %v1182 = vpop.f32.mrf.mxu0
      %1183 = vmatprep.mubr.bf16.mxu0 %v988
      %1184 = vmatmul.mubr.bf16.gmra.mxu0 %v985
      %v1185 = vpop.f32.mrf.mxu0
      %v1186 = vadd.f32 0.0, %v1185
      %v1187 = vpop.f32.mrf.mxu0
      %v1188 = vpop.f32.mrf.mxu0
      %v1189 = vpop.f32.mrf.mxu0
      %1190 = vdwg.mxu0
      %1191 = vmatprep.subr.bf16.mxu0 0
      %1192 = vmatpush1.bf16.msra.mxu0 %v1118
      %1193 = vmatprep.subr.bf16.mxu0 0
      %1194 = vmatpush1.bf16.msra.mxu0 %v1117
      %1195 = vmatprep.subr.bf16.mxu0 0
      %1196 = vmatpush1.bf16.msra.mxu0 %v1116
      %1197 = vmatprep.subr.bf16.mxu0 0
      %1198 = vmatpush1.bf16.msra.mxu0 %v1115
      %1199 = vmatprep.subr.bf16.mxu0 0
      %1200 = vmatpush1.bf16.msra.mxu0 %v1114
      %1201 = vmatprep.subr.bf16.mxu0 0
      %1202 = vmatpush1.bf16.msra.mxu0 %v1113
      %1203 = vmatprep.subr.bf16.mxu0 0
      %1204 = vmatpush1.bf16.msra.mxu0 %v1112
      %1205 = vmatprep.subr.bf16.mxu0 0
      %1206 = vmatpush1.bf16.msra.mxu0 %v1111
      %1207 = vmatprep.subr.bf16.mxu0 0
      %1208 = vmatpush2.bf16.msra.mxu0 0
      %1209 = vmatprep.subr.bf16.mxu0 0
      %1210 = vmatpush2.bf16.msra.mxu0 0
      %1211 = vmatprep.subr.bf16.mxu0 0
      %1212 = vmatpush2.bf16.msra.mxu0 0
      %1213 = vmatprep.subr.bf16.mxu0 0
      %1214 = vmatpush2.bf16.msra.mxu0 0
      %1215 = vmatprep.subr.bf16.mxu0 0
      %1216 = vmatpush2.bf16.msra.mxu0 0
      %1217 = vmatprep.subr.bf16.mxu0 0
      %1218 = vmatpush2.bf16.msra.mxu0 0
      %1219 = vmatprep.subr.bf16.mxu0 0
      %1220 = vmatpush2.bf16.msra.mxu0 0
      %1221 = vmatprep.subr.bf16.mxu0 0
      %1222 = vmatpush2.bf16.msra.mxu0 0
      %1223 = vmatprep.mubr.bf16.mxu0 0
      %1224 = vmatmul.mubr.bf16.gmra.mxu0 %v992
      %v1225 = vpop.f32.mrf.mxu0
      %v1226 = vadd.f32 %v1178, %v1225
      %v1227 = vpop.f32.mrf.mxu0
      %v1228 = vpop.f32.mrf.mxu0
      %v1229 = vadd.f32 %v1181, %v1228
      %v1230 = vpop.f32.mrf.mxu0
      %1231 = vmatprep.mubr.bf16.mxu0 0
      %1232 = vmatmul.mubr.bf16.gmra.mxu0 %v991
      %v1233 = vpop.f32.mrf.mxu0
      %v1234 = vadd.f32 %v1186, %v1233
      %v1235 = vpop.f32.mrf.mxu0
      %v1236 = vpop.f32.mrf.mxu0
      %v1237 = vpop.f32.mrf.mxu0
      %1238 = vdwg.mxu0
      %v1239 = vadd.f32 %v881, %v1226
      %v1240 = vadd.f32 %v884, %v1229
      %v1241 = vadd.f32 %v889, %v1234
      %v1242 = vld [vmem:[%s213] sm:$0x1]
      %v1244 = vlaneseq
      %v1245 = vshrl.u32 %v1244, 7
      %v1246 = vsub.s32 0, %v1245
      %v1247 = vrot.slane %v1242, %v1246
      %v1249 = vadd.f32 %v1239, %v1247
      %v1250 = vadd.f32 %v1240, %v1247
      %v1251 = vadd.f32 %v1241, %v1247
      %v1252 = vmax.f32 %v1249, 0.0
      %v1253 = vmax.f32 %v1250, 0.0
      %v1254 = vmax.f32 %v1251, 0.0
      %v1255 = vpack.c.bf16 %v1253, %v1252
      %v1256 = vpack.c.bf16 %v1254, %v1254
      %v1259 = vunpack.c.l.b16 %v1255
      %v1260 = vunpack.c.h.b16 %v1255
      %v1261 = vunpack.c.l.b16 %v1256
      %v1262 = vpack.c.b16 %v1259, %v1259
      %v1263 = vpack.c.b16 %v1260, %v1260
      %v1264 = vpack.c.b16 %v1261, %v1261
      %1268 = vst [vmem:[%s221] sm:$0xf] %v1262
      %1269 = vst [vmem:[%s221 + $0x4] sm:$0xf] %v1263
      %1270 = vst [vmem:[%s221 + $0x8] sm:$0xf] %v1264
      %p1271 = scmp.lt.s32.totalorder %s18, 1
      %s1272 = scalar_select %p1271, %s18, 1
      %p1273 = scmp.lt.s32.totalorder %s19, 0
      %s1274 = scalar_select %p1273, %s19, 0
      %s1275 = smul.addr %s1272, 3
      %s1276 = sadd.s32 %s1274, %s1275
      %s1277 = smul.addr %s1276, 4
      %s1278 = scalar_lea.vmem %s3, %s1277
      // Predicated region
      $region33: #{_lambda_.28} parent=31 // pred_check
        %p1279 = pneg %p124
      $region34: #{_lambda_.28} parent=31 // pred_check_branch
        %1281 = sbr.rel (%p1279) target = $region36
      $region35: #{_lambda_.28} parent=31 // pred_region
        _
      $region36: #{_lambda_.28} parent=31 // pred_fallthru
        _
    $region32: #{_lambda_.28} parent=5 // pred_fallthru
      _
    %p1282 = scmp.le.s32.totalorder 2, %s9
    // Predicated region
    $region37: #{_lambda_.28} parent=5 // pred_check
      %p1283 = pneg %p1282
    $region38: #{_lambda_.28} parent=5 // pred_check_branch
      %1285 = sbr.rel (%p1283) target = $region40
    $region39: #{_lambda_.28} parent=5 // pred_region
      %s1286 = ssub.s32 %s9, 2
      // Predicated region
      $region41: #{_lambda_.28} parent=39 // pred_check
        %p1287 = pneg %p130
      $region42: #{_lambda_.28} parent=39 // pred_check_branch
        %1289 = sbr.rel (%p1287) target = $region44
      $region43: #{_lambda_.28} parent=39 // pred_region
        %p1290 = scmp.lt.s32.totalorder %s20, 1
        %s1291 = scalar_select %p1290, %s20, 1
        %p1292 = scmp.lt.s32.totalorder %s21, 0
        %s1293 = scalar_select %p1292, %s21, 0
        %s1294 = smul.addr %s1291, 3
        %s1295 = sadd.s32 %s1293, %s1294
        %s1296 = smul.addr %s1295, 4
        %s1297 = scalar_lea.vmem %s3, %s1296
      $region44: #{_lambda_.28} parent=39 // pred_fallthru
        _
    $region40: #{_lambda_.28} parent=5 // pred_fallthru
      _
  $region6: #{_lambda_.28} parent=0 // loop_footer
    %s13 = sadd.s32 1, %s9
  $region7: #{_lambda_.28} parent=0 // loop_footer_branch
    %8 = sbr.rel target = $region3
  $region8: #{_lambda_.28} parent=0 // loop_exit
    _

</llo_original>
